<compile_context>
chip_gen: v7x
topology: tpu7x:2x2x1
jax: 0.10.0
libtpu: 0.0.40
codegen_flags: <defaults>
</compile_context>

<pallas_src>
import functools
from types import SimpleNamespace

import jax
import jax.numpy as jnp
from jax import lax
from jax.experimental import pallas as pl
from jax.experimental.pallas import tpu as pltpu

_VMEM = functools.partial(pl.BlockSpec, memory_space=pltpu.MemorySpace.VMEM)
_BN_EPS = 1e-5
_REVIN_EPS = 1e-5


# ---------------------------------------------------------------------------
# in-kernel math helpers
# ---------------------------------------------------------------------------
def _erf(x):
    # Abramowitz & Stegun 7.1.26, |abs err| < 1.5e-7 (~f32 precision); only needs exp (EUP).
    # TODO(synk): torch.nn.GELU uses hardware-exact erf; this polynomial is a f32-accurate stand-in
    # (kept instead of the faster tanh-approx GELU to stay closest to nn.GELU semantics).
    p = 0.3275911
    a1, a2, a3, a4, a5 = 0.254829592, -0.284496736, 1.421413741, -1.453152027, 1.061405429
    s = jnp.where(x >= 0.0, 1.0, -1.0)
    ax = jnp.abs(x)
    t = 1.0 / (1.0 + p * ax)
    poly = t * (a1 + t * (a2 + t * (a3 + t * (a4 + t * a5))))
    return s * (1.0 - poly * jnp.exp(-ax * ax))


def _gelu(x):  # exact-GELU semantics (erf form), matching nn.GELU()
    return 0.5 * x * (1.0 + _erf(x * 0.7071067811865476))


# ---------------------------------------------------------------------------
# the fused Pallas kernel: whole PatchTST forward for one batch of series
# ---------------------------------------------------------------------------
def _fused_kernel(x_ref, wmain_ref, wpad_ref, wcol_ref, bpos_ref,
                  wqkv_ref, bqkv_ref, wo_ref, bo_ref, bn1w_ref, bn1b_ref,
                  w1_ref, b1_ref, w2_ref, b2_ref, bn2w_ref, bn2b_ref,
                  whead_ref, bhead_ref, out_ref, u_scr,
                  *, N, L, Q, D, H, dk, n_layers):
    f32 = jnp.float32
    HD = H * dk

    x = x_ref[...]                                            # [N, L]  (N = B*enc_in series)

    # ---- RevIN 'norm' statistics (per series, biased variance, eps=1e-5) ----
    mean = jnp.mean(x, axis=-1, keepdims=True)                # [N, 1]
    xc = x - mean
    var = jnp.mean(xc * xc, axis=-1, keepdims=True)
    rstd = lax.rsqrt(var + _REVIN_EPS)                        # EUP rsqrt instead of divide
    stdev = jnp.sqrt(var + _REVIN_EPS)                        # kept for the denorm at the end
    x_last = x[:, L - 1:L]                                    # ReplicationPad1d value

    # ---- fused RevIN-norm + ReplicationPad1d((0,S)) + unfold + W_P + W_pos ----
    # u[n, q*D+d] = ((x_pad[n]-mean)/std) @ W_exp + b_P + W_pos, with W_exp expanded offline and
    # the pad / mean corrections expressed as precomputed column sums (wpad / wcol).
    u = jnp.dot(x, wmain_ref[...], preferred_element_type=f32)        # [N, Q*D]
    u = u + x_last * wpad_ref[...] - mean * wcol_ref[...]
    u = u * rstd + bpos_ref[...]

    # re-block [N, Q*D] -> [N, Q, D] token layout via lane-aligned slices into VMEM scratch
    for q in range(Q):
        u_scr[:, q, :] = u[:, q * D:(q + 1) * D]
    x2 = u_scr[...].reshape(N * Q, D)                         # tokens: row n*Q + q

    # ---- TST encoder: residual attention scores carried layer-to-layer in VMEM only ----
    scale = float(dk) ** -0.5                                 # head_dim ** -0.5
    prev = None
    for l in range(n_layers):                                 # static layer loop (stacked weights)
        wqkv = wqkv_ref[l]
        wo = wo_ref[l]
        qkv = jnp.dot(x2, wqkv, preferred_element_type=f32) + bqkv_ref[l]   # merged Q|K|V matmul

        attn_out = None
        new_scores = []
        for h in range(H):                                    # static head loop (H small)
            qh = qkv[:, h * dk:(h + 1) * dk].reshape(N, Q, dk)
            kh = qkv[:, HD + h * dk:HD + (h + 1) * dk].reshape(N, Q, dk)
            vh = qkv[:, 2 * HD + h * dk:2 * HD + (h + 1) * dk].reshape(N, Q, dk)

            sc = lax.dot_general(qh, kh, (((2,), (2,)), ((0,), (0,))),
                                 preferred_element_type=f32) * scale        # [N, Q, Q]
            if prev is not None:                              # residual attention scores
                sc = sc + prev[h]
            new_scores.append(sc)

            m = jnp.max(sc, axis=-1, keepdims=True)
            e = jnp.exp(sc - m)
            inv = 1.0 / jnp.sum(e, axis=-1, keepdims=True)    # one divide per row, not per element
            aw = e * inv
            oh = lax.dot_general(aw, vh, (((2,), (1,)), ((0,), (0,))),
                                 preferred_element_type=f32)                # [N, Q, dk]
            # per-head output projection (== concat(heads) @ W_O, without the concat relayout)
            ph = jnp.dot(oh.reshape(N * Q, dk), wo[h * dk:(h + 1) * dk, :],
                         preferred_element_type=f32)                        # [N*Q, D]
            attn_out = ph if attn_out is None else attn_out + ph
        prev = new_scores

        x2 = x2 + attn_out + bo_ref[l]

        # norm_attn: BatchNorm1d(d_model), training-mode batch stats over all N*Q tokens
        mu = jnp.mean(x2, axis=0, keepdims=True)
        xm = x2 - mu
        v = jnp.mean(xm * xm, axis=0, keepdims=True)
        x2 = xm * lax.rsqrt(v + _BN_EPS) * bn1w_ref[l] + bn1b_ref[l]

        # position-wise FFN: Linear -> GELU -> (Dropout p=0) -> Linear
        h1 = jnp.dot(x2, w1_ref[l], preferred_element_type=f32) + b1_ref[l]
        h1 = _gelu(h1)
        x2 = x2 + jnp.dot(h1, w2_ref[l], preferred_element_type=f32) + b2_ref[l]

        # norm_ffn
        mu2 = jnp.mean(x2, axis=0, keepdims=True)
        xm2 = x2 - mu2
        v2 = jnp.mean(xm2 * xm2, axis=0, keepdims=True)
        x2 = xm2 * lax.rsqrt(v2 + _BN_EPS) * bn2w_ref[l] + bn2b_ref[l]

    # ---- Flatten_Head (weights pre-permuted offline to the natural [q, d] token order) ----
    u_scr[...] = x2.reshape(N, Q, D)
    acc = None
    for q in range(Q):
        t = jnp.dot(u_scr[:, q, :], whead_ref[q], preferred_element_type=f32)   # [N, T]
        acc = t if acc is None else acc + t
    y = acc + bhead_ref[...]

    # ---- RevIN 'denorm' ----
    out_ref[...] = y * stdev + mean


def _fused_call(x2d, pp, cfg):
    N, L = x2d.shape
    D, H = cfg.d_model, cfg.n_heads
    dk = D // H
    Q, _, T = pp['w_head'].shape
    n_layers = pp['wqkv'].shape[0]

    args = (x2d, pp['w_main'], pp['w_pad'], pp['w_col'], pp['bias_pos'],
            pp['wqkv'], pp['bqkv'], pp['wo'], pp['bo'],
            pp['bn1w'], pp['bn1b'], pp['w1'], pp['b1'],
            pp['w2'], pp['b2'], pp['bn2w'], pp['bn2b'],
            pp['w_head'], pp['b_head'])

    kernel = functools.partial(_fused_kernel, N=N, L=L, Q=Q, D=D, H=H,
                               dk=dk, n_layers=n_layers)
    return pl.pallas_call(
        kernel,
        out_shape=jax.ShapeDtypeStruct((N, T), jnp.float32),
        in_specs=[_VMEM()] * len(args),
        out_specs=_VMEM(),
        scratch_shapes=[pltpu.VMEM((N, Q, D), jnp.float32)],
    )(*args)


# ---------------------------------------------------------------------------
# parameters (deterministic synthetic init; shapes follow PatchTST_backbone.__init__)
# ---------------------------------------------------------------------------
def init_params(key, cfg):
    D, H, dff, P = cfg.d_model, cfg.n_heads, cfg.d_ff, cfg.patch_len
    dk = D // H
    patch_num = (cfg.seq_len - P) // cfg.stride + 1 + (1 if cfg.padding_patch == 'end' else 0)
    T = cfg.pred_len
    nf = D * patch_num

    def nrm(k, shape, scale=0.02):
        return (scale * jax.random.normal(k, shape)).astype(jnp.float32)

    keys = jax.random.split(key, 8 + cfg.e_layers)
    params = {
        'W_P': nrm(keys[0], (P, D)),
        'b_P': nrm(keys[1], (1, D)),
        # pe='zeros', learn_pe=True  ->  uniform(-0.02, 0.02) init
        'W_pos': (0.04 * jax.random.uniform(keys[2], (patch_num, D)) - 0.02).astype(jnp.float32),
        'W_head': nrm(keys[3], (nf, T)),      # rows ordered (d_model, patch_num) like nn.Flatten(-2)
        'b_head': nrm(keys[4], (1, T)),
        'layers': [],
    }
    for li in range(cfg.e_layers):
        lk = jax.random.split(keys[8 + li], 12)
        params['layers'].append({
            'wq': nrm(lk[0], (D, H * dk)), 'bq': nrm(lk[1], (1, H * dk)),
            'wk': nrm(lk[2], (D, H * dk)), 'bk': nrm(lk[3], (1, H * dk)),
            'wv': nrm(lk[4], (D, H * dk)), 'bv': nrm(lk[5], (1, H * dk)),
            'wo': nrm(lk[6], (H * dk, D)), 'bo': nrm(lk[7], (1, D)),
            'bn1w': jnp.ones((1, D), jnp.float32), 'bn1b': jnp.zeros((1, D), jnp.float32),
            'w1': nrm(lk[8], (D, dff)), 'b1': nrm(lk[9], (1, dff)),
            'w2': nrm(lk[10], (dff, D)), 'b2': nrm(lk[11], (1, D)),
            'bn2w': jnp.ones((1, D), jnp.float32), 'bn2b': jnp.zeros((1, D), jnp.float32),
        })
    return params


def pack_params(params, cfg):
    """Offline weight packing (free at init): expanded patch-embedding weight, merged QKV,
    stacked per-layer weights, head weight permuted to the kernel's (q, d) token layout."""
    L, P, S = cfg.seq_len, cfg.patch_len, cfg.stride
    D, T = cfg.d_model, cfg.pred_len
    pad = S if cfg.padding_patch == 'end' else 0
    Q = (L - P) // S + 1 + (1 if pad else 0)
    Lp = L + pad

    W_P, b_P, W_pos = params['W_P'], params['b_P'], params['W_pos']

    # W_exp[t, q*D+d] = W_P[t - q*S, d] for t in the q-th patch window, else 0.
    W_exp = jnp.zeros((Lp, Q * D), jnp.float32)
    for q in range(Q):
        W_exp = W_exp.at[q * S:q * S + P, q * D:(q + 1) * D].set(W_P)

    layers = params['layers']
    stack = lambda k: jnp.stack([lp[k] for lp in layers])
    packed = {
        'w_main': W_exp[:L],                                          # [L, Q*D]
        'w_pad': jnp.sum(W_exp[L:], axis=0, keepdims=True),           # replication-pad correction
        'w_col': jnp.sum(W_exp, axis=0, keepdims=True),               # mean-subtraction correction
        'bias_pos': (W_pos + b_P).reshape(1, Q * D),                  # b_P tiled per patch + W_pos
        'wqkv': jnp.stack([jnp.concatenate([lp['wq'], lp['wk'], lp['wv']], axis=1) for lp in layers]),
        'bqkv': jnp.stack([jnp.concatenate([lp['bq'], lp['bk'], lp['bv']], axis=1) for lp in layers]),
        'wo': stack('wo'), 'bo': stack('bo'),
        'bn1w': stack('bn1w'), 'bn1b': stack('bn1b'),
        'w1': stack('w1'), 'b1': stack('b1'),
        'w2': stack('w2'), 'b2': stack('b2'),
        'bn2w': stack('bn2w'), 'bn2b': stack('bn2b'),
        # Flatten_Head flattens (d_model, patch_num); permute so the kernel can consume (q, d).
        'w_head': params['W_head'].reshape(D, Q, T).transpose(1, 0, 2),   # [Q, D, T]
        'b_head': params['b_head'],
    }
    return packed


# ---------------------------------------------------------------------------
# full forward: only the Model.forward permutes remain outside the kernel
# ---------------------------------------------------------------------------
def model_forward(x, packed, cfg):
    # Model.forward (decomposition=0): x:[B,L,C] -> permute(0,2,1) -> backbone -> permute -> [B,T,C]
    B, L, C = x.shape
    x2d = jnp.transpose(x, (0, 2, 1)).reshape(B * C, L).astype(jnp.float32)   # channel-independent series
    y = _fused_call(x2d, packed, cfg)                                         # [B*C, pred_len]
    return jnp.transpose(y.reshape(B, C, cfg.pred_len), (0, 2, 1))            # [B, pred_len, C]


# ---------------------------------------------------------------------------
if __name__ == "__main__":
    cfg = SimpleNamespace(
        enc_in=4, seq_len=16, pred_len=8, e_layers=2, n_heads=2,
        d_model=32, d_ff=64, dropout=0.0, fc_dropout=0.0, head_dropout=0.0,
        individual=0, patch_len=4, stride=2, padding_patch='end',
        revin=1, affine=0, subtract_last=0, decomposition=0, kernel_size=25,
    )
    key = jax.random.PRNGKey(0)
    kx, kp = jax.random.split(key)
    x = jax.random.normal(kx, (2, cfg.seq_len, cfg.enc_in), dtype=jnp.float32)

    params = init_params(kp, cfg)
    packed = pack_params(params, cfg)

    @jax.jit
    def run(xb):
        return model_forward(xb, packed, cfg)

    y = jax.block_until_ready(run(x))

    assert y.shape == (2, cfg.pred_len, cfg.enc_in), y.shape
    assert bool(jnp.all(jnp.isfinite(y)))
    print("KERNEL_OK")
</pallas_src>

<mosaic_0001>
module attributes {stable_mosaic.version = 11 : i64} {
  func.func @_fused_kernel(%arg0: memref<8x16xf32, #tpu.memory_space<vmem>>, %arg1: memref<16x256xf32, #tpu.memory_space<vmem>>, %arg2: memref<1x256xf32, #tpu.memory_space<vmem>>, %arg3: memref<1x256xf32, #tpu.memory_space<vmem>>, %arg4: memref<1x256xf32, #tpu.memory_space<vmem>>, %arg5: memref<2x32x96xf32, #tpu.memory_space<vmem>>, %arg6: memref<2x1x96xf32, #tpu.memory_space<vmem>>, %arg7: memref<2x32x32xf32, #tpu.memory_space<vmem>>, %arg8: memref<2x1x32xf32, #tpu.memory_space<vmem>>, %arg9: memref<2x1x32xf32, #tpu.memory_space<vmem>>, %arg10: memref<2x1x32xf32, #tpu.memory_space<vmem>>, %arg11: memref<2x32x64xf32, #tpu.memory_space<vmem>>, %arg12: memref<2x1x64xf32, #tpu.memory_space<vmem>>, %arg13: memref<2x64x32xf32, #tpu.memory_space<vmem>>, %arg14: memref<2x1x32xf32, #tpu.memory_space<vmem>>, %arg15: memref<2x1x32xf32, #tpu.memory_space<vmem>>, %arg16: memref<2x1x32xf32, #tpu.memory_space<vmem>>, %arg17: memref<8x32x8xf32, #tpu.memory_space<vmem>>, %arg18: memref<1x8xf32, #tpu.memory_space<vmem>>, %arg19: memref<8x8xf32, #tpu.memory_space<vmem>>, %arg20: memref<8x8x32xf32, #tpu.memory_space<vmem>>) attributes {dimension_semantics = [], scalar_prefetch = 0 : i64, scratch_operands = 1 : i64, tpu.core_type = #tpu.core_type<tc>} {
    %c0 = arith.constant 0 : index
    %c0_0 = arith.constant 0 : index
    %0 = vector.load %arg0[%c0, %c0_0] : memref<8x16xf32, #tpu.memory_space<vmem>>, vector<8x16xf32>
    %cst = arith.constant dense<0.000000e+00> : vector<8xf32>
    %1 = vector.multi_reduction <add>, %0, %cst [1] : vector<8x16xf32> to vector<8xf32>
    %2 = vector.shape_cast %1 : vector<8xf32> to vector<8x1xf32>
    %cst_1 = arith.constant 1.600000e+01 : f32
    %3 = vector.broadcast %cst_1 : f32 to vector<8x1xf32>
    %4 = arith.divf %2, %3 : vector<8x1xf32>
    %5 = vector.broadcast %4 : vector<8x1xf32> to vector<8x16xf32>
    %6 = arith.subf %0, %5 : vector<8x16xf32>
    %7 = arith.mulf %6, %6 : vector<8x16xf32>
    %cst_2 = arith.constant dense<0.000000e+00> : vector<8xf32>
    %8 = vector.multi_reduction <add>, %7, %cst_2 [1] : vector<8x16xf32> to vector<8xf32>
    %9 = vector.shape_cast %8 : vector<8xf32> to vector<8x1xf32>
    %cst_3 = arith.constant 1.600000e+01 : f32
    %10 = vector.broadcast %cst_3 : f32 to vector<8x1xf32>
    %11 = arith.divf %9, %10 : vector<8x1xf32>
    %cst_4 = arith.constant 9.99999974E-6 : f32
    %12 = vector.broadcast %cst_4 : f32 to vector<8x1xf32>
    %13 = arith.addf %11, %12 : vector<8x1xf32>
    %14 = math.rsqrt %13 : vector<8x1xf32>
    %cst_5 = arith.constant 9.99999974E-6 : f32
    %15 = vector.broadcast %cst_5 : f32 to vector<8x1xf32>
    %16 = arith.addf %11, %15 : vector<8x1xf32>
    %17 = math.sqrt %16 : vector<8x1xf32>
    %18 = vector.extract_strided_slice %0 {offsets = [0, 15], sizes = [8, 1], strides = [1, 1]} : vector<8x16xf32> to vector<8x1xf32>
    %c0_6 = arith.constant 0 : index
    %c0_7 = arith.constant 0 : index
    %19 = vector.load %arg1[%c0_6, %c0_7] : memref<16x256xf32, #tpu.memory_space<vmem>>, vector<16x256xf32>
    %cst_8 = arith.constant dense<0.000000e+00> : vector<8x256xf32>
    %20 = tpu.matmul %0, %19, %cst_8 {dimension_numbers = #tpu.dot_dimension_numbers<[1], [0], [0], [1], [0, 0, 1, 1], [], []>} : vector<8x16xf32>, vector<16x256xf32>, vector<8x256xf32> -> vector<8x256xf32>
    %c0_9 = arith.constant 0 : index
    %c0_10 = arith.constant 0 : index
    %21 = vector.load %arg2[%c0_9, %c0_10] : memref<1x256xf32, #tpu.memory_space<vmem>>, vector<1x256xf32>
    %22 = vector.broadcast %18 : vector<8x1xf32> to vector<8x256xf32>
    %23 = vector.broadcast %21 : vector<1x256xf32> to vector<8x256xf32>
    %24 = arith.mulf %22, %23 : vector<8x256xf32>
    %25 = arith.addf %20, %24 : vector<8x256xf32>
    %c0_11 = arith.constant 0 : index
    %c0_12 = arith.constant 0 : index
    %26 = vector.load %arg3[%c0_11, %c0_12] : memref<1x256xf32, #tpu.memory_space<vmem>>, vector<1x256xf32>
    %27 = vector.broadcast %4 : vector<8x1xf32> to vector<8x256xf32>
    %28 = vector.broadcast %26 : vector<1x256xf32> to vector<8x256xf32>
    %29 = arith.mulf %27, %28 : vector<8x256xf32>
    %30 = arith.subf %25, %29 : vector<8x256xf32>
    %31 = vector.broadcast %14 : vector<8x1xf32> to vector<8x256xf32>
    %32 = arith.mulf %30, %31 : vector<8x256xf32>
    %c0_13 = arith.constant 0 : index
    %c0_14 = arith.constant 0 : index
    %33 = vector.load %arg4[%c0_13, %c0_14] : memref<1x256xf32, #tpu.memory_space<vmem>>, vector<1x256xf32>
    %34 = vector.broadcast %33 : vector<1x256xf32> to vector<8x256xf32>
    %35 = arith.addf %32, %34 : vector<8x256xf32>
    %36 = vector.extract_strided_slice %35 {offsets = [0, 0], sizes = [8, 32], strides = [1, 1]} : vector<8x256xf32> to vector<8x32xf32>
    %c0_15 = arith.constant 0 : index
    %c0_16 = arith.constant 0 : index
    %c0_17 = arith.constant 0 : index
    %37 = vector.load %arg20[%c0_15, %c0_16, %c0_17] : memref<8x8x32xf32, #tpu.memory_space<vmem>>, vector<8x1x32xf32>
    %38 = vector.shape_cast %37 : vector<8x1x32xf32> to vector<8x32xf32>
    %39 = vector.shape_cast %36 : vector<8x32xf32> to vector<8x1x32xf32>
    tpu.vector_store %arg20[%c0_15, %c0_16, %c0_17], %39 {strides = array<i32>} : memref<8x8x32xf32, #tpu.memory_space<vmem>>, vector<8x1x32xf32>,
    %40 = vector.extract_strided_slice %35 {offsets = [0, 32], sizes = [8, 32], strides = [1, 1]} : vector<8x256xf32> to vector<8x32xf32>
    %c0_18 = arith.constant 0 : index
    %c1 = arith.constant 1 : index
    %c0_19 = arith.constant 0 : index
    %41 = vector.load %arg20[%c0_18, %c1, %c0_19] : memref<8x8x32xf32, #tpu.memory_space<vmem>>, vector<8x1x32xf32>
    %42 = vector.shape_cast %41 : vector<8x1x32xf32> to vector<8x32xf32>
    %43 = vector.shape_cast %40 : vector<8x32xf32> to vector<8x1x32xf32>
    tpu.vector_store %arg20[%c0_18, %c1, %c0_19], %43 {strides = array<i32>} : memref<8x8x32xf32, #tpu.memory_space<vmem>>, vector<8x1x32xf32>,
    %44 = vector.extract_strided_slice %35 {offsets = [0, 64], sizes = [8, 32], strides = [1, 1]} : vector<8x256xf32> to vector<8x32xf32>
    %c0_20 = arith.constant 0 : index
    %c2 = arith.constant 2 : index
    %c0_21 = arith.constant 0 : index
    %45 = vector.load %arg20[%c0_20, %c2, %c0_21] : memref<8x8x32xf32, #tpu.memory_space<vmem>>, vector<8x1x32xf32>
    %46 = vector.shape_cast %45 : vector<8x1x32xf32> to vector<8x32xf32>
    %47 = vector.shape_cast %44 : vector<8x32xf32> to vector<8x1x32xf32>
    tpu.vector_store %arg20[%c0_20, %c2, %c0_21], %47 {strides = array<i32>} : memref<8x8x32xf32, #tpu.memory_space<vmem>>, vector<8x1x32xf32>,
    %48 = vector.extract_strided_slice %35 {offsets = [0, 96], sizes = [8, 32], strides = [1, 1]} : vector<8x256xf32> to vector<8x32xf32>
    %c0_22 = arith.constant 0 : index
    %c3 = arith.constant 3 : index
    %c0_23 = arith.constant 0 : index
    %49 = vector.load %arg20[%c0_22, %c3, %c0_23] : memref<8x8x32xf32, #tpu.memory_space<vmem>>, vector<8x1x32xf32>
    %50 = vector.shape_cast %49 : vector<8x1x32xf32> to vector<8x32xf32>
    %51 = vector.shape_cast %48 : vector<8x32xf32> to vector<8x1x32xf32>
    tpu.vector_store %arg20[%c0_22, %c3, %c0_23], %51 {strides = array<i32>} : memref<8x8x32xf32, #tpu.memory_space<vmem>>, vector<8x1x32xf32>,
    %52 = vector.extract_strided_slice %35 {offsets = [0, 128], sizes = [8, 32], strides = [1, 1]} : vector<8x256xf32> to vector<8x32xf32>
    %c0_24 = arith.constant 0 : index
    %c4 = arith.constant 4 : index
    %c0_25 = arith.constant 0 : index
    %53 = vector.load %arg20[%c0_24, %c4, %c0_25] : memref<8x8x32xf32, #tpu.memory_space<vmem>>, vector<8x1x32xf32>
    %54 = vector.shape_cast %53 : vector<8x1x32xf32> to vector<8x32xf32>
    %55 = vector.shape_cast %52 : vector<8x32xf32> to vector<8x1x32xf32>
    tpu.vector_store %arg20[%c0_24, %c4, %c0_25], %55 {strides = array<i32>} : memref<8x8x32xf32, #tpu.memory_space<vmem>>, vector<8x1x32xf32>,
    %56 = vector.extract_strided_slice %35 {offsets = [0, 160], sizes = [8, 32], strides = [1, 1]} : vector<8x256xf32> to vector<8x32xf32>
    %c0_26 = arith.constant 0 : index
    %c5 = arith.constant 5 : index
    %c0_27 = arith.constant 0 : index
    %57 = vector.load %arg20[%c0_26, %c5, %c0_27] : memref<8x8x32xf32, #tpu.memory_space<vmem>>, vector<8x1x32xf32>
    %58 = vector.shape_cast %57 : vector<8x1x32xf32> to vector<8x32xf32>
    %59 = vector.shape_cast %56 : vector<8x32xf32> to vector<8x1x32xf32>
    tpu.vector_store %arg20[%c0_26, %c5, %c0_27], %59 {strides = array<i32>} : memref<8x8x32xf32, #tpu.memory_space<vmem>>, vector<8x1x32xf32>,
    %60 = vector.extract_strided_slice %35 {offsets = [0, 192], sizes = [8, 32], strides = [1, 1]} : vector<8x256xf32> to vector<8x32xf32>
    %c0_28 = arith.constant 0 : index
    %c6 = arith.constant 6 : index
    %c0_29 = arith.constant 0 : index
    %61 = vector.load %arg20[%c0_28, %c6, %c0_29] : memref<8x8x32xf32, #tpu.memory_space<vmem>>, vector<8x1x32xf32>
    %62 = vector.shape_cast %61 : vector<8x1x32xf32> to vector<8x32xf32>
    %63 = vector.shape_cast %60 : vector<8x32xf32> to vector<8x1x32xf32>
    tpu.vector_store %arg20[%c0_28, %c6, %c0_29], %63 {strides = array<i32>} : memref<8x8x32xf32, #tpu.memory_space<vmem>>, vector<8x1x32xf32>,
    %64 = vector.extract_strided_slice %35 {offsets = [0, 224], sizes = [8, 32], strides = [1, 1]} : vector<8x256xf32> to vector<8x32xf32>
    %c0_30 = arith.constant 0 : index
    %c7 = arith.constant 7 : index
    %c0_31 = arith.constant 0 : index
    %65 = vector.load %arg20[%c0_30, %c7, %c0_31] : memref<8x8x32xf32, #tpu.memory_space<vmem>>, vector<8x1x32xf32>
    %66 = vector.shape_cast %65 : vector<8x1x32xf32> to vector<8x32xf32>
    %67 = vector.shape_cast %64 : vector<8x32xf32> to vector<8x1x32xf32>
    tpu.vector_store %arg20[%c0_30, %c7, %c0_31], %67 {strides = array<i32>} : memref<8x8x32xf32, #tpu.memory_space<vmem>>, vector<8x1x32xf32>,
    %c0_32 = arith.constant 0 : index
    %c0_33 = arith.constant 0 : index
    %c0_34 = arith.constant 0 : index
    %68 = vector.load %arg20[%c0_32, %c0_33, %c0_34] : memref<8x8x32xf32, #tpu.memory_space<vmem>>, vector<8x8x32xf32>
    %69 = vector.shape_cast %68 : vector<8x8x32xf32> to vector<64x32xf32>
    %c0_35 = arith.constant 0 : index
    %c0_36 = arith.constant 0 : index
    %c0_37 = arith.constant 0 : index
    %70 = vector.load %arg5[%c0_35, %c0_36, %c0_37] : memref<2x32x96xf32, #tpu.memory_space<vmem>>, vector<1x32x96xf32>
    %71 = vector.shape_cast %70 : vector<1x32x96xf32> to vector<32x96xf32>
    %c0_38 = arith.constant 0 : index
    %c0_39 = arith.constant 0 : index
    %c0_40 = arith.constant 0 : index
    %72 = vector.load %arg7[%c0_38, %c0_39, %c0_40] : memref<2x32x32xf32, #tpu.memory_space<vmem>>, vector<1x32x32xf32>
    %73 = vector.shape_cast %72 : vector<1x32x32xf32> to vector<32x32xf32>
    %cst_41 = arith.constant dense<0.000000e+00> : vector<64x96xf32>
    %74 = tpu.matmul %69, %71, %cst_41 {dimension_numbers = #tpu.dot_dimension_numbers<[1], [0], [0], [1], [0, 0, 1, 1], [], []>} : vector<64x32xf32>, vector<32x96xf32>, vector<64x96xf32> -> vector<64x96xf32>
    %c0_42 = arith.constant 0 : index
    %c0_43 = arith.constant 0 : index
    %c0_44 = arith.constant 0 : index
    %75 = vector.load %arg6[%c0_42, %c0_43, %c0_44] : memref<2x1x96xf32, #tpu.memory_space<vmem>>, vector<1x1x96xf32>
    %76 = vector.shape_cast %75 : vector<1x1x96xf32> to vector<1x96xf32>
    %77 = vector.broadcast %76 : vector<1x96xf32> to vector<64x96xf32>
    %78 = arith.addf %74, %77 : vector<64x96xf32>
    %79 = vector.extract_strided_slice %78 {offsets = [0, 0], sizes = [64, 16], strides = [1, 1]} : vector<64x96xf32> to vector<64x16xf32>
    %80 = vector.shape_cast %79 : vector<64x16xf32> to vector<8x8x16xf32>
    %81 = vector.extract_strided_slice %78 {offsets = [0, 32], sizes = [64, 16], strides = [1, 1]} : vector<64x96xf32> to vector<64x16xf32>
    %82 = vector.shape_cast %81 : vector<64x16xf32> to vector<8x8x16xf32>
    %83 = vector.extract_strided_slice %78 {offsets = [0, 64], sizes = [64, 16], strides = [1, 1]} : vector<64x96xf32> to vector<64x16xf32>
    %84 = vector.shape_cast %83 : vector<64x16xf32> to vector<8x8x16xf32>
    %cst_45 = arith.constant dense<0.000000e+00> : vector<8x8x8xf32>
    %85 = tpu.matmul %80, %82, %cst_45 {dimension_numbers = #tpu.dot_dimension_numbers<[2], [2], [1], [1], [0, 0, 0, 1, 1, 1], [0], [0]>} : vector<8x8x16xf32>, vector<8x8x16xf32>, vector<8x8x8xf32> -> vector<8x8x8xf32>
    %cst_46 = arith.constant 2.500000e-01 : f32
    %86 = vector.broadcast %cst_46 : f32 to vector<8x8x8xf32>
    %87 = arith.mulf %85, %86 : vector<8x8x8xf32>
    %cst_47 = arith.constant dense<0xFF800000> : vector<8x8xf32>
    %88 = vector.multi_reduction <maximumf>, %87, %cst_47 [2] : vector<8x8x8xf32> to vector<8x8xf32>
    %89 = vector.shape_cast %88 : vector<8x8xf32> to vector<8x8x1xf32>
    %90 = vector.broadcast %89 : vector<8x8x1xf32> to vector<8x8x8xf32>
    %91 = arith.subf %87, %90 : vector<8x8x8xf32>
    %92 = math.exp %91 : vector<8x8x8xf32>
    %cst_48 = arith.constant dense<0.000000e+00> : vector<8x8xf32>
    %93 = vector.multi_reduction <add>, %92, %cst_48 [2] : vector<8x8x8xf32> to vector<8x8xf32>
    %94 = vector.shape_cast %93 : vector<8x8xf32> to vector<8x8x1xf32>
    %cst_49 = arith.constant 1.000000e+00 : f32
    %95 = vector.broadcast %cst_49 : f32 to vector<8x8x1xf32>
    %96 = arith.divf %95, %94 : vector<8x8x1xf32>
    %97 = vector.broadcast %96 : vector<8x8x1xf32> to vector<8x8x8xf32>
    %98 = arith.mulf %92, %97 : vector<8x8x8xf32>
    %cst_50 = arith.constant dense<0.000000e+00> : vector<8x8x16xf32>
    %99 = tpu.matmul %98, %84, %cst_50 {dimension_numbers = #tpu.dot_dimension_numbers<[2], [1], [1], [2], [0, 0, 0, 1, 1, 2], [0], [0]>} : vector<8x8x8xf32>, vector<8x8x16xf32>, vector<8x8x16xf32> -> vector<8x8x16xf32>
    %100 = vector.shape_cast %99 : vector<8x8x16xf32> to vector<64x16xf32>
    %101 = vector.extract_strided_slice %73 {offsets = [0, 0], sizes = [16, 32], strides = [1, 1]} : vector<32x32xf32> to vector<16x32xf32>
    %cst_51 = arith.constant dense<0.000000e+00> : vector<64x32xf32>
    %102 = tpu.matmul %100, %101, %cst_51 {dimension_numbers = #tpu.dot_dimension_numbers<[1], [0], [0], [1], [0, 0, 1, 1], [], []>} : vector<64x16xf32>, vector<16x32xf32>, vector<64x32xf32> -> vector<64x32xf32>
    %103 = vector.extract_strided_slice %78 {offsets = [0, 16], sizes = [64, 16], strides = [1, 1]} : vector<64x96xf32> to vector<64x16xf32>
    %104 = vector.shape_cast %103 : vector<64x16xf32> to vector<8x8x16xf32>
    %105 = vector.extract_strided_slice %78 {offsets = [0, 48], sizes = [64, 16], strides = [1, 1]} : vector<64x96xf32> to vector<64x16xf32>
    %106 = vector.shape_cast %105 : vector<64x16xf32> to vector<8x8x16xf32>
    %107 = vector.extract_strided_slice %78 {offsets = [0, 80], sizes = [64, 16], strides = [1, 1]} : vector<64x96xf32> to vector<64x16xf32>
    %108 = vector.shape_cast %107 : vector<64x16xf32> to vector<8x8x16xf32>
    %cst_52 = arith.constant dense<0.000000e+00> : vector<8x8x8xf32>
    %109 = tpu.matmul %104, %106, %cst_52 {dimension_numbers = #tpu.dot_dimension_numbers<[2], [2], [1], [1], [0, 0, 0, 1, 1, 1], [0], [0]>} : vector<8x8x16xf32>, vector<8x8x16xf32>, vector<8x8x8xf32> -> vector<8x8x8xf32>
    %cst_53 = arith.constant 2.500000e-01 : f32
    %110 = vector.broadcast %cst_53 : f32 to vector<8x8x8xf32>
    %111 = arith.mulf %109, %110 : vector<8x8x8xf32>
    %cst_54 = arith.constant dense<0xFF800000> : vector<8x8xf32>
    %112 = vector.multi_reduction <maximumf>, %111, %cst_54 [2] : vector<8x8x8xf32> to vector<8x8xf32>
    %113 = vector.shape_cast %112 : vector<8x8xf32> to vector<8x8x1xf32>
    %114 = vector.broadcast %113 : vector<8x8x1xf32> to vector<8x8x8xf32>
    %115 = arith.subf %111, %114 : vector<8x8x8xf32>
    %116 = math.exp %115 : vector<8x8x8xf32>
    %cst_55 = arith.constant dense<0.000000e+00> : vector<8x8xf32>
    %117 = vector.multi_reduction <add>, %116, %cst_55 [2] : vector<8x8x8xf32> to vector<8x8xf32>
    %118 = vector.shape_cast %117 : vector<8x8xf32> to vector<8x8x1xf32>
    %cst_56 = arith.constant 1.000000e+00 : f32
    %119 = vector.broadcast %cst_56 : f32 to vector<8x8x1xf32>
    %120 = arith.divf %119, %118 : vector<8x8x1xf32>
    %121 = vector.broadcast %120 : vector<8x8x1xf32> to vector<8x8x8xf32>
    %122 = arith.mulf %116, %121 : vector<8x8x8xf32>
    %cst_57 = arith.constant dense<0.000000e+00> : vector<8x8x16xf32>
    %123 = tpu.matmul %122, %108, %cst_57 {dimension_numbers = #tpu.dot_dimension_numbers<[2], [1], [1], [2], [0, 0, 0, 1, 1, 2], [0], [0]>} : vector<8x8x8xf32>, vector<8x8x16xf32>, vector<8x8x16xf32> -> vector<8x8x16xf32>
    %124 = vector.shape_cast %123 : vector<8x8x16xf32> to vector<64x16xf32>
    %125 = vector.extract_strided_slice %73 {offsets = [16, 0], sizes = [16, 32], strides = [1, 1]} : vector<32x32xf32> to vector<16x32xf32>
    %cst_58 = arith.constant dense<0.000000e+00> : vector<64x32xf32>
    %126 = tpu.matmul %124, %125, %cst_58 {dimension_numbers = #tpu.dot_dimension_numbers<[1], [0], [0], [1], [0, 0, 1, 1], [], []>} : vector<64x16xf32>, vector<16x32xf32>, vector<64x32xf32> -> vector<64x32xf32>
    %127 = arith.addf %102, %126 : vector<64x32xf32>
    %128 = arith.addf %69, %127 : vector<64x32xf32>
    %c0_59 = arith.constant 0 : index
    %c0_60 = arith.constant 0 : index
    %c0_61 = arith.constant 0 : index
    %129 = vector.load %arg8[%c0_59, %c0_60, %c0_61] : memref<2x1x32xf32, #tpu.memory_space<vmem>>, vector<1x1x32xf32>
    %130 = vector.shape_cast %129 : vector<1x1x32xf32> to vector<1x32xf32>
    %131 = vector.broadcast %130 : vector<1x32xf32> to vector<64x32xf32>
    %132 = arith.addf %128, %131 : vector<64x32xf32>
    %cst_62 = arith.constant dense<0.000000e+00> : vector<32xf32>
    %133 = vector.multi_reduction <add>, %132, %cst_62 [0] : vector<64x32xf32> to vector<32xf32>
    %134 = vector.shape_cast %133 : vector<32xf32> to vector<1x32xf32>
    %cst_63 = arith.constant 6.400000e+01 : f32
    %135 = vector.broadcast %cst_63 : f32 to vector<1x32xf32>
    %136 = arith.divf %134, %135 : vector<1x32xf32>
    %137 = vector.broadcast %136 : vector<1x32xf32> to vector<64x32xf32>
    %138 = arith.subf %132, %137 : vector<64x32xf32>
    %139 = arith.mulf %138, %138 : vector<64x32xf32>
    %cst_64 = arith.constant dense<0.000000e+00> : vector<32xf32>
    %140 = vector.multi_reduction <add>, %139, %cst_64 [0] : vector<64x32xf32> to vector<32xf32>
    %141 = vector.shape_cast %140 : vector<32xf32> to vector<1x32xf32>
    %cst_65 = arith.constant 6.400000e+01 : f32
    %142 = vector.broadcast %cst_65 : f32 to vector<1x32xf32>
    %143 = arith.divf %141, %142 : vector<1x32xf32>
    %cst_66 = arith.constant 9.99999974E-6 : f32
    %144 = vector.broadcast %cst_66 : f32 to vector<1x32xf32>
    %145 = arith.addf %143, %144 : vector<1x32xf32>
    %146 = math.rsqrt %145 : vector<1x32xf32>
    %147 = vector.broadcast %146 : vector<1x32xf32> to vector<64x32xf32>
    %148 = arith.mulf %138, %147 : vector<64x32xf32>
    %c0_67 = arith.constant 0 : index
    %c0_68 = arith.constant 0 : index
    %c0_69 = arith.constant 0 : index
    %149 = vector.load %arg9[%c0_67, %c0_68, %c0_69] : memref<2x1x32xf32, #tpu.memory_space<vmem>>, vector<1x1x32xf32>
    %150 = vector.shape_cast %149 : vector<1x1x32xf32> to vector<1x32xf32>
    %151 = vector.broadcast %150 : vector<1x32xf32> to vector<64x32xf32>
    %152 = arith.mulf %148, %151 : vector<64x32xf32>
    %c0_70 = arith.constant 0 : index
    %c0_71 = arith.constant 0 : index
    %c0_72 = arith.constant 0 : index
    %153 = vector.load %arg10[%c0_70, %c0_71, %c0_72] : memref<2x1x32xf32, #tpu.memory_space<vmem>>, vector<1x1x32xf32>
    %154 = vector.shape_cast %153 : vector<1x1x32xf32> to vector<1x32xf32>
    %155 = vector.broadcast %154 : vector<1x32xf32> to vector<64x32xf32>
    %156 = arith.addf %152, %155 : vector<64x32xf32>
    %c0_73 = arith.constant 0 : index
    %c0_74 = arith.constant 0 : index
    %c0_75 = arith.constant 0 : index
    %157 = vector.load %arg11[%c0_73, %c0_74, %c0_75] : memref<2x32x64xf32, #tpu.memory_space<vmem>>, vector<1x32x64xf32>
    %158 = vector.shape_cast %157 : vector<1x32x64xf32> to vector<32x64xf32>
    %cst_76 = arith.constant dense<0.000000e+00> : vector<64x64xf32>
    %159 = tpu.matmul %156, %158, %cst_76 {dimension_numbers = #tpu.dot_dimension_numbers<[1], [0], [0], [1], [0, 0, 1, 1], [], []>} : vector<64x32xf32>, vector<32x64xf32>, vector<64x64xf32> -> vector<64x64xf32>
    %c0_77 = arith.constant 0 : index
    %c0_78 = arith.constant 0 : index
    %c0_79 = arith.constant 0 : index
    %160 = vector.load %arg12[%c0_77, %c0_78, %c0_79] : memref<2x1x64xf32, #tpu.memory_space<vmem>>, vector<1x1x64xf32>
    %161 = vector.shape_cast %160 : vector<1x1x64xf32> to vector<1x64xf32>
    %162 = vector.broadcast %161 : vector<1x64xf32> to vector<64x64xf32>
    %163 = arith.addf %159, %162 : vector<64x64xf32>
    %cst_80 = arith.constant 5.000000e-01 : f32
    %164 = vector.broadcast %cst_80 : f32 to vector<64x64xf32>
    %165 = arith.mulf %164, %163 : vector<64x64xf32>
    %cst_81 = arith.constant 0.707106769 : f32
    %166 = vector.broadcast %cst_81 : f32 to vector<64x64xf32>
    %167 = arith.mulf %163, %166 : vector<64x64xf32>
    %cst_82 = arith.constant 0.000000e+00 : f32
    %168 = vector.broadcast %cst_82 : f32 to vector<64x64xf32>
    %169 = arith.cmpf oge, %167, %168 : vector<64x64xf32>
    %cst_83 = arith.constant 1.000000e+00 : f32
    %cst_84 = arith.constant -1.000000e+00 : f32
    %170 = vector.broadcast %cst_83 : f32 to vector<64x64xf32>
    %171 = vector.broadcast %cst_84 : f32 to vector<64x64xf32>
    %172 = arith.select %169, %170, %171 : vector<64x64xi1>, vector<64x64xf32>
    %173 = math.absf %167 : vector<64x64xf32>
    %cst_85 = arith.constant 0.327591091 : f32
    %174 = vector.broadcast %cst_85 : f32 to vector<64x64xf32>
    %175 = arith.mulf %174, %173 : vector<64x64xf32>
    %cst_86 = arith.constant 1.000000e+00 : f32
    %176 = vector.broadcast %cst_86 : f32 to vector<64x64xf32>
    %177 = arith.addf %176, %175 : vector<64x64xf32>
    %cst_87 = arith.constant 1.000000e+00 : f32
    %178 = vector.broadcast %cst_87 : f32 to vector<64x64xf32>
    %179 = arith.divf %178, %177 : vector<64x64xf32>
    %cst_88 = arith.constant 1.06140542 : f32
    %180 = vector.broadcast %cst_88 : f32 to vector<64x64xf32>
    %181 = arith.mulf %179, %180 : vector<64x64xf32>
    %cst_89 = arith.constant -1.45315206 : f32
    %182 = vector.broadcast %cst_89 : f32 to vector<64x64xf32>
    %183 = arith.addf %182, %181 : vector<64x64xf32>
    %184 = arith.mulf %179, %183 : vector<64x64xf32>
    %cst_90 = arith.constant 1.42141378 : f32
    %185 = vector.broadcast %cst_90 : f32 to vector<64x64xf32>
    %186 = arith.addf %185, %184 : vector<64x64xf32>
    %187 = arith.mulf %179, %186 : vector<64x64xf32>
    %cst_91 = arith.constant -0.284496725 : f32
    %188 = vector.broadcast %cst_91 : f32 to vector<64x64xf32>
    %189 = arith.addf %188, %187 : vector<64x64xf32>
    %190 = arith.mulf %179, %189 : vector<64x64xf32>
    %cst_92 = arith.constant 0.254829586 : f32
    %191 = vector.broadcast %cst_92 : f32 to vector<64x64xf32>
    %192 = arith.addf %191, %190 : vector<64x64xf32>
    %193 = arith.mulf %179, %192 : vector<64x64xf32>
    %cst_93 = arith.constant 0.000000e+00 : f32
    %194 = vector.broadcast %cst_93 : f32 to vector<64x64xf32>
    %195 = arith.subf %194, %173 : vector<64x64xf32>
    %196 = arith.mulf %195, %173 : vector<64x64xf32>
    %197 = math.exp %196 : vector<64x64xf32>
    %198 = arith.mulf %193, %197 : vector<64x64xf32>
    %cst_94 = arith.constant 1.000000e+00 : f32
    %199 = vector.broadcast %cst_94 : f32 to vector<64x64xf32>
    %200 = arith.subf %199, %198 : vector<64x64xf32>
    %201 = arith.mulf %172, %200 : vector<64x64xf32>
    %cst_95 = arith.constant 1.000000e+00 : f32
    %202 = vector.broadcast %cst_95 : f32 to vector<64x64xf32>
    %203 = arith.addf %202, %201 : vector<64x64xf32>
    %204 = arith.mulf %165, %203 : vector<64x64xf32>
    %c0_96 = arith.constant 0 : index
    %c0_97 = arith.constant 0 : index
    %c0_98 = arith.constant 0 : index
    %205 = vector.load %arg13[%c0_96, %c0_97, %c0_98] : memref<2x64x32xf32, #tpu.memory_space<vmem>>, vector<1x64x32xf32>
    %206 = vector.shape_cast %205 : vector<1x64x32xf32> to vector<64x32xf32>
    %cst_99 = arith.constant dense<0.000000e+00> : vector<64x32xf32>
    %207 = tpu.matmul %204, %206, %cst_99 {dimension_numbers = #tpu.dot_dimension_numbers<[1], [0], [0], [1], [0, 0, 1, 1], [], []>} : vector<64x64xf32>, vector<64x32xf32>, vector<64x32xf32> -> vector<64x32xf32>
    %208 = arith.addf %156, %207 : vector<64x32xf32>
    %c0_100 = arith.constant 0 : index
    %c0_101 = arith.constant 0 : index
    %c0_102 = arith.constant 0 : index
    %209 = vector.load %arg14[%c0_100, %c0_101, %c0_102] : memref<2x1x32xf32, #tpu.memory_space<vmem>>, vector<1x1x32xf32>
    %210 = vector.shape_cast %209 : vector<1x1x32xf32> to vector<1x32xf32>
    %211 = vector.broadcast %210 : vector<1x32xf32> to vector<64x32xf32>
    %212 = arith.addf %208, %211 : vector<64x32xf32>
    %cst_103 = arith.constant dense<0.000000e+00> : vector<32xf32>
    %213 = vector.multi_reduction <add>, %212, %cst_103 [0] : vector<64x32xf32> to vector<32xf32>
    %214 = vector.shape_cast %213 : vector<32xf32> to vector<1x32xf32>
    %cst_104 = arith.constant 6.400000e+01 : f32
    %215 = vector.broadcast %cst_104 : f32 to vector<1x32xf32>
    %216 = arith.divf %214, %215 : vector<1x32xf32>
    %217 = vector.broadcast %216 : vector<1x32xf32> to vector<64x32xf32>
    %218 = arith.subf %212, %217 : vector<64x32xf32>
    %219 = arith.mulf %218, %218 : vector<64x32xf32>
    %cst_105 = arith.constant dense<0.000000e+00> : vector<32xf32>
    %220 = vector.multi_reduction <add>, %219, %cst_105 [0] : vector<64x32xf32> to vector<32xf32>
    %221 = vector.shape_cast %220 : vector<32xf32> to vector<1x32xf32>
    %cst_106 = arith.constant 6.400000e+01 : f32
    %222 = vector.broadcast %cst_106 : f32 to vector<1x32xf32>
    %223 = arith.divf %221, %222 : vector<1x32xf32>
    %cst_107 = arith.constant 9.99999974E-6 : f32
    %224 = vector.broadcast %cst_107 : f32 to vector<1x32xf32>
    %225 = arith.addf %223, %224 : vector<1x32xf32>
    %226 = math.rsqrt %225 : vector<1x32xf32>
    %227 = vector.broadcast %226 : vector<1x32xf32> to vector<64x32xf32>
    %228 = arith.mulf %218, %227 : vector<64x32xf32>
    %c0_108 = arith.constant 0 : index
    %c0_109 = arith.constant 0 : index
    %c0_110 = arith.constant 0 : index
    %229 = vector.load %arg15[%c0_108, %c0_109, %c0_110] : memref<2x1x32xf32, #tpu.memory_space<vmem>>, vector<1x1x32xf32>
    %230 = vector.shape_cast %229 : vector<1x1x32xf32> to vector<1x32xf32>
    %231 = vector.broadcast %230 : vector<1x32xf32> to vector<64x32xf32>
    %232 = arith.mulf %228, %231 : vector<64x32xf32>
    %c0_111 = arith.constant 0 : index
    %c0_112 = arith.constant 0 : index
    %c0_113 = arith.constant 0 : index
    %233 = vector.load %arg16[%c0_111, %c0_112, %c0_113] : memref<2x1x32xf32, #tpu.memory_space<vmem>>, vector<1x1x32xf32>
    %234 = vector.shape_cast %233 : vector<1x1x32xf32> to vector<1x32xf32>
    %235 = vector.broadcast %234 : vector<1x32xf32> to vector<64x32xf32>
    %236 = arith.addf %232, %235 : vector<64x32xf32>
    %c1_114 = arith.constant 1 : index
    %c0_115 = arith.constant 0 : index
    %c0_116 = arith.constant 0 : index
    %237 = vector.load %arg5[%c1_114, %c0_115, %c0_116] : memref<2x32x96xf32, #tpu.memory_space<vmem>>, vector<1x32x96xf32>
    %238 = vector.shape_cast %237 : vector<1x32x96xf32> to vector<32x96xf32>
    %c1_117 = arith.constant 1 : index
    %c0_118 = arith.constant 0 : index
    %c0_119 = arith.constant 0 : index
    %239 = vector.load %arg7[%c1_117, %c0_118, %c0_119] : memref<2x32x32xf32, #tpu.memory_space<vmem>>, vector<1x32x32xf32>
    %240 = vector.shape_cast %239 : vector<1x32x32xf32> to vector<32x32xf32>
    %cst_120 = arith.constant dense<0.000000e+00> : vector<64x96xf32>
    %241 = tpu.matmul %236, %238, %cst_120 {dimension_numbers = #tpu.dot_dimension_numbers<[1], [0], [0], [1], [0, 0, 1, 1], [], []>} : vector<64x32xf32>, vector<32x96xf32>, vector<64x96xf32> -> vector<64x96xf32>
    %c1_121 = arith.constant 1 : index
    %c0_122 = arith.constant 0 : index
    %c0_123 = arith.constant 0 : index
    %242 = vector.load %arg6[%c1_121, %c0_122, %c0_123] : memref<2x1x96xf32, #tpu.memory_space<vmem>>, vector<1x1x96xf32>
    %243 = vector.shape_cast %242 : vector<1x1x96xf32> to vector<1x96xf32>
    %244 = vector.broadcast %243 : vector<1x96xf32> to vector<64x96xf32>
    %245 = arith.addf %241, %244 : vector<64x96xf32>
    %246 = vector.extract_strided_slice %245 {offsets = [0, 0], sizes = [64, 16], strides = [1, 1]} : vector<64x96xf32> to vector<64x16xf32>
    %247 = vector.shape_cast %246 : vector<64x16xf32> to vector<8x8x16xf32>
    %248 = vector.extract_strided_slice %245 {offsets = [0, 32], sizes = [64, 16], strides = [1, 1]} : vector<64x96xf32> to vector<64x16xf32>
    %249 = vector.shape_cast %248 : vector<64x16xf32> to vector<8x8x16xf32>
    %250 = vector.extract_strided_slice %245 {offsets = [0, 64], sizes = [64, 16], strides = [1, 1]} : vector<64x96xf32> to vector<64x16xf32>
    %251 = vector.shape_cast %250 : vector<64x16xf32> to vector<8x8x16xf32>
    %cst_124 = arith.constant dense<0.000000e+00> : vector<8x8x8xf32>
    %252 = tpu.matmul %247, %249, %cst_124 {dimension_numbers = #tpu.dot_dimension_numbers<[2], [2], [1], [1], [0, 0, 0, 1, 1, 1], [0], [0]>} : vector<8x8x16xf32>, vector<8x8x16xf32>, vector<8x8x8xf32> -> vector<8x8x8xf32>
    %cst_125 = arith.constant 2.500000e-01 : f32
    %253 = vector.broadcast %cst_125 : f32 to vector<8x8x8xf32>
    %254 = arith.mulf %252, %253 : vector<8x8x8xf32>
    %255 = arith.addf %254, %87 : vector<8x8x8xf32>
    %cst_126 = arith.constant dense<0xFF800000> : vector<8x8xf32>
    %256 = vector.multi_reduction <maximumf>, %255, %cst_126 [2] : vector<8x8x8xf32> to vector<8x8xf32>
    %257 = vector.shape_cast %256 : vector<8x8xf32> to vector<8x8x1xf32>
    %258 = vector.broadcast %257 : vector<8x8x1xf32> to vector<8x8x8xf32>
    %259 = arith.subf %255, %258 : vector<8x8x8xf32>
    %260 = math.exp %259 : vector<8x8x8xf32>
    %cst_127 = arith.constant dense<0.000000e+00> : vector<8x8xf32>
    %261 = vector.multi_reduction <add>, %260, %cst_127 [2] : vector<8x8x8xf32> to vector<8x8xf32>
    %262 = vector.shape_cast %261 : vector<8x8xf32> to vector<8x8x1xf32>
    %cst_128 = arith.constant 1.000000e+00 : f32
    %263 = vector.broadcast %cst_128 : f32 to vector<8x8x1xf32>
    %264 = arith.divf %263, %262 : vector<8x8x1xf32>
    %265 = vector.broadcast %264 : vector<8x8x1xf32> to vector<8x8x8xf32>
    %266 = arith.mulf %260, %265 : vector<8x8x8xf32>
    %cst_129 = arith.constant dense<0.000000e+00> : vector<8x8x16xf32>
    %267 = tpu.matmul %266, %251, %cst_129 {dimension_numbers = #tpu.dot_dimension_numbers<[2], [1], [1], [2], [0, 0, 0, 1, 1, 2], [0], [0]>} : vector<8x8x8xf32>, vector<8x8x16xf32>, vector<8x8x16xf32> -> vector<8x8x16xf32>
    %268 = vector.shape_cast %267 : vector<8x8x16xf32> to vector<64x16xf32>
    %269 = vector.extract_strided_slice %240 {offsets = [0, 0], sizes = [16, 32], strides = [1, 1]} : vector<32x32xf32> to vector<16x32xf32>
    %cst_130 = arith.constant dense<0.000000e+00> : vector<64x32xf32>
    %270 = tpu.matmul %268, %269, %cst_130 {dimension_numbers = #tpu.dot_dimension_numbers<[1], [0], [0], [1], [0, 0, 1, 1], [], []>} : vector<64x16xf32>, vector<16x32xf32>, vector<64x32xf32> -> vector<64x32xf32>
    %271 = vector.extract_strided_slice %245 {offsets = [0, 16], sizes = [64, 16], strides = [1, 1]} : vector<64x96xf32> to vector<64x16xf32>
    %272 = vector.shape_cast %271 : vector<64x16xf32> to vector<8x8x16xf32>
    %273 = vector.extract_strided_slice %245 {offsets = [0, 48], sizes = [64, 16], strides = [1, 1]} : vector<64x96xf32> to vector<64x16xf32>
    %274 = vector.shape_cast %273 : vector<64x16xf32> to vector<8x8x16xf32>
    %275 = vector.extract_strided_slice %245 {offsets = [0, 80], sizes = [64, 16], strides = [1, 1]} : vector<64x96xf32> to vector<64x16xf32>
    %276 = vector.shape_cast %275 : vector<64x16xf32> to vector<8x8x16xf32>
    %cst_131 = arith.constant dense<0.000000e+00> : vector<8x8x8xf32>
    %277 = tpu.matmul %272, %274, %cst_131 {dimension_numbers = #tpu.dot_dimension_numbers<[2], [2], [1], [1], [0, 0, 0, 1, 1, 1], [0], [0]>} : vector<8x8x16xf32>, vector<8x8x16xf32>, vector<8x8x8xf32> -> vector<8x8x8xf32>
    %cst_132 = arith.constant 2.500000e-01 : f32
    %278 = vector.broadcast %cst_132 : f32 to vector<8x8x8xf32>
    %279 = arith.mulf %277, %278 : vector<8x8x8xf32>
    %280 = arith.addf %279, %111 : vector<8x8x8xf32>
    %cst_133 = arith.constant dense<0xFF800000> : vector<8x8xf32>
    %281 = vector.multi_reduction <maximumf>, %280, %cst_133 [2] : vector<8x8x8xf32> to vector<8x8xf32>
    %282 = vector.shape_cast %281 : vector<8x8xf32> to vector<8x8x1xf32>
    %283 = vector.broadcast %282 : vector<8x8x1xf32> to vector<8x8x8xf32>
    %284 = arith.subf %280, %283 : vector<8x8x8xf32>
    %285 = math.exp %284 : vector<8x8x8xf32>
    %cst_134 = arith.constant dense<0.000000e+00> : vector<8x8xf32>
    %286 = vector.multi_reduction <add>, %285, %cst_134 [2] : vector<8x8x8xf32> to vector<8x8xf32>
    %287 = vector.shape_cast %286 : vector<8x8xf32> to vector<8x8x1xf32>
    %cst_135 = arith.constant 1.000000e+00 : f32
    %288 = vector.broadcast %cst_135 : f32 to vector<8x8x1xf32>
    %289 = arith.divf %288, %287 : vector<8x8x1xf32>
    %290 = vector.broadcast %289 : vector<8x8x1xf32> to vector<8x8x8xf32>
    %291 = arith.mulf %285, %290 : vector<8x8x8xf32>
    %cst_136 = arith.constant dense<0.000000e+00> : vector<8x8x16xf32>
    %292 = tpu.matmul %291, %276, %cst_136 {dimension_numbers = #tpu.dot_dimension_numbers<[2], [1], [1], [2], [0, 0, 0, 1, 1, 2], [0], [0]>} : vector<8x8x8xf32>, vector<8x8x16xf32>, vector<8x8x16xf32> -> vector<8x8x16xf32>
    %293 = vector.shape_cast %292 : vector<8x8x16xf32> to vector<64x16xf32>
    %294 = vector.extract_strided_slice %240 {offsets = [16, 0], sizes = [16, 32], strides = [1, 1]} : vector<32x32xf32> to vector<16x32xf32>
    %cst_137 = arith.constant dense<0.000000e+00> : vector<64x32xf32>
    %295 = tpu.matmul %293, %294, %cst_137 {dimension_numbers = #tpu.dot_dimension_numbers<[1], [0], [0], [1], [0, 0, 1, 1], [], []>} : vector<64x16xf32>, vector<16x32xf32>, vector<64x32xf32> -> vector<64x32xf32>
    %296 = arith.addf %270, %295 : vector<64x32xf32>
    %297 = arith.addf %236, %296 : vector<64x32xf32>
    %c1_138 = arith.constant 1 : index
    %c0_139 = arith.constant 0 : index
    %c0_140 = arith.constant 0 : index
    %298 = vector.load %arg8[%c1_138, %c0_139, %c0_140] : memref<2x1x32xf32, #tpu.memory_space<vmem>>, vector<1x1x32xf32>
    %299 = vector.shape_cast %298 : vector<1x1x32xf32> to vector<1x32xf32>
    %300 = vector.broadcast %299 : vector<1x32xf32> to vector<64x32xf32>
    %301 = arith.addf %297, %300 : vector<64x32xf32>
    %cst_141 = arith.constant dense<0.000000e+00> : vector<32xf32>
    %302 = vector.multi_reduction <add>, %301, %cst_141 [0] : vector<64x32xf32> to vector<32xf32>
    %303 = vector.shape_cast %302 : vector<32xf32> to vector<1x32xf32>
    %cst_142 = arith.constant 6.400000e+01 : f32
    %304 = vector.broadcast %cst_142 : f32 to vector<1x32xf32>
    %305 = arith.divf %303, %304 : vector<1x32xf32>
    %306 = vector.broadcast %305 : vector<1x32xf32> to vector<64x32xf32>
    %307 = arith.subf %301, %306 : vector<64x32xf32>
    %308 = arith.mulf %307, %307 : vector<64x32xf32>
    %cst_143 = arith.constant dense<0.000000e+00> : vector<32xf32>
    %309 = vector.multi_reduction <add>, %308, %cst_143 [0] : vector<64x32xf32> to vector<32xf32>
    %310 = vector.shape_cast %309 : vector<32xf32> to vector<1x32xf32>
    %cst_144 = arith.constant 6.400000e+01 : f32
    %311 = vector.broadcast %cst_144 : f32 to vector<1x32xf32>
    %312 = arith.divf %310, %311 : vector<1x32xf32>
    %cst_145 = arith.constant 9.99999974E-6 : f32
    %313 = vector.broadcast %cst_145 : f32 to vector<1x32xf32>
    %314 = arith.addf %312, %313 : vector<1x32xf32>
    %315 = math.rsqrt %314 : vector<1x32xf32>
    %316 = vector.broadcast %315 : vector<1x32xf32> to vector<64x32xf32>
    %317 = arith.mulf %307, %316 : vector<64x32xf32>
    %c1_146 = arith.constant 1 : index
    %c0_147 = arith.constant 0 : index
    %c0_148 = arith.constant 0 : index
    %318 = vector.load %arg9[%c1_146, %c0_147, %c0_148] : memref<2x1x32xf32, #tpu.memory_space<vmem>>, vector<1x1x32xf32>
    %319 = vector.shape_cast %318 : vector<1x1x32xf32> to vector<1x32xf32>
    %320 = vector.broadcast %319 : vector<1x32xf32> to vector<64x32xf32>
    %321 = arith.mulf %317, %320 : vector<64x32xf32>
    %c1_149 = arith.constant 1 : index
    %c0_150 = arith.constant 0 : index
    %c0_151 = arith.constant 0 : index
    %322 = vector.load %arg10[%c1_149, %c0_150, %c0_151] : memref<2x1x32xf32, #tpu.memory_space<vmem>>, vector<1x1x32xf32>
    %323 = vector.shape_cast %322 : vector<1x1x32xf32> to vector<1x32xf32>
    %324 = vector.broadcast %323 : vector<1x32xf32> to vector<64x32xf32>
    %325 = arith.addf %321, %324 : vector<64x32xf32>
    %c1_152 = arith.constant 1 : index
    %c0_153 = arith.constant 0 : index
    %c0_154 = arith.constant 0 : index
    %326 = vector.load %arg11[%c1_152, %c0_153, %c0_154] : memref<2x32x64xf32, #tpu.memory_space<vmem>>, vector<1x32x64xf32>
    %327 = vector.shape_cast %326 : vector<1x32x64xf32> to vector<32x64xf32>
    %cst_155 = arith.constant dense<0.000000e+00> : vector<64x64xf32>
    %328 = tpu.matmul %325, %327, %cst_155 {dimension_numbers = #tpu.dot_dimension_numbers<[1], [0], [0], [1], [0, 0, 1, 1], [], []>} : vector<64x32xf32>, vector<32x64xf32>, vector<64x64xf32> -> vector<64x64xf32>
    %c1_156 = arith.constant 1 : index
    %c0_157 = arith.constant 0 : index
    %c0_158 = arith.constant 0 : index
    %329 = vector.load %arg12[%c1_156, %c0_157, %c0_158] : memref<2x1x64xf32, #tpu.memory_space<vmem>>, vector<1x1x64xf32>
    %330 = vector.shape_cast %329 : vector<1x1x64xf32> to vector<1x64xf32>
    %331 = vector.broadcast %330 : vector<1x64xf32> to vector<64x64xf32>
    %332 = arith.addf %328, %331 : vector<64x64xf32>
    %cst_159 = arith.constant 5.000000e-01 : f32
    %333 = vector.broadcast %cst_159 : f32 to vector<64x64xf32>
    %334 = arith.mulf %333, %332 : vector<64x64xf32>
    %cst_160 = arith.constant 0.707106769 : f32
    %335 = vector.broadcast %cst_160 : f32 to vector<64x64xf32>
    %336 = arith.mulf %332, %335 : vector<64x64xf32>
    %cst_161 = arith.constant 0.000000e+00 : f32
    %337 = vector.broadcast %cst_161 : f32 to vector<64x64xf32>
    %338 = arith.cmpf oge, %336, %337 : vector<64x64xf32>
    %cst_162 = arith.constant 1.000000e+00 : f32
    %cst_163 = arith.constant -1.000000e+00 : f32
    %339 = vector.broadcast %cst_162 : f32 to vector<64x64xf32>
    %340 = vector.broadcast %cst_163 : f32 to vector<64x64xf32>
    %341 = arith.select %338, %339, %340 : vector<64x64xi1>, vector<64x64xf32>
    %342 = math.absf %336 : vector<64x64xf32>
    %cst_164 = arith.constant 0.327591091 : f32
    %343 = vector.broadcast %cst_164 : f32 to vector<64x64xf32>
    %344 = arith.mulf %343, %342 : vector<64x64xf32>
    %cst_165 = arith.constant 1.000000e+00 : f32
    %345 = vector.broadcast %cst_165 : f32 to vector<64x64xf32>
    %346 = arith.addf %345, %344 : vector<64x64xf32>
    %cst_166 = arith.constant 1.000000e+00 : f32
    %347 = vector.broadcast %cst_166 : f32 to vector<64x64xf32>
    %348 = arith.divf %347, %346 : vector<64x64xf32>
    %cst_167 = arith.constant 1.06140542 : f32
    %349 = vector.broadcast %cst_167 : f32 to vector<64x64xf32>
    %350 = arith.mulf %348, %349 : vector<64x64xf32>
    %cst_168 = arith.constant -1.45315206 : f32
    %351 = vector.broadcast %cst_168 : f32 to vector<64x64xf32>
    %352 = arith.addf %351, %350 : vector<64x64xf32>
    %353 = arith.mulf %348, %352 : vector<64x64xf32>
    %cst_169 = arith.constant 1.42141378 : f32
    %354 = vector.broadcast %cst_169 : f32 to vector<64x64xf32>
    %355 = arith.addf %354, %353 : vector<64x64xf32>
    %356 = arith.mulf %348, %355 : vector<64x64xf32>
    %cst_170 = arith.constant -0.284496725 : f32
    %357 = vector.broadcast %cst_170 : f32 to vector<64x64xf32>
    %358 = arith.addf %357, %356 : vector<64x64xf32>
    %359 = arith.mulf %348, %358 : vector<64x64xf32>
    %cst_171 = arith.constant 0.254829586 : f32
    %360 = vector.broadcast %cst_171 : f32 to vector<64x64xf32>
    %361 = arith.addf %360, %359 : vector<64x64xf32>
    %362 = arith.mulf %348, %361 : vector<64x64xf32>
    %cst_172 = arith.constant 0.000000e+00 : f32
    %363 = vector.broadcast %cst_172 : f32 to vector<64x64xf32>
    %364 = arith.subf %363, %342 : vector<64x64xf32>
    %365 = arith.mulf %364, %342 : vector<64x64xf32>
    %366 = math.exp %365 : vector<64x64xf32>
    %367 = arith.mulf %362, %366 : vector<64x64xf32>
    %cst_173 = arith.constant 1.000000e+00 : f32
    %368 = vector.broadcast %cst_173 : f32 to vector<64x64xf32>
    %369 = arith.subf %368, %367 : vector<64x64xf32>
    %370 = arith.mulf %341, %369 : vector<64x64xf32>
    %cst_174 = arith.constant 1.000000e+00 : f32
    %371 = vector.broadcast %cst_174 : f32 to vector<64x64xf32>
    %372 = arith.addf %371, %370 : vector<64x64xf32>
    %373 = arith.mulf %334, %372 : vector<64x64xf32>
    %c1_175 = arith.constant 1 : index
    %c0_176 = arith.constant 0 : index
    %c0_177 = arith.constant 0 : index
    %374 = vector.load %arg13[%c1_175, %c0_176, %c0_177] : memref<2x64x32xf32, #tpu.memory_space<vmem>>, vector<1x64x32xf32>
    %375 = vector.shape_cast %374 : vector<1x64x32xf32> to vector<64x32xf32>
    %cst_178 = arith.constant dense<0.000000e+00> : vector<64x32xf32>
    %376 = tpu.matmul %373, %375, %cst_178 {dimension_numbers = #tpu.dot_dimension_numbers<[1], [0], [0], [1], [0, 0, 1, 1], [], []>} : vector<64x64xf32>, vector<64x32xf32>, vector<64x32xf32> -> vector<64x32xf32>
    %377 = arith.addf %325, %376 : vector<64x32xf32>
    %c1_179 = arith.constant 1 : index
    %c0_180 = arith.constant 0 : index
    %c0_181 = arith.constant 0 : index
    %378 = vector.load %arg14[%c1_179, %c0_180, %c0_181] : memref<2x1x32xf32, #tpu.memory_space<vmem>>, vector<1x1x32xf32>
    %379 = vector.shape_cast %378 : vector<1x1x32xf32> to vector<1x32xf32>
    %380 = vector.broadcast %379 : vector<1x32xf32> to vector<64x32xf32>
    %381 = arith.addf %377, %380 : vector<64x32xf32>
    %cst_182 = arith.constant dense<0.000000e+00> : vector<32xf32>
    %382 = vector.multi_reduction <add>, %381, %cst_182 [0] : vector<64x32xf32> to vector<32xf32>
    %383 = vector.shape_cast %382 : vector<32xf32> to vector<1x32xf32>
    %cst_183 = arith.constant 6.400000e+01 : f32
    %384 = vector.broadcast %cst_183 : f32 to vector<1x32xf32>
    %385 = arith.divf %383, %384 : vector<1x32xf32>
    %386 = vector.broadcast %385 : vector<1x32xf32> to vector<64x32xf32>
    %387 = arith.subf %381, %386 : vector<64x32xf32>
    %388 = arith.mulf %387, %387 : vector<64x32xf32>
    %cst_184 = arith.constant dense<0.000000e+00> : vector<32xf32>
    %389 = vector.multi_reduction <add>, %388, %cst_184 [0] : vector<64x32xf32> to vector<32xf32>
    %390 = vector.shape_cast %389 : vector<32xf32> to vector<1x32xf32>
    %cst_185 = arith.constant 6.400000e+01 : f32
    %391 = vector.broadcast %cst_185 : f32 to vector<1x32xf32>
    %392 = arith.divf %390, %391 : vector<1x32xf32>
    %cst_186 = arith.constant 9.99999974E-6 : f32
    %393 = vector.broadcast %cst_186 : f32 to vector<1x32xf32>
    %394 = arith.addf %392, %393 : vector<1x32xf32>
    %395 = math.rsqrt %394 : vector<1x32xf32>
    %396 = vector.broadcast %395 : vector<1x32xf32> to vector<64x32xf32>
    %397 = arith.mulf %387, %396 : vector<64x32xf32>
    %c1_187 = arith.constant 1 : index
    %c0_188 = arith.constant 0 : index
    %c0_189 = arith.constant 0 : index
    %398 = vector.load %arg15[%c1_187, %c0_188, %c0_189] : memref<2x1x32xf32, #tpu.memory_space<vmem>>, vector<1x1x32xf32>
    %399 = vector.shape_cast %398 : vector<1x1x32xf32> to vector<1x32xf32>
    %400 = vector.broadcast %399 : vector<1x32xf32> to vector<64x32xf32>
    %401 = arith.mulf %397, %400 : vector<64x32xf32>
    %c1_190 = arith.constant 1 : index
    %c0_191 = arith.constant 0 : index
    %c0_192 = arith.constant 0 : index
    %402 = vector.load %arg16[%c1_190, %c0_191, %c0_192] : memref<2x1x32xf32, #tpu.memory_space<vmem>>, vector<1x1x32xf32>
    %403 = vector.shape_cast %402 : vector<1x1x32xf32> to vector<1x32xf32>
    %404 = vector.broadcast %403 : vector<1x32xf32> to vector<64x32xf32>
    %405 = arith.addf %401, %404 : vector<64x32xf32>
    %406 = vector.shape_cast %405 : vector<64x32xf32> to vector<8x8x32xf32>
    %c0_193 = arith.constant 0 : index
    %c0_194 = arith.constant 0 : index
    %c0_195 = arith.constant 0 : index
    %407 = vector.load %arg20[%c0_193, %c0_194, %c0_195] : memref<8x8x32xf32, #tpu.memory_space<vmem>>, vector<8x8x32xf32>
    tpu.vector_store %arg20[%c0_193, %c0_194, %c0_195], %406 {strides = array<i32>} : memref<8x8x32xf32, #tpu.memory_space<vmem>>, vector<8x8x32xf32>,
    %c0_196 = arith.constant 0 : index
    %c0_197 = arith.constant 0 : index
    %c0_198 = arith.constant 0 : index
    %408 = vector.load %arg20[%c0_196, %c0_197, %c0_198] : memref<8x8x32xf32, #tpu.memory_space<vmem>>, vector<8x1x32xf32>
    %409 = vector.shape_cast %408 : vector<8x1x32xf32> to vector<8x32xf32>
    %c0_199 = arith.constant 0 : index
    %c0_200 = arith.constant 0 : index
    %c0_201 = arith.constant 0 : index
    %410 = vector.load %arg17[%c0_199, %c0_200, %c0_201] : memref<8x32x8xf32, #tpu.memory_space<vmem>>, vector<1x32x8xf32>
    %411 = vector.shape_cast %410 : vector<1x32x8xf32> to vector<32x8xf32>
    %cst_202 = arith.constant dense<0.000000e+00> : vector<8x8xf32>
    %412 = tpu.matmul %409, %411, %cst_202 {dimension_numbers = #tpu.dot_dimension_numbers<[1], [0], [0], [1], [0, 0, 1, 1], [], []>} : vector<8x32xf32>, vector<32x8xf32>, vector<8x8xf32> -> vector<8x8xf32>
    %c0_203 = arith.constant 0 : index
    %c1_204 = arith.constant 1 : index
    %c0_205 = arith.constant 0 : index
    %413 = vector.load %arg20[%c0_203, %c1_204, %c0_205] : memref<8x8x32xf32, #tpu.memory_space<vmem>>, vector<8x1x32xf32>
    %414 = vector.shape_cast %413 : vector<8x1x32xf32> to vector<8x32xf32>
    %c1_206 = arith.constant 1 : index
    %c0_207 = arith.constant 0 : index
    %c0_208 = arith.constant 0 : index
    %415 = vector.load %arg17[%c1_206, %c0_207, %c0_208] : memref<8x32x8xf32, #tpu.memory_space<vmem>>, vector<1x32x8xf32>
    %416 = vector.shape_cast %415 : vector<1x32x8xf32> to vector<32x8xf32>
    %cst_209 = arith.constant dense<0.000000e+00> : vector<8x8xf32>
    %417 = tpu.matmul %414, %416, %cst_209 {dimension_numbers = #tpu.dot_dimension_numbers<[1], [0], [0], [1], [0, 0, 1, 1], [], []>} : vector<8x32xf32>, vector<32x8xf32>, vector<8x8xf32> -> vector<8x8xf32>
    %418 = arith.addf %412, %417 : vector<8x8xf32>
    %c0_210 = arith.constant 0 : index
    %c2_211 = arith.constant 2 : index
    %c0_212 = arith.constant 0 : index
    %419 = vector.load %arg20[%c0_210, %c2_211, %c0_212] : memref<8x8x32xf32, #tpu.memory_space<vmem>>, vector<8x1x32xf32>
    %420 = vector.shape_cast %419 : vector<8x1x32xf32> to vector<8x32xf32>
    %c2_213 = arith.constant 2 : index
    %c0_214 = arith.constant 0 : index
    %c0_215 = arith.constant 0 : index
    %421 = vector.load %arg17[%c2_213, %c0_214, %c0_215] : memref<8x32x8xf32, #tpu.memory_space<vmem>>, vector<1x32x8xf32>
    %422 = vector.shape_cast %421 : vector<1x32x8xf32> to vector<32x8xf32>
    %cst_216 = arith.constant dense<0.000000e+00> : vector<8x8xf32>
    %423 = tpu.matmul %420, %422, %cst_216 {dimension_numbers = #tpu.dot_dimension_numbers<[1], [0], [0], [1], [0, 0, 1, 1], [], []>} : vector<8x32xf32>, vector<32x8xf32>, vector<8x8xf32> -> vector<8x8xf32>
    %424 = arith.addf %418, %423 : vector<8x8xf32>
    %c0_217 = arith.constant 0 : index
    %c3_218 = arith.constant 3 : index
    %c0_219 = arith.constant 0 : index
    %425 = vector.load %arg20[%c0_217, %c3_218, %c0_219] : memref<8x8x32xf32, #tpu.memory_space<vmem>>, vector<8x1x32xf32>
    %426 = vector.shape_cast %425 : vector<8x1x32xf32> to vector<8x32xf32>
    %c3_220 = arith.constant 3 : index
    %c0_221 = arith.constant 0 : index
    %c0_222 = arith.constant 0 : index
    %427 = vector.load %arg17[%c3_220, %c0_221, %c0_222] : memref<8x32x8xf32, #tpu.memory_space<vmem>>, vector<1x32x8xf32>
    %428 = vector.shape_cast %427 : vector<1x32x8xf32> to vector<32x8xf32>
    %cst_223 = arith.constant dense<0.000000e+00> : vector<8x8xf32>
    %429 = tpu.matmul %426, %428, %cst_223 {dimension_numbers = #tpu.dot_dimension_numbers<[1], [0], [0], [1], [0, 0, 1, 1], [], []>} : vector<8x32xf32>, vector<32x8xf32>, vector<8x8xf32> -> vector<8x8xf32>
    %430 = arith.addf %424, %429 : vector<8x8xf32>
    %c0_224 = arith.constant 0 : index
    %c4_225 = arith.constant 4 : index
    %c0_226 = arith.constant 0 : index
    %431 = vector.load %arg20[%c0_224, %c4_225, %c0_226] : memref<8x8x32xf32, #tpu.memory_space<vmem>>, vector<8x1x32xf32>
    %432 = vector.shape_cast %431 : vector<8x1x32xf32> to vector<8x32xf32>
    %c4_227 = arith.constant 4 : index
    %c0_228 = arith.constant 0 : index
    %c0_229 = arith.constant 0 : index
    %433 = vector.load %arg17[%c4_227, %c0_228, %c0_229] : memref<8x32x8xf32, #tpu.memory_space<vmem>>, vector<1x32x8xf32>
    %434 = vector.shape_cast %433 : vector<1x32x8xf32> to vector<32x8xf32>
    %cst_230 = arith.constant dense<0.000000e+00> : vector<8x8xf32>
    %435 = tpu.matmul %432, %434, %cst_230 {dimension_numbers = #tpu.dot_dimension_numbers<[1], [0], [0], [1], [0, 0, 1, 1], [], []>} : vector<8x32xf32>, vector<32x8xf32>, vector<8x8xf32> -> vector<8x8xf32>
    %436 = arith.addf %430, %435 : vector<8x8xf32>
    %c0_231 = arith.constant 0 : index
    %c5_232 = arith.constant 5 : index
    %c0_233 = arith.constant 0 : index
    %437 = vector.load %arg20[%c0_231, %c5_232, %c0_233] : memref<8x8x32xf32, #tpu.memory_space<vmem>>, vector<8x1x32xf32>
    %438 = vector.shape_cast %437 : vector<8x1x32xf32> to vector<8x32xf32>
    %c5_234 = arith.constant 5 : index
    %c0_235 = arith.constant 0 : index
    %c0_236 = arith.constant 0 : index
    %439 = vector.load %arg17[%c5_234, %c0_235, %c0_236] : memref<8x32x8xf32, #tpu.memory_space<vmem>>, vector<1x32x8xf32>
    %440 = vector.shape_cast %439 : vector<1x32x8xf32> to vector<32x8xf32>
    %cst_237 = arith.constant dense<0.000000e+00> : vector<8x8xf32>
    %441 = tpu.matmul %438, %440, %cst_237 {dimension_numbers = #tpu.dot_dimension_numbers<[1], [0], [0], [1], [0, 0, 1, 1], [], []>} : vector<8x32xf32>, vector<32x8xf32>, vector<8x8xf32> -> vector<8x8xf32>
    %442 = arith.addf %436, %441 : vector<8x8xf32>
    %c0_238 = arith.constant 0 : index
    %c6_239 = arith.constant 6 : index
    %c0_240 = arith.constant 0 : index
    %443 = vector.load %arg20[%c0_238, %c6_239, %c0_240] : memref<8x8x32xf32, #tpu.memory_space<vmem>>, vector<8x1x32xf32>
    %444 = vector.shape_cast %443 : vector<8x1x32xf32> to vector<8x32xf32>
    %c6_241 = arith.constant 6 : index
    %c0_242 = arith.constant 0 : index
    %c0_243 = arith.constant 0 : index
    %445 = vector.load %arg17[%c6_241, %c0_242, %c0_243] : memref<8x32x8xf32, #tpu.memory_space<vmem>>, vector<1x32x8xf32>
    %446 = vector.shape_cast %445 : vector<1x32x8xf32> to vector<32x8xf32>
    %cst_244 = arith.constant dense<0.000000e+00> : vector<8x8xf32>
    %447 = tpu.matmul %444, %446, %cst_244 {dimension_numbers = #tpu.dot_dimension_numbers<[1], [0], [0], [1], [0, 0, 1, 1], [], []>} : vector<8x32xf32>, vector<32x8xf32>, vector<8x8xf32> -> vector<8x8xf32>
    %448 = arith.addf %442, %447 : vector<8x8xf32>
    %c0_245 = arith.constant 0 : index
    %c7_246 = arith.constant 7 : index
    %c0_247 = arith.constant 0 : index
    %449 = vector.load %arg20[%c0_245, %c7_246, %c0_247] : memref<8x8x32xf32, #tpu.memory_space<vmem>>, vector<8x1x32xf32>
    %450 = vector.shape_cast %449 : vector<8x1x32xf32> to vector<8x32xf32>
    %c7_248 = arith.constant 7 : index
    %c0_249 = arith.constant 0 : index
    %c0_250 = arith.constant 0 : index
    %451 = vector.load %arg17[%c7_248, %c0_249, %c0_250] : memref<8x32x8xf32, #tpu.memory_space<vmem>>, vector<1x32x8xf32>
    %452 = vector.shape_cast %451 : vector<1x32x8xf32> to vector<32x8xf32>
    %cst_251 = arith.constant dense<0.000000e+00> : vector<8x8xf32>
    %453 = tpu.matmul %450, %452, %cst_251 {dimension_numbers = #tpu.dot_dimension_numbers<[1], [0], [0], [1], [0, 0, 1, 1], [], []>} : vector<8x32xf32>, vector<32x8xf32>, vector<8x8xf32> -> vector<8x8xf32>
    %454 = arith.addf %448, %453 : vector<8x8xf32>
    %c0_252 = arith.constant 0 : index
    %c0_253 = arith.constant 0 : index
    %455 = vector.load %arg18[%c0_252, %c0_253] : memref<1x8xf32, #tpu.memory_space<vmem>>, vector<1x8xf32>
    %456 = vector.broadcast %455 : vector<1x8xf32> to vector<8x8xf32>
    %457 = arith.addf %454, %456 : vector<8x8xf32>
    %458 = vector.broadcast %17 : vector<8x1xf32> to vector<8x8xf32>
    %459 = arith.mulf %457, %458 : vector<8x8xf32>
    %460 = vector.broadcast %4 : vector<8x1xf32> to vector<8x8xf32>
    %461 = arith.addf %459, %460 : vector<8x8xf32>
    %c0_254 = arith.constant 0 : index
    %c0_255 = arith.constant 0 : index
    %462 = vector.load %arg19[%c0_254, %c0_255] : memref<8x8xf32, #tpu.memory_space<vmem>>, vector<8x8xf32>
    tpu.vector_store %arg19[%c0_254, %c0_255], %461 {strides = array<i32>} : memref<8x8xf32, #tpu.memory_space<vmem>>, vector<8x8xf32>,
    return
  }
}

</mosaic_0001>

<llo_original>
// kernel: run.1
$region0: #{run.1}
  #allocation0 [shape = 'u32[]', space=smem, size = 0x4, offset = 0x4, fixed_abs, tag = 'smem constant byte address 0x4 - core index']
  #allocation1 [shape = 'u32[144,128]{1,0:T(1,128)}', space=vmem, size = 0x12000, scoped, tag = 'internal scratch']
  #allocation2 [shape = 'f32[8,8,32]{2,1,0:T(8,128)}', space=vmem, size = 0x8000, scoped, tag = 'scratch operand']
  %s0 = inlined_call_operand.vmem [shape: f32[8,16], index: 0, kind: input, shape index: {}]
  %s1 = inlined_call_operand.hbm [shape: f32[16,256], index: 1, kind: input, shape index: {}]
  %s2 = inlined_call_operand.vmem [shape: f32[1,256], index: 2, kind: input, shape index: {}]
  %s3 = inlined_call_operand.vmem [shape: f32[1,256], index: 3, kind: input, shape index: {}]
  %s4 = inlined_call_operand.vmem [shape: f32[1,256], index: 4, kind: input, shape index: {}]
  %s5 = inlined_call_operand.hbm [shape: f32[2,32,96], index: 5, kind: input, shape index: {}]
  %s6 = inlined_call_operand.vmem [shape: f32[2,1,96], index: 6, kind: input, shape index: {}]
  %s7 = inlined_call_operand.hbm [shape: f32[2,32,32], index: 7, kind: input, shape index: {}]
  %s8 = inlined_call_operand.vmem [shape: f32[2,1,32], index: 8, kind: input, shape index: {}]
  %s9 = inlined_call_operand.vmem [shape: f32[2,1,32], index: 9, kind: input, shape index: {}, may-alias: {9,15}]
  %s10 = inlined_call_operand.vmem [shape: f32[2,1,32], index: 10, kind: input, shape index: {}, may-alias: {10,16}]
  %s11 = inlined_call_operand.hbm [shape: f32[2,32,64], index: 11, kind: input, shape index: {}]
  %s12 = inlined_call_operand.vmem [shape: f32[2,1,64], index: 12, kind: input, shape index: {}]
  %s13 = inlined_call_operand.hbm [shape: f32[2,64,32], index: 13, kind: input, shape index: {}]
  %s14 = inlined_call_operand.vmem [shape: f32[2,1,32], index: 14, kind: input, shape index: {}]
  %s15 = inlined_call_operand.vmem [shape: f32[2,1,32], index: 15, kind: input, shape index: {}, may-alias: {9,15}]
  %s16 = inlined_call_operand.vmem [shape: f32[2,1,32], index: 16, kind: input, shape index: {}, may-alias: {10,16}]
  %s17 = inlined_call_operand.hbm [shape: f32[8,32,8], index: 17, kind: input, shape index: {}]
  %s18 = inlined_call_operand.vmem [shape: f32[1,8], index: 18, kind: input, shape index: {}]
  %s19 = inlined_call_operand.hbm [shape: f32[8,8], index: 19, kind: output, shape index: {}]
  %s20 = sld [smem:[#allocation0]]
  $region110: #{run.1} parent=0
    _
  %s22 = ssub.s32 1, %s20
  %s23 = scalar_select 0, %s22, %s20
  $region1: #{run.1} parent=0
    #allocation3 [shape = 'u8[16384]{0}', space=vmem, size = 0x4000, scoped, tag = 'input window, operand 1, single buffered']
    #allocation4 [shape = 's32[1]{0}', space=sflag, size = 0x4, scoped, tag = 'scoped memory for run.1']
    #allocation5 [shape = 's32[1]{0}', space=sflag, size = 0x4, scoped, tag = 'scoped memory for run.1']
    #allocation6 [shape = 'u8[32768]{0}', space=vmem, size = 0x8000, scoped, tag = 'input window, operand 5, single buffered']
    #allocation7 [shape = 's32[1]{0}', space=sflag, size = 0x4, scoped, tag = 'scoped memory for run.1']
    #allocation8 [shape = 'u8[32768]{0}', space=vmem, size = 0x8000, scoped, tag = 'input window, operand 7, single buffered']
    #allocation9 [shape = 'u8[32768]{0}', space=vmem, size = 0x8000, scoped, tag = 'input window, operand 11, single buffered']
    #allocation10 [shape = 's32[1]{0}', space=sflag, size = 0x4, scoped, tag = 'scoped memory for run.1']
    #allocation11 [shape = 'u8[65536]{0}', space=vmem, size = 0x10000, scoped, tag = 'input window, operand 13, single buffered']
    #allocation12 [shape = 'u8[131072]{0}', space=vmem, size = 0x20000, scoped, tag = 'input window, operand 17, single buffered']
    #allocation13 [shape = 's32[1]{0}', space=sflag, size = 0x4, scoped, tag = 'scoped memory for run.1']
    #allocation14 [shape = 'u8[4096]{0}', space=vmem, size = 0x1000, scoped, tag = 'output window, operand 0, single buffered']
    %24 = vsyncpa [#allocation4], 0
    %25 = vsyncpa [#allocation7], 0
    %26 = vsyncpa [#allocation10], 0
    %27 = vsyncpa [#allocation13], 0
    %28 = vsyncpa [#allocation5], 0
    // Predicated region
    $region2: #{run.1} parent=1 // pred_check
      _
    $region3: #{run.1} parent=1 // pred_check_branch
      %30 = sbr.rel (0) target = $region5
    $region4: #{run.1} parent=1 // pred_region
      _
    $region5: #{run.1} parent=1 // pred_fallthru
      _
    // Predicated region
    $region6: #{run.1} parent=1 // pred_check
      _
    $region7: #{run.1} parent=1 // pred_check_branch
      %32 = sbr.rel (0) target = $region9
    $region8: #{run.1} parent=1 // pred_region
      %s34 = ssub.s32 512, 512
      %35 = vsyncadd [#allocation4], %s34
      %s36 = sshll.u32 [#allocation3], 4
      %s37 = int_to_ptr.vmem [resolvable:$true] %s36
      %42 = dma.hbm_to_vmem [thread:$0]  %s1, 512, %s37, [#allocation4], 256, 256, 16
    $region9: #{run.1} parent=1 // pred_fallthru
      _
    // Predicated region
    $region10: #{run.1} parent=1 // pred_check
      _
    $region11: #{run.1} parent=1 // pred_check_branch
      %44 = sbr.rel (0) target = $region13
    $region12: #{run.1} parent=1 // pred_region
      _
    $region13: #{run.1} parent=1 // pred_fallthru
      _
    // Predicated region
    $region14: #{run.1} parent=1 // pred_check
      _
    $region15: #{run.1} parent=1 // pred_check_branch
      %46 = sbr.rel (0) target = $region17
    $region16: #{run.1} parent=1 // pred_region
      _
    $region17: #{run.1} parent=1 // pred_fallthru
      _
    // Predicated region
    $region18: #{run.1} parent=1 // pred_check
      _
    $region19: #{run.1} parent=1 // pred_check_branch
      %48 = sbr.rel (0) target = $region21
    $region20: #{run.1} parent=1 // pred_region
      _
    $region21: #{run.1} parent=1 // pred_fallthru
      _
    // Predicated region
    $region22: #{run.1} parent=1 // pred_check
      _
    $region23: #{run.1} parent=1 // pred_check_branch
      %50 = sbr.rel (0) target = $region25
    $region24: #{run.1} parent=1 // pred_region
      %s52 = ssub.s32 1024, 1024
      %53 = vsyncadd [#allocation7], %s52
      %s54 = sshll.u32 [#allocation6], 4
      %s55 = int_to_ptr.vmem [resolvable:$true] %s54
      %60 = dma.hbm_to_vmem [thread:$0]  %s5, 1024, %s55, [#allocation7], 128, 128, 8
    $region25: #{run.1} parent=1 // pred_fallthru
      _
    // Predicated region
    $region26: #{run.1} parent=1 // pred_check
      _
    $region27: #{run.1} parent=1 // pred_check_branch
      %62 = sbr.rel (0) target = $region29
    $region28: #{run.1} parent=1 // pred_region
      _
    $region29: #{run.1} parent=1 // pred_fallthru
      _
    // Predicated region
    $region30: #{run.1} parent=1 // pred_check
      _
    $region31: #{run.1} parent=1 // pred_check_branch
      %64 = sbr.rel (0) target = $region33
    $region32: #{run.1} parent=1 // pred_region
      %s66 = ssub.s32 1024, 1024
      %67 = vsyncadd [#allocation7], %s66
      %s68 = sshll.u32 [#allocation8], 4
      %s69 = int_to_ptr.vmem [resolvable:$true] %s68
      %74 = dma.hbm_to_vmem [thread:$0]  %s7, 1024, %s69, [#allocation7], 128, 128, 8
    $region33: #{run.1} parent=1 // pred_fallthru
      _
    // Predicated region
    $region34: #{run.1} parent=1 // pred_check
      _
    $region35: #{run.1} parent=1 // pred_check_branch
      %76 = sbr.rel (0) target = $region37
    $region36: #{run.1} parent=1 // pred_region
      _
    $region37: #{run.1} parent=1 // pred_fallthru
      _
    // Predicated region
    $region38: #{run.1} parent=1 // pred_check
      _
    $region39: #{run.1} parent=1 // pred_check_branch
      %78 = sbr.rel (0) target = $region41
    $region40: #{run.1} parent=1 // pred_region
      _
    $region41: #{run.1} parent=1 // pred_fallthru
      _
    // Predicated region
    $region42: #{run.1} parent=1 // pred_check
      _
    $region43: #{run.1} parent=1 // pred_check_branch
      %80 = sbr.rel (0) target = $region45
    $region44: #{run.1} parent=1 // pred_region
      _
    $region45: #{run.1} parent=1 // pred_fallthru
      _
    // Predicated region
    $region46: #{run.1} parent=1 // pred_check
      _
    $region47: #{run.1} parent=1 // pred_check_branch
      %82 = sbr.rel (0) target = $region49
    $region48: #{run.1} parent=1 // pred_region
      %s84 = ssub.s32 1024, 1024
      %85 = vsyncadd [#allocation10], %s84
      %s86 = sshll.u32 [#allocation9], 4
      %s87 = int_to_ptr.vmem [resolvable:$true] %s86
      %92 = dma.hbm_to_vmem [thread:$0]  %s11, 1024, %s87, [#allocation10], 128, 128, 8
    $region49: #{run.1} parent=1 // pred_fallthru
      _
    // Predicated region
    $region50: #{run.1} parent=1 // pred_check
      _
    $region51: #{run.1} parent=1 // pred_check_branch
      %94 = sbr.rel (0) target = $region53
    $region52: #{run.1} parent=1 // pred_region
      _
    $region53: #{run.1} parent=1 // pred_fallthru
      _
    // Predicated region
    $region54: #{run.1} parent=1 // pred_check
      _
    $region55: #{run.1} parent=1 // pred_check_branch
      %96 = sbr.rel (0) target = $region57
    $region56: #{run.1} parent=1 // pred_region
      %s98 = ssub.s32 2048, 2048
      %99 = vsyncadd [#allocation10], %s98
      %s100 = sshll.u32 [#allocation11], 4
      %s101 = int_to_ptr.vmem [resolvable:$true] %s100
      %106 = dma.hbm_to_vmem [thread:$0]  %s13, 2048, %s101, [#allocation10], 128, 128, 8
    $region57: #{run.1} parent=1 // pred_fallthru
      _
    // Predicated region
    $region58: #{run.1} parent=1 // pred_check
      _
    $region59: #{run.1} parent=1 // pred_check_branch
      %108 = sbr.rel (0) target = $region61
    $region60: #{run.1} parent=1 // pred_region
      _
    $region61: #{run.1} parent=1 // pred_fallthru
      _
    // Predicated region
    $region62: #{run.1} parent=1 // pred_check
      _
    $region63: #{run.1} parent=1 // pred_check_branch
      %110 = sbr.rel (0) target = $region65
    $region64: #{run.1} parent=1 // pred_region
      _
    $region65: #{run.1} parent=1 // pred_fallthru
      _
    // Predicated region
    $region66: #{run.1} parent=1 // pred_check
      _
    $region67: #{run.1} parent=1 // pred_check_branch
      %112 = sbr.rel (0) target = $region69
    $region68: #{run.1} parent=1 // pred_region
      _
    $region69: #{run.1} parent=1 // pred_fallthru
      _
    // Predicated region
    $region70: #{run.1} parent=1 // pred_check
      _
    $region71: #{run.1} parent=1 // pred_check_branch
      %114 = sbr.rel (0) target = $region73
    $region72: #{run.1} parent=1 // pred_region
      %s116 = ssub.s32 4096, 4096
      %117 = vsyncadd [#allocation13], %s116
      %s118 = sshll.u32 [#allocation12], 4
      %s119 = int_to_ptr.vmem [resolvable:$true] %s118
      %124 = dma.hbm_to_vmem [thread:$0]  %s17, 4096, %s119, [#allocation13], 128, 128, 8
    $region73: #{run.1} parent=1 // pred_fallthru
      _
    // Predicated region
    $region74: #{run.1} parent=1 // pred_check
      _
    $region75: #{run.1} parent=1 // pred_check_branch
      %126 = sbr.rel (0) target = $region77
    $region76: #{run.1} parent=1 // pred_region
      _
    $region77: #{run.1} parent=1 // pred_fallthru
      _
    // Predicated region
    $region78: #{run.1} parent=1 // pred_check
      _
    $region79: #{run.1} parent=1 // pred_check_branch
      %128 = sbr.rel (0) target = $region81
    $region80: #{run.1} parent=1 // pred_region
      %129 = dma.done [#allocation4], 512
    $region81: #{run.1} parent=1 // pred_fallthru
      _
    // Predicated region
    $region82: #{run.1} parent=1 // pred_check
      _
    $region83: #{run.1} parent=1 // pred_check_branch
      %131 = sbr.rel (0) target = $region85
    $region84: #{run.1} parent=1 // pred_region
      %132 = dma.done [#allocation7], 1024
    $region85: #{run.1} parent=1 // pred_fallthru
      _
    // Predicated region
    $region86: #{run.1} parent=1 // pred_check
      _
    $region87: #{run.1} parent=1 // pred_check_branch
      %134 = sbr.rel (0) target = $region89
    $region88: #{run.1} parent=1 // pred_region
      %135 = dma.done [#allocation7], 1024
    $region89: #{run.1} parent=1 // pred_fallthru
      _
    // Predicated region
    $region90: #{run.1} parent=1 // pred_check
      _
    $region91: #{run.1} parent=1 // pred_check_branch
      %137 = sbr.rel (0) target = $region93
    $region92: #{run.1} parent=1 // pred_region
      %138 = dma.done [#allocation10], 1024
    $region93: #{run.1} parent=1 // pred_fallthru
      _
    // Predicated region
    $region94: #{run.1} parent=1 // pred_check
      _
    $region95: #{run.1} parent=1 // pred_check_branch
      %140 = sbr.rel (0) target = $region97
    $region96: #{run.1} parent=1 // pred_region
      %141 = dma.done [#allocation10], 2048
    $region97: #{run.1} parent=1 // pred_fallthru
      _
    // Predicated region
    $region98: #{run.1} parent=1 // pred_check
      _
    $region99: #{run.1} parent=1 // pred_check_branch
      %143 = sbr.rel (0) target = $region101
    $region100: #{run.1} parent=1 // pred_region
      %144 = dma.done [#allocation13], 4096
    $region101: #{run.1} parent=1 // pred_fallthru
      _
    %v145 = vld [vmem:[%s0] sm:$0xff]
    %vm146 = vcmask 130048
    %v147 = vsel %vm146, %v145, 0.0
    %148 = vadd.xlane.f32.xlu0 %v147
    %v149 = vpop.xlane.xlu0 %148
    %v150 = vrcp.pop 16.0
    %v151 = vmul.f32 %v149, %v150
    %v152 = vsub.f32 %v145, %v151
    %v153 = vmul.f32 %v152, %v152
    %v154 = vsel %vm146, %v153, 0.0
    %155 = vadd.xlane.f32.xlu0 %v154
    %v156 = vpop.xlane.xlu0 %155
    %v157 = vmul.f32 %v156, %v150
    %v158 = vadd.f32 %v157, 1e-05
    %v159 = vrsqrt.pop %v158
    %v160 = vrsqrt.pop %v158
    %v161 = vmul.f32 %v158, %v160
    %vm162 = vcmp.eq.f32.partialorder %v158, inf
    %v163 = vsel %vm162, %v158, %v161
    %vm164 = vcmp.eq.f32.partialorder %v158, 0.0
    %v165 = vand.u32 %v158, 2147483648
    %v166 = vsel %vm164, %v165, %v163
    %v167 = vld [vmem:[#allocation3] sm:$0xff]
    %v168 = vld [vmem:[#allocation3 + $0x8] sm:$0xff]
    %v169 = vld [vmem:[#allocation3 + $0x10] sm:$0xff]
    %v170 = vld [vmem:[#allocation3 + $0x18] sm:$0xff]
    %v171 = vld [vmem:[%s2] sm:$0x3]
    %173 = vset.pattern.permute.xlu0 15
    %174 = vperm.xlu0 %173, %v145
    %v175 = vpop.permute.xlu0 %174
    %v178 = vlaneseq
    %v179 = vshrl.u32 %v178, 7
    %v180 = vsub.s32 0, %v179
    %v181 = vrot.slane %v171, %v180
    %v182 = vlaneseq
    %v183 = vshrl.u32 %v182, 7
    %v184 = vsub.s32 1, %v183
    %v185 = vrot.slane %v171, %v184
    %v188 = vmul.f32 %v175, %v181
    %v189 = vmul.f32 %v175, %v185
    %v190 = vsel %vm146, %v145, 0
    %192 = vmatprep.subr.mxu0 %v168
    %193 = vmatpush1.msra.mxu0 %v167
    %194 = vmatprep.subr.mxu0 %v170
    %195 = vmatpush1.msra.mxu0 %v169
    %196 = vmatprep.subr.mxu0 0.0
    %197 = vmatpush1.msra.mxu0 0.0
    %198 = vmatprep.subr.mxu0 0.0
    %199 = vmatpush1.msra.mxu0 0.0
    %200 = vmatprep.subr.mxu0 0.0
    %201 = vmatpush1.msra.mxu0 0.0
    %202 = vmatprep.subr.mxu0 0.0
    %203 = vmatpush1.msra.mxu0 0.0
    %204 = vmatprep.subr.mxu0 0.0
    %205 = vmatpush1.msra.mxu0 0.0
    %206 = vmatprep.subr.mxu0 0.0
    %207 = vmatpush1.msra.mxu0 0.0
    %208 = vmatprep.subr.mxu0 0.0
    %209 = vmatpush1.msra.mxu0 0.0
    %210 = vmatprep.subr.mxu0 0.0
    %211 = vmatpush1.msra.mxu0 0.0
    %212 = vmatprep.subr.mxu0 0.0
    %213 = vmatpush1.msra.mxu0 0.0
    %214 = vmatprep.subr.mxu0 0.0
    %215 = vmatpush1.msra.mxu0 0.0
    %216 = vmatprep.subr.mxu0 0.0
    %217 = vmatpush1.msra.mxu0 0.0
    %218 = vmatprep.subr.mxu0 0.0
    %219 = vmatpush1.msra.mxu0 0.0
    %220 = vmatprep.subr.mxu0 0.0
    %221 = vmatpush1.msra.mxu0 0.0
    %222 = vmatprep.subr.mxu0 0.0
    %223 = vmatpush1.msra.mxu0 0.0
    %224 = vmatprep.subr.mxu0 0.0
    %225 = vmatpush1.msra.mxu0 0.0
    %226 = vmatprep.subr.mxu0 0.0
    %227 = vmatpush1.msra.mxu0 0.0
    %228 = vmatprep.subr.mxu0 0.0
    %229 = vmatpush1.msra.mxu0 0.0
    %230 = vmatprep.subr.mxu0 0.0
    %231 = vmatpush1.msra.mxu0 0.0
    %232 = vmatprep.subr.mxu0 0.0
    %233 = vmatpush1.msra.mxu0 0.0
    %234 = vmatprep.subr.mxu0 0.0
    %235 = vmatpush1.msra.mxu0 0.0
    %236 = vmatprep.subr.mxu0 0.0
    %237 = vmatpush1.msra.mxu0 0.0
    %238 = vmatprep.subr.mxu0 0.0
    %239 = vmatpush1.msra.mxu0 0.0
    %240 = vmatprep.subr.mxu0 0.0
    %241 = vmatpush1.msra.mxu0 0.0
    %242 = vmatprep.subr.mxu0 0.0
    %243 = vmatpush1.msra.mxu0 0.0
    %244 = vmatprep.subr.mxu0 0.0
    %245 = vmatpush1.msra.mxu0 0.0
    %246 = vmatprep.subr.mxu0 0.0
    %247 = vmatpush1.msra.mxu0 0.0
    %248 = vmatprep.subr.mxu0 0.0
    %249 = vmatpush1.msra.mxu0 0.0
    %250 = vmatprep.subr.mxu0 0.0
    %251 = vmatpush1.msra.mxu0 0.0
    %252 = vmatprep.subr.mxu0 0.0
    %253 = vmatpush1.msra.mxu0 0.0
    %254 = vmatprep.subr.mxu0 0.0
    %255 = vmatpush1.msra.mxu0 0.0
    %256 = vmatprep.mubr.f32.mxu0 0.0
    %257 = vmatmul.mubr.f32.gmra.mrb[0].mxu0 %v190
    %v258 = vpop.f32.mrb[0].mxu0
    %v259 = vadd.f32 %v188, %v258
    %v260 = vpop.f32.mrb[0].mxu0
    %v261 = vadd.f32 %v189, %v260
    %262 = vdwg.mxu0
    %v263 = vld [vmem:[%s3] sm:$0x3]
    %v265 = vlaneseq
    %v266 = vshrl.u32 %v265, 7
    %v267 = vsub.s32 0, %v266
    %v268 = vrot.slane %v263, %v267
    %v269 = vlaneseq
    %v270 = vshrl.u32 %v269, 7
    %v271 = vsub.s32 1, %v270
    %v272 = vrot.slane %v263, %v271
    %v275 = vmul.f32 %v151, %v268
    %v276 = vmul.f32 %v151, %v272
    %v277 = vsub.f32 %v259, %v275
    %v278 = vsub.f32 %v261, %v276
    %v279 = vmul.f32 %v277, %v159
    %v280 = vmul.f32 %v278, %v159
    %v281 = vld [vmem:[%s4] sm:$0x3]
    %v283 = vlaneseq
    %v284 = vshrl.u32 %v283, 7
    %v285 = vsub.s32 0, %v284
    %v286 = vrot.slane %v281, %v285
    %v287 = vlaneseq
    %v288 = vshrl.u32 %v287, 7
    %v289 = vsub.s32 1, %v288
    %v290 = vrot.slane %v281, %v289
    %v293 = vadd.f32 %v279, %v286
    %v294 = vadd.f32 %v280, %v290
    %v296 = vcombine.high %v293, %v293
    %v298 = vunpack.c.l.s4 1966171168
    %v299 = vunpack.c.0.s8 %v298
    %v300 = vlaneseq
    %v301 = vshrl.u32 %v300, 7
    %v302 = vsub.s32 %v299, %v301
    %v303 = vrot.slane %v293, %v302
    %v305 = vunpack.c.l.s4 1966171168
    %v306 = vunpack.c.0.s8 %v305
    %v307 = vlaneseq
    %v308 = vshrl.u32 %v307, 7
    %v309 = vsub.s32 %v306, %v308
    %v310 = vrot.slane %v296, %v309
    %v311 = vcombine.high %v303, %v303
    %v312 = vcombine.high %v310, %v310
    %v314 = vunpack.c.l.s4 1966171168
    %v315 = vunpack.c.0.s8 %v314
    %v316 = vlaneseq
    %v317 = vshrl.u32 %v316, 7
    %v318 = vsub.s32 %v315, %v317
    %v319 = vrot.slane %v303, %v318
    %v321 = vunpack.c.l.s4 1966171168
    %v322 = vunpack.c.0.s8 %v321
    %v323 = vlaneseq
    %v324 = vshrl.u32 %v323, 7
    %v325 = vsub.s32 %v322, %v324
    %v326 = vrot.slane %v310, %v325
    %v328 = vunpack.c.l.s4 1966171168
    %v329 = vunpack.c.0.s8 %v328
    %v330 = vlaneseq
    %v331 = vshrl.u32 %v330, 7
    %v332 = vsub.s32 %v329, %v331
    %v333 = vrot.slane %v311, %v332
    %v335 = vunpack.c.l.s4 1966171168
    %v336 = vunpack.c.0.s8 %v335
    %v337 = vlaneseq
    %v338 = vshrl.u32 %v337, 7
    %v339 = vsub.s32 %v336, %v338
    %v340 = vrot.slane %v312, %v339
    %v341 = vcombine.high %v319, %v319
    %v342 = vcombine.high %v326, %v326
    %v343 = vcombine.high %v333, %v333
    %v344 = vcombine.high %v340, %v340
    %vm353 = vcmask 253952
    %354 = vst.msk [vmem:[#allocation2] sm:$0x1] %vm353, %v319
    %355 = vst.msk [vmem:[#allocation2 + $0x8] sm:$0x1] %vm353, %v333
    %356 = vst.msk [vmem:[#allocation2 + $0x10] sm:$0x1] %vm353, %v341
    %357 = vst.msk [vmem:[#allocation2 + $0x18] sm:$0x1] %vm353, %v343
    %358 = vst.msk [vmem:[#allocation2 + $0x20] sm:$0x1] %vm353, %v326
    %359 = vst.msk [vmem:[#allocation2 + $0x28] sm:$0x1] %vm353, %v340
    %360 = vst.msk [vmem:[#allocation2 + $0x30] sm:$0x1] %vm353, %v342
    %361 = vst.msk [vmem:[#allocation2 + $0x38] sm:$0x1] %vm353, %v344
    %v362 = vlaneseq
    %v363 = vshrl.u32 %v362, 7
    %v364 = vsub.s32 0, %v363
    %v365 = vrot.slane %v319, %v364
    %v366 = vlaneseq
    %v367 = vshrl.u32 %v366, 7
    %v368 = vsub.s32 0, %v367
    %v369 = vrot.slane %v333, %v368
    %v370 = vlaneseq
    %v371 = vshrl.u32 %v370, 7
    %v372 = vsub.s32 0, %v371
    %v373 = vrot.slane %v341, %v372
    %v374 = vlaneseq
    %v375 = vshrl.u32 %v374, 7
    %v376 = vsub.s32 0, %v375
    %v377 = vrot.slane %v343, %v376
    %v378 = vlaneseq
    %v379 = vshrl.u32 %v378, 7
    %v380 = vsub.s32 0, %v379
    %v381 = vrot.slane %v326, %v380
    %v382 = vlaneseq
    %v383 = vshrl.u32 %v382, 7
    %v384 = vsub.s32 0, %v383
    %v385 = vrot.slane %v340, %v384
    %v386 = vlaneseq
    %v387 = vshrl.u32 %v386, 7
    %v388 = vsub.s32 0, %v387
    %v389 = vrot.slane %v342, %v388
    %v390 = vlaneseq
    %v391 = vshrl.u32 %v390, 7
    %v392 = vsub.s32 0, %v391
    %v393 = vrot.slane %v344, %v392
    %394 = vrot.lane.b32.xlu0 %v365, 96
    %v395 = vpop.permute.xlu0 %394
    %396 = vrot.lane.b32.xlu0 %v369, 96
    %v397 = vpop.permute.xlu0 %396
    %398 = vrot.lane.b32.xlu0 %v373, 96
    %v399 = vpop.permute.xlu0 %398
    %400 = vrot.lane.b32.xlu0 %v377, 96
    %v401 = vpop.permute.xlu0 %400
    %402 = vrot.lane.b32.xlu0 %v381, 96
    %v403 = vpop.permute.xlu0 %402
    %404 = vrot.lane.b32.xlu0 %v385, 96
    %v405 = vpop.permute.xlu0 %404
    %406 = vrot.lane.b32.xlu0 %v389, 96
    %v407 = vpop.permute.xlu0 %406
    %408 = vrot.lane.b32.xlu0 %v393, 96
    %v409 = vpop.permute.xlu0 %408
    %418 = vst.msk [vmem:[#allocation2 + $0x1] sm:$0x1] %vm353, %v395
    %419 = vst.msk [vmem:[#allocation2 + $0x9] sm:$0x1] %vm353, %v397
    %420 = vst.msk [vmem:[#allocation2 + $0x11] sm:$0x1] %vm353, %v399
    %421 = vst.msk [vmem:[#allocation2 + $0x19] sm:$0x1] %vm353, %v401
    %422 = vst.msk [vmem:[#allocation2 + $0x21] sm:$0x1] %vm353, %v403
    %423 = vst.msk [vmem:[#allocation2 + $0x29] sm:$0x1] %vm353, %v405
    %424 = vst.msk [vmem:[#allocation2 + $0x31] sm:$0x1] %vm353, %v407
    %425 = vst.msk [vmem:[#allocation2 + $0x39] sm:$0x1] %vm353, %v409
    %426 = vrot.lane.b32.xlu0 %v365, 64
    %v427 = vpop.permute.xlu0 %426
    %428 = vrot.lane.b32.xlu0 %v369, 64
    %v429 = vpop.permute.xlu0 %428
    %430 = vrot.lane.b32.xlu0 %v373, 64
    %v431 = vpop.permute.xlu0 %430
    %432 = vrot.lane.b32.xlu0 %v377, 64
    %v433 = vpop.permute.xlu0 %432
    %434 = vrot.lane.b32.xlu0 %v381, 64
    %v435 = vpop.permute.xlu0 %434
    %436 = vrot.lane.b32.xlu0 %v385, 64
    %v437 = vpop.permute.xlu0 %436
    %438 = vrot.lane.b32.xlu0 %v389, 64
    %v439 = vpop.permute.xlu0 %438
    %440 = vrot.lane.b32.xlu0 %v393, 64
    %v441 = vpop.permute.xlu0 %440
    %450 = vst.msk [vmem:[#allocation2 + $0x2] sm:$0x1] %vm353, %v427
    %451 = vst.msk [vmem:[#allocation2 + $0xa] sm:$0x1] %vm353, %v429
    %452 = vst.msk [vmem:[#allocation2 + $0x12] sm:$0x1] %vm353, %v431
    %453 = vst.msk [vmem:[#allocation2 + $0x1a] sm:$0x1] %vm353, %v433
    %454 = vst.msk [vmem:[#allocation2 + $0x22] sm:$0x1] %vm353, %v435
    %455 = vst.msk [vmem:[#allocation2 + $0x2a] sm:$0x1] %vm353, %v437
    %456 = vst.msk [vmem:[#allocation2 + $0x32] sm:$0x1] %vm353, %v439
    %457 = vst.msk [vmem:[#allocation2 + $0x3a] sm:$0x1] %vm353, %v441
    %458 = vrot.lane.b32.xlu0 %v365, 32
    %v459 = vpop.permute.xlu0 %458
    %460 = vrot.lane.b32.xlu0 %v369, 32
    %v461 = vpop.permute.xlu0 %460
    %462 = vrot.lane.b32.xlu0 %v373, 32
    %v463 = vpop.permute.xlu0 %462
    %464 = vrot.lane.b32.xlu0 %v377, 32
    %v465 = vpop.permute.xlu0 %464
    %466 = vrot.lane.b32.xlu0 %v381, 32
    %v467 = vpop.permute.xlu0 %466
    %468 = vrot.lane.b32.xlu0 %v385, 32
    %v469 = vpop.permute.xlu0 %468
    %470 = vrot.lane.b32.xlu0 %v389, 32
    %v471 = vpop.permute.xlu0 %470
    %472 = vrot.lane.b32.xlu0 %v393, 32
    %v473 = vpop.permute.xlu0 %472
    %482 = vst.msk [vmem:[#allocation2 + $0x3] sm:$0x1] %vm353, %v459
    %483 = vst.msk [vmem:[#allocation2 + $0xb] sm:$0x1] %vm353, %v461
    %484 = vst.msk [vmem:[#allocation2 + $0x13] sm:$0x1] %vm353, %v463
    %485 = vst.msk [vmem:[#allocation2 + $0x1b] sm:$0x1] %vm353, %v465
    %486 = vst.msk [vmem:[#allocation2 + $0x23] sm:$0x1] %vm353, %v467
    %487 = vst.msk [vmem:[#allocation2 + $0x2b] sm:$0x1] %vm353, %v469
    %488 = vst.msk [vmem:[#allocation2 + $0x33] sm:$0x1] %vm353, %v471
    %489 = vst.msk [vmem:[#allocation2 + $0x3b] sm:$0x1] %vm353, %v473
    %v491 = vcombine.high %v294, %v294
    %v493 = vunpack.c.l.s4 1966171168
    %v494 = vunpack.c.0.s8 %v493
    %v495 = vlaneseq
    %v496 = vshrl.u32 %v495, 7
    %v497 = vsub.s32 %v494, %v496
    %v498 = vrot.slane %v294, %v497
    %v500 = vunpack.c.l.s4 1966171168
    %v501 = vunpack.c.0.s8 %v500
    %v502 = vlaneseq
    %v503 = vshrl.u32 %v502, 7
    %v504 = vsub.s32 %v501, %v503
    %v505 = vrot.slane %v491, %v504
    %v506 = vcombine.high %v498, %v498
    %v507 = vcombine.high %v505, %v505
    %v509 = vunpack.c.l.s4 1966171168
    %v510 = vunpack.c.0.s8 %v509
    %v511 = vlaneseq
    %v512 = vshrl.u32 %v511, 7
    %v513 = vsub.s32 %v510, %v512
    %v514 = vrot.slane %v498, %v513
    %v516 = vunpack.c.l.s4 1966171168
    %v517 = vunpack.c.0.s8 %v516
    %v518 = vlaneseq
    %v519 = vshrl.u32 %v518, 7
    %v520 = vsub.s32 %v517, %v519
    %v521 = vrot.slane %v505, %v520
    %v523 = vunpack.c.l.s4 1966171168
    %v524 = vunpack.c.0.s8 %v523
    %v525 = vlaneseq
    %v526 = vshrl.u32 %v525, 7
    %v527 = vsub.s32 %v524, %v526
    %v528 = vrot.slane %v506, %v527
    %v530 = vunpack.c.l.s4 1966171168
    %v531 = vunpack.c.0.s8 %v530
    %v532 = vlaneseq
    %v533 = vshrl.u32 %v532, 7
    %v534 = vsub.s32 %v531, %v533
    %v535 = vrot.slane %v507, %v534
    %v536 = vcombine.high %v514, %v514
    %v537 = vcombine.high %v521, %v521
    %v538 = vcombine.high %v528, %v528
    %v539 = vcombine.high %v535, %v535
    %548 = vst.msk [vmem:[#allocation2 + $0x4] sm:$0x1] %vm353, %v514
    %549 = vst.msk [vmem:[#allocation2 + $0xc] sm:$0x1] %vm353, %v528
    %550 = vst.msk [vmem:[#allocation2 + $0x14] sm:$0x1] %vm353, %v536
    %551 = vst.msk [vmem:[#allocation2 + $0x1c] sm:$0x1] %vm353, %v538
    %552 = vst.msk [vmem:[#allocation2 + $0x24] sm:$0x1] %vm353, %v521
    %553 = vst.msk [vmem:[#allocation2 + $0x2c] sm:$0x1] %vm353, %v535
    %554 = vst.msk [vmem:[#allocation2 + $0x34] sm:$0x1] %vm353, %v537
    %555 = vst.msk [vmem:[#allocation2 + $0x3c] sm:$0x1] %vm353, %v539
    %v556 = vlaneseq
    %v557 = vshrl.u32 %v556, 7
    %v558 = vsub.s32 0, %v557
    %v559 = vrot.slane %v514, %v558
    %v560 = vlaneseq
    %v561 = vshrl.u32 %v560, 7
    %v562 = vsub.s32 0, %v561
    %v563 = vrot.slane %v528, %v562
    %v564 = vlaneseq
    %v565 = vshrl.u32 %v564, 7
    %v566 = vsub.s32 0, %v565
    %v567 = vrot.slane %v536, %v566
    %v568 = vlaneseq
    %v569 = vshrl.u32 %v568, 7
    %v570 = vsub.s32 0, %v569
    %v571 = vrot.slane %v538, %v570
    %v572 = vlaneseq
    %v573 = vshrl.u32 %v572, 7
    %v574 = vsub.s32 0, %v573
    %v575 = vrot.slane %v521, %v574
    %v576 = vlaneseq
    %v577 = vshrl.u32 %v576, 7
    %v578 = vsub.s32 0, %v577
    %v579 = vrot.slane %v535, %v578
    %v580 = vlaneseq
    %v581 = vshrl.u32 %v580, 7
    %v582 = vsub.s32 0, %v581
    %v583 = vrot.slane %v537, %v582
    %v584 = vlaneseq
    %v585 = vshrl.u32 %v584, 7
    %v586 = vsub.s32 0, %v585
    %v587 = vrot.slane %v539, %v586
    %588 = vrot.lane.b32.xlu0 %v559, 96
    %v589 = vpop.permute.xlu0 %588
    %590 = vrot.lane.b32.xlu0 %v563, 96
    %v591 = vpop.permute.xlu0 %590
    %592 = vrot.lane.b32.xlu0 %v567, 96
    %v593 = vpop.permute.xlu0 %592
    %594 = vrot.lane.b32.xlu0 %v571, 96
    %v595 = vpop.permute.xlu0 %594
    %596 = vrot.lane.b32.xlu0 %v575, 96
    %v597 = vpop.permute.xlu0 %596
    %598 = vrot.lane.b32.xlu0 %v579, 96
    %v599 = vpop.permute.xlu0 %598
    %600 = vrot.lane.b32.xlu0 %v583, 96
    %v601 = vpop.permute.xlu0 %600
    %602 = vrot.lane.b32.xlu0 %v587, 96
    %v603 = vpop.permute.xlu0 %602
    %612 = vst.msk [vmem:[#allocation2 + $0x5] sm:$0x1] %vm353, %v589
    %613 = vst.msk [vmem:[#allocation2 + $0xd] sm:$0x1] %vm353, %v591
    %614 = vst.msk [vmem:[#allocation2 + $0x15] sm:$0x1] %vm353, %v593
    %615 = vst.msk [vmem:[#allocation2 + $0x1d] sm:$0x1] %vm353, %v595
    %616 = vst.msk [vmem:[#allocation2 + $0x25] sm:$0x1] %vm353, %v597
    %617 = vst.msk [vmem:[#allocation2 + $0x2d] sm:$0x1] %vm353, %v599
    %618 = vst.msk [vmem:[#allocation2 + $0x35] sm:$0x1] %vm353, %v601
    %619 = vst.msk [vmem:[#allocation2 + $0x3d] sm:$0x1] %vm353, %v603
    %620 = vrot.lane.b32.xlu0 %v559, 64
    %v621 = vpop.permute.xlu0 %620
    %622 = vrot.lane.b32.xlu0 %v563, 64
    %v623 = vpop.permute.xlu0 %622
    %624 = vrot.lane.b32.xlu0 %v567, 64
    %v625 = vpop.permute.xlu0 %624
    %626 = vrot.lane.b32.xlu0 %v571, 64
    %v627 = vpop.permute.xlu0 %626
    %628 = vrot.lane.b32.xlu0 %v575, 64
    %v629 = vpop.permute.xlu0 %628
    %630 = vrot.lane.b32.xlu0 %v579, 64
    %v631 = vpop.permute.xlu0 %630
    %632 = vrot.lane.b32.xlu0 %v583, 64
    %v633 = vpop.permute.xlu0 %632
    %634 = vrot.lane.b32.xlu0 %v587, 64
    %v635 = vpop.permute.xlu0 %634
    %644 = vst.msk [vmem:[#allocation2 + $0x6] sm:$0x1] %vm353, %v621
    %645 = vst.msk [vmem:[#allocation2 + $0xe] sm:$0x1] %vm353, %v623
    %646 = vst.msk [vmem:[#allocation2 + $0x16] sm:$0x1] %vm353, %v625
    %647 = vst.msk [vmem:[#allocation2 + $0x1e] sm:$0x1] %vm353, %v627
    %648 = vst.msk [vmem:[#allocation2 + $0x26] sm:$0x1] %vm353, %v629
    %649 = vst.msk [vmem:[#allocation2 + $0x2e] sm:$0x1] %vm353, %v631
    %650 = vst.msk [vmem:[#allocation2 + $0x36] sm:$0x1] %vm353, %v633
    %651 = vst.msk [vmem:[#allocation2 + $0x3e] sm:$0x1] %vm353, %v635
    %652 = vrot.lane.b32.xlu0 %v559, 32
    %v653 = vpop.permute.xlu0 %652
    %654 = vrot.lane.b32.xlu0 %v563, 32
    %v655 = vpop.permute.xlu0 %654
    %656 = vrot.lane.b32.xlu0 %v567, 32
    %v657 = vpop.permute.xlu0 %656
    %658 = vrot.lane.b32.xlu0 %v571, 32
    %v659 = vpop.permute.xlu0 %658
    %660 = vrot.lane.b32.xlu0 %v575, 32
    %v661 = vpop.permute.xlu0 %660
    %662 = vrot.lane.b32.xlu0 %v579, 32
    %v663 = vpop.permute.xlu0 %662
    %664 = vrot.lane.b32.xlu0 %v583, 32
    %v665 = vpop.permute.xlu0 %664
    %666 = vrot.lane.b32.xlu0 %v587, 32
    %v667 = vpop.permute.xlu0 %666
    %676 = vst.msk [vmem:[#allocation2 + $0x7] sm:$0x1] %vm353, %v653
    %677 = vst.msk [vmem:[#allocation2 + $0xf] sm:$0x1] %vm353, %v655
    %678 = vst.msk [vmem:[#allocation2 + $0x17] sm:$0x1] %vm353, %v657
    %679 = vst.msk [vmem:[#allocation2 + $0x1f] sm:$0x1] %vm353, %v659
    %680 = vst.msk [vmem:[#allocation2 + $0x27] sm:$0x1] %vm353, %v661
    %681 = vst.msk [vmem:[#allocation2 + $0x2f] sm:$0x1] %vm353, %v663
    %682 = vst.msk [vmem:[#allocation2 + $0x37] sm:$0x1] %vm353, %v665
    %683 = vst.msk [vmem:[#allocation2 + $0x3f] sm:$0x1] %vm353, %v667
    %v684 = vld [vmem:[#allocation2] sm:$0xff]
    %v685 = vld [vmem:[#allocation2 + $0x8] sm:$0xff]
    %v686 = vld [vmem:[#allocation2 + $0x10] sm:$0xff]
    %v687 = vld [vmem:[#allocation2 + $0x18] sm:$0xff]
    %v688 = vld [vmem:[#allocation2 + $0x20] sm:$0xff]
    %v689 = vld [vmem:[#allocation2 + $0x28] sm:$0xff]
    %v690 = vld [vmem:[#allocation2 + $0x30] sm:$0xff]
    %v691 = vld [vmem:[#allocation2 + $0x38] sm:$0xff]
    %v692 = vld [vmem:[#allocation6] sm:$0xff]
    %v693 = vld [vmem:[#allocation6 + $0x8] sm:$0xff]
    %v694 = vld [vmem:[#allocation6 + $0x10] sm:$0xff]
    %v695 = vld [vmem:[#allocation6 + $0x18] sm:$0xff]
    %v696 = vld [vmem:[#allocation8] sm:$0xff]
    %v697 = vld [vmem:[#allocation8 + $0x8] sm:$0xff]
    %v698 = vld [vmem:[#allocation8 + $0x10] sm:$0xff]
    %v699 = vld [vmem:[#allocation8 + $0x18] sm:$0xff]
    %v700 = vld [vmem:[%s6] sm:$0x1]
    %v702 = vlaneseq
    %v703 = vshrl.u32 %v702, 7
    %v704 = vsub.s32 0, %v703
    %v705 = vrot.slane %v700, %v704
    %vm707 = vcmask 261120
    %v709 = vsel %vm707, %v684, 0
    %v712 = vsel %vm707, %v685, 0
    %v715 = vsel %vm707, %v686, 0
    %v718 = vsel %vm707, %v687, 0
    %v721 = vsel %vm707, %v688, 0
    %v724 = vsel %vm707, %v689, 0
    %v727 = vsel %vm707, %v690, 0
    %v730 = vsel %vm707, %v691, 0
    %732 = vmatprep.subr.mxu0 0.0
    %733 = vmatpush1.msra.mxu0 %v692
    %734 = vmatprep.subr.mxu0 0.0
    %735 = vmatpush1.msra.mxu0 %v693
    %736 = vmatprep.subr.mxu0 0.0
    %737 = vmatpush1.msra.mxu0 %v694
    %738 = vmatprep.subr.mxu0 0.0
    %739 = vmatpush1.msra.mxu0 %v695
    %740 = vmatprep.subr.mxu0 0.0
    %741 = vmatpush1.msra.mxu0 0.0
    %742 = vmatprep.subr.mxu0 0.0
    %743 = vmatpush1.msra.mxu0 0.0
    %744 = vmatprep.subr.mxu0 0.0
    %745 = vmatpush1.msra.mxu0 0.0
    %746 = vmatprep.subr.mxu0 0.0
    %747 = vmatpush1.msra.mxu0 0.0
    %748 = vmatprep.subr.mxu0 0.0
    %749 = vmatpush1.msra.mxu0 0.0
    %750 = vmatprep.subr.mxu0 0.0
    %751 = vmatpush1.msra.mxu0 0.0
    %752 = vmatprep.subr.mxu0 0.0
    %753 = vmatpush1.msra.mxu0 0.0
    %754 = vmatprep.subr.mxu0 0.0
    %755 = vmatpush1.msra.mxu0 0.0
    %756 = vmatprep.subr.mxu0 0.0
    %757 = vmatpush1.msra.mxu0 0.0
    %758 = vmatprep.subr.mxu0 0.0
    %759 = vmatpush1.msra.mxu0 0.0
    %760 = vmatprep.subr.mxu0 0.0
    %761 = vmatpush1.msra.mxu0 0.0
    %762 = vmatprep.subr.mxu0 0.0
    %763 = vmatpush1.msra.mxu0 0.0
    %764 = vmatprep.subr.mxu0 0.0
    %765 = vmatpush1.msra.mxu0 0.0
    %766 = vmatprep.subr.mxu0 0.0
    %767 = vmatpush1.msra.mxu0 0.0
    %768 = vmatprep.subr.mxu0 0.0
    %769 = vmatpush1.msra.mxu0 0.0
    %770 = vmatprep.subr.mxu0 0.0
    %771 = vmatpush1.msra.mxu0 0.0
    %772 = vmatprep.subr.mxu0 0.0
    %773 = vmatpush1.msra.mxu0 0.0
    %774 = vmatprep.subr.mxu0 0.0
    %775 = vmatpush1.msra.mxu0 0.0
    %776 = vmatprep.subr.mxu0 0.0
    %777 = vmatpush1.msra.mxu0 0.0
    %778 = vmatprep.subr.mxu0 0.0
    %779 = vmatpush1.msra.mxu0 0.0
    %780 = vmatprep.subr.mxu0 0.0
    %781 = vmatpush1.msra.mxu0 0.0
    %782 = vmatprep.subr.mxu0 0.0
    %783 = vmatpush1.msra.mxu0 0.0
    %784 = vmatprep.subr.mxu0 0.0
    %785 = vmatpush1.msra.mxu0 0.0
    %786 = vmatprep.subr.mxu0 0.0
    %787 = vmatpush1.msra.mxu0 0.0
    %788 = vmatprep.subr.mxu0 0.0
    %789 = vmatpush1.msra.mxu0 0.0
    %790 = vmatprep.subr.mxu0 0.0
    %791 = vmatpush1.msra.mxu0 0.0
    %792 = vmatprep.subr.mxu0 0.0
    %793 = vmatpush1.msra.mxu0 0.0
    %794 = vmatprep.subr.mxu0 0.0
    %795 = vmatpush1.msra.mxu0 0.0
    %796 = vmatprep.mubr.f32.mxu0 0.0
    %797 = vmatmul.mubr.f32.gmra.mrb[0].mxu0 %v709
    %v798 = vpop.f32.mrb[0].mxu0
    %v799 = vadd.f32 %v705, %v798
    %v800 = vpop.f32.mrb[0].mxu0
    %801 = vmatprep.mubr.f32.mxu0 0.0
    %802 = vmatmul.mubr.f32.gmra.mrb[0].mxu0 %v712
    %v803 = vpop.f32.mrb[0].mxu0
    %v804 = vadd.f32 %v705, %v803
    %v805 = vpop.f32.mrb[0].mxu0
    %806 = vmatprep.mubr.f32.mxu0 0.0
    %807 = vmatmul.mubr.f32.gmra.mrb[0].mxu0 %v715
    %v808 = vpop.f32.mrb[0].mxu0
    %v809 = vadd.f32 %v705, %v808
    %v810 = vpop.f32.mrb[0].mxu0
    %811 = vmatprep.mubr.f32.mxu0 0.0
    %812 = vmatmul.mubr.f32.gmra.mrb[0].mxu0 %v718
    %v813 = vpop.f32.mrb[0].mxu0
    %v814 = vadd.f32 %v705, %v813
    %v815 = vpop.f32.mrb[0].mxu0
    %816 = vmatprep.mubr.f32.mxu0 0.0
    %817 = vmatmul.mubr.f32.gmra.mrb[0].mxu0 %v721
    %v818 = vpop.f32.mrb[0].mxu0
    %v819 = vadd.f32 %v705, %v818
    %v820 = vpop.f32.mrb[0].mxu0
    %821 = vmatprep.mubr.f32.mxu0 0.0
    %822 = vmatmul.mubr.f32.gmra.mrb[0].mxu0 %v724
    %v823 = vpop.f32.mrb[0].mxu0
    %v824 = vadd.f32 %v705, %v823
    %v825 = vpop.f32.mrb[0].mxu0
    %826 = vmatprep.mubr.f32.mxu0 0.0
    %827 = vmatmul.mubr.f32.gmra.mrb[0].mxu0 %v727
    %v828 = vpop.f32.mrb[0].mxu0
    %v829 = vadd.f32 %v705, %v828
    %v830 = vpop.f32.mrb[0].mxu0
    %831 = vmatprep.mubr.f32.mxu0 0.0
    %832 = vmatmul.mubr.f32.gmra.mrb[0].mxu0 %v730
    %v833 = vpop.f32.mrb[0].mxu0
    %v834 = vadd.f32 %v705, %v833
    %v835 = vpop.f32.mrb[0].mxu0
    %836 = vdwg.mxu0
    %838 = vrot.lane.b32.xlu0 %v799, 96
    %v839 = vpop.permute.xlu0 %838
    %v840 = vsel %vm146, %v799, 0
    %v842 = vsel %vm146, %v839, 0
    %844 = vmatprep.subr.mxu0 0.0
    %845 = vmatpush1.xpose.msra.mxu0 %v842
    %846 = vmatprep.subr.mxu0 0.0
    %847 = vmatpush1.xpose.msra.mxu0 0.0
    %848 = vmatprep.subr.mxu0 0.0
    %849 = vmatpush1.xpose.msra.mxu0 0.0
    %850 = vmatprep.subr.mxu0 0.0
    %851 = vmatpush1.xpose.msra.mxu0 0.0
    %852 = vmatprep.subr.mxu0 0.0
    %853 = vmatpush1.xpose.msra.mxu0 0.0
    %854 = vmatprep.subr.mxu0 0.0
    %855 = vmatpush1.xpose.msra.mxu0 0.0
    %856 = vmatprep.subr.mxu0 0.0
    %857 = vmatpush1.xpose.msra.mxu0 0.0
    %858 = vmatprep.subr.mxu0 0.0
    %859 = vmatpush1.xpose.msra.mxu0 0.0
    %860 = vmatprep.subr.mxu0 0.0
    %861 = vmatpush1.xpose.msra.mxu0 0.0
    %862 = vmatprep.subr.mxu0 0.0
    %863 = vmatpush1.xpose.msra.mxu0 0.0
    %864 = vmatprep.subr.mxu0 0.0
    %865 = vmatpush1.xpose.msra.mxu0 0.0
    %866 = vmatprep.subr.mxu0 0.0
    %867 = vmatpush1.xpose.msra.mxu0 0.0
    %868 = vmatprep.subr.mxu0 0.0
    %869 = vmatpush1.xpose.msra.mxu0 0.0
    %870 = vmatprep.subr.mxu0 0.0
    %871 = vmatpush1.xpose.msra.mxu0 0.0
    %872 = vmatprep.subr.mxu0 0.0
    %873 = vmatpush1.xpose.msra.mxu0 0.0
    %874 = vmatprep.subr.mxu0 0.0
    %875 = vmatpush1.xpose.msra.mxu0 0.0
    %876 = vmatprep.subr.mxu0 0.0
    %877 = vmatpush1.xpose.msra.mxu0 0.0
    %878 = vmatprep.subr.mxu0 0.0
    %879 = vmatpush1.xpose.msra.mxu0 0.0
    %880 = vmatprep.subr.mxu0 0.0
    %881 = vmatpush1.xpose.msra.mxu0 0.0
    %882 = vmatprep.subr.mxu0 0.0
    %883 = vmatpush1.xpose.msra.mxu0 0.0
    %884 = vmatprep.subr.mxu0 0.0
    %885 = vmatpush1.xpose.msra.mxu0 0.0
    %886 = vmatprep.subr.mxu0 0.0
    %887 = vmatpush1.xpose.msra.mxu0 0.0
    %888 = vmatprep.subr.mxu0 0.0
    %889 = vmatpush1.xpose.msra.mxu0 0.0
    %890 = vmatprep.subr.mxu0 0.0
    %891 = vmatpush1.xpose.msra.mxu0 0.0
    %892 = vmatprep.subr.mxu0 0.0
    %893 = vmatpush1.xpose.msra.mxu0 0.0
    %894 = vmatprep.subr.mxu0 0.0
    %895 = vmatpush1.xpose.msra.mxu0 0.0
    %896 = vmatprep.subr.mxu0 0.0
    %897 = vmatpush1.xpose.msra.mxu0 0.0
    %898 = vmatprep.subr.mxu0 0.0
    %899 = vmatpush1.xpose.msra.mxu0 0.0
    %900 = vmatprep.subr.mxu0 0.0
    %901 = vmatpush1.xpose.msra.mxu0 0.0
    %902 = vmatprep.subr.mxu0 0.0
    %903 = vmatpush1.xpose.msra.mxu0 0.0
    %904 = vmatprep.subr.mxu0 0.0
    %905 = vmatpush1.xpose.msra.mxu0 0.0
    %906 = vmatprep.subr.mxu0 0.0
    %907 = vmatpush1.xpose.msra.mxu0 0.0
    %908 = vmatprep.mubr.f32.mxu0 0.0
    %909 = vmatmul.mubr.f32.gmra.mrb[0].mxu0 %v840
    %v910 = vpop.f32.mrb[0].mxu0
    %v911 = vadd.f32 0.0, %v910
    %v912 = vpop.f32.mrb[0].mxu0
    %913 = vdwg.mxu0
    %915 = vrot.lane.b32.xlu0 %v804, 96
    %v916 = vpop.permute.xlu0 %915
    %v917 = vsel %vm146, %v804, 0
    %v919 = vsel %vm146, %v916, 0
    %921 = vmatprep.subr.mxu0 0.0
    %922 = vmatpush1.xpose.msra.mxu0 %v919
    %923 = vmatprep.subr.mxu0 0.0
    %924 = vmatpush1.xpose.msra.mxu0 0.0
    %925 = vmatprep.subr.mxu0 0.0
    %926 = vmatpush1.xpose.msra.mxu0 0.0
    %927 = vmatprep.subr.mxu0 0.0
    %928 = vmatpush1.xpose.msra.mxu0 0.0
    %929 = vmatprep.subr.mxu0 0.0
    %930 = vmatpush1.xpose.msra.mxu0 0.0
    %931 = vmatprep.subr.mxu0 0.0
    %932 = vmatpush1.xpose.msra.mxu0 0.0
    %933 = vmatprep.subr.mxu0 0.0
    %934 = vmatpush1.xpose.msra.mxu0 0.0
    %935 = vmatprep.subr.mxu0 0.0
    %936 = vmatpush1.xpose.msra.mxu0 0.0
    %937 = vmatprep.subr.mxu0 0.0
    %938 = vmatpush1.xpose.msra.mxu0 0.0
    %939 = vmatprep.subr.mxu0 0.0
    %940 = vmatpush1.xpose.msra.mxu0 0.0
    %941 = vmatprep.subr.mxu0 0.0
    %942 = vmatpush1.xpose.msra.mxu0 0.0
    %943 = vmatprep.subr.mxu0 0.0
    %944 = vmatpush1.xpose.msra.mxu0 0.0
    %945 = vmatprep.subr.mxu0 0.0
    %946 = vmatpush1.xpose.msra.mxu0 0.0
    %947 = vmatprep.subr.mxu0 0.0
    %948 = vmatpush1.xpose.msra.mxu0 0.0
    %949 = vmatprep.subr.mxu0 0.0
    %950 = vmatpush1.xpose.msra.mxu0 0.0
    %951 = vmatprep.subr.mxu0 0.0
    %952 = vmatpush1.xpose.msra.mxu0 0.0
    %953 = vmatprep.subr.mxu0 0.0
    %954 = vmatpush1.xpose.msra.mxu0 0.0
    %955 = vmatprep.subr.mxu0 0.0
    %956 = vmatpush1.xpose.msra.mxu0 0.0
    %957 = vmatprep.subr.mxu0 0.0
    %958 = vmatpush1.xpose.msra.mxu0 0.0
    %959 = vmatprep.subr.mxu0 0.0
    %960 = vmatpush1.xpose.msra.mxu0 0.0
    %961 = vmatprep.subr.mxu0 0.0
    %962 = vmatpush1.xpose.msra.mxu0 0.0
    %963 = vmatprep.subr.mxu0 0.0
    %964 = vmatpush1.xpose.msra.mxu0 0.0
    %965 = vmatprep.subr.mxu0 0.0
    %966 = vmatpush1.xpose.msra.mxu0 0.0
    %967 = vmatprep.subr.mxu0 0.0
    %968 = vmatpush1.xpose.msra.mxu0 0.0
    %969 = vmatprep.subr.mxu0 0.0
    %970 = vmatpush1.xpose.msra.mxu0 0.0
    %971 = vmatprep.subr.mxu0 0.0
    %972 = vmatpush1.xpose.msra.mxu0 0.0
    %973 = vmatprep.subr.mxu0 0.0
    %974 = vmatpush1.xpose.msra.mxu0 0.0
    %975 = vmatprep.subr.mxu0 0.0
    %976 = vmatpush1.xpose.msra.mxu0 0.0
    %977 = vmatprep.subr.mxu0 0.0
    %978 = vmatpush1.xpose.msra.mxu0 0.0
    %979 = vmatprep.subr.mxu0 0.0
    %980 = vmatpush1.xpose.msra.mxu0 0.0
    %981 = vmatprep.subr.mxu0 0.0
    %982 = vmatpush1.xpose.msra.mxu0 0.0
    %983 = vmatprep.subr.mxu0 0.0
    %984 = vmatpush1.xpose.msra.mxu0 0.0
    %985 = vmatprep.mubr.f32.mxu0 0.0
    %986 = vmatmul.mubr.f32.gmra.mrb[0].mxu0 %v917
    %v987 = vpop.f32.mrb[0].mxu0
    %v988 = vadd.f32 0.0, %v987
    %v989 = vpop.f32.mrb[0].mxu0
    %990 = vdwg.mxu0
    %992 = vrot.lane.b32.xlu0 %v809, 96
    %v993 = vpop.permute.xlu0 %992
    %v994 = vsel %vm146, %v809, 0
    %v996 = vsel %vm146, %v993, 0
    %998 = vmatprep.subr.mxu0 0.0
    %999 = vmatpush1.xpose.msra.mxu0 %v996
    %1000 = vmatprep.subr.mxu0 0.0
    %1001 = vmatpush1.xpose.msra.mxu0 0.0
    %1002 = vmatprep.subr.mxu0 0.0
    %1003 = vmatpush1.xpose.msra.mxu0 0.0
    %1004 = vmatprep.subr.mxu0 0.0
    %1005 = vmatpush1.xpose.msra.mxu0 0.0
    %1006 = vmatprep.subr.mxu0 0.0
    %1007 = vmatpush1.xpose.msra.mxu0 0.0
    %1008 = vmatprep.subr.mxu0 0.0
    %1009 = vmatpush1.xpose.msra.mxu0 0.0
    %1010 = vmatprep.subr.mxu0 0.0
    %1011 = vmatpush1.xpose.msra.mxu0 0.0
    %1012 = vmatprep.subr.mxu0 0.0
    %1013 = vmatpush1.xpose.msra.mxu0 0.0
    %1014 = vmatprep.subr.mxu0 0.0
    %1015 = vmatpush1.xpose.msra.mxu0 0.0
    %1016 = vmatprep.subr.mxu0 0.0
    %1017 = vmatpush1.xpose.msra.mxu0 0.0
    %1018 = vmatprep.subr.mxu0 0.0
    %1019 = vmatpush1.xpose.msra.mxu0 0.0
    %1020 = vmatprep.subr.mxu0 0.0
    %1021 = vmatpush1.xpose.msra.mxu0 0.0
    %1022 = vmatprep.subr.mxu0 0.0
    %1023 = vmatpush1.xpose.msra.mxu0 0.0
    %1024 = vmatprep.subr.mxu0 0.0
    %1025 = vmatpush1.xpose.msra.mxu0 0.0
    %1026 = vmatprep.subr.mxu0 0.0
    %1027 = vmatpush1.xpose.msra.mxu0 0.0
    %1028 = vmatprep.subr.mxu0 0.0
    %1029 = vmatpush1.xpose.msra.mxu0 0.0
    %1030 = vmatprep.subr.mxu0 0.0
    %1031 = vmatpush1.xpose.msra.mxu0 0.0
    %1032 = vmatprep.subr.mxu0 0.0
    %1033 = vmatpush1.xpose.msra.mxu0 0.0
    %1034 = vmatprep.subr.mxu0 0.0
    %1035 = vmatpush1.xpose.msra.mxu0 0.0
    %1036 = vmatprep.subr.mxu0 0.0
    %1037 = vmatpush1.xpose.msra.mxu0 0.0
    %1038 = vmatprep.subr.mxu0 0.0
    %1039 = vmatpush1.xpose.msra.mxu0 0.0
    %1040 = vmatprep.subr.mxu0 0.0
    %1041 = vmatpush1.xpose.msra.mxu0 0.0
    %1042 = vmatprep.subr.mxu0 0.0
    %1043 = vmatpush1.xpose.msra.mxu0 0.0
    %1044 = vmatprep.subr.mxu0 0.0
    %1045 = vmatpush1.xpose.msra.mxu0 0.0
    %1046 = vmatprep.subr.mxu0 0.0
    %1047 = vmatpush1.xpose.msra.mxu0 0.0
    %1048 = vmatprep.subr.mxu0 0.0
    %1049 = vmatpush1.xpose.msra.mxu0 0.0
    %1050 = vmatprep.subr.mxu0 0.0
    %1051 = vmatpush1.xpose.msra.mxu0 0.0
    %1052 = vmatprep.subr.mxu0 0.0
    %1053 = vmatpush1.xpose.msra.mxu0 0.0
    %1054 = vmatprep.subr.mxu0 0.0
    %1055 = vmatpush1.xpose.msra.mxu0 0.0
    %1056 = vmatprep.subr.mxu0 0.0
    %1057 = vmatpush1.xpose.msra.mxu0 0.0
    %1058 = vmatprep.subr.mxu0 0.0
    %1059 = vmatpush1.xpose.msra.mxu0 0.0
    %1060 = vmatprep.subr.mxu0 0.0
    %1061 = vmatpush1.xpose.msra.mxu0 0.0
    %1062 = vmatprep.mubr.f32.mxu0 0.0
    %1063 = vmatmul.mubr.f32.gmra.mrb[0].mxu0 %v994
    %v1064 = vpop.f32.mrb[0].mxu0
    %v1065 = vadd.f32 0.0, %v1064
    %v1066 = vpop.f32.mrb[0].mxu0
    %1067 = vdwg.mxu0
    %1069 = vrot.lane.b32.xlu0 %v814, 96
    %v1070 = vpop.permute.xlu0 %1069
    %v1071 = vsel %vm146, %v814, 0
    %v1073 = vsel %vm146, %v1070, 0
    %1075 = vmatprep.subr.mxu0 0.0
    %1076 = vmatpush1.xpose.msra.mxu0 %v1073
    %1077 = vmatprep.subr.mxu0 0.0
    %1078 = vmatpush1.xpose.msra.mxu0 0.0
    %1079 = vmatprep.subr.mxu0 0.0
    %1080 = vmatpush1.xpose.msra.mxu0 0.0
    %1081 = vmatprep.subr.mxu0 0.0
    %1082 = vmatpush1.xpose.msra.mxu0 0.0
    %1083 = vmatprep.subr.mxu0 0.0
    %1084 = vmatpush1.xpose.msra.mxu0 0.0
    %1085 = vmatprep.subr.mxu0 0.0
    %1086 = vmatpush1.xpose.msra.mxu0 0.0
    %1087 = vmatprep.subr.mxu0 0.0
    %1088 = vmatpush1.xpose.msra.mxu0 0.0
    %1089 = vmatprep.subr.mxu0 0.0
    %1090 = vmatpush1.xpose.msra.mxu0 0.0
    %1091 = vmatprep.subr.mxu0 0.0
    %1092 = vmatpush1.xpose.msra.mxu0 0.0
    %1093 = vmatprep.subr.mxu0 0.0
    %1094 = vmatpush1.xpose.msra.mxu0 0.0
    %1095 = vmatprep.subr.mxu0 0.0
    %1096 = vmatpush1.xpose.msra.mxu0 0.0
    %1097 = vmatprep.subr.mxu0 0.0
    %1098 = vmatpush1.xpose.msra.mxu0 0.0
    %1099 = vmatprep.subr.mxu0 0.0
    %1100 = vmatpush1.xpose.msra.mxu0 0.0
    %1101 = vmatprep.subr.mxu0 0.0
    %1102 = vmatpush1.xpose.msra.mxu0 0.0
    %1103 = vmatprep.subr.mxu0 0.0
    %1104 = vmatpush1.xpose.msra.mxu0 0.0
    %1105 = vmatprep.subr.mxu0 0.0
    %1106 = vmatpush1.xpose.msra.mxu0 0.0
    %1107 = vmatprep.subr.mxu0 0.0
    %1108 = vmatpush1.xpose.msra.mxu0 0.0
    %1109 = vmatprep.subr.mxu0 0.0
    %1110 = vmatpush1.xpose.msra.mxu0 0.0
    %1111 = vmatprep.subr.mxu0 0.0
    %1112 = vmatpush1.xpose.msra.mxu0 0.0
    %1113 = vmatprep.subr.mxu0 0.0
    %1114 = vmatpush1.xpose.msra.mxu0 0.0
    %1115 = vmatprep.subr.mxu0 0.0
    %1116 = vmatpush1.xpose.msra.mxu0 0.0
    %1117 = vmatprep.subr.mxu0 0.0
    %1118 = vmatpush1.xpose.msra.mxu0 0.0
    %1119 = vmatprep.subr.mxu0 0.0
    %1120 = vmatpush1.xpose.msra.mxu0 0.0
    %1121 = vmatprep.subr.mxu0 0.0
    %1122 = vmatpush1.xpose.msra.mxu0 0.0
    %1123 = vmatprep.subr.mxu0 0.0
    %1124 = vmatpush1.xpose.msra.mxu0 0.0
    %1125 = vmatprep.subr.mxu0 0.0
    %1126 = vmatpush1.xpose.msra.mxu0 0.0
    %1127 = vmatprep.subr.mxu0 0.0
    %1128 = vmatpush1.xpose.msra.mxu0 0.0
    %1129 = vmatprep.subr.mxu0 0.0
    %1130 = vmatpush1.xpose.msra.mxu0 0.0
    %1131 = vmatprep.subr.mxu0 0.0
    %1132 = vmatpush1.xpose.msra.mxu0 0.0
    %1133 = vmatprep.subr.mxu0 0.0
    %1134 = vmatpush1.xpose.msra.mxu0 0.0
    %1135 = vmatprep.subr.mxu0 0.0
    %1136 = vmatpush1.xpose.msra.mxu0 0.0
    %1137 = vmatprep.subr.mxu0 0.0
    %1138 = vmatpush1.xpose.msra.mxu0 0.0
    %1139 = vmatprep.mubr.f32.mxu0 0.0
    %1140 = vmatmul.mubr.f32.gmra.mrb[0].mxu0 %v1071
    %v1141 = vpop.f32.mrb[0].mxu0
    %v1142 = vadd.f32 0.0, %v1141
    %v1143 = vpop.f32.mrb[0].mxu0
    %1144 = vdwg.mxu0
    %1146 = vrot.lane.b32.xlu0 %v819, 96
    %v1147 = vpop.permute.xlu0 %1146
    %v1148 = vsel %vm146, %v819, 0
    %v1150 = vsel %vm146, %v1147, 0
    %1152 = vmatprep.subr.mxu0 0.0
    %1153 = vmatpush1.xpose.msra.mxu0 %v1150
    %1154 = vmatprep.subr.mxu0 0.0
    %1155 = vmatpush1.xpose.msra.mxu0 0.0
    %1156 = vmatprep.subr.mxu0 0.0
    %1157 = vmatpush1.xpose.msra.mxu0 0.0
    %1158 = vmatprep.subr.mxu0 0.0
    %1159 = vmatpush1.xpose.msra.mxu0 0.0
    %1160 = vmatprep.subr.mxu0 0.0
    %1161 = vmatpush1.xpose.msra.mxu0 0.0
    %1162 = vmatprep.subr.mxu0 0.0
    %1163 = vmatpush1.xpose.msra.mxu0 0.0
    %1164 = vmatprep.subr.mxu0 0.0
    %1165 = vmatpush1.xpose.msra.mxu0 0.0
    %1166 = vmatprep.subr.mxu0 0.0
    %1167 = vmatpush1.xpose.msra.mxu0 0.0
    %1168 = vmatprep.subr.mxu0 0.0
    %1169 = vmatpush1.xpose.msra.mxu0 0.0
    %1170 = vmatprep.subr.mxu0 0.0
    %1171 = vmatpush1.xpose.msra.mxu0 0.0
    %1172 = vmatprep.subr.mxu0 0.0
    %1173 = vmatpush1.xpose.msra.mxu0 0.0
    %1174 = vmatprep.subr.mxu0 0.0
    %1175 = vmatpush1.xpose.msra.mxu0 0.0
    %1176 = vmatprep.subr.mxu0 0.0
    %1177 = vmatpush1.xpose.msra.mxu0 0.0
    %1178 = vmatprep.subr.mxu0 0.0
    %1179 = vmatpush1.xpose.msra.mxu0 0.0
    %1180 = vmatprep.subr.mxu0 0.0
    %1181 = vmatpush1.xpose.msra.mxu0 0.0
    %1182 = vmatprep.subr.mxu0 0.0
    %1183 = vmatpush1.xpose.msra.mxu0 0.0
    %1184 = vmatprep.subr.mxu0 0.0
    %1185 = vmatpush1.xpose.msra.mxu0 0.0
    %1186 = vmatprep.subr.mxu0 0.0
    %1187 = vmatpush1.xpose.msra.mxu0 0.0
    %1188 = vmatprep.subr.mxu0 0.0
    %1189 = vmatpush1.xpose.msra.mxu0 0.0
    %1190 = vmatprep.subr.mxu0 0.0
    %1191 = vmatpush1.xpose.msra.mxu0 0.0
    %1192 = vmatprep.subr.mxu0 0.0
    %1193 = vmatpush1.xpose.msra.mxu0 0.0
    %1194 = vmatprep.subr.mxu0 0.0
    %1195 = vmatpush1.xpose.msra.mxu0 0.0
    %1196 = vmatprep.subr.mxu0 0.0
    %1197 = vmatpush1.xpose.msra.mxu0 0.0
    %1198 = vmatprep.subr.mxu0 0.0
    %1199 = vmatpush1.xpose.msra.mxu0 0.0
    %1200 = vmatprep.subr.mxu0 0.0
    %1201 = vmatpush1.xpose.msra.mxu0 0.0
    %1202 = vmatprep.subr.mxu0 0.0
    %1203 = vmatpush1.xpose.msra.mxu0 0.0
    %1204 = vmatprep.subr.mxu0 0.0
    %1205 = vmatpush1.xpose.msra.mxu0 0.0
    %1206 = vmatprep.subr.mxu0 0.0
    %1207 = vmatpush1.xpose.msra.mxu0 0.0
    %1208 = vmatprep.subr.mxu0 0.0
    %1209 = vmatpush1.xpose.msra.mxu0 0.0
    %1210 = vmatprep.subr.mxu0 0.0
    %1211 = vmatpush1.xpose.msra.mxu0 0.0
    %1212 = vmatprep.subr.mxu0 0.0
    %1213 = vmatpush1.xpose.msra.mxu0 0.0
    %1214 = vmatprep.subr.mxu0 0.0
    %1215 = vmatpush1.xpose.msra.mxu0 0.0
    %1216 = vmatprep.mubr.f32.mxu0 0.0
    %1217 = vmatmul.mubr.f32.gmra.mrb[0].mxu0 %v1148
    %v1218 = vpop.f32.mrb[0].mxu0
    %v1219 = vadd.f32 0.0, %v1218
    %v1220 = vpop.f32.mrb[0].mxu0
    %1221 = vdwg.mxu0
    %1223 = vrot.lane.b32.xlu0 %v824, 96
    %v1224 = vpop.permute.xlu0 %1223
    %v1225 = vsel %vm146, %v824, 0
    %v1227 = vsel %vm146, %v1224, 0
    %1229 = vmatprep.subr.mxu0 0.0
    %1230 = vmatpush1.xpose.msra.mxu0 %v1227
    %1231 = vmatprep.subr.mxu0 0.0
    %1232 = vmatpush1.xpose.msra.mxu0 0.0
    %1233 = vmatprep.subr.mxu0 0.0
    %1234 = vmatpush1.xpose.msra.mxu0 0.0
    %1235 = vmatprep.subr.mxu0 0.0
    %1236 = vmatpush1.xpose.msra.mxu0 0.0
    %1237 = vmatprep.subr.mxu0 0.0
    %1238 = vmatpush1.xpose.msra.mxu0 0.0
    %1239 = vmatprep.subr.mxu0 0.0
    %1240 = vmatpush1.xpose.msra.mxu0 0.0
    %1241 = vmatprep.subr.mxu0 0.0
    %1242 = vmatpush1.xpose.msra.mxu0 0.0
    %1243 = vmatprep.subr.mxu0 0.0
    %1244 = vmatpush1.xpose.msra.mxu0 0.0
    %1245 = vmatprep.subr.mxu0 0.0
    %1246 = vmatpush1.xpose.msra.mxu0 0.0
    %1247 = vmatprep.subr.mxu0 0.0
    %1248 = vmatpush1.xpose.msra.mxu0 0.0
    %1249 = vmatprep.subr.mxu0 0.0
    %1250 = vmatpush1.xpose.msra.mxu0 0.0
    %1251 = vmatprep.subr.mxu0 0.0
    %1252 = vmatpush1.xpose.msra.mxu0 0.0
    %1253 = vmatprep.subr.mxu0 0.0
    %1254 = vmatpush1.xpose.msra.mxu0 0.0
    %1255 = vmatprep.subr.mxu0 0.0
    %1256 = vmatpush1.xpose.msra.mxu0 0.0
    %1257 = vmatprep.subr.mxu0 0.0
    %1258 = vmatpush1.xpose.msra.mxu0 0.0
    %1259 = vmatprep.subr.mxu0 0.0
    %1260 = vmatpush1.xpose.msra.mxu0 0.0
    %1261 = vmatprep.subr.mxu0 0.0
    %1262 = vmatpush1.xpose.msra.mxu0 0.0
    %1263 = vmatprep.subr.mxu0 0.0
    %1264 = vmatpush1.xpose.msra.mxu0 0.0
    %1265 = vmatprep.subr.mxu0 0.0
    %1266 = vmatpush1.xpose.msra.mxu0 0.0
    %1267 = vmatprep.subr.mxu0 0.0
    %1268 = vmatpush1.xpose.msra.mxu0 0.0
    %1269 = vmatprep.subr.mxu0 0.0
    %1270 = vmatpush1.xpose.msra.mxu0 0.0
    %1271 = vmatprep.subr.mxu0 0.0
    %1272 = vmatpush1.xpose.msra.mxu0 0.0
    %1273 = vmatprep.subr.mxu0 0.0
    %1274 = vmatpush1.xpose.msra.mxu0 0.0
    %1275 = vmatprep.subr.mxu0 0.0
    %1276 = vmatpush1.xpose.msra.mxu0 0.0
    %1277 = vmatprep.subr.mxu0 0.0
    %1278 = vmatpush1.xpose.msra.mxu0 0.0
    %1279 = vmatprep.subr.mxu0 0.0
    %1280 = vmatpush1.xpose.msra.mxu0 0.0
    %1281 = vmatprep.subr.mxu0 0.0
    %1282 = vmatpush1.xpose.msra.mxu0 0.0
    %1283 = vmatprep.subr.mxu0 0.0
    %1284 = vmatpush1.xpose.msra.mxu0 0.0
    %1285 = vmatprep.subr.mxu0 0.0
    %1286 = vmatpush1.xpose.msra.mxu0 0.0
    %1287 = vmatprep.subr.mxu0 0.0
    %1288 = vmatpush1.xpose.msra.mxu0 0.0
    %1289 = vmatprep.subr.mxu0 0.0
    %1290 = vmatpush1.xpose.msra.mxu0 0.0
    %1291 = vmatprep.subr.mxu0 0.0
    %1292 = vmatpush1.xpose.msra.mxu0 0.0
    %1293 = vmatprep.mubr.f32.mxu0 0.0
    %1294 = vmatmul.mubr.f32.gmra.mrb[0].mxu0 %v1225
    %v1295 = vpop.f32.mrb[0].mxu0
    %v1296 = vadd.f32 0.0, %v1295
    %v1297 = vpop.f32.mrb[0].mxu0
    %1298 = vdwg.mxu0
    %1300 = vrot.lane.b32.xlu0 %v829, 96
    %v1301 = vpop.permute.xlu0 %1300
    %v1302 = vsel %vm146, %v829, 0
    %v1304 = vsel %vm146, %v1301, 0
    %1306 = vmatprep.subr.mxu0 0.0
    %1307 = vmatpush1.xpose.msra.mxu0 %v1304
    %1308 = vmatprep.subr.mxu0 0.0
    %1309 = vmatpush1.xpose.msra.mxu0 0.0
    %1310 = vmatprep.subr.mxu0 0.0
    %1311 = vmatpush1.xpose.msra.mxu0 0.0
    %1312 = vmatprep.subr.mxu0 0.0
    %1313 = vmatpush1.xpose.msra.mxu0 0.0
    %1314 = vmatprep.subr.mxu0 0.0
    %1315 = vmatpush1.xpose.msra.mxu0 0.0
    %1316 = vmatprep.subr.mxu0 0.0
    %1317 = vmatpush1.xpose.msra.mxu0 0.0
    %1318 = vmatprep.subr.mxu0 0.0
    %1319 = vmatpush1.xpose.msra.mxu0 0.0
    %1320 = vmatprep.subr.mxu0 0.0
    %1321 = vmatpush1.xpose.msra.mxu0 0.0
    %1322 = vmatprep.subr.mxu0 0.0
    %1323 = vmatpush1.xpose.msra.mxu0 0.0
    %1324 = vmatprep.subr.mxu0 0.0
    %1325 = vmatpush1.xpose.msra.mxu0 0.0
    %1326 = vmatprep.subr.mxu0 0.0
    %1327 = vmatpush1.xpose.msra.mxu0 0.0
    %1328 = vmatprep.subr.mxu0 0.0
    %1329 = vmatpush1.xpose.msra.mxu0 0.0
    %1330 = vmatprep.subr.mxu0 0.0
    %1331 = vmatpush1.xpose.msra.mxu0 0.0
    %1332 = vmatprep.subr.mxu0 0.0
    %1333 = vmatpush1.xpose.msra.mxu0 0.0
    %1334 = vmatprep.subr.mxu0 0.0
    %1335 = vmatpush1.xpose.msra.mxu0 0.0
    %1336 = vmatprep.subr.mxu0 0.0
    %1337 = vmatpush1.xpose.msra.mxu0 0.0
    %1338 = vmatprep.subr.mxu0 0.0
    %1339 = vmatpush1.xpose.msra.mxu0 0.0
    %1340 = vmatprep.subr.mxu0 0.0
    %1341 = vmatpush1.xpose.msra.mxu0 0.0
    %1342 = vmatprep.subr.mxu0 0.0
    %1343 = vmatpush1.xpose.msra.mxu0 0.0
    %1344 = vmatprep.subr.mxu0 0.0
    %1345 = vmatpush1.xpose.msra.mxu0 0.0
    %1346 = vmatprep.subr.mxu0 0.0
    %1347 = vmatpush1.xpose.msra.mxu0 0.0
    %1348 = vmatprep.subr.mxu0 0.0
    %1349 = vmatpush1.xpose.msra.mxu0 0.0
    %1350 = vmatprep.subr.mxu0 0.0
    %1351 = vmatpush1.xpose.msra.mxu0 0.0
    %1352 = vmatprep.subr.mxu0 0.0
    %1353 = vmatpush1.xpose.msra.mxu0 0.0
    %1354 = vmatprep.subr.mxu0 0.0
    %1355 = vmatpush1.xpose.msra.mxu0 0.0
    %1356 = vmatprep.subr.mxu0 0.0
    %1357 = vmatpush1.xpose.msra.mxu0 0.0
    %1358 = vmatprep.subr.mxu0 0.0
    %1359 = vmatpush1.xpose.msra.mxu0 0.0
    %1360 = vmatprep.subr.mxu0 0.0
    %1361 = vmatpush1.xpose.msra.mxu0 0.0
    %1362 = vmatprep.subr.mxu0 0.0
    %1363 = vmatpush1.xpose.msra.mxu0 0.0
    %1364 = vmatprep.subr.mxu0 0.0
    %1365 = vmatpush1.xpose.msra.mxu0 0.0
    %1366 = vmatprep.subr.mxu0 0.0
    %1367 = vmatpush1.xpose.msra.mxu0 0.0
    %1368 = vmatprep.subr.mxu0 0.0
    %1369 = vmatpush1.xpose.msra.mxu0 0.0
    %1370 = vmatprep.mubr.f32.mxu0 0.0
    %1371 = vmatmul.mubr.f32.gmra.mrb[0].mxu0 %v1302
    %v1372 = vpop.f32.mrb[0].mxu0
    %v1373 = vadd.f32 0.0, %v1372
    %v1374 = vpop.f32.mrb[0].mxu0
    %1375 = vdwg.mxu0
    %1377 = vrot.lane.b32.xlu0 %v834, 96
    %v1378 = vpop.permute.xlu0 %1377
    %v1379 = vsel %vm146, %v834, 0
    %v1381 = vsel %vm146, %v1378, 0
    %1383 = vmatprep.subr.mxu0 0.0
    %1384 = vmatpush1.xpose.msra.mxu0 %v1381
    %1385 = vmatprep.subr.mxu0 0.0
    %1386 = vmatpush1.xpose.msra.mxu0 0.0
    %1387 = vmatprep.subr.mxu0 0.0
    %1388 = vmatpush1.xpose.msra.mxu0 0.0
    %1389 = vmatprep.subr.mxu0 0.0
    %1390 = vmatpush1.xpose.msra.mxu0 0.0
    %1391 = vmatprep.subr.mxu0 0.0
    %1392 = vmatpush1.xpose.msra.mxu0 0.0
    %1393 = vmatprep.subr.mxu0 0.0
    %1394 = vmatpush1.xpose.msra.mxu0 0.0
    %1395 = vmatprep.subr.mxu0 0.0
    %1396 = vmatpush1.xpose.msra.mxu0 0.0
    %1397 = vmatprep.subr.mxu0 0.0
    %1398 = vmatpush1.xpose.msra.mxu0 0.0
    %1399 = vmatprep.subr.mxu0 0.0
    %1400 = vmatpush1.xpose.msra.mxu0 0.0
    %1401 = vmatprep.subr.mxu0 0.0
    %1402 = vmatpush1.xpose.msra.mxu0 0.0
    %1403 = vmatprep.subr.mxu0 0.0
    %1404 = vmatpush1.xpose.msra.mxu0 0.0
    %1405 = vmatprep.subr.mxu0 0.0
    %1406 = vmatpush1.xpose.msra.mxu0 0.0
    %1407 = vmatprep.subr.mxu0 0.0
    %1408 = vmatpush1.xpose.msra.mxu0 0.0
    %1409 = vmatprep.subr.mxu0 0.0
    %1410 = vmatpush1.xpose.msra.mxu0 0.0
    %1411 = vmatprep.subr.mxu0 0.0
    %1412 = vmatpush1.xpose.msra.mxu0 0.0
    %1413 = vmatprep.subr.mxu0 0.0
    %1414 = vmatpush1.xpose.msra.mxu0 0.0
    %1415 = vmatprep.subr.mxu0 0.0
    %1416 = vmatpush1.xpose.msra.mxu0 0.0
    %1417 = vmatprep.subr.mxu0 0.0
    %1418 = vmatpush1.xpose.msra.mxu0 0.0
    %1419 = vmatprep.subr.mxu0 0.0
    %1420 = vmatpush1.xpose.msra.mxu0 0.0
    %1421 = vmatprep.subr.mxu0 0.0
    %1422 = vmatpush1.xpose.msra.mxu0 0.0
    %1423 = vmatprep.subr.mxu0 0.0
    %1424 = vmatpush1.xpose.msra.mxu0 0.0
    %1425 = vmatprep.subr.mxu0 0.0
    %1426 = vmatpush1.xpose.msra.mxu0 0.0
    %1427 = vmatprep.subr.mxu0 0.0
    %1428 = vmatpush1.xpose.msra.mxu0 0.0
    %1429 = vmatprep.subr.mxu0 0.0
    %1430 = vmatpush1.xpose.msra.mxu0 0.0
    %1431 = vmatprep.subr.mxu0 0.0
    %1432 = vmatpush1.xpose.msra.mxu0 0.0
    %1433 = vmatprep.subr.mxu0 0.0
    %1434 = vmatpush1.xpose.msra.mxu0 0.0
    %1435 = vmatprep.subr.mxu0 0.0
    %1436 = vmatpush1.xpose.msra.mxu0 0.0
    %1437 = vmatprep.subr.mxu0 0.0
    %1438 = vmatpush1.xpose.msra.mxu0 0.0
    %1439 = vmatprep.subr.mxu0 0.0
    %1440 = vmatpush1.xpose.msra.mxu0 0.0
    %1441 = vmatprep.subr.mxu0 0.0
    %1442 = vmatpush1.xpose.msra.mxu0 0.0
    %1443 = vmatprep.subr.mxu0 0.0
    %1444 = vmatpush1.xpose.msra.mxu0 0.0
    %1445 = vmatprep.subr.mxu0 0.0
    %1446 = vmatpush1.xpose.msra.mxu0 0.0
    %1447 = vmatprep.mubr.f32.mxu0 0.0
    %1448 = vmatmul.mubr.f32.gmra.mrb[0].mxu0 %v1379
    %v1449 = vpop.f32.mrb[0].mxu0
    %v1450 = vadd.f32 0.0, %v1449
    %v1451 = vpop.f32.mrb[0].mxu0
    %1452 = vdwg.mxu0
    %v1453 = vmul.f32 %v911, 0.25
    %v1454 = vmul.f32 %v988, 0.25
    %v1455 = vmul.f32 %v1065, 0.25
    %v1456 = vmul.f32 %v1142, 0.25
    %v1457 = vmul.f32 %v1219, 0.25
    %v1458 = vmul.f32 %v1296, 0.25
    %v1459 = vmul.f32 %v1373, 0.25
    %v1460 = vmul.f32 %v1450, 0.25
    %vm1461 = vcmask 64512
    %v1462 = vsel %vm1461, %v1453, -inf
    %1463 = vmax.xlane.f32.xlu0 %v1462
    %v1464 = vpop.xlane.xlu0 %1463
    %v1465 = vsel %vm1461, %v1454, -inf
    %1466 = vmax.xlane.f32.xlu0 %v1465
    %v1467 = vpop.xlane.xlu0 %1466
    %v1468 = vsel %vm1461, %v1455, -inf
    %1469 = vmax.xlane.f32.xlu0 %v1468
    %v1470 = vpop.xlane.xlu0 %1469
    %v1471 = vsel %vm1461, %v1456, -inf
    %1472 = vmax.xlane.f32.xlu0 %v1471
    %v1473 = vpop.xlane.xlu0 %1472
    %v1474 = vsel %vm1461, %v1457, -inf
    %1475 = vmax.xlane.f32.xlu0 %v1474
    %v1476 = vpop.xlane.xlu0 %1475
    %v1477 = vsel %vm1461, %v1458, -inf
    %1478 = vmax.xlane.f32.xlu0 %v1477
    %v1479 = vpop.xlane.xlu0 %1478
    %v1480 = vsel %vm1461, %v1459, -inf
    %1481 = vmax.xlane.f32.xlu0 %v1480
    %v1482 = vpop.xlane.xlu0 %1481
    %v1483 = vsel %vm1461, %v1460, -inf
    %1484 = vmax.xlane.f32.xlu0 %v1483
    %v1485 = vpop.xlane.xlu0 %1484
    %v1486 = vsub.f32 %v1453, %v1464
    %v1487 = vsub.f32 %v1454, %v1467
    %v1488 = vsub.f32 %v1455, %v1470
    %v1489 = vsub.f32 %v1456, %v1473
    %v1490 = vsub.f32 %v1457, %v1476
    %v1491 = vsub.f32 %v1458, %v1479
    %v1492 = vsub.f32 %v1459, %v1482
    %v1493 = vsub.f32 %v1460, %v1485
    %v1494 = vmul.f32 %v1486, 1.442695
    %v1495 = vpow.pop %v1494
    %v1496 = vmul.f32 %v1487, 1.442695
    %v1497 = vpow.pop %v1496
    %v1498 = vmul.f32 %v1488, 1.442695
    %v1499 = vpow.pop %v1498
    %v1500 = vmul.f32 %v1489, 1.442695
    %v1501 = vpow.pop %v1500
    %v1502 = vmul.f32 %v1490, 1.442695
    %v1503 = vpow.pop %v1502
    %v1504 = vmul.f32 %v1491, 1.442695
    %v1505 = vpow.pop %v1504
    %v1506 = vmul.f32 %v1492, 1.442695
    %v1507 = vpow.pop %v1506
    %v1508 = vmul.f32 %v1493, 1.442695
    %v1509 = vpow.pop %v1508
    %v1510 = vsel %vm1461, %v1495, 0.0
    %1511 = vadd.xlane.f32.xlu0 %v1510
    %v1512 = vpop.xlane.xlu0 %1511
    %v1513 = vsel %vm1461, %v1497, 0.0
    %1514 = vadd.xlane.f32.xlu0 %v1513
    %v1515 = vpop.xlane.xlu0 %1514
    %v1516 = vsel %vm1461, %v1499, 0.0
    %1517 = vadd.xlane.f32.xlu0 %v1516
    %v1518 = vpop.xlane.xlu0 %1517
    %v1519 = vsel %vm1461, %v1501, 0.0
    %1520 = vadd.xlane.f32.xlu0 %v1519
    %v1521 = vpop.xlane.xlu0 %1520
    %v1522 = vsel %vm1461, %v1503, 0.0
    %1523 = vadd.xlane.f32.xlu0 %v1522
    %v1524 = vpop.xlane.xlu0 %1523
    %v1525 = vsel %vm1461, %v1505, 0.0
    %1526 = vadd.xlane.f32.xlu0 %v1525
    %v1527 = vpop.xlane.xlu0 %1526
    %v1528 = vsel %vm1461, %v1507, 0.0
    %1529 = vadd.xlane.f32.xlu0 %v1528
    %v1530 = vpop.xlane.xlu0 %1529
    %v1531 = vsel %vm1461, %v1509, 0.0
    %1532 = vadd.xlane.f32.xlu0 %v1531
    %v1533 = vpop.xlane.xlu0 %1532
    %v1534 = vrcp.pop %v1512
    %v1535 = vmul.f32 1.0, %v1534
    %v1536 = vrcp.pop %v1515
    %v1537 = vmul.f32 1.0, %v1536
    %v1538 = vrcp.pop %v1518
    %v1539 = vmul.f32 1.0, %v1538
    %v1540 = vrcp.pop %v1521
    %v1541 = vmul.f32 1.0, %v1540
    %v1542 = vrcp.pop %v1524
    %v1543 = vmul.f32 1.0, %v1542
    %v1544 = vrcp.pop %v1527
    %v1545 = vmul.f32 1.0, %v1544
    %v1546 = vrcp.pop %v1530
    %v1547 = vmul.f32 1.0, %v1546
    %v1548 = vrcp.pop %v1533
    %v1549 = vmul.f32 1.0, %v1548
    %v1550 = vmul.f32 %v1495, %v1535
    %v1551 = vmul.f32 %v1497, %v1537
    %v1552 = vmul.f32 %v1499, %v1539
    %v1553 = vmul.f32 %v1501, %v1541
    %v1554 = vmul.f32 %v1503, %v1543
    %v1555 = vmul.f32 %v1505, %v1545
    %v1556 = vmul.f32 %v1507, %v1547
    %v1557 = vmul.f32 %v1509, %v1549
    %1558 = vrot.lane.b32.xlu0 %v799, 64
    %v1559 = vpop.permute.xlu0 %1558
    %v1562 = vsel %vm1461, %v1550, 0
    %1564 = vmatprep.subr.mxu0 0.0
    %1565 = vmatpush1.msra.mxu0 %v1559
    %1566 = vmatprep.subr.mxu0 0.0
    %1567 = vmatpush1.msra.mxu0 0.0
    %1568 = vmatprep.subr.mxu0 0.0
    %1569 = vmatpush1.msra.mxu0 0.0
    %1570 = vmatprep.subr.mxu0 0.0
    %1571 = vmatpush1.msra.mxu0 0.0
    %1572 = vmatprep.subr.mxu0 0.0
    %1573 = vmatpush1.msra.mxu0 0.0
    %1574 = vmatprep.subr.mxu0 0.0
    %1575 = vmatpush1.msra.mxu0 0.0
    %1576 = vmatprep.subr.mxu0 0.0
    %1577 = vmatpush1.msra.mxu0 0.0
    %1578 = vmatprep.subr.mxu0 0.0
    %1579 = vmatpush1.msra.mxu0 0.0
    %1580 = vmatprep.subr.mxu0 0.0
    %1581 = vmatpush1.msra.mxu0 0.0
    %1582 = vmatprep.subr.mxu0 0.0
    %1583 = vmatpush1.msra.mxu0 0.0
    %1584 = vmatprep.subr.mxu0 0.0
    %1585 = vmatpush1.msra.mxu0 0.0
    %1586 = vmatprep.subr.mxu0 0.0
    %1587 = vmatpush1.msra.mxu0 0.0
    %1588 = vmatprep.subr.mxu0 0.0
    %1589 = vmatpush1.msra.mxu0 0.0
    %1590 = vmatprep.subr.mxu0 0.0
    %1591 = vmatpush1.msra.mxu0 0.0
    %1592 = vmatprep.subr.mxu0 0.0
    %1593 = vmatpush1.msra.mxu0 0.0
    %1594 = vmatprep.subr.mxu0 0.0
    %1595 = vmatpush1.msra.mxu0 0.0
    %1596 = vmatprep.subr.mxu0 0.0
    %1597 = vmatpush1.msra.mxu0 0.0
    %1598 = vmatprep.subr.mxu0 0.0
    %1599 = vmatpush1.msra.mxu0 0.0
    %1600 = vmatprep.subr.mxu0 0.0
    %1601 = vmatpush1.msra.mxu0 0.0
    %1602 = vmatprep.subr.mxu0 0.0
    %1603 = vmatpush1.msra.mxu0 0.0
    %1604 = vmatprep.subr.mxu0 0.0
    %1605 = vmatpush1.msra.mxu0 0.0
    %1606 = vmatprep.subr.mxu0 0.0
    %1607 = vmatpush1.msra.mxu0 0.0
    %1608 = vmatprep.subr.mxu0 0.0
    %1609 = vmatpush1.msra.mxu0 0.0
    %1610 = vmatprep.subr.mxu0 0.0
    %1611 = vmatpush1.msra.mxu0 0.0
    %1612 = vmatprep.subr.mxu0 0.0
    %1613 = vmatpush1.msra.mxu0 0.0
    %1614 = vmatprep.subr.mxu0 0.0
    %1615 = vmatpush1.msra.mxu0 0.0
    %1616 = vmatprep.subr.mxu0 0.0
    %1617 = vmatpush1.msra.mxu0 0.0
    %1618 = vmatprep.subr.mxu0 0.0
    %1619 = vmatpush1.msra.mxu0 0.0
    %1620 = vmatprep.subr.mxu0 0.0
    %1621 = vmatpush1.msra.mxu0 0.0
    %1622 = vmatprep.subr.mxu0 0.0
    %1623 = vmatpush1.msra.mxu0 0.0
    %1624 = vmatprep.subr.mxu0 0.0
    %1625 = vmatpush1.msra.mxu0 0.0
    %1626 = vmatprep.subr.mxu0 0.0
    %1627 = vmatpush1.msra.mxu0 0.0
    %1628 = vmatprep.mubr.f32.mxu0 0.0
    %1629 = vmatmul.mubr.f32.gmra.mrb[0].mxu0 %v1562
    %v1630 = vpop.f32.mrb[0].mxu0
    %v1631 = vadd.f32 0.0, %v1630
    %v1632 = vpop.f32.mrb[0].mxu0
    %1633 = vdwg.mxu0
    %1634 = vrot.lane.b32.xlu0 %v804, 64
    %v1635 = vpop.permute.xlu0 %1634
    %v1638 = vsel %vm1461, %v1551, 0
    %1640 = vmatprep.subr.mxu0 0.0
    %1641 = vmatpush1.msra.mxu0 %v1635
    %1642 = vmatprep.subr.mxu0 0.0
    %1643 = vmatpush1.msra.mxu0 0.0
    %1644 = vmatprep.subr.mxu0 0.0
    %1645 = vmatpush1.msra.mxu0 0.0
    %1646 = vmatprep.subr.mxu0 0.0
    %1647 = vmatpush1.msra.mxu0 0.0
    %1648 = vmatprep.subr.mxu0 0.0
    %1649 = vmatpush1.msra.mxu0 0.0
    %1650 = vmatprep.subr.mxu0 0.0
    %1651 = vmatpush1.msra.mxu0 0.0
    %1652 = vmatprep.subr.mxu0 0.0
    %1653 = vmatpush1.msra.mxu0 0.0
    %1654 = vmatprep.subr.mxu0 0.0
    %1655 = vmatpush1.msra.mxu0 0.0
    %1656 = vmatprep.subr.mxu0 0.0
    %1657 = vmatpush1.msra.mxu0 0.0
    %1658 = vmatprep.subr.mxu0 0.0
    %1659 = vmatpush1.msra.mxu0 0.0
    %1660 = vmatprep.subr.mxu0 0.0
    %1661 = vmatpush1.msra.mxu0 0.0
    %1662 = vmatprep.subr.mxu0 0.0
    %1663 = vmatpush1.msra.mxu0 0.0
    %1664 = vmatprep.subr.mxu0 0.0
    %1665 = vmatpush1.msra.mxu0 0.0
    %1666 = vmatprep.subr.mxu0 0.0
    %1667 = vmatpush1.msra.mxu0 0.0
    %1668 = vmatprep.subr.mxu0 0.0
    %1669 = vmatpush1.msra.mxu0 0.0
    %1670 = vmatprep.subr.mxu0 0.0
    %1671 = vmatpush1.msra.mxu0 0.0
    %1672 = vmatprep.subr.mxu0 0.0
    %1673 = vmatpush1.msra.mxu0 0.0
    %1674 = vmatprep.subr.mxu0 0.0
    %1675 = vmatpush1.msra.mxu0 0.0
    %1676 = vmatprep.subr.mxu0 0.0
    %1677 = vmatpush1.msra.mxu0 0.0
    %1678 = vmatprep.subr.mxu0 0.0
    %1679 = vmatpush1.msra.mxu0 0.0
    %1680 = vmatprep.subr.mxu0 0.0
    %1681 = vmatpush1.msra.mxu0 0.0
    %1682 = vmatprep.subr.mxu0 0.0
    %1683 = vmatpush1.msra.mxu0 0.0
    %1684 = vmatprep.subr.mxu0 0.0
    %1685 = vmatpush1.msra.mxu0 0.0
    %1686 = vmatprep.subr.mxu0 0.0
    %1687 = vmatpush1.msra.mxu0 0.0
    %1688 = vmatprep.subr.mxu0 0.0
    %1689 = vmatpush1.msra.mxu0 0.0
    %1690 = vmatprep.subr.mxu0 0.0
    %1691 = vmatpush1.msra.mxu0 0.0
    %1692 = vmatprep.subr.mxu0 0.0
    %1693 = vmatpush1.msra.mxu0 0.0
    %1694 = vmatprep.subr.mxu0 0.0
    %1695 = vmatpush1.msra.mxu0 0.0
    %1696 = vmatprep.subr.mxu0 0.0
    %1697 = vmatpush1.msra.mxu0 0.0
    %1698 = vmatprep.subr.mxu0 0.0
    %1699 = vmatpush1.msra.mxu0 0.0
    %1700 = vmatprep.subr.mxu0 0.0
    %1701 = vmatpush1.msra.mxu0 0.0
    %1702 = vmatprep.subr.mxu0 0.0
    %1703 = vmatpush1.msra.mxu0 0.0
    %1704 = vmatprep.mubr.f32.mxu0 0.0
    %1705 = vmatmul.mubr.f32.gmra.mrb[0].mxu0 %v1638
    %v1706 = vpop.f32.mrb[0].mxu0
    %v1707 = vadd.f32 0.0, %v1706
    %v1708 = vpop.f32.mrb[0].mxu0
    %1709 = vdwg.mxu0
    %1710 = vrot.lane.b32.xlu0 %v809, 64
    %v1711 = vpop.permute.xlu0 %1710
    %v1714 = vsel %vm1461, %v1552, 0
    %1716 = vmatprep.subr.mxu0 0.0
    %1717 = vmatpush1.msra.mxu0 %v1711
    %1718 = vmatprep.subr.mxu0 0.0
    %1719 = vmatpush1.msra.mxu0 0.0
    %1720 = vmatprep.subr.mxu0 0.0
    %1721 = vmatpush1.msra.mxu0 0.0
    %1722 = vmatprep.subr.mxu0 0.0
    %1723 = vmatpush1.msra.mxu0 0.0
    %1724 = vmatprep.subr.mxu0 0.0
    %1725 = vmatpush1.msra.mxu0 0.0
    %1726 = vmatprep.subr.mxu0 0.0
    %1727 = vmatpush1.msra.mxu0 0.0
    %1728 = vmatprep.subr.mxu0 0.0
    %1729 = vmatpush1.msra.mxu0 0.0
    %1730 = vmatprep.subr.mxu0 0.0
    %1731 = vmatpush1.msra.mxu0 0.0
    %1732 = vmatprep.subr.mxu0 0.0
    %1733 = vmatpush1.msra.mxu0 0.0
    %1734 = vmatprep.subr.mxu0 0.0
    %1735 = vmatpush1.msra.mxu0 0.0
    %1736 = vmatprep.subr.mxu0 0.0
    %1737 = vmatpush1.msra.mxu0 0.0
    %1738 = vmatprep.subr.mxu0 0.0
    %1739 = vmatpush1.msra.mxu0 0.0
    %1740 = vmatprep.subr.mxu0 0.0
    %1741 = vmatpush1.msra.mxu0 0.0
    %1742 = vmatprep.subr.mxu0 0.0
    %1743 = vmatpush1.msra.mxu0 0.0
    %1744 = vmatprep.subr.mxu0 0.0
    %1745 = vmatpush1.msra.mxu0 0.0
    %1746 = vmatprep.subr.mxu0 0.0
    %1747 = vmatpush1.msra.mxu0 0.0
    %1748 = vmatprep.subr.mxu0 0.0
    %1749 = vmatpush1.msra.mxu0 0.0
    %1750 = vmatprep.subr.mxu0 0.0
    %1751 = vmatpush1.msra.mxu0 0.0
    %1752 = vmatprep.subr.mxu0 0.0
    %1753 = vmatpush1.msra.mxu0 0.0
    %1754 = vmatprep.subr.mxu0 0.0
    %1755 = vmatpush1.msra.mxu0 0.0
    %1756 = vmatprep.subr.mxu0 0.0
    %1757 = vmatpush1.msra.mxu0 0.0
    %1758 = vmatprep.subr.mxu0 0.0
    %1759 = vmatpush1.msra.mxu0 0.0
    %1760 = vmatprep.subr.mxu0 0.0
    %1761 = vmatpush1.msra.mxu0 0.0
    %1762 = vmatprep.subr.mxu0 0.0
    %1763 = vmatpush1.msra.mxu0 0.0
    %1764 = vmatprep.subr.mxu0 0.0
    %1765 = vmatpush1.msra.mxu0 0.0
    %1766 = vmatprep.subr.mxu0 0.0
    %1767 = vmatpush1.msra.mxu0 0.0
    %1768 = vmatprep.subr.mxu0 0.0
    %1769 = vmatpush1.msra.mxu0 0.0
    %1770 = vmatprep.subr.mxu0 0.0
    %1771 = vmatpush1.msra.mxu0 0.0
    %1772 = vmatprep.subr.mxu0 0.0
    %1773 = vmatpush1.msra.mxu0 0.0
    %1774 = vmatprep.subr.mxu0 0.0
    %1775 = vmatpush1.msra.mxu0 0.0
    %1776 = vmatprep.subr.mxu0 0.0
    %1777 = vmatpush1.msra.mxu0 0.0
    %1778 = vmatprep.subr.mxu0 0.0
    %1779 = vmatpush1.msra.mxu0 0.0
    %1780 = vmatprep.mubr.f32.mxu0 0.0
    %1781 = vmatmul.mubr.f32.gmra.mrb[0].mxu0 %v1714
    %v1782 = vpop.f32.mrb[0].mxu0
    %v1783 = vadd.f32 0.0, %v1782
    %v1784 = vpop.f32.mrb[0].mxu0
    %1785 = vdwg.mxu0
    %1786 = vrot.lane.b32.xlu0 %v814, 64
    %v1787 = vpop.permute.xlu0 %1786
    %v1790 = vsel %vm1461, %v1553, 0
    %1792 = vmatprep.subr.mxu0 0.0
    %1793 = vmatpush1.msra.mxu0 %v1787
    %1794 = vmatprep.subr.mxu0 0.0
    %1795 = vmatpush1.msra.mxu0 0.0
    %1796 = vmatprep.subr.mxu0 0.0
    %1797 = vmatpush1.msra.mxu0 0.0
    %1798 = vmatprep.subr.mxu0 0.0
    %1799 = vmatpush1.msra.mxu0 0.0
    %1800 = vmatprep.subr.mxu0 0.0
    %1801 = vmatpush1.msra.mxu0 0.0
    %1802 = vmatprep.subr.mxu0 0.0
    %1803 = vmatpush1.msra.mxu0 0.0
    %1804 = vmatprep.subr.mxu0 0.0
    %1805 = vmatpush1.msra.mxu0 0.0
    %1806 = vmatprep.subr.mxu0 0.0
    %1807 = vmatpush1.msra.mxu0 0.0
    %1808 = vmatprep.subr.mxu0 0.0
    %1809 = vmatpush1.msra.mxu0 0.0
    %1810 = vmatprep.subr.mxu0 0.0
    %1811 = vmatpush1.msra.mxu0 0.0
    %1812 = vmatprep.subr.mxu0 0.0
    %1813 = vmatpush1.msra.mxu0 0.0
    %1814 = vmatprep.subr.mxu0 0.0
    %1815 = vmatpush1.msra.mxu0 0.0
    %1816 = vmatprep.subr.mxu0 0.0
    %1817 = vmatpush1.msra.mxu0 0.0
    %1818 = vmatprep.subr.mxu0 0.0
    %1819 = vmatpush1.msra.mxu0 0.0
    %1820 = vmatprep.subr.mxu0 0.0
    %1821 = vmatpush1.msra.mxu0 0.0
    %1822 = vmatprep.subr.mxu0 0.0
    %1823 = vmatpush1.msra.mxu0 0.0
    %1824 = vmatprep.subr.mxu0 0.0
    %1825 = vmatpush1.msra.mxu0 0.0
    %1826 = vmatprep.subr.mxu0 0.0
    %1827 = vmatpush1.msra.mxu0 0.0
    %1828 = vmatprep.subr.mxu0 0.0
    %1829 = vmatpush1.msra.mxu0 0.0
    %1830 = vmatprep.subr.mxu0 0.0
    %1831 = vmatpush1.msra.mxu0 0.0
    %1832 = vmatprep.subr.mxu0 0.0
    %1833 = vmatpush1.msra.mxu0 0.0
    %1834 = vmatprep.subr.mxu0 0.0
    %1835 = vmatpush1.msra.mxu0 0.0
    %1836 = vmatprep.subr.mxu0 0.0
    %1837 = vmatpush1.msra.mxu0 0.0
    %1838 = vmatprep.subr.mxu0 0.0
    %1839 = vmatpush1.msra.mxu0 0.0
    %1840 = vmatprep.subr.mxu0 0.0
    %1841 = vmatpush1.msra.mxu0 0.0
    %1842 = vmatprep.subr.mxu0 0.0
    %1843 = vmatpush1.msra.mxu0 0.0
    %1844 = vmatprep.subr.mxu0 0.0
    %1845 = vmatpush1.msra.mxu0 0.0
    %1846 = vmatprep.subr.mxu0 0.0
    %1847 = vmatpush1.msra.mxu0 0.0
    %1848 = vmatprep.subr.mxu0 0.0
    %1849 = vmatpush1.msra.mxu0 0.0
    %1850 = vmatprep.subr.mxu0 0.0
    %1851 = vmatpush1.msra.mxu0 0.0
    %1852 = vmatprep.subr.mxu0 0.0
    %1853 = vmatpush1.msra.mxu0 0.0
    %1854 = vmatprep.subr.mxu0 0.0
    %1855 = vmatpush1.msra.mxu0 0.0
    %1856 = vmatprep.mubr.f32.mxu0 0.0
    %1857 = vmatmul.mubr.f32.gmra.mrb[0].mxu0 %v1790
    %v1858 = vpop.f32.mrb[0].mxu0
    %v1859 = vadd.f32 0.0, %v1858
    %v1860 = vpop.f32.mrb[0].mxu0
    %1861 = vdwg.mxu0
    %1862 = vrot.lane.b32.xlu0 %v819, 64
    %v1863 = vpop.permute.xlu0 %1862
    %v1866 = vsel %vm1461, %v1554, 0
    %1868 = vmatprep.subr.mxu0 0.0
    %1869 = vmatpush1.msra.mxu0 %v1863
    %1870 = vmatprep.subr.mxu0 0.0
    %1871 = vmatpush1.msra.mxu0 0.0
    %1872 = vmatprep.subr.mxu0 0.0
    %1873 = vmatpush1.msra.mxu0 0.0
    %1874 = vmatprep.subr.mxu0 0.0
    %1875 = vmatpush1.msra.mxu0 0.0
    %1876 = vmatprep.subr.mxu0 0.0
    %1877 = vmatpush1.msra.mxu0 0.0
    %1878 = vmatprep.subr.mxu0 0.0
    %1879 = vmatpush1.msra.mxu0 0.0
    %1880 = vmatprep.subr.mxu0 0.0
    %1881 = vmatpush1.msra.mxu0 0.0
    %1882 = vmatprep.subr.mxu0 0.0
    %1883 = vmatpush1.msra.mxu0 0.0
    %1884 = vmatprep.subr.mxu0 0.0
    %1885 = vmatpush1.msra.mxu0 0.0
    %1886 = vmatprep.subr.mxu0 0.0
    %1887 = vmatpush1.msra.mxu0 0.0
    %1888 = vmatprep.subr.mxu0 0.0
    %1889 = vmatpush1.msra.mxu0 0.0
    %1890 = vmatprep.subr.mxu0 0.0
    %1891 = vmatpush1.msra.mxu0 0.0
    %1892 = vmatprep.subr.mxu0 0.0
    %1893 = vmatpush1.msra.mxu0 0.0
    %1894 = vmatprep.subr.mxu0 0.0
    %1895 = vmatpush1.msra.mxu0 0.0
    %1896 = vmatprep.subr.mxu0 0.0
    %1897 = vmatpush1.msra.mxu0 0.0
    %1898 = vmatprep.subr.mxu0 0.0
    %1899 = vmatpush1.msra.mxu0 0.0
    %1900 = vmatprep.subr.mxu0 0.0
    %1901 = vmatpush1.msra.mxu0 0.0
    %1902 = vmatprep.subr.mxu0 0.0
    %1903 = vmatpush1.msra.mxu0 0.0
    %1904 = vmatprep.subr.mxu0 0.0
    %1905 = vmatpush1.msra.mxu0 0.0
    %1906 = vmatprep.subr.mxu0 0.0
    %1907 = vmatpush1.msra.mxu0 0.0
    %1908 = vmatprep.subr.mxu0 0.0
    %1909 = vmatpush1.msra.mxu0 0.0
    %1910 = vmatprep.subr.mxu0 0.0
    %1911 = vmatpush1.msra.mxu0 0.0
    %1912 = vmatprep.subr.mxu0 0.0
    %1913 = vmatpush1.msra.mxu0 0.0
    %1914 = vmatprep.subr.mxu0 0.0
    %1915 = vmatpush1.msra.mxu0 0.0
    %1916 = vmatprep.subr.mxu0 0.0
    %1917 = vmatpush1.msra.mxu0 0.0
    %1918 = vmatprep.subr.mxu0 0.0
    %1919 = vmatpush1.msra.mxu0 0.0
    %1920 = vmatprep.subr.mxu0 0.0
    %1921 = vmatpush1.msra.mxu0 0.0
    %1922 = vmatprep.subr.mxu0 0.0
    %1923 = vmatpush1.msra.mxu0 0.0
    %1924 = vmatprep.subr.mxu0 0.0
    %1925 = vmatpush1.msra.mxu0 0.0
    %1926 = vmatprep.subr.mxu0 0.0
    %1927 = vmatpush1.msra.mxu0 0.0
    %1928 = vmatprep.subr.mxu0 0.0
    %1929 = vmatpush1.msra.mxu0 0.0
    %1930 = vmatprep.subr.mxu0 0.0
    %1931 = vmatpush1.msra.mxu0 0.0
    %1932 = vmatprep.mubr.f32.mxu0 0.0
    %1933 = vmatmul.mubr.f32.gmra.mrb[0].mxu0 %v1866
    %v1934 = vpop.f32.mrb[0].mxu0
    %v1935 = vadd.f32 0.0, %v1934
    %v1936 = vpop.f32.mrb[0].mxu0
    %1937 = vdwg.mxu0
    %1938 = vrot.lane.b32.xlu0 %v824, 64
    %v1939 = vpop.permute.xlu0 %1938
    %v1942 = vsel %vm1461, %v1555, 0
    %1944 = vmatprep.subr.mxu0 0.0
    %1945 = vmatpush1.msra.mxu0 %v1939
    %1946 = vmatprep.subr.mxu0 0.0
    %1947 = vmatpush1.msra.mxu0 0.0
    %1948 = vmatprep.subr.mxu0 0.0
    %1949 = vmatpush1.msra.mxu0 0.0
    %1950 = vmatprep.subr.mxu0 0.0
    %1951 = vmatpush1.msra.mxu0 0.0
    %1952 = vmatprep.subr.mxu0 0.0
    %1953 = vmatpush1.msra.mxu0 0.0
    %1954 = vmatprep.subr.mxu0 0.0
    %1955 = vmatpush1.msra.mxu0 0.0
    %1956 = vmatprep.subr.mxu0 0.0
    %1957 = vmatpush1.msra.mxu0 0.0
    %1958 = vmatprep.subr.mxu0 0.0
    %1959 = vmatpush1.msra.mxu0 0.0
    %1960 = vmatprep.subr.mxu0 0.0
    %1961 = vmatpush1.msra.mxu0 0.0
    %1962 = vmatprep.subr.mxu0 0.0
    %1963 = vmatpush1.msra.mxu0 0.0
    %1964 = vmatprep.subr.mxu0 0.0
    %1965 = vmatpush1.msra.mxu0 0.0
    %1966 = vmatprep.subr.mxu0 0.0
    %1967 = vmatpush1.msra.mxu0 0.0
    %1968 = vmatprep.subr.mxu0 0.0
    %1969 = vmatpush1.msra.mxu0 0.0
    %1970 = vmatprep.subr.mxu0 0.0
    %1971 = vmatpush1.msra.mxu0 0.0
    %1972 = vmatprep.subr.mxu0 0.0
    %1973 = vmatpush1.msra.mxu0 0.0
    %1974 = vmatprep.subr.mxu0 0.0
    %1975 = vmatpush1.msra.mxu0 0.0
    %1976 = vmatprep.subr.mxu0 0.0
    %1977 = vmatpush1.msra.mxu0 0.0
    %1978 = vmatprep.subr.mxu0 0.0
    %1979 = vmatpush1.msra.mxu0 0.0
    %1980 = vmatprep.subr.mxu0 0.0
    %1981 = vmatpush1.msra.mxu0 0.0
    %1982 = vmatprep.subr.mxu0 0.0
    %1983 = vmatpush1.msra.mxu0 0.0
    %1984 = vmatprep.subr.mxu0 0.0
    %1985 = vmatpush1.msra.mxu0 0.0
    %1986 = vmatprep.subr.mxu0 0.0
    %1987 = vmatpush1.msra.mxu0 0.0
    %1988 = vmatprep.subr.mxu0 0.0
    %1989 = vmatpush1.msra.mxu0 0.0
    %1990 = vmatprep.subr.mxu0 0.0
    %1991 = vmatpush1.msra.mxu0 0.0
    %1992 = vmatprep.subr.mxu0 0.0
    %1993 = vmatpush1.msra.mxu0 0.0
    %1994 = vmatprep.subr.mxu0 0.0
    %1995 = vmatpush1.msra.mxu0 0.0
    %1996 = vmatprep.subr.mxu0 0.0
    %1997 = vmatpush1.msra.mxu0 0.0
    %1998 = vmatprep.subr.mxu0 0.0
    %1999 = vmatpush1.msra.mxu0 0.0
    %2000 = vmatprep.subr.mxu0 0.0
    %2001 = vmatpush1.msra.mxu0 0.0
    %2002 = vmatprep.subr.mxu0 0.0
    %2003 = vmatpush1.msra.mxu0 0.0
    %2004 = vmatprep.subr.mxu0 0.0
    %2005 = vmatpush1.msra.mxu0 0.0
    %2006 = vmatprep.subr.mxu0 0.0
    %2007 = vmatpush1.msra.mxu0 0.0
    %2008 = vmatprep.mubr.f32.mxu0 0.0
    %2009 = vmatmul.mubr.f32.gmra.mrb[0].mxu0 %v1942
    %v2010 = vpop.f32.mrb[0].mxu0
    %v2011 = vadd.f32 0.0, %v2010
    %v2012 = vpop.f32.mrb[0].mxu0
    %2013 = vdwg.mxu0
    %2014 = vrot.lane.b32.xlu0 %v829, 64
    %v2015 = vpop.permute.xlu0 %2014
    %v2018 = vsel %vm1461, %v1556, 0
    %2020 = vmatprep.subr.mxu0 0.0
    %2021 = vmatpush1.msra.mxu0 %v2015
    %2022 = vmatprep.subr.mxu0 0.0
    %2023 = vmatpush1.msra.mxu0 0.0
    %2024 = vmatprep.subr.mxu0 0.0
    %2025 = vmatpush1.msra.mxu0 0.0
    %2026 = vmatprep.subr.mxu0 0.0
    %2027 = vmatpush1.msra.mxu0 0.0
    %2028 = vmatprep.subr.mxu0 0.0
    %2029 = vmatpush1.msra.mxu0 0.0
    %2030 = vmatprep.subr.mxu0 0.0
    %2031 = vmatpush1.msra.mxu0 0.0
    %2032 = vmatprep.subr.mxu0 0.0
    %2033 = vmatpush1.msra.mxu0 0.0
    %2034 = vmatprep.subr.mxu0 0.0
    %2035 = vmatpush1.msra.mxu0 0.0
    %2036 = vmatprep.subr.mxu0 0.0
    %2037 = vmatpush1.msra.mxu0 0.0
    %2038 = vmatprep.subr.mxu0 0.0
    %2039 = vmatpush1.msra.mxu0 0.0
    %2040 = vmatprep.subr.mxu0 0.0
    %2041 = vmatpush1.msra.mxu0 0.0
    %2042 = vmatprep.subr.mxu0 0.0
    %2043 = vmatpush1.msra.mxu0 0.0
    %2044 = vmatprep.subr.mxu0 0.0
    %2045 = vmatpush1.msra.mxu0 0.0
    %2046 = vmatprep.subr.mxu0 0.0
    %2047 = vmatpush1.msra.mxu0 0.0
    %2048 = vmatprep.subr.mxu0 0.0
    %2049 = vmatpush1.msra.mxu0 0.0
    %2050 = vmatprep.subr.mxu0 0.0
    %2051 = vmatpush1.msra.mxu0 0.0
    %2052 = vmatprep.subr.mxu0 0.0
    %2053 = vmatpush1.msra.mxu0 0.0
    %2054 = vmatprep.subr.mxu0 0.0
    %2055 = vmatpush1.msra.mxu0 0.0
    %2056 = vmatprep.subr.mxu0 0.0
    %2057 = vmatpush1.msra.mxu0 0.0
    %2058 = vmatprep.subr.mxu0 0.0
    %2059 = vmatpush1.msra.mxu0 0.0
    %2060 = vmatprep.subr.mxu0 0.0
    %2061 = vmatpush1.msra.mxu0 0.0
    %2062 = vmatprep.subr.mxu0 0.0
    %2063 = vmatpush1.msra.mxu0 0.0
    %2064 = vmatprep.subr.mxu0 0.0
    %2065 = vmatpush1.msra.mxu0 0.0
    %2066 = vmatprep.subr.mxu0 0.0
    %2067 = vmatpush1.msra.mxu0 0.0
    %2068 = vmatprep.subr.mxu0 0.0
    %2069 = vmatpush1.msra.mxu0 0.0
    %2070 = vmatprep.subr.mxu0 0.0
    %2071 = vmatpush1.msra.mxu0 0.0
    %2072 = vmatprep.subr.mxu0 0.0
    %2073 = vmatpush1.msra.mxu0 0.0
    %2074 = vmatprep.subr.mxu0 0.0
    %2075 = vmatpush1.msra.mxu0 0.0
    %2076 = vmatprep.subr.mxu0 0.0
    %2077 = vmatpush1.msra.mxu0 0.0
    %2078 = vmatprep.subr.mxu0 0.0
    %2079 = vmatpush1.msra.mxu0 0.0
    %2080 = vmatprep.subr.mxu0 0.0
    %2081 = vmatpush1.msra.mxu0 0.0
    %2082 = vmatprep.subr.mxu0 0.0
    %2083 = vmatpush1.msra.mxu0 0.0
    %2084 = vmatprep.mubr.f32.mxu0 0.0
    %2085 = vmatmul.mubr.f32.gmra.mrb[0].mxu0 %v2018
    %v2086 = vpop.f32.mrb[0].mxu0
    %v2087 = vadd.f32 0.0, %v2086
    %v2088 = vpop.f32.mrb[0].mxu0
    %2089 = vdwg.mxu0
    %2090 = vrot.lane.b32.xlu0 %v834, 64
    %v2091 = vpop.permute.xlu0 %2090
    %v2094 = vsel %vm1461, %v1557, 0
    %2096 = vmatprep.subr.mxu0 0.0
    %2097 = vmatpush1.msra.mxu0 %v2091
    %2098 = vmatprep.subr.mxu0 0.0
    %2099 = vmatpush1.msra.mxu0 0.0
    %2100 = vmatprep.subr.mxu0 0.0
    %2101 = vmatpush1.msra.mxu0 0.0
    %2102 = vmatprep.subr.mxu0 0.0
    %2103 = vmatpush1.msra.mxu0 0.0
    %2104 = vmatprep.subr.mxu0 0.0
    %2105 = vmatpush1.msra.mxu0 0.0
    %2106 = vmatprep.subr.mxu0 0.0
    %2107 = vmatpush1.msra.mxu0 0.0
    %2108 = vmatprep.subr.mxu0 0.0
    %2109 = vmatpush1.msra.mxu0 0.0
    %2110 = vmatprep.subr.mxu0 0.0
    %2111 = vmatpush1.msra.mxu0 0.0
    %2112 = vmatprep.subr.mxu0 0.0
    %2113 = vmatpush1.msra.mxu0 0.0
    %2114 = vmatprep.subr.mxu0 0.0
    %2115 = vmatpush1.msra.mxu0 0.0
    %2116 = vmatprep.subr.mxu0 0.0
    %2117 = vmatpush1.msra.mxu0 0.0
    %2118 = vmatprep.subr.mxu0 0.0
    %2119 = vmatpush1.msra.mxu0 0.0
    %2120 = vmatprep.subr.mxu0 0.0
    %2121 = vmatpush1.msra.mxu0 0.0
    %2122 = vmatprep.subr.mxu0 0.0
    %2123 = vmatpush1.msra.mxu0 0.0
    %2124 = vmatprep.subr.mxu0 0.0
    %2125 = vmatpush1.msra.mxu0 0.0
    %2126 = vmatprep.subr.mxu0 0.0
    %2127 = vmatpush1.msra.mxu0 0.0
    %2128 = vmatprep.subr.mxu0 0.0
    %2129 = vmatpush1.msra.mxu0 0.0
    %2130 = vmatprep.subr.mxu0 0.0
    %2131 = vmatpush1.msra.mxu0 0.0
    %2132 = vmatprep.subr.mxu0 0.0
    %2133 = vmatpush1.msra.mxu0 0.0
    %2134 = vmatprep.subr.mxu0 0.0
    %2135 = vmatpush1.msra.mxu0 0.0
    %2136 = vmatprep.subr.mxu0 0.0
    %2137 = vmatpush1.msra.mxu0 0.0
    %2138 = vmatprep.subr.mxu0 0.0
    %2139 = vmatpush1.msra.mxu0 0.0
    %2140 = vmatprep.subr.mxu0 0.0
    %2141 = vmatpush1.msra.mxu0 0.0
    %2142 = vmatprep.subr.mxu0 0.0
    %2143 = vmatpush1.msra.mxu0 0.0
    %2144 = vmatprep.subr.mxu0 0.0
    %2145 = vmatpush1.msra.mxu0 0.0
    %2146 = vmatprep.subr.mxu0 0.0
    %2147 = vmatpush1.msra.mxu0 0.0
    %2148 = vmatprep.subr.mxu0 0.0
    %2149 = vmatpush1.msra.mxu0 0.0
    %2150 = vmatprep.subr.mxu0 0.0
    %2151 = vmatpush1.msra.mxu0 0.0
    %2152 = vmatprep.subr.mxu0 0.0
    %2153 = vmatpush1.msra.mxu0 0.0
    %2154 = vmatprep.subr.mxu0 0.0
    %2155 = vmatpush1.msra.mxu0 0.0
    %2156 = vmatprep.subr.mxu0 0.0
    %2157 = vmatpush1.msra.mxu0 0.0
    %2158 = vmatprep.subr.mxu0 0.0
    %2159 = vmatpush1.msra.mxu0 0.0
    %2160 = vmatprep.mubr.f32.mxu0 0.0
    %2161 = vmatmul.mubr.f32.gmra.mrb[0].mxu0 %v2094
    %v2162 = vpop.f32.mrb[0].mxu0
    %v2163 = vadd.f32 0.0, %v2162
    %v2164 = vpop.f32.mrb[0].mxu0
    %2165 = vdwg.mxu0
    %2166 = vrot.lane.b32.xlu0 %v799, 112
    %v2167 = vpop.permute.xlu0 %2166
    %2168 = vrot.lane.b32.xlu0 %v799, 80
    %v2169 = vpop.permute.xlu0 %2168
    %v2170 = vsel %vm146, %v2167, 0
    %v2172 = vsel %vm146, %v2169, 0
    %2174 = vmatprep.subr.mxu0 0.0
    %2175 = vmatpush1.xpose.msra.mxu0 %v2172
    %2176 = vmatprep.subr.mxu0 0.0
    %2177 = vmatpush1.xpose.msra.mxu0 0.0
    %2178 = vmatprep.subr.mxu0 0.0
    %2179 = vmatpush1.xpose.msra.mxu0 0.0
    %2180 = vmatprep.subr.mxu0 0.0
    %2181 = vmatpush1.xpose.msra.mxu0 0.0
    %2182 = vmatprep.subr.mxu0 0.0
    %2183 = vmatpush1.xpose.msra.mxu0 0.0
    %2184 = vmatprep.subr.mxu0 0.0
    %2185 = vmatpush1.xpose.msra.mxu0 0.0
    %2186 = vmatprep.subr.mxu0 0.0
    %2187 = vmatpush1.xpose.msra.mxu0 0.0
    %2188 = vmatprep.subr.mxu0 0.0
    %2189 = vmatpush1.xpose.msra.mxu0 0.0
    %2190 = vmatprep.subr.mxu0 0.0
    %2191 = vmatpush1.xpose.msra.mxu0 0.0
    %2192 = vmatprep.subr.mxu0 0.0
    %2193 = vmatpush1.xpose.msra.mxu0 0.0
    %2194 = vmatprep.subr.mxu0 0.0
    %2195 = vmatpush1.xpose.msra.mxu0 0.0
    %2196 = vmatprep.subr.mxu0 0.0
    %2197 = vmatpush1.xpose.msra.mxu0 0.0
    %2198 = vmatprep.subr.mxu0 0.0
    %2199 = vmatpush1.xpose.msra.mxu0 0.0
    %2200 = vmatprep.subr.mxu0 0.0
    %2201 = vmatpush1.xpose.msra.mxu0 0.0
    %2202 = vmatprep.subr.mxu0 0.0
    %2203 = vmatpush1.xpose.msra.mxu0 0.0
    %2204 = vmatprep.subr.mxu0 0.0
    %2205 = vmatpush1.xpose.msra.mxu0 0.0
    %2206 = vmatprep.subr.mxu0 0.0
    %2207 = vmatpush1.xpose.msra.mxu0 0.0
    %2208 = vmatprep.subr.mxu0 0.0
    %2209 = vmatpush1.xpose.msra.mxu0 0.0
    %2210 = vmatprep.subr.mxu0 0.0
    %2211 = vmatpush1.xpose.msra.mxu0 0.0
    %2212 = vmatprep.subr.mxu0 0.0
    %2213 = vmatpush1.xpose.msra.mxu0 0.0
    %2214 = vmatprep.subr.mxu0 0.0
    %2215 = vmatpush1.xpose.msra.mxu0 0.0
    %2216 = vmatprep.subr.mxu0 0.0
    %2217 = vmatpush1.xpose.msra.mxu0 0.0
    %2218 = vmatprep.subr.mxu0 0.0
    %2219 = vmatpush1.xpose.msra.mxu0 0.0
    %2220 = vmatprep.subr.mxu0 0.0
    %2221 = vmatpush1.xpose.msra.mxu0 0.0
    %2222 = vmatprep.subr.mxu0 0.0
    %2223 = vmatpush1.xpose.msra.mxu0 0.0
    %2224 = vmatprep.subr.mxu0 0.0
    %2225 = vmatpush1.xpose.msra.mxu0 0.0
    %2226 = vmatprep.subr.mxu0 0.0
    %2227 = vmatpush1.xpose.msra.mxu0 0.0
    %2228 = vmatprep.subr.mxu0 0.0
    %2229 = vmatpush1.xpose.msra.mxu0 0.0
    %2230 = vmatprep.subr.mxu0 0.0
    %2231 = vmatpush1.xpose.msra.mxu0 0.0
    %2232 = vmatprep.subr.mxu0 0.0
    %2233 = vmatpush1.xpose.msra.mxu0 0.0
    %2234 = vmatprep.subr.mxu0 0.0
    %2235 = vmatpush1.xpose.msra.mxu0 0.0
    %2236 = vmatprep.subr.mxu0 0.0
    %2237 = vmatpush1.xpose.msra.mxu0 0.0
    %2238 = vmatprep.mubr.f32.mxu0 0.0
    %2239 = vmatmul.mubr.f32.gmra.mrb[0].mxu0 %v2170
    %v2240 = vpop.f32.mrb[0].mxu0
    %v2241 = vadd.f32 0.0, %v2240
    %v2242 = vpop.f32.mrb[0].mxu0
    %2243 = vdwg.mxu0
    %2244 = vrot.lane.b32.xlu0 %v804, 112
    %v2245 = vpop.permute.xlu0 %2244
    %2246 = vrot.lane.b32.xlu0 %v804, 80
    %v2247 = vpop.permute.xlu0 %2246
    %v2248 = vsel %vm146, %v2245, 0
    %v2250 = vsel %vm146, %v2247, 0
    %2252 = vmatprep.subr.mxu0 0.0
    %2253 = vmatpush1.xpose.msra.mxu0 %v2250
    %2254 = vmatprep.subr.mxu0 0.0
    %2255 = vmatpush1.xpose.msra.mxu0 0.0
    %2256 = vmatprep.subr.mxu0 0.0
    %2257 = vmatpush1.xpose.msra.mxu0 0.0
    %2258 = vmatprep.subr.mxu0 0.0
    %2259 = vmatpush1.xpose.msra.mxu0 0.0
    %2260 = vmatprep.subr.mxu0 0.0
    %2261 = vmatpush1.xpose.msra.mxu0 0.0
    %2262 = vmatprep.subr.mxu0 0.0
    %2263 = vmatpush1.xpose.msra.mxu0 0.0
    %2264 = vmatprep.subr.mxu0 0.0
    %2265 = vmatpush1.xpose.msra.mxu0 0.0
    %2266 = vmatprep.subr.mxu0 0.0
    %2267 = vmatpush1.xpose.msra.mxu0 0.0
    %2268 = vmatprep.subr.mxu0 0.0
    %2269 = vmatpush1.xpose.msra.mxu0 0.0
    %2270 = vmatprep.subr.mxu0 0.0
    %2271 = vmatpush1.xpose.msra.mxu0 0.0
    %2272 = vmatprep.subr.mxu0 0.0
    %2273 = vmatpush1.xpose.msra.mxu0 0.0
    %2274 = vmatprep.subr.mxu0 0.0
    %2275 = vmatpush1.xpose.msra.mxu0 0.0
    %2276 = vmatprep.subr.mxu0 0.0
    %2277 = vmatpush1.xpose.msra.mxu0 0.0
    %2278 = vmatprep.subr.mxu0 0.0
    %2279 = vmatpush1.xpose.msra.mxu0 0.0
    %2280 = vmatprep.subr.mxu0 0.0
    %2281 = vmatpush1.xpose.msra.mxu0 0.0
    %2282 = vmatprep.subr.mxu0 0.0
    %2283 = vmatpush1.xpose.msra.mxu0 0.0
    %2284 = vmatprep.subr.mxu0 0.0
    %2285 = vmatpush1.xpose.msra.mxu0 0.0
    %2286 = vmatprep.subr.mxu0 0.0
    %2287 = vmatpush1.xpose.msra.mxu0 0.0
    %2288 = vmatprep.subr.mxu0 0.0
    %2289 = vmatpush1.xpose.msra.mxu0 0.0
    %2290 = vmatprep.subr.mxu0 0.0
    %2291 = vmatpush1.xpose.msra.mxu0 0.0
    %2292 = vmatprep.subr.mxu0 0.0
    %2293 = vmatpush1.xpose.msra.mxu0 0.0
    %2294 = vmatprep.subr.mxu0 0.0
    %2295 = vmatpush1.xpose.msra.mxu0 0.0
    %2296 = vmatprep.subr.mxu0 0.0
    %2297 = vmatpush1.xpose.msra.mxu0 0.0
    %2298 = vmatprep.subr.mxu0 0.0
    %2299 = vmatpush1.xpose.msra.mxu0 0.0
    %2300 = vmatprep.subr.mxu0 0.0
    %2301 = vmatpush1.xpose.msra.mxu0 0.0
    %2302 = vmatprep.subr.mxu0 0.0
    %2303 = vmatpush1.xpose.msra.mxu0 0.0
    %2304 = vmatprep.subr.mxu0 0.0
    %2305 = vmatpush1.xpose.msra.mxu0 0.0
    %2306 = vmatprep.subr.mxu0 0.0
    %2307 = vmatpush1.xpose.msra.mxu0 0.0
    %2308 = vmatprep.subr.mxu0 0.0
    %2309 = vmatpush1.xpose.msra.mxu0 0.0
    %2310 = vmatprep.subr.mxu0 0.0
    %2311 = vmatpush1.xpose.msra.mxu0 0.0
    %2312 = vmatprep.subr.mxu0 0.0
    %2313 = vmatpush1.xpose.msra.mxu0 0.0
    %2314 = vmatprep.subr.mxu0 0.0
    %2315 = vmatpush1.xpose.msra.mxu0 0.0
    %2316 = vmatprep.mubr.f32.mxu0 0.0
    %2317 = vmatmul.mubr.f32.gmra.mrb[0].mxu0 %v2248
    %v2318 = vpop.f32.mrb[0].mxu0
    %v2319 = vadd.f32 0.0, %v2318
    %v2320 = vpop.f32.mrb[0].mxu0
    %2321 = vdwg.mxu0
    %2322 = vrot.lane.b32.xlu0 %v809, 112
    %v2323 = vpop.permute.xlu0 %2322
    %2324 = vrot.lane.b32.xlu0 %v809, 80
    %v2325 = vpop.permute.xlu0 %2324
    %v2326 = vsel %vm146, %v2323, 0
    %v2328 = vsel %vm146, %v2325, 0
    %2330 = vmatprep.subr.mxu0 0.0
    %2331 = vmatpush1.xpose.msra.mxu0 %v2328
    %2332 = vmatprep.subr.mxu0 0.0
    %2333 = vmatpush1.xpose.msra.mxu0 0.0
    %2334 = vmatprep.subr.mxu0 0.0
    %2335 = vmatpush1.xpose.msra.mxu0 0.0
    %2336 = vmatprep.subr.mxu0 0.0
    %2337 = vmatpush1.xpose.msra.mxu0 0.0
    %2338 = vmatprep.subr.mxu0 0.0
    %2339 = vmatpush1.xpose.msra.mxu0 0.0
    %2340 = vmatprep.subr.mxu0 0.0
    %2341 = vmatpush1.xpose.msra.mxu0 0.0
    %2342 = vmatprep.subr.mxu0 0.0
    %2343 = vmatpush1.xpose.msra.mxu0 0.0
    %2344 = vmatprep.subr.mxu0 0.0
    %2345 = vmatpush1.xpose.msra.mxu0 0.0
    %2346 = vmatprep.subr.mxu0 0.0
    %2347 = vmatpush1.xpose.msra.mxu0 0.0
    %2348 = vmatprep.subr.mxu0 0.0
    %2349 = vmatpush1.xpose.msra.mxu0 0.0
    %2350 = vmatprep.subr.mxu0 0.0
    %2351 = vmatpush1.xpose.msra.mxu0 0.0
    %2352 = vmatprep.subr.mxu0 0.0
    %2353 = vmatpush1.xpose.msra.mxu0 0.0
    %2354 = vmatprep.subr.mxu0 0.0
    %2355 = vmatpush1.xpose.msra.mxu0 0.0
    %2356 = vmatprep.subr.mxu0 0.0
    %2357 = vmatpush1.xpose.msra.mxu0 0.0
    %2358 = vmatprep.subr.mxu0 0.0
    %2359 = vmatpush1.xpose.msra.mxu0 0.0
    %2360 = vmatprep.subr.mxu0 0.0
    %2361 = vmatpush1.xpose.msra.mxu0 0.0
    %2362 = vmatprep.subr.mxu0 0.0
    %2363 = vmatpush1.xpose.msra.mxu0 0.0
    %2364 = vmatprep.subr.mxu0 0.0
    %2365 = vmatpush1.xpose.msra.mxu0 0.0
    %2366 = vmatprep.subr.mxu0 0.0
    %2367 = vmatpush1.xpose.msra.mxu0 0.0
    %2368 = vmatprep.subr.mxu0 0.0
    %2369 = vmatpush1.xpose.msra.mxu0 0.0
    %2370 = vmatprep.subr.mxu0 0.0
    %2371 = vmatpush1.xpose.msra.mxu0 0.0
    %2372 = vmatprep.subr.mxu0 0.0
    %2373 = vmatpush1.xpose.msra.mxu0 0.0
    %2374 = vmatprep.subr.mxu0 0.0
    %2375 = vmatpush1.xpose.msra.mxu0 0.0
    %2376 = vmatprep.subr.mxu0 0.0
    %2377 = vmatpush1.xpose.msra.mxu0 0.0
    %2378 = vmatprep.subr.mxu0 0.0
    %2379 = vmatpush1.xpose.msra.mxu0 0.0
    %2380 = vmatprep.subr.mxu0 0.0
    %2381 = vmatpush1.xpose.msra.mxu0 0.0
    %2382 = vmatprep.subr.mxu0 0.0
    %2383 = vmatpush1.xpose.msra.mxu0 0.0
    %2384 = vmatprep.subr.mxu0 0.0
    %2385 = vmatpush1.xpose.msra.mxu0 0.0
    %2386 = vmatprep.subr.mxu0 0.0
    %2387 = vmatpush1.xpose.msra.mxu0 0.0
    %2388 = vmatprep.subr.mxu0 0.0
    %2389 = vmatpush1.xpose.msra.mxu0 0.0
    %2390 = vmatprep.subr.mxu0 0.0
    %2391 = vmatpush1.xpose.msra.mxu0 0.0
    %2392 = vmatprep.subr.mxu0 0.0
    %2393 = vmatpush1.xpose.msra.mxu0 0.0
    %2394 = vmatprep.mubr.f32.mxu0 0.0
    %2395 = vmatmul.mubr.f32.gmra.mrb[0].mxu0 %v2326
    %v2396 = vpop.f32.mrb[0].mxu0
    %v2397 = vadd.f32 0.0, %v2396
    %v2398 = vpop.f32.mrb[0].mxu0
    %2399 = vdwg.mxu0
    %2400 = vrot.lane.b32.xlu0 %v814, 112
    %v2401 = vpop.permute.xlu0 %2400
    %2402 = vrot.lane.b32.xlu0 %v814, 80
    %v2403 = vpop.permute.xlu0 %2402
    %v2404 = vsel %vm146, %v2401, 0
    %v2406 = vsel %vm146, %v2403, 0
    %2408 = vmatprep.subr.mxu0 0.0
    %2409 = vmatpush1.xpose.msra.mxu0 %v2406
    %2410 = vmatprep.subr.mxu0 0.0
    %2411 = vmatpush1.xpose.msra.mxu0 0.0
    %2412 = vmatprep.subr.mxu0 0.0
    %2413 = vmatpush1.xpose.msra.mxu0 0.0
    %2414 = vmatprep.subr.mxu0 0.0
    %2415 = vmatpush1.xpose.msra.mxu0 0.0
    %2416 = vmatprep.subr.mxu0 0.0
    %2417 = vmatpush1.xpose.msra.mxu0 0.0
    %2418 = vmatprep.subr.mxu0 0.0
    %2419 = vmatpush1.xpose.msra.mxu0 0.0
    %2420 = vmatprep.subr.mxu0 0.0
    %2421 = vmatpush1.xpose.msra.mxu0 0.0
    %2422 = vmatprep.subr.mxu0 0.0
    %2423 = vmatpush1.xpose.msra.mxu0 0.0
    %2424 = vmatprep.subr.mxu0 0.0
    %2425 = vmatpush1.xpose.msra.mxu0 0.0
    %2426 = vmatprep.subr.mxu0 0.0
    %2427 = vmatpush1.xpose.msra.mxu0 0.0
    %2428 = vmatprep.subr.mxu0 0.0
    %2429 = vmatpush1.xpose.msra.mxu0 0.0
    %2430 = vmatprep.subr.mxu0 0.0
    %2431 = vmatpush1.xpose.msra.mxu0 0.0
    %2432 = vmatprep.subr.mxu0 0.0
    %2433 = vmatpush1.xpose.msra.mxu0 0.0
    %2434 = vmatprep.subr.mxu0 0.0
    %2435 = vmatpush1.xpose.msra.mxu0 0.0
    %2436 = vmatprep.subr.mxu0 0.0
    %2437 = vmatpush1.xpose.msra.mxu0 0.0
    %2438 = vmatprep.subr.mxu0 0.0
    %2439 = vmatpush1.xpose.msra.mxu0 0.0
    %2440 = vmatprep.subr.mxu0 0.0
    %2441 = vmatpush1.xpose.msra.mxu0 0.0
    %2442 = vmatprep.subr.mxu0 0.0
    %2443 = vmatpush1.xpose.msra.mxu0 0.0
    %2444 = vmatprep.subr.mxu0 0.0
    %2445 = vmatpush1.xpose.msra.mxu0 0.0
    %2446 = vmatprep.subr.mxu0 0.0
    %2447 = vmatpush1.xpose.msra.mxu0 0.0
    %2448 = vmatprep.subr.mxu0 0.0
    %2449 = vmatpush1.xpose.msra.mxu0 0.0
    %2450 = vmatprep.subr.mxu0 0.0
    %2451 = vmatpush1.xpose.msra.mxu0 0.0
    %2452 = vmatprep.subr.mxu0 0.0
    %2453 = vmatpush1.xpose.msra.mxu0 0.0
    %2454 = vmatprep.subr.mxu0 0.0
    %2455 = vmatpush1.xpose.msra.mxu0 0.0
    %2456 = vmatprep.subr.mxu0 0.0
    %2457 = vmatpush1.xpose.msra.mxu0 0.0
    %2458 = vmatprep.subr.mxu0 0.0
    %2459 = vmatpush1.xpose.msra.mxu0 0.0
    %2460 = vmatprep.subr.mxu0 0.0
    %2461 = vmatpush1.xpose.msra.mxu0 0.0
    %2462 = vmatprep.subr.mxu0 0.0
    %2463 = vmatpush1.xpose.msra.mxu0 0.0
    %2464 = vmatprep.subr.mxu0 0.0
    %2465 = vmatpush1.xpose.msra.mxu0 0.0
    %2466 = vmatprep.subr.mxu0 0.0
    %2467 = vmatpush1.xpose.msra.mxu0 0.0
    %2468 = vmatprep.subr.mxu0 0.0
    %2469 = vmatpush1.xpose.msra.mxu0 0.0
    %2470 = vmatprep.subr.mxu0 0.0
    %2471 = vmatpush1.xpose.msra.mxu0 0.0
    %2472 = vmatprep.mubr.f32.mxu0 0.0
    %2473 = vmatmul.mubr.f32.gmra.mrb[0].mxu0 %v2404
    %v2474 = vpop.f32.mrb[0].mxu0
    %v2475 = vadd.f32 0.0, %v2474
    %v2476 = vpop.f32.mrb[0].mxu0
    %2477 = vdwg.mxu0
    %2478 = vrot.lane.b32.xlu0 %v819, 112
    %v2479 = vpop.permute.xlu0 %2478
    %2480 = vrot.lane.b32.xlu0 %v819, 80
    %v2481 = vpop.permute.xlu0 %2480
    %v2482 = vsel %vm146, %v2479, 0
    %v2484 = vsel %vm146, %v2481, 0
    %2486 = vmatprep.subr.mxu0 0.0
    %2487 = vmatpush1.xpose.msra.mxu0 %v2484
    %2488 = vmatprep.subr.mxu0 0.0
    %2489 = vmatpush1.xpose.msra.mxu0 0.0
    %2490 = vmatprep.subr.mxu0 0.0
    %2491 = vmatpush1.xpose.msra.mxu0 0.0
    %2492 = vmatprep.subr.mxu0 0.0
    %2493 = vmatpush1.xpose.msra.mxu0 0.0
    %2494 = vmatprep.subr.mxu0 0.0
    %2495 = vmatpush1.xpose.msra.mxu0 0.0
    %2496 = vmatprep.subr.mxu0 0.0
    %2497 = vmatpush1.xpose.msra.mxu0 0.0
    %2498 = vmatprep.subr.mxu0 0.0
    %2499 = vmatpush1.xpose.msra.mxu0 0.0
    %2500 = vmatprep.subr.mxu0 0.0
    %2501 = vmatpush1.xpose.msra.mxu0 0.0
    %2502 = vmatprep.subr.mxu0 0.0
    %2503 = vmatpush1.xpose.msra.mxu0 0.0
    %2504 = vmatprep.subr.mxu0 0.0
    %2505 = vmatpush1.xpose.msra.mxu0 0.0
    %2506 = vmatprep.subr.mxu0 0.0
    %2507 = vmatpush1.xpose.msra.mxu0 0.0
    %2508 = vmatprep.subr.mxu0 0.0
    %2509 = vmatpush1.xpose.msra.mxu0 0.0
    %2510 = vmatprep.subr.mxu0 0.0
    %2511 = vmatpush1.xpose.msra.mxu0 0.0
    %2512 = vmatprep.subr.mxu0 0.0
    %2513 = vmatpush1.xpose.msra.mxu0 0.0
    %2514 = vmatprep.subr.mxu0 0.0
    %2515 = vmatpush1.xpose.msra.mxu0 0.0
    %2516 = vmatprep.subr.mxu0 0.0
    %2517 = vmatpush1.xpose.msra.mxu0 0.0
    %2518 = vmatprep.subr.mxu0 0.0
    %2519 = vmatpush1.xpose.msra.mxu0 0.0
    %2520 = vmatprep.subr.mxu0 0.0
    %2521 = vmatpush1.xpose.msra.mxu0 0.0
    %2522 = vmatprep.subr.mxu0 0.0
    %2523 = vmatpush1.xpose.msra.mxu0 0.0
    %2524 = vmatprep.subr.mxu0 0.0
    %2525 = vmatpush1.xpose.msra.mxu0 0.0
    %2526 = vmatprep.subr.mxu0 0.0
    %2527 = vmatpush1.xpose.msra.mxu0 0.0
    %2528 = vmatprep.subr.mxu0 0.0
    %2529 = vmatpush1.xpose.msra.mxu0 0.0
    %2530 = vmatprep.subr.mxu0 0.0
    %2531 = vmatpush1.xpose.msra.mxu0 0.0
    %2532 = vmatprep.subr.mxu0 0.0
    %2533 = vmatpush1.xpose.msra.mxu0 0.0
    %2534 = vmatprep.subr.mxu0 0.0
    %2535 = vmatpush1.xpose.msra.mxu0 0.0
    %2536 = vmatprep.subr.mxu0 0.0
    %2537 = vmatpush1.xpose.msra.mxu0 0.0
    %2538 = vmatprep.subr.mxu0 0.0
    %2539 = vmatpush1.xpose.msra.mxu0 0.0
    %2540 = vmatprep.subr.mxu0 0.0
    %2541 = vmatpush1.xpose.msra.mxu0 0.0
    %2542 = vmatprep.subr.mxu0 0.0
    %2543 = vmatpush1.xpose.msra.mxu0 0.0
    %2544 = vmatprep.subr.mxu0 0.0
    %2545 = vmatpush1.xpose.msra.mxu0 0.0
    %2546 = vmatprep.subr.mxu0 0.0
    %2547 = vmatpush1.xpose.msra.mxu0 0.0
    %2548 = vmatprep.subr.mxu0 0.0
    %2549 = vmatpush1.xpose.msra.mxu0 0.0
    %2550 = vmatprep.mubr.f32.mxu0 0.0
    %2551 = vmatmul.mubr.f32.gmra.mrb[0].mxu0 %v2482
    %v2552 = vpop.f32.mrb[0].mxu0
    %v2553 = vadd.f32 0.0, %v2552
    %v2554 = vpop.f32.mrb[0].mxu0
    %2555 = vdwg.mxu0
    %2556 = vrot.lane.b32.xlu0 %v824, 112
    %v2557 = vpop.permute.xlu0 %2556
    %2558 = vrot.lane.b32.xlu0 %v824, 80
    %v2559 = vpop.permute.xlu0 %2558
    %v2560 = vsel %vm146, %v2557, 0
    %v2562 = vsel %vm146, %v2559, 0
    %2564 = vmatprep.subr.mxu0 0.0
    %2565 = vmatpush1.xpose.msra.mxu0 %v2562
    %2566 = vmatprep.subr.mxu0 0.0
    %2567 = vmatpush1.xpose.msra.mxu0 0.0
    %2568 = vmatprep.subr.mxu0 0.0
    %2569 = vmatpush1.xpose.msra.mxu0 0.0
    %2570 = vmatprep.subr.mxu0 0.0
    %2571 = vmatpush1.xpose.msra.mxu0 0.0
    %2572 = vmatprep.subr.mxu0 0.0
    %2573 = vmatpush1.xpose.msra.mxu0 0.0
    %2574 = vmatprep.subr.mxu0 0.0
    %2575 = vmatpush1.xpose.msra.mxu0 0.0
    %2576 = vmatprep.subr.mxu0 0.0
    %2577 = vmatpush1.xpose.msra.mxu0 0.0
    %2578 = vmatprep.subr.mxu0 0.0
    %2579 = vmatpush1.xpose.msra.mxu0 0.0
    %2580 = vmatprep.subr.mxu0 0.0
    %2581 = vmatpush1.xpose.msra.mxu0 0.0
    %2582 = vmatprep.subr.mxu0 0.0
    %2583 = vmatpush1.xpose.msra.mxu0 0.0
    %2584 = vmatprep.subr.mxu0 0.0
    %2585 = vmatpush1.xpose.msra.mxu0 0.0
    %2586 = vmatprep.subr.mxu0 0.0
    %2587 = vmatpush1.xpose.msra.mxu0 0.0
    %2588 = vmatprep.subr.mxu0 0.0
    %2589 = vmatpush1.xpose.msra.mxu0 0.0
    %2590 = vmatprep.subr.mxu0 0.0
    %2591 = vmatpush1.xpose.msra.mxu0 0.0
    %2592 = vmatprep.subr.mxu0 0.0
    %2593 = vmatpush1.xpose.msra.mxu0 0.0
    %2594 = vmatprep.subr.mxu0 0.0
    %2595 = vmatpush1.xpose.msra.mxu0 0.0
    %2596 = vmatprep.subr.mxu0 0.0
    %2597 = vmatpush1.xpose.msra.mxu0 0.0
    %2598 = vmatprep.subr.mxu0 0.0
    %2599 = vmatpush1.xpose.msra.mxu0 0.0
    %2600 = vmatprep.subr.mxu0 0.0
    %2601 = vmatpush1.xpose.msra.mxu0 0.0
    %2602 = vmatprep.subr.mxu0 0.0
    %2603 = vmatpush1.xpose.msra.mxu0 0.0
    %2604 = vmatprep.subr.mxu0 0.0
    %2605 = vmatpush1.xpose.msra.mxu0 0.0
    %2606 = vmatprep.subr.mxu0 0.0
    %2607 = vmatpush1.xpose.msra.mxu0 0.0
    %2608 = vmatprep.subr.mxu0 0.0
    %2609 = vmatpush1.xpose.msra.mxu0 0.0
    %2610 = vmatprep.subr.mxu0 0.0
    %2611 = vmatpush1.xpose.msra.mxu0 0.0
    %2612 = vmatprep.subr.mxu0 0.0
    %2613 = vmatpush1.xpose.msra.mxu0 0.0
    %2614 = vmatprep.subr.mxu0 0.0
    %2615 = vmatpush1.xpose.msra.mxu0 0.0
    %2616 = vmatprep.subr.mxu0 0.0
    %2617 = vmatpush1.xpose.msra.mxu0 0.0
    %2618 = vmatprep.subr.mxu0 0.0
    %2619 = vmatpush1.xpose.msra.mxu0 0.0
    %2620 = vmatprep.subr.mxu0 0.0
    %2621 = vmatpush1.xpose.msra.mxu0 0.0
    %2622 = vmatprep.subr.mxu0 0.0
    %2623 = vmatpush1.xpose.msra.mxu0 0.0
    %2624 = vmatprep.subr.mxu0 0.0
    %2625 = vmatpush1.xpose.msra.mxu0 0.0
    %2626 = vmatprep.subr.mxu0 0.0
    %2627 = vmatpush1.xpose.msra.mxu0 0.0
    %2628 = vmatprep.mubr.f32.mxu0 0.0
    %2629 = vmatmul.mubr.f32.gmra.mrb[0].mxu0 %v2560
    %v2630 = vpop.f32.mrb[0].mxu0
    %v2631 = vadd.f32 0.0, %v2630
    %v2632 = vpop.f32.mrb[0].mxu0
    %2633 = vdwg.mxu0
    %2634 = vrot.lane.b32.xlu0 %v829, 112
    %v2635 = vpop.permute.xlu0 %2634
    %2636 = vrot.lane.b32.xlu0 %v829, 80
    %v2637 = vpop.permute.xlu0 %2636
    %v2638 = vsel %vm146, %v2635, 0
    %v2640 = vsel %vm146, %v2637, 0
    %2642 = vmatprep.subr.mxu0 0.0
    %2643 = vmatpush1.xpose.msra.mxu0 %v2640
    %2644 = vmatprep.subr.mxu0 0.0
    %2645 = vmatpush1.xpose.msra.mxu0 0.0
    %2646 = vmatprep.subr.mxu0 0.0
    %2647 = vmatpush1.xpose.msra.mxu0 0.0
    %2648 = vmatprep.subr.mxu0 0.0
    %2649 = vmatpush1.xpose.msra.mxu0 0.0
    %2650 = vmatprep.subr.mxu0 0.0
    %2651 = vmatpush1.xpose.msra.mxu0 0.0
    %2652 = vmatprep.subr.mxu0 0.0
    %2653 = vmatpush1.xpose.msra.mxu0 0.0
    %2654 = vmatprep.subr.mxu0 0.0
    %2655 = vmatpush1.xpose.msra.mxu0 0.0
    %2656 = vmatprep.subr.mxu0 0.0
    %2657 = vmatpush1.xpose.msra.mxu0 0.0
    %2658 = vmatprep.subr.mxu0 0.0
    %2659 = vmatpush1.xpose.msra.mxu0 0.0
    %2660 = vmatprep.subr.mxu0 0.0
    %2661 = vmatpush1.xpose.msra.mxu0 0.0
    %2662 = vmatprep.subr.mxu0 0.0
    %2663 = vmatpush1.xpose.msra.mxu0 0.0
    %2664 = vmatprep.subr.mxu0 0.0
    %2665 = vmatpush1.xpose.msra.mxu0 0.0
    %2666 = vmatprep.subr.mxu0 0.0
    %2667 = vmatpush1.xpose.msra.mxu0 0.0
    %2668 = vmatprep.subr.mxu0 0.0
    %2669 = vmatpush1.xpose.msra.mxu0 0.0
    %2670 = vmatprep.subr.mxu0 0.0
    %2671 = vmatpush1.xpose.msra.mxu0 0.0
    %2672 = vmatprep.subr.mxu0 0.0
    %2673 = vmatpush1.xpose.msra.mxu0 0.0
    %2674 = vmatprep.subr.mxu0 0.0
    %2675 = vmatpush1.xpose.msra.mxu0 0.0
    %2676 = vmatprep.subr.mxu0 0.0
    %2677 = vmatpush1.xpose.msra.mxu0 0.0
    %2678 = vmatprep.subr.mxu0 0.0
    %2679 = vmatpush1.xpose.msra.mxu0 0.0
    %2680 = vmatprep.subr.mxu0 0.0
    %2681 = vmatpush1.xpose.msra.mxu0 0.0
    %2682 = vmatprep.subr.mxu0 0.0
    %2683 = vmatpush1.xpose.msra.mxu0 0.0
    %2684 = vmatprep.subr.mxu0 0.0
    %2685 = vmatpush1.xpose.msra.mxu0 0.0
    %2686 = vmatprep.subr.mxu0 0.0
    %2687 = vmatpush1.xpose.msra.mxu0 0.0
    %2688 = vmatprep.subr.mxu0 0.0
    %2689 = vmatpush1.xpose.msra.mxu0 0.0
    %2690 = vmatprep.subr.mxu0 0.0
    %2691 = vmatpush1.xpose.msra.mxu0 0.0
    %2692 = vmatprep.subr.mxu0 0.0
    %2693 = vmatpush1.xpose.msra.mxu0 0.0
    %2694 = vmatprep.subr.mxu0 0.0
    %2695 = vmatpush1.xpose.msra.mxu0 0.0
    %2696 = vmatprep.subr.mxu0 0.0
    %2697 = vmatpush1.xpose.msra.mxu0 0.0
    %2698 = vmatprep.subr.mxu0 0.0
    %2699 = vmatpush1.xpose.msra.mxu0 0.0
    %2700 = vmatprep.subr.mxu0 0.0
    %2701 = vmatpush1.xpose.msra.mxu0 0.0
    %2702 = vmatprep.subr.mxu0 0.0
    %2703 = vmatpush1.xpose.msra.mxu0 0.0
    %2704 = vmatprep.subr.mxu0 0.0
    %2705 = vmatpush1.xpose.msra.mxu0 0.0
    %2706 = vmatprep.mubr.f32.mxu0 0.0
    %2707 = vmatmul.mubr.f32.gmra.mrb[0].mxu0 %v2638
    %v2708 = vpop.f32.mrb[0].mxu0
    %v2709 = vadd.f32 0.0, %v2708
    %v2710 = vpop.f32.mrb[0].mxu0
    %2711 = vdwg.mxu0
    %2712 = vrot.lane.b32.xlu0 %v834, 112
    %v2713 = vpop.permute.xlu0 %2712
    %2714 = vrot.lane.b32.xlu0 %v834, 80
    %v2715 = vpop.permute.xlu0 %2714
    %v2716 = vsel %vm146, %v2713, 0
    %v2718 = vsel %vm146, %v2715, 0
    %2720 = vmatprep.subr.mxu0 0.0
    %2721 = vmatpush1.xpose.msra.mxu0 %v2718
    %2722 = vmatprep.subr.mxu0 0.0
    %2723 = vmatpush1.xpose.msra.mxu0 0.0
    %2724 = vmatprep.subr.mxu0 0.0
    %2725 = vmatpush1.xpose.msra.mxu0 0.0
    %2726 = vmatprep.subr.mxu0 0.0
    %2727 = vmatpush1.xpose.msra.mxu0 0.0
    %2728 = vmatprep.subr.mxu0 0.0
    %2729 = vmatpush1.xpose.msra.mxu0 0.0
    %2730 = vmatprep.subr.mxu0 0.0
    %2731 = vmatpush1.xpose.msra.mxu0 0.0
    %2732 = vmatprep.subr.mxu0 0.0
    %2733 = vmatpush1.xpose.msra.mxu0 0.0
    %2734 = vmatprep.subr.mxu0 0.0
    %2735 = vmatpush1.xpose.msra.mxu0 0.0
    %2736 = vmatprep.subr.mxu0 0.0
    %2737 = vmatpush1.xpose.msra.mxu0 0.0
    %2738 = vmatprep.subr.mxu0 0.0
    %2739 = vmatpush1.xpose.msra.mxu0 0.0
    %2740 = vmatprep.subr.mxu0 0.0
    %2741 = vmatpush1.xpose.msra.mxu0 0.0
    %2742 = vmatprep.subr.mxu0 0.0
    %2743 = vmatpush1.xpose.msra.mxu0 0.0
    %2744 = vmatprep.subr.mxu0 0.0
    %2745 = vmatpush1.xpose.msra.mxu0 0.0
    %2746 = vmatprep.subr.mxu0 0.0
    %2747 = vmatpush1.xpose.msra.mxu0 0.0
    %2748 = vmatprep.subr.mxu0 0.0
    %2749 = vmatpush1.xpose.msra.mxu0 0.0
    %2750 = vmatprep.subr.mxu0 0.0
    %2751 = vmatpush1.xpose.msra.mxu0 0.0
    %2752 = vmatprep.subr.mxu0 0.0
    %2753 = vmatpush1.xpose.msra.mxu0 0.0
    %2754 = vmatprep.subr.mxu0 0.0
    %2755 = vmatpush1.xpose.msra.mxu0 0.0
    %2756 = vmatprep.subr.mxu0 0.0
    %2757 = vmatpush1.xpose.msra.mxu0 0.0
    %2758 = vmatprep.subr.mxu0 0.0
    %2759 = vmatpush1.xpose.msra.mxu0 0.0
    %2760 = vmatprep.subr.mxu0 0.0
    %2761 = vmatpush1.xpose.msra.mxu0 0.0
    %2762 = vmatprep.subr.mxu0 0.0
    %2763 = vmatpush1.xpose.msra.mxu0 0.0
    %2764 = vmatprep.subr.mxu0 0.0
    %2765 = vmatpush1.xpose.msra.mxu0 0.0
    %2766 = vmatprep.subr.mxu0 0.0
    %2767 = vmatpush1.xpose.msra.mxu0 0.0
    %2768 = vmatprep.subr.mxu0 0.0
    %2769 = vmatpush1.xpose.msra.mxu0 0.0
    %2770 = vmatprep.subr.mxu0 0.0
    %2771 = vmatpush1.xpose.msra.mxu0 0.0
    %2772 = vmatprep.subr.mxu0 0.0
    %2773 = vmatpush1.xpose.msra.mxu0 0.0
    %2774 = vmatprep.subr.mxu0 0.0
    %2775 = vmatpush1.xpose.msra.mxu0 0.0
    %2776 = vmatprep.subr.mxu0 0.0
    %2777 = vmatpush1.xpose.msra.mxu0 0.0
    %2778 = vmatprep.subr.mxu0 0.0
    %2779 = vmatpush1.xpose.msra.mxu0 0.0
    %2780 = vmatprep.subr.mxu0 0.0
    %2781 = vmatpush1.xpose.msra.mxu0 0.0
    %2782 = vmatprep.subr.mxu0 0.0
    %2783 = vmatpush1.xpose.msra.mxu0 0.0
    %2784 = vmatprep.mubr.f32.mxu0 0.0
    %2785 = vmatmul.mubr.f32.gmra.mrb[0].mxu0 %v2716
    %v2786 = vpop.f32.mrb[0].mxu0
    %v2787 = vadd.f32 0.0, %v2786
    %v2788 = vpop.f32.mrb[0].mxu0
    %2789 = vdwg.mxu0
    %v2790 = vmul.f32 %v2241, 0.25
    %v2791 = vmul.f32 %v2319, 0.25
    %v2792 = vmul.f32 %v2397, 0.25
    %v2793 = vmul.f32 %v2475, 0.25
    %v2794 = vmul.f32 %v2553, 0.25
    %v2795 = vmul.f32 %v2631, 0.25
    %v2796 = vmul.f32 %v2709, 0.25
    %v2797 = vmul.f32 %v2787, 0.25
    %v2798 = vsel %vm1461, %v2790, -inf
    %2799 = vmax.xlane.f32.xlu0 %v2798
    %v2800 = vpop.xlane.xlu0 %2799
    %v2801 = vsel %vm1461, %v2791, -inf
    %2802 = vmax.xlane.f32.xlu0 %v2801
    %v2803 = vpop.xlane.xlu0 %2802
    %v2804 = vsel %vm1461, %v2792, -inf
    %2805 = vmax.xlane.f32.xlu0 %v2804
    %v2806 = vpop.xlane.xlu0 %2805
    %v2807 = vsel %vm1461, %v2793, -inf
    %2808 = vmax.xlane.f32.xlu0 %v2807
    %v2809 = vpop.xlane.xlu0 %2808
    %v2810 = vsel %vm1461, %v2794, -inf
    %2811 = vmax.xlane.f32.xlu0 %v2810
    %v2812 = vpop.xlane.xlu0 %2811
    %v2813 = vsel %vm1461, %v2795, -inf
    %2814 = vmax.xlane.f32.xlu0 %v2813
    %v2815 = vpop.xlane.xlu0 %2814
    %v2816 = vsel %vm1461, %v2796, -inf
    %2817 = vmax.xlane.f32.xlu0 %v2816
    %v2818 = vpop.xlane.xlu0 %2817
    %v2819 = vsel %vm1461, %v2797, -inf
    %2820 = vmax.xlane.f32.xlu0 %v2819
    %v2821 = vpop.xlane.xlu0 %2820
    %v2822 = vsub.f32 %v2790, %v2800
    %v2823 = vsub.f32 %v2791, %v2803
    %v2824 = vsub.f32 %v2792, %v2806
    %v2825 = vsub.f32 %v2793, %v2809
    %v2826 = vsub.f32 %v2794, %v2812
    %v2827 = vsub.f32 %v2795, %v2815
    %v2828 = vsub.f32 %v2796, %v2818
    %v2829 = vsub.f32 %v2797, %v2821
    %v2830 = vmul.f32 %v2822, 1.442695
    %v2831 = vpow.pop %v2830
    %v2832 = vmul.f32 %v2823, 1.442695
    %v2833 = vpow.pop %v2832
    %v2834 = vmul.f32 %v2824, 1.442695
    %v2835 = vpow.pop %v2834
    %v2836 = vmul.f32 %v2825, 1.442695
    %v2837 = vpow.pop %v2836
    %v2838 = vmul.f32 %v2826, 1.442695
    %v2839 = vpow.pop %v2838
    %v2840 = vmul.f32 %v2827, 1.442695
    %v2841 = vpow.pop %v2840
    %v2842 = vmul.f32 %v2828, 1.442695
    %v2843 = vpow.pop %v2842
    %v2844 = vmul.f32 %v2829, 1.442695
    %v2845 = vpow.pop %v2844
    %v2846 = vsel %vm1461, %v2831, 0.0
    %2847 = vadd.xlane.f32.xlu0 %v2846
    %v2848 = vpop.xlane.xlu0 %2847
    %v2849 = vsel %vm1461, %v2833, 0.0
    %2850 = vadd.xlane.f32.xlu0 %v2849
    %v2851 = vpop.xlane.xlu0 %2850
    %v2852 = vsel %vm1461, %v2835, 0.0
    %2853 = vadd.xlane.f32.xlu0 %v2852
    %v2854 = vpop.xlane.xlu0 %2853
    %v2855 = vsel %vm1461, %v2837, 0.0
    %2856 = vadd.xlane.f32.xlu0 %v2855
    %v2857 = vpop.xlane.xlu0 %2856
    %v2858 = vsel %vm1461, %v2839, 0.0
    %2859 = vadd.xlane.f32.xlu0 %v2858
    %v2860 = vpop.xlane.xlu0 %2859
    %v2861 = vsel %vm1461, %v2841, 0.0
    %2862 = vadd.xlane.f32.xlu0 %v2861
    %v2863 = vpop.xlane.xlu0 %2862
    %v2864 = vsel %vm1461, %v2843, 0.0
    %2865 = vadd.xlane.f32.xlu0 %v2864
    %v2866 = vpop.xlane.xlu0 %2865
    %v2867 = vsel %vm1461, %v2845, 0.0
    %2868 = vadd.xlane.f32.xlu0 %v2867
    %v2869 = vpop.xlane.xlu0 %2868
    %v2870 = vrcp.pop %v2848
    %v2871 = vmul.f32 1.0, %v2870
    %v2872 = vrcp.pop %v2851
    %v2873 = vmul.f32 1.0, %v2872
    %v2874 = vrcp.pop %v2854
    %v2875 = vmul.f32 1.0, %v2874
    %v2876 = vrcp.pop %v2857
    %v2877 = vmul.f32 1.0, %v2876
    %v2878 = vrcp.pop %v2860
    %v2879 = vmul.f32 1.0, %v2878
    %v2880 = vrcp.pop %v2863
    %v2881 = vmul.f32 1.0, %v2880
    %v2882 = vrcp.pop %v2866
    %v2883 = vmul.f32 1.0, %v2882
    %v2884 = vrcp.pop %v2869
    %v2885 = vmul.f32 1.0, %v2884
    %v2886 = vmul.f32 %v2831, %v2871
    %v2887 = vmul.f32 %v2833, %v2873
    %v2888 = vmul.f32 %v2835, %v2875
    %v2889 = vmul.f32 %v2837, %v2877
    %v2890 = vmul.f32 %v2839, %v2879
    %v2891 = vmul.f32 %v2841, %v2881
    %v2892 = vmul.f32 %v2843, %v2883
    %v2893 = vmul.f32 %v2845, %v2885
    %2894 = vrot.lane.b32.xlu0 %v799, 48
    %v2895 = vpop.permute.xlu0 %2894
    %v2898 = vsel %vm1461, %v2886, 0
    %2900 = vmatprep.subr.mxu0 0.0
    %2901 = vmatpush1.msra.mxu0 %v2895
    %2902 = vmatprep.subr.mxu0 0.0
    %2903 = vmatpush1.msra.mxu0 0.0
    %2904 = vmatprep.subr.mxu0 0.0
    %2905 = vmatpush1.msra.mxu0 0.0
    %2906 = vmatprep.subr.mxu0 0.0
    %2907 = vmatpush1.msra.mxu0 0.0
    %2908 = vmatprep.subr.mxu0 0.0
    %2909 = vmatpush1.msra.mxu0 0.0
    %2910 = vmatprep.subr.mxu0 0.0
    %2911 = vmatpush1.msra.mxu0 0.0
    %2912 = vmatprep.subr.mxu0 0.0
    %2913 = vmatpush1.msra.mxu0 0.0
    %2914 = vmatprep.subr.mxu0 0.0
    %2915 = vmatpush1.msra.mxu0 0.0
    %2916 = vmatprep.subr.mxu0 0.0
    %2917 = vmatpush1.msra.mxu0 0.0
    %2918 = vmatprep.subr.mxu0 0.0
    %2919 = vmatpush1.msra.mxu0 0.0
    %2920 = vmatprep.subr.mxu0 0.0
    %2921 = vmatpush1.msra.mxu0 0.0
    %2922 = vmatprep.subr.mxu0 0.0
    %2923 = vmatpush1.msra.mxu0 0.0
    %2924 = vmatprep.subr.mxu0 0.0
    %2925 = vmatpush1.msra.mxu0 0.0
    %2926 = vmatprep.subr.mxu0 0.0
    %2927 = vmatpush1.msra.mxu0 0.0
    %2928 = vmatprep.subr.mxu0 0.0
    %2929 = vmatpush1.msra.mxu0 0.0
    %2930 = vmatprep.subr.mxu0 0.0
    %2931 = vmatpush1.msra.mxu0 0.0
    %2932 = vmatprep.subr.mxu0 0.0
    %2933 = vmatpush1.msra.mxu0 0.0
    %2934 = vmatprep.subr.mxu0 0.0
    %2935 = vmatpush1.msra.mxu0 0.0
    %2936 = vmatprep.subr.mxu0 0.0
    %2937 = vmatpush1.msra.mxu0 0.0
    %2938 = vmatprep.subr.mxu0 0.0
    %2939 = vmatpush1.msra.mxu0 0.0
    %2940 = vmatprep.subr.mxu0 0.0
    %2941 = vmatpush1.msra.mxu0 0.0
    %2942 = vmatprep.subr.mxu0 0.0
    %2943 = vmatpush1.msra.mxu0 0.0
    %2944 = vmatprep.subr.mxu0 0.0
    %2945 = vmatpush1.msra.mxu0 0.0
    %2946 = vmatprep.subr.mxu0 0.0
    %2947 = vmatpush1.msra.mxu0 0.0
    %2948 = vmatprep.subr.mxu0 0.0
    %2949 = vmatpush1.msra.mxu0 0.0
    %2950 = vmatprep.subr.mxu0 0.0
    %2951 = vmatpush1.msra.mxu0 0.0
    %2952 = vmatprep.subr.mxu0 0.0
    %2953 = vmatpush1.msra.mxu0 0.0
    %2954 = vmatprep.subr.mxu0 0.0
    %2955 = vmatpush1.msra.mxu0 0.0
    %2956 = vmatprep.subr.mxu0 0.0
    %2957 = vmatpush1.msra.mxu0 0.0
    %2958 = vmatprep.subr.mxu0 0.0
    %2959 = vmatpush1.msra.mxu0 0.0
    %2960 = vmatprep.subr.mxu0 0.0
    %2961 = vmatpush1.msra.mxu0 0.0
    %2962 = vmatprep.subr.mxu0 0.0
    %2963 = vmatpush1.msra.mxu0 0.0
    %2964 = vmatprep.mubr.f32.mxu0 0.0
    %2965 = vmatmul.mubr.f32.gmra.mrb[0].mxu0 %v2898
    %v2966 = vpop.f32.mrb[0].mxu0
    %v2967 = vadd.f32 0.0, %v2966
    %v2968 = vpop.f32.mrb[0].mxu0
    %2969 = vdwg.mxu0
    %2970 = vrot.lane.b32.xlu0 %v804, 48
    %v2971 = vpop.permute.xlu0 %2970
    %v2974 = vsel %vm1461, %v2887, 0
    %2976 = vmatprep.subr.mxu0 0.0
    %2977 = vmatpush1.msra.mxu0 %v2971
    %2978 = vmatprep.subr.mxu0 0.0
    %2979 = vmatpush1.msra.mxu0 0.0
    %2980 = vmatprep.subr.mxu0 0.0
    %2981 = vmatpush1.msra.mxu0 0.0
    %2982 = vmatprep.subr.mxu0 0.0
    %2983 = vmatpush1.msra.mxu0 0.0
    %2984 = vmatprep.subr.mxu0 0.0
    %2985 = vmatpush1.msra.mxu0 0.0
    %2986 = vmatprep.subr.mxu0 0.0
    %2987 = vmatpush1.msra.mxu0 0.0
    %2988 = vmatprep.subr.mxu0 0.0
    %2989 = vmatpush1.msra.mxu0 0.0
    %2990 = vmatprep.subr.mxu0 0.0
    %2991 = vmatpush1.msra.mxu0 0.0
    %2992 = vmatprep.subr.mxu0 0.0
    %2993 = vmatpush1.msra.mxu0 0.0
    %2994 = vmatprep.subr.mxu0 0.0
    %2995 = vmatpush1.msra.mxu0 0.0
    %2996 = vmatprep.subr.mxu0 0.0
    %2997 = vmatpush1.msra.mxu0 0.0
    %2998 = vmatprep.subr.mxu0 0.0
    %2999 = vmatpush1.msra.mxu0 0.0
    %3000 = vmatprep.subr.mxu0 0.0
    %3001 = vmatpush1.msra.mxu0 0.0
    %3002 = vmatprep.subr.mxu0 0.0
    %3003 = vmatpush1.msra.mxu0 0.0
    %3004 = vmatprep.subr.mxu0 0.0
    %3005 = vmatpush1.msra.mxu0 0.0
    %3006 = vmatprep.subr.mxu0 0.0
    %3007 = vmatpush1.msra.mxu0 0.0
    %3008 = vmatprep.subr.mxu0 0.0
    %3009 = vmatpush1.msra.mxu0 0.0
    %3010 = vmatprep.subr.mxu0 0.0
    %3011 = vmatpush1.msra.mxu0 0.0
    %3012 = vmatprep.subr.mxu0 0.0
    %3013 = vmatpush1.msra.mxu0 0.0
    %3014 = vmatprep.subr.mxu0 0.0
    %3015 = vmatpush1.msra.mxu0 0.0
    %3016 = vmatprep.subr.mxu0 0.0
    %3017 = vmatpush1.msra.mxu0 0.0
    %3018 = vmatprep.subr.mxu0 0.0
    %3019 = vmatpush1.msra.mxu0 0.0
    %3020 = vmatprep.subr.mxu0 0.0
    %3021 = vmatpush1.msra.mxu0 0.0
    %3022 = vmatprep.subr.mxu0 0.0
    %3023 = vmatpush1.msra.mxu0 0.0
    %3024 = vmatprep.subr.mxu0 0.0
    %3025 = vmatpush1.msra.mxu0 0.0
    %3026 = vmatprep.subr.mxu0 0.0
    %3027 = vmatpush1.msra.mxu0 0.0
    %3028 = vmatprep.subr.mxu0 0.0
    %3029 = vmatpush1.msra.mxu0 0.0
    %3030 = vmatprep.subr.mxu0 0.0
    %3031 = vmatpush1.msra.mxu0 0.0
    %3032 = vmatprep.subr.mxu0 0.0
    %3033 = vmatpush1.msra.mxu0 0.0
    %3034 = vmatprep.subr.mxu0 0.0
    %3035 = vmatpush1.msra.mxu0 0.0
    %3036 = vmatprep.subr.mxu0 0.0
    %3037 = vmatpush1.msra.mxu0 0.0
    %3038 = vmatprep.subr.mxu0 0.0
    %3039 = vmatpush1.msra.mxu0 0.0
    %3040 = vmatprep.mubr.f32.mxu0 0.0
    %3041 = vmatmul.mubr.f32.gmra.mrb[0].mxu0 %v2974
    %v3042 = vpop.f32.mrb[0].mxu0
    %v3043 = vadd.f32 0.0, %v3042
    %v3044 = vpop.f32.mrb[0].mxu0
    %3045 = vdwg.mxu0
    %3046 = vrot.lane.b32.xlu0 %v809, 48
    %v3047 = vpop.permute.xlu0 %3046
    %v3050 = vsel %vm1461, %v2888, 0
    %3052 = vmatprep.subr.mxu0 0.0
    %3053 = vmatpush1.msra.mxu0 %v3047
    %3054 = vmatprep.subr.mxu0 0.0
    %3055 = vmatpush1.msra.mxu0 0.0
    %3056 = vmatprep.subr.mxu0 0.0
    %3057 = vmatpush1.msra.mxu0 0.0
    %3058 = vmatprep.subr.mxu0 0.0
    %3059 = vmatpush1.msra.mxu0 0.0
    %3060 = vmatprep.subr.mxu0 0.0
    %3061 = vmatpush1.msra.mxu0 0.0
    %3062 = vmatprep.subr.mxu0 0.0
    %3063 = vmatpush1.msra.mxu0 0.0
    %3064 = vmatprep.subr.mxu0 0.0
    %3065 = vmatpush1.msra.mxu0 0.0
    %3066 = vmatprep.subr.mxu0 0.0
    %3067 = vmatpush1.msra.mxu0 0.0
    %3068 = vmatprep.subr.mxu0 0.0
    %3069 = vmatpush1.msra.mxu0 0.0
    %3070 = vmatprep.subr.mxu0 0.0
    %3071 = vmatpush1.msra.mxu0 0.0
    %3072 = vmatprep.subr.mxu0 0.0
    %3073 = vmatpush1.msra.mxu0 0.0
    %3074 = vmatprep.subr.mxu0 0.0
    %3075 = vmatpush1.msra.mxu0 0.0
    %3076 = vmatprep.subr.mxu0 0.0
    %3077 = vmatpush1.msra.mxu0 0.0
    %3078 = vmatprep.subr.mxu0 0.0
    %3079 = vmatpush1.msra.mxu0 0.0
    %3080 = vmatprep.subr.mxu0 0.0
    %3081 = vmatpush1.msra.mxu0 0.0
    %3082 = vmatprep.subr.mxu0 0.0
    %3083 = vmatpush1.msra.mxu0 0.0
    %3084 = vmatprep.subr.mxu0 0.0
    %3085 = vmatpush1.msra.mxu0 0.0
    %3086 = vmatprep.subr.mxu0 0.0
    %3087 = vmatpush1.msra.mxu0 0.0
    %3088 = vmatprep.subr.mxu0 0.0
    %3089 = vmatpush1.msra.mxu0 0.0
    %3090 = vmatprep.subr.mxu0 0.0
    %3091 = vmatpush1.msra.mxu0 0.0
    %3092 = vmatprep.subr.mxu0 0.0
    %3093 = vmatpush1.msra.mxu0 0.0
    %3094 = vmatprep.subr.mxu0 0.0
    %3095 = vmatpush1.msra.mxu0 0.0
    %3096 = vmatprep.subr.mxu0 0.0
    %3097 = vmatpush1.msra.mxu0 0.0
    %3098 = vmatprep.subr.mxu0 0.0
    %3099 = vmatpush1.msra.mxu0 0.0
    %3100 = vmatprep.subr.mxu0 0.0
    %3101 = vmatpush1.msra.mxu0 0.0
    %3102 = vmatprep.subr.mxu0 0.0
    %3103 = vmatpush1.msra.mxu0 0.0
    %3104 = vmatprep.subr.mxu0 0.0
    %3105 = vmatpush1.msra.mxu0 0.0
    %3106 = vmatprep.subr.mxu0 0.0
    %3107 = vmatpush1.msra.mxu0 0.0
    %3108 = vmatprep.subr.mxu0 0.0
    %3109 = vmatpush1.msra.mxu0 0.0
    %3110 = vmatprep.subr.mxu0 0.0
    %3111 = vmatpush1.msra.mxu0 0.0
    %3112 = vmatprep.subr.mxu0 0.0
    %3113 = vmatpush1.msra.mxu0 0.0
    %3114 = vmatprep.subr.mxu0 0.0
    %3115 = vmatpush1.msra.mxu0 0.0
    %3116 = vmatprep.mubr.f32.mxu0 0.0
    %3117 = vmatmul.mubr.f32.gmra.mrb[0].mxu0 %v3050
    %v3118 = vpop.f32.mrb[0].mxu0
    %v3119 = vadd.f32 0.0, %v3118
    %v3120 = vpop.f32.mrb[0].mxu0
    %3121 = vdwg.mxu0
    %3122 = vrot.lane.b32.xlu0 %v814, 48
    %v3123 = vpop.permute.xlu0 %3122
    %v3126 = vsel %vm1461, %v2889, 0
    %3128 = vmatprep.subr.mxu0 0.0
    %3129 = vmatpush1.msra.mxu0 %v3123
    %3130 = vmatprep.subr.mxu0 0.0
    %3131 = vmatpush1.msra.mxu0 0.0
    %3132 = vmatprep.subr.mxu0 0.0
    %3133 = vmatpush1.msra.mxu0 0.0
    %3134 = vmatprep.subr.mxu0 0.0
    %3135 = vmatpush1.msra.mxu0 0.0
    %3136 = vmatprep.subr.mxu0 0.0
    %3137 = vmatpush1.msra.mxu0 0.0
    %3138 = vmatprep.subr.mxu0 0.0
    %3139 = vmatpush1.msra.mxu0 0.0
    %3140 = vmatprep.subr.mxu0 0.0
    %3141 = vmatpush1.msra.mxu0 0.0
    %3142 = vmatprep.subr.mxu0 0.0
    %3143 = vmatpush1.msra.mxu0 0.0
    %3144 = vmatprep.subr.mxu0 0.0
    %3145 = vmatpush1.msra.mxu0 0.0
    %3146 = vmatprep.subr.mxu0 0.0
    %3147 = vmatpush1.msra.mxu0 0.0
    %3148 = vmatprep.subr.mxu0 0.0
    %3149 = vmatpush1.msra.mxu0 0.0
    %3150 = vmatprep.subr.mxu0 0.0
    %3151 = vmatpush1.msra.mxu0 0.0
    %3152 = vmatprep.subr.mxu0 0.0
    %3153 = vmatpush1.msra.mxu0 0.0
    %3154 = vmatprep.subr.mxu0 0.0
    %3155 = vmatpush1.msra.mxu0 0.0
    %3156 = vmatprep.subr.mxu0 0.0
    %3157 = vmatpush1.msra.mxu0 0.0
    %3158 = vmatprep.subr.mxu0 0.0
    %3159 = vmatpush1.msra.mxu0 0.0
    %3160 = vmatprep.subr.mxu0 0.0
    %3161 = vmatpush1.msra.mxu0 0.0
    %3162 = vmatprep.subr.mxu0 0.0
    %3163 = vmatpush1.msra.mxu0 0.0
    %3164 = vmatprep.subr.mxu0 0.0
    %3165 = vmatpush1.msra.mxu0 0.0
    %3166 = vmatprep.subr.mxu0 0.0
    %3167 = vmatpush1.msra.mxu0 0.0
    %3168 = vmatprep.subr.mxu0 0.0
    %3169 = vmatpush1.msra.mxu0 0.0
    %3170 = vmatprep.subr.mxu0 0.0
    %3171 = vmatpush1.msra.mxu0 0.0
    %3172 = vmatprep.subr.mxu0 0.0
    %3173 = vmatpush1.msra.mxu0 0.0
    %3174 = vmatprep.subr.mxu0 0.0
    %3175 = vmatpush1.msra.mxu0 0.0
    %3176 = vmatprep.subr.mxu0 0.0
    %3177 = vmatpush1.msra.mxu0 0.0
    %3178 = vmatprep.subr.mxu0 0.0
    %3179 = vmatpush1.msra.mxu0 0.0
    %3180 = vmatprep.subr.mxu0 0.0
    %3181 = vmatpush1.msra.mxu0 0.0
    %3182 = vmatprep.subr.mxu0 0.0
    %3183 = vmatpush1.msra.mxu0 0.0
    %3184 = vmatprep.subr.mxu0 0.0
    %3185 = vmatpush1.msra.mxu0 0.0
    %3186 = vmatprep.subr.mxu0 0.0
    %3187 = vmatpush1.msra.mxu0 0.0
    %3188 = vmatprep.subr.mxu0 0.0
    %3189 = vmatpush1.msra.mxu0 0.0
    %3190 = vmatprep.subr.mxu0 0.0
    %3191 = vmatpush1.msra.mxu0 0.0
    %3192 = vmatprep.mubr.f32.mxu0 0.0
    %3193 = vmatmul.mubr.f32.gmra.mrb[0].mxu0 %v3126
    %v3194 = vpop.f32.mrb[0].mxu0
    %v3195 = vadd.f32 0.0, %v3194
    %v3196 = vpop.f32.mrb[0].mxu0
    %3197 = vdwg.mxu0
    %3198 = vrot.lane.b32.xlu0 %v819, 48
    %v3199 = vpop.permute.xlu0 %3198
    %v3202 = vsel %vm1461, %v2890, 0
    %3204 = vmatprep.subr.mxu0 0.0
    %3205 = vmatpush1.msra.mxu0 %v3199
    %3206 = vmatprep.subr.mxu0 0.0
    %3207 = vmatpush1.msra.mxu0 0.0
    %3208 = vmatprep.subr.mxu0 0.0
    %3209 = vmatpush1.msra.mxu0 0.0
    %3210 = vmatprep.subr.mxu0 0.0
    %3211 = vmatpush1.msra.mxu0 0.0
    %3212 = vmatprep.subr.mxu0 0.0
    %3213 = vmatpush1.msra.mxu0 0.0
    %3214 = vmatprep.subr.mxu0 0.0
    %3215 = vmatpush1.msra.mxu0 0.0
    %3216 = vmatprep.subr.mxu0 0.0
    %3217 = vmatpush1.msra.mxu0 0.0
    %3218 = vmatprep.subr.mxu0 0.0
    %3219 = vmatpush1.msra.mxu0 0.0
    %3220 = vmatprep.subr.mxu0 0.0
    %3221 = vmatpush1.msra.mxu0 0.0
    %3222 = vmatprep.subr.mxu0 0.0
    %3223 = vmatpush1.msra.mxu0 0.0
    %3224 = vmatprep.subr.mxu0 0.0
    %3225 = vmatpush1.msra.mxu0 0.0
    %3226 = vmatprep.subr.mxu0 0.0
    %3227 = vmatpush1.msra.mxu0 0.0
    %3228 = vmatprep.subr.mxu0 0.0
    %3229 = vmatpush1.msra.mxu0 0.0
    %3230 = vmatprep.subr.mxu0 0.0
    %3231 = vmatpush1.msra.mxu0 0.0
    %3232 = vmatprep.subr.mxu0 0.0
    %3233 = vmatpush1.msra.mxu0 0.0
    %3234 = vmatprep.subr.mxu0 0.0
    %3235 = vmatpush1.msra.mxu0 0.0
    %3236 = vmatprep.subr.mxu0 0.0
    %3237 = vmatpush1.msra.mxu0 0.0
    %3238 = vmatprep.subr.mxu0 0.0
    %3239 = vmatpush1.msra.mxu0 0.0
    %3240 = vmatprep.subr.mxu0 0.0
    %3241 = vmatpush1.msra.mxu0 0.0
    %3242 = vmatprep.subr.mxu0 0.0
    %3243 = vmatpush1.msra.mxu0 0.0
    %3244 = vmatprep.subr.mxu0 0.0
    %3245 = vmatpush1.msra.mxu0 0.0
    %3246 = vmatprep.subr.mxu0 0.0
    %3247 = vmatpush1.msra.mxu0 0.0
    %3248 = vmatprep.subr.mxu0 0.0
    %3249 = vmatpush1.msra.mxu0 0.0
    %3250 = vmatprep.subr.mxu0 0.0
    %3251 = vmatpush1.msra.mxu0 0.0
    %3252 = vmatprep.subr.mxu0 0.0
    %3253 = vmatpush1.msra.mxu0 0.0
    %3254 = vmatprep.subr.mxu0 0.0
    %3255 = vmatpush1.msra.mxu0 0.0
    %3256 = vmatprep.subr.mxu0 0.0
    %3257 = vmatpush1.msra.mxu0 0.0
    %3258 = vmatprep.subr.mxu0 0.0
    %3259 = vmatpush1.msra.mxu0 0.0
    %3260 = vmatprep.subr.mxu0 0.0
    %3261 = vmatpush1.msra.mxu0 0.0
    %3262 = vmatprep.subr.mxu0 0.0
    %3263 = vmatpush1.msra.mxu0 0.0
    %3264 = vmatprep.subr.mxu0 0.0
    %3265 = vmatpush1.msra.mxu0 0.0
    %3266 = vmatprep.subr.mxu0 0.0
    %3267 = vmatpush1.msra.mxu0 0.0
    %3268 = vmatprep.mubr.f32.mxu0 0.0
    %3269 = vmatmul.mubr.f32.gmra.mrb[0].mxu0 %v3202
    %v3270 = vpop.f32.mrb[0].mxu0
    %v3271 = vadd.f32 0.0, %v3270
    %v3272 = vpop.f32.mrb[0].mxu0
    %3273 = vdwg.mxu0
    %3274 = vrot.lane.b32.xlu0 %v824, 48
    %v3275 = vpop.permute.xlu0 %3274
    %v3278 = vsel %vm1461, %v2891, 0
    %3280 = vmatprep.subr.mxu0 0.0
    %3281 = vmatpush1.msra.mxu0 %v3275
    %3282 = vmatprep.subr.mxu0 0.0
    %3283 = vmatpush1.msra.mxu0 0.0
    %3284 = vmatprep.subr.mxu0 0.0
    %3285 = vmatpush1.msra.mxu0 0.0
    %3286 = vmatprep.subr.mxu0 0.0
    %3287 = vmatpush1.msra.mxu0 0.0
    %3288 = vmatprep.subr.mxu0 0.0
    %3289 = vmatpush1.msra.mxu0 0.0
    %3290 = vmatprep.subr.mxu0 0.0
    %3291 = vmatpush1.msra.mxu0 0.0
    %3292 = vmatprep.subr.mxu0 0.0
    %3293 = vmatpush1.msra.mxu0 0.0
    %3294 = vmatprep.subr.mxu0 0.0
    %3295 = vmatpush1.msra.mxu0 0.0
    %3296 = vmatprep.subr.mxu0 0.0
    %3297 = vmatpush1.msra.mxu0 0.0
    %3298 = vmatprep.subr.mxu0 0.0
    %3299 = vmatpush1.msra.mxu0 0.0
    %3300 = vmatprep.subr.mxu0 0.0
    %3301 = vmatpush1.msra.mxu0 0.0
    %3302 = vmatprep.subr.mxu0 0.0
    %3303 = vmatpush1.msra.mxu0 0.0
    %3304 = vmatprep.subr.mxu0 0.0
    %3305 = vmatpush1.msra.mxu0 0.0
    %3306 = vmatprep.subr.mxu0 0.0
    %3307 = vmatpush1.msra.mxu0 0.0
    %3308 = vmatprep.subr.mxu0 0.0
    %3309 = vmatpush1.msra.mxu0 0.0
    %3310 = vmatprep.subr.mxu0 0.0
    %3311 = vmatpush1.msra.mxu0 0.0
    %3312 = vmatprep.subr.mxu0 0.0
    %3313 = vmatpush1.msra.mxu0 0.0
    %3314 = vmatprep.subr.mxu0 0.0
    %3315 = vmatpush1.msra.mxu0 0.0
    %3316 = vmatprep.subr.mxu0 0.0
    %3317 = vmatpush1.msra.mxu0 0.0
    %3318 = vmatprep.subr.mxu0 0.0
    %3319 = vmatpush1.msra.mxu0 0.0
    %3320 = vmatprep.subr.mxu0 0.0
    %3321 = vmatpush1.msra.mxu0 0.0
    %3322 = vmatprep.subr.mxu0 0.0
    %3323 = vmatpush1.msra.mxu0 0.0
    %3324 = vmatprep.subr.mxu0 0.0
    %3325 = vmatpush1.msra.mxu0 0.0
    %3326 = vmatprep.subr.mxu0 0.0
    %3327 = vmatpush1.msra.mxu0 0.0
    %3328 = vmatprep.subr.mxu0 0.0
    %3329 = vmatpush1.msra.mxu0 0.0
    %3330 = vmatprep.subr.mxu0 0.0
    %3331 = vmatpush1.msra.mxu0 0.0
    %3332 = vmatprep.subr.mxu0 0.0
    %3333 = vmatpush1.msra.mxu0 0.0
    %3334 = vmatprep.subr.mxu0 0.0
    %3335 = vmatpush1.msra.mxu0 0.0
    %3336 = vmatprep.subr.mxu0 0.0
    %3337 = vmatpush1.msra.mxu0 0.0
    %3338 = vmatprep.subr.mxu0 0.0
    %3339 = vmatpush1.msra.mxu0 0.0
    %3340 = vmatprep.subr.mxu0 0.0
    %3341 = vmatpush1.msra.mxu0 0.0
    %3342 = vmatprep.subr.mxu0 0.0
    %3343 = vmatpush1.msra.mxu0 0.0
    %3344 = vmatprep.mubr.f32.mxu0 0.0
    %3345 = vmatmul.mubr.f32.gmra.mrb[0].mxu0 %v3278
    %v3346 = vpop.f32.mrb[0].mxu0
    %v3347 = vadd.f32 0.0, %v3346
    %v3348 = vpop.f32.mrb[0].mxu0
    %3349 = vdwg.mxu0
    %3350 = vrot.lane.b32.xlu0 %v829, 48
    %v3351 = vpop.permute.xlu0 %3350
    %v3354 = vsel %vm1461, %v2892, 0
    %3356 = vmatprep.subr.mxu0 0.0
    %3357 = vmatpush1.msra.mxu0 %v3351
    %3358 = vmatprep.subr.mxu0 0.0
    %3359 = vmatpush1.msra.mxu0 0.0
    %3360 = vmatprep.subr.mxu0 0.0
    %3361 = vmatpush1.msra.mxu0 0.0
    %3362 = vmatprep.subr.mxu0 0.0
    %3363 = vmatpush1.msra.mxu0 0.0
    %3364 = vmatprep.subr.mxu0 0.0
    %3365 = vmatpush1.msra.mxu0 0.0
    %3366 = vmatprep.subr.mxu0 0.0
    %3367 = vmatpush1.msra.mxu0 0.0
    %3368 = vmatprep.subr.mxu0 0.0
    %3369 = vmatpush1.msra.mxu0 0.0
    %3370 = vmatprep.subr.mxu0 0.0
    %3371 = vmatpush1.msra.mxu0 0.0
    %3372 = vmatprep.subr.mxu0 0.0
    %3373 = vmatpush1.msra.mxu0 0.0
    %3374 = vmatprep.subr.mxu0 0.0
    %3375 = vmatpush1.msra.mxu0 0.0
    %3376 = vmatprep.subr.mxu0 0.0
    %3377 = vmatpush1.msra.mxu0 0.0
    %3378 = vmatprep.subr.mxu0 0.0
    %3379 = vmatpush1.msra.mxu0 0.0
    %3380 = vmatprep.subr.mxu0 0.0
    %3381 = vmatpush1.msra.mxu0 0.0
    %3382 = vmatprep.subr.mxu0 0.0
    %3383 = vmatpush1.msra.mxu0 0.0
    %3384 = vmatprep.subr.mxu0 0.0
    %3385 = vmatpush1.msra.mxu0 0.0
    %3386 = vmatprep.subr.mxu0 0.0
    %3387 = vmatpush1.msra.mxu0 0.0
    %3388 = vmatprep.subr.mxu0 0.0
    %3389 = vmatpush1.msra.mxu0 0.0
    %3390 = vmatprep.subr.mxu0 0.0
    %3391 = vmatpush1.msra.mxu0 0.0
    %3392 = vmatprep.subr.mxu0 0.0
    %3393 = vmatpush1.msra.mxu0 0.0
    %3394 = vmatprep.subr.mxu0 0.0
    %3395 = vmatpush1.msra.mxu0 0.0
    %3396 = vmatprep.subr.mxu0 0.0
    %3397 = vmatpush1.msra.mxu0 0.0
    %3398 = vmatprep.subr.mxu0 0.0
    %3399 = vmatpush1.msra.mxu0 0.0
    %3400 = vmatprep.subr.mxu0 0.0
    %3401 = vmatpush1.msra.mxu0 0.0
    %3402 = vmatprep.subr.mxu0 0.0
    %3403 = vmatpush1.msra.mxu0 0.0
    %3404 = vmatprep.subr.mxu0 0.0
    %3405 = vmatpush1.msra.mxu0 0.0
    %3406 = vmatprep.subr.mxu0 0.0
    %3407 = vmatpush1.msra.mxu0 0.0
    %3408 = vmatprep.subr.mxu0 0.0
    %3409 = vmatpush1.msra.mxu0 0.0
    %3410 = vmatprep.subr.mxu0 0.0
    %3411 = vmatpush1.msra.mxu0 0.0
    %3412 = vmatprep.subr.mxu0 0.0
    %3413 = vmatpush1.msra.mxu0 0.0
    %3414 = vmatprep.subr.mxu0 0.0
    %3415 = vmatpush1.msra.mxu0 0.0
    %3416 = vmatprep.subr.mxu0 0.0
    %3417 = vmatpush1.msra.mxu0 0.0
    %3418 = vmatprep.subr.mxu0 0.0
    %3419 = vmatpush1.msra.mxu0 0.0
    %3420 = vmatprep.mubr.f32.mxu0 0.0
    %3421 = vmatmul.mubr.f32.gmra.mrb[0].mxu0 %v3354
    %v3422 = vpop.f32.mrb[0].mxu0
    %v3423 = vadd.f32 0.0, %v3422
    %v3424 = vpop.f32.mrb[0].mxu0
    %3425 = vdwg.mxu0
    %3426 = vrot.lane.b32.xlu0 %v834, 48
    %v3427 = vpop.permute.xlu0 %3426
    %v3430 = vsel %vm1461, %v2893, 0
    %3432 = vmatprep.subr.mxu0 0.0
    %3433 = vmatpush1.msra.mxu0 %v3427
    %3434 = vmatprep.subr.mxu0 0.0
    %3435 = vmatpush1.msra.mxu0 0.0
    %3436 = vmatprep.subr.mxu0 0.0
    %3437 = vmatpush1.msra.mxu0 0.0
    %3438 = vmatprep.subr.mxu0 0.0
    %3439 = vmatpush1.msra.mxu0 0.0
    %3440 = vmatprep.subr.mxu0 0.0
    %3441 = vmatpush1.msra.mxu0 0.0
    %3442 = vmatprep.subr.mxu0 0.0
    %3443 = vmatpush1.msra.mxu0 0.0
    %3444 = vmatprep.subr.mxu0 0.0
    %3445 = vmatpush1.msra.mxu0 0.0
    %3446 = vmatprep.subr.mxu0 0.0
    %3447 = vmatpush1.msra.mxu0 0.0
    %3448 = vmatprep.subr.mxu0 0.0
    %3449 = vmatpush1.msra.mxu0 0.0
    %3450 = vmatprep.subr.mxu0 0.0
    %3451 = vmatpush1.msra.mxu0 0.0
    %3452 = vmatprep.subr.mxu0 0.0
    %3453 = vmatpush1.msra.mxu0 0.0
    %3454 = vmatprep.subr.mxu0 0.0
    %3455 = vmatpush1.msra.mxu0 0.0
    %3456 = vmatprep.subr.mxu0 0.0
    %3457 = vmatpush1.msra.mxu0 0.0
    %3458 = vmatprep.subr.mxu0 0.0
    %3459 = vmatpush1.msra.mxu0 0.0
    %3460 = vmatprep.subr.mxu0 0.0
    %3461 = vmatpush1.msra.mxu0 0.0
    %3462 = vmatprep.subr.mxu0 0.0
    %3463 = vmatpush1.msra.mxu0 0.0
    %3464 = vmatprep.subr.mxu0 0.0
    %3465 = vmatpush1.msra.mxu0 0.0
    %3466 = vmatprep.subr.mxu0 0.0
    %3467 = vmatpush1.msra.mxu0 0.0
    %3468 = vmatprep.subr.mxu0 0.0
    %3469 = vmatpush1.msra.mxu0 0.0
    %3470 = vmatprep.subr.mxu0 0.0
    %3471 = vmatpush1.msra.mxu0 0.0
    %3472 = vmatprep.subr.mxu0 0.0
    %3473 = vmatpush1.msra.mxu0 0.0
    %3474 = vmatprep.subr.mxu0 0.0
    %3475 = vmatpush1.msra.mxu0 0.0
    %3476 = vmatprep.subr.mxu0 0.0
    %3477 = vmatpush1.msra.mxu0 0.0
    %3478 = vmatprep.subr.mxu0 0.0
    %3479 = vmatpush1.msra.mxu0 0.0
    %3480 = vmatprep.subr.mxu0 0.0
    %3481 = vmatpush1.msra.mxu0 0.0
    %3482 = vmatprep.subr.mxu0 0.0
    %3483 = vmatpush1.msra.mxu0 0.0
    %3484 = vmatprep.subr.mxu0 0.0
    %3485 = vmatpush1.msra.mxu0 0.0
    %3486 = vmatprep.subr.mxu0 0.0
    %3487 = vmatpush1.msra.mxu0 0.0
    %3488 = vmatprep.subr.mxu0 0.0
    %3489 = vmatpush1.msra.mxu0 0.0
    %3490 = vmatprep.subr.mxu0 0.0
    %3491 = vmatpush1.msra.mxu0 0.0
    %3492 = vmatprep.subr.mxu0 0.0
    %3493 = vmatpush1.msra.mxu0 0.0
    %3494 = vmatprep.subr.mxu0 0.0
    %3495 = vmatpush1.msra.mxu0 0.0
    %3496 = vmatprep.mubr.f32.mxu0 0.0
    %3497 = vmatmul.mubr.f32.gmra.mrb[0].mxu0 %v3430
    %v3498 = vpop.f32.mrb[0].mxu0
    %v3499 = vadd.f32 0.0, %v3498
    %v3500 = vpop.f32.mrb[0].mxu0
    %3501 = vdwg.mxu0
    %v3503 = vsel %vm146, %v2967, 0
    %v3506 = vsel %vm146, %v3043, 0
    %v3509 = vsel %vm146, %v3119, 0
    %v3512 = vsel %vm146, %v3195, 0
    %v3515 = vsel %vm146, %v3271, 0
    %v3518 = vsel %vm146, %v3347, 0
    %v3521 = vsel %vm146, %v3423, 0
    %v3524 = vsel %vm146, %v3499, 0
    %3526 = vmatprep.subr.mxu0 0.0
    %3527 = vmatpush1.msra.mxu0 %v698
    %3528 = vmatprep.subr.mxu0 0.0
    %3529 = vmatpush1.msra.mxu0 %v699
    %3530 = vmatprep.subr.mxu0 0.0
    %3531 = vmatpush1.msra.mxu0 0.0
    %3532 = vmatprep.subr.mxu0 0.0
    %3533 = vmatpush1.msra.mxu0 0.0
    %3534 = vmatprep.subr.mxu0 0.0
    %3535 = vmatpush1.msra.mxu0 0.0
    %3536 = vmatprep.subr.mxu0 0.0
    %3537 = vmatpush1.msra.mxu0 0.0
    %3538 = vmatprep.subr.mxu0 0.0
    %3539 = vmatpush1.msra.mxu0 0.0
    %3540 = vmatprep.subr.mxu0 0.0
    %3541 = vmatpush1.msra.mxu0 0.0
    %3542 = vmatprep.subr.mxu0 0.0
    %3543 = vmatpush1.msra.mxu0 0.0
    %3544 = vmatprep.subr.mxu0 0.0
    %3545 = vmatpush1.msra.mxu0 0.0
    %3546 = vmatprep.subr.mxu0 0.0
    %3547 = vmatpush1.msra.mxu0 0.0
    %3548 = vmatprep.subr.mxu0 0.0
    %3549 = vmatpush1.msra.mxu0 0.0
    %3550 = vmatprep.subr.mxu0 0.0
    %3551 = vmatpush1.msra.mxu0 0.0
    %3552 = vmatprep.subr.mxu0 0.0
    %3553 = vmatpush1.msra.mxu0 0.0
    %3554 = vmatprep.subr.mxu0 0.0
    %3555 = vmatpush1.msra.mxu0 0.0
    %3556 = vmatprep.subr.mxu0 0.0
    %3557 = vmatpush1.msra.mxu0 0.0
    %3558 = vmatprep.subr.mxu0 0.0
    %3559 = vmatpush1.msra.mxu0 0.0
    %3560 = vmatprep.subr.mxu0 0.0
    %3561 = vmatpush1.msra.mxu0 0.0
    %3562 = vmatprep.subr.mxu0 0.0
    %3563 = vmatpush1.msra.mxu0 0.0
    %3564 = vmatprep.subr.mxu0 0.0
    %3565 = vmatpush1.msra.mxu0 0.0
    %3566 = vmatprep.subr.mxu0 0.0
    %3567 = vmatpush1.msra.mxu0 0.0
    %3568 = vmatprep.subr.mxu0 0.0
    %3569 = vmatpush1.msra.mxu0 0.0
    %3570 = vmatprep.subr.mxu0 0.0
    %3571 = vmatpush1.msra.mxu0 0.0
    %3572 = vmatprep.subr.mxu0 0.0
    %3573 = vmatpush1.msra.mxu0 0.0
    %3574 = vmatprep.subr.mxu0 0.0
    %3575 = vmatpush1.msra.mxu0 0.0
    %3576 = vmatprep.subr.mxu0 0.0
    %3577 = vmatpush1.msra.mxu0 0.0
    %3578 = vmatprep.subr.mxu0 0.0
    %3579 = vmatpush1.msra.mxu0 0.0
    %3580 = vmatprep.subr.mxu0 0.0
    %3581 = vmatpush1.msra.mxu0 0.0
    %3582 = vmatprep.subr.mxu0 0.0
    %3583 = vmatpush1.msra.mxu0 0.0
    %3584 = vmatprep.subr.mxu0 0.0
    %3585 = vmatpush1.msra.mxu0 0.0
    %3586 = vmatprep.subr.mxu0 0.0
    %3587 = vmatpush1.msra.mxu0 0.0
    %3588 = vmatprep.subr.mxu0 0.0
    %3589 = vmatpush1.msra.mxu0 0.0
    %3590 = vmatprep.mubr.f32.mxu0 0.0
    %3591 = vmatmul.mubr.f32.gmra.mrb[0].mxu0 %v3503
    %v3592 = vpop.f32.mrb[0].mxu0
    %v3593 = vadd.f32 0.0, %v3592
    %v3594 = vpop.f32.mrb[0].mxu0
    %3595 = vmatprep.mubr.f32.mxu0 0.0
    %3596 = vmatmul.mubr.f32.gmra.mrb[0].mxu0 %v3506
    %v3597 = vpop.f32.mrb[0].mxu0
    %v3598 = vadd.f32 0.0, %v3597
    %v3599 = vpop.f32.mrb[0].mxu0
    %3600 = vmatprep.mubr.f32.mxu0 0.0
    %3601 = vmatmul.mubr.f32.gmra.mrb[0].mxu0 %v3509
    %v3602 = vpop.f32.mrb[0].mxu0
    %v3603 = vadd.f32 0.0, %v3602
    %v3604 = vpop.f32.mrb[0].mxu0
    %3605 = vmatprep.mubr.f32.mxu0 0.0
    %3606 = vmatmul.mubr.f32.gmra.mrb[0].mxu0 %v3512
    %v3607 = vpop.f32.mrb[0].mxu0
    %v3608 = vadd.f32 0.0, %v3607
    %v3609 = vpop.f32.mrb[0].mxu0
    %3610 = vmatprep.mubr.f32.mxu0 0.0
    %3611 = vmatmul.mubr.f32.gmra.mrb[0].mxu0 %v3515
    %v3612 = vpop.f32.mrb[0].mxu0
    %v3613 = vadd.f32 0.0, %v3612
    %v3614 = vpop.f32.mrb[0].mxu0
    %3615 = vmatprep.mubr.f32.mxu0 0.0
    %3616 = vmatmul.mubr.f32.gmra.mrb[0].mxu0 %v3518
    %v3617 = vpop.f32.mrb[0].mxu0
    %v3618 = vadd.f32 0.0, %v3617
    %v3619 = vpop.f32.mrb[0].mxu0
    %3620 = vmatprep.mubr.f32.mxu0 0.0
    %3621 = vmatmul.mubr.f32.gmra.mrb[0].mxu0 %v3521
    %v3622 = vpop.f32.mrb[0].mxu0
    %v3623 = vadd.f32 0.0, %v3622
    %v3624 = vpop.f32.mrb[0].mxu0
    %3625 = vmatprep.mubr.f32.mxu0 0.0
    %3626 = vmatmul.mubr.f32.gmra.mrb[0].mxu0 %v3524
    %v3627 = vpop.f32.mrb[0].mxu0
    %v3628 = vadd.f32 0.0, %v3627
    %v3629 = vpop.f32.mrb[0].mxu0
    %3630 = vdwg.mxu0
    %v3632 = vsel %vm146, %v1631, 0
    %v3635 = vsel %vm146, %v1707, 0
    %v3638 = vsel %vm146, %v1783, 0
    %v3641 = vsel %vm146, %v1859, 0
    %v3644 = vsel %vm146, %v1935, 0
    %v3647 = vsel %vm146, %v2011, 0
    %v3650 = vsel %vm146, %v2087, 0
    %v3653 = vsel %vm146, %v2163, 0
    %3655 = vmatprep.subr.mxu0 0.0
    %3656 = vmatpush1.msra.mxu0 %v696
    %3657 = vmatprep.subr.mxu0 0.0
    %3658 = vmatpush1.msra.mxu0 %v697
    %3659 = vmatprep.subr.mxu0 0.0
    %3660 = vmatpush1.msra.mxu0 0.0
    %3661 = vmatprep.subr.mxu0 0.0
    %3662 = vmatpush1.msra.mxu0 0.0
    %3663 = vmatprep.subr.mxu0 0.0
    %3664 = vmatpush1.msra.mxu0 0.0
    %3665 = vmatprep.subr.mxu0 0.0
    %3666 = vmatpush1.msra.mxu0 0.0
    %3667 = vmatprep.subr.mxu0 0.0
    %3668 = vmatpush1.msra.mxu0 0.0
    %3669 = vmatprep.subr.mxu0 0.0
    %3670 = vmatpush1.msra.mxu0 0.0
    %3671 = vmatprep.subr.mxu0 0.0
    %3672 = vmatpush1.msra.mxu0 0.0
    %3673 = vmatprep.subr.mxu0 0.0
    %3674 = vmatpush1.msra.mxu0 0.0
    %3675 = vmatprep.subr.mxu0 0.0
    %3676 = vmatpush1.msra.mxu0 0.0
    %3677 = vmatprep.subr.mxu0 0.0
    %3678 = vmatpush1.msra.mxu0 0.0
    %3679 = vmatprep.subr.mxu0 0.0
    %3680 = vmatpush1.msra.mxu0 0.0
    %3681 = vmatprep.subr.mxu0 0.0
    %3682 = vmatpush1.msra.mxu0 0.0
    %3683 = vmatprep.subr.mxu0 0.0
    %3684 = vmatpush1.msra.mxu0 0.0
    %3685 = vmatprep.subr.mxu0 0.0
    %3686 = vmatpush1.msra.mxu0 0.0
    %3687 = vmatprep.subr.mxu0 0.0
    %3688 = vmatpush1.msra.mxu0 0.0
    %3689 = vmatprep.subr.mxu0 0.0
    %3690 = vmatpush1.msra.mxu0 0.0
    %3691 = vmatprep.subr.mxu0 0.0
    %3692 = vmatpush1.msra.mxu0 0.0
    %3693 = vmatprep.subr.mxu0 0.0
    %3694 = vmatpush1.msra.mxu0 0.0
    %3695 = vmatprep.subr.mxu0 0.0
    %3696 = vmatpush1.msra.mxu0 0.0
    %3697 = vmatprep.subr.mxu0 0.0
    %3698 = vmatpush1.msra.mxu0 0.0
    %3699 = vmatprep.subr.mxu0 0.0
    %3700 = vmatpush1.msra.mxu0 0.0
    %3701 = vmatprep.subr.mxu0 0.0
    %3702 = vmatpush1.msra.mxu0 0.0
    %3703 = vmatprep.subr.mxu0 0.0
    %3704 = vmatpush1.msra.mxu0 0.0
    %3705 = vmatprep.subr.mxu0 0.0
    %3706 = vmatpush1.msra.mxu0 0.0
    %3707 = vmatprep.subr.mxu0 0.0
    %3708 = vmatpush1.msra.mxu0 0.0
    %3709 = vmatprep.subr.mxu0 0.0
    %3710 = vmatpush1.msra.mxu0 0.0
    %3711 = vmatprep.subr.mxu0 0.0
    %3712 = vmatpush1.msra.mxu0 0.0
    %3713 = vmatprep.subr.mxu0 0.0
    %3714 = vmatpush1.msra.mxu0 0.0
    %3715 = vmatprep.subr.mxu0 0.0
    %3716 = vmatpush1.msra.mxu0 0.0
    %3717 = vmatprep.subr.mxu0 0.0
    %3718 = vmatpush1.msra.mxu0 0.0
    %3719 = vmatprep.mubr.f32.mxu0 0.0
    %3720 = vmatmul.mubr.f32.gmra.mrb[0].mxu0 %v3632
    %v3721 = vpop.f32.mrb[0].mxu0
    %v3722 = vadd.f32 %v3593, %v3721
    %v3723 = vpop.f32.mrb[0].mxu0
    %3724 = vmatprep.mubr.f32.mxu0 0.0
    %3725 = vmatmul.mubr.f32.gmra.mrb[0].mxu0 %v3635
    %v3726 = vpop.f32.mrb[0].mxu0
    %v3727 = vadd.f32 %v3598, %v3726
    %v3728 = vpop.f32.mrb[0].mxu0
    %3729 = vmatprep.mubr.f32.mxu0 0.0
    %3730 = vmatmul.mubr.f32.gmra.mrb[0].mxu0 %v3638
    %v3731 = vpop.f32.mrb[0].mxu0
    %v3732 = vadd.f32 %v3603, %v3731
    %v3733 = vpop.f32.mrb[0].mxu0
    %3734 = vmatprep.mubr.f32.mxu0 0.0
    %3735 = vmatmul.mubr.f32.gmra.mrb[0].mxu0 %v3641
    %v3736 = vpop.f32.mrb[0].mxu0
    %v3737 = vadd.f32 %v3608, %v3736
    %v3738 = vpop.f32.mrb[0].mxu0
    %3739 = vmatprep.mubr.f32.mxu0 0.0
    %3740 = vmatmul.mubr.f32.gmra.mrb[0].mxu0 %v3644
    %v3741 = vpop.f32.mrb[0].mxu0
    %v3742 = vadd.f32 %v3613, %v3741
    %v3743 = vpop.f32.mrb[0].mxu0
    %3744 = vmatprep.mubr.f32.mxu0 0.0
    %3745 = vmatmul.mubr.f32.gmra.mrb[0].mxu0 %v3647
    %v3746 = vpop.f32.mrb[0].mxu0
    %v3747 = vadd.f32 %v3618, %v3746
    %v3748 = vpop.f32.mrb[0].mxu0
    %3749 = vmatprep.mubr.f32.mxu0 0.0
    %3750 = vmatmul.mubr.f32.gmra.mrb[0].mxu0 %v3650
    %v3751 = vpop.f32.mrb[0].mxu0
    %v3752 = vadd.f32 %v3623, %v3751
    %v3753 = vpop.f32.mrb[0].mxu0
    %3754 = vmatprep.mubr.f32.mxu0 0.0
    %3755 = vmatmul.mubr.f32.gmra.mrb[0].mxu0 %v3653
    %v3756 = vpop.f32.mrb[0].mxu0
    %v3757 = vadd.f32 %v3628, %v3756
    %v3758 = vpop.f32.mrb[0].mxu0
    %3759 = vdwg.mxu0
    %v3760 = vadd.f32 %v684, %v3722
    %v3761 = vadd.f32 %v685, %v3727
    %v3762 = vadd.f32 %v686, %v3732
    %v3763 = vadd.f32 %v687, %v3737
    %v3764 = vadd.f32 %v688, %v3742
    %v3765 = vadd.f32 %v689, %v3747
    %v3766 = vadd.f32 %v690, %v3752
    %v3767 = vadd.f32 %v691, %v3757
    %v3768 = vld [vmem:[%s8] sm:$0x1]
    %v3770 = vlaneseq
    %v3771 = vshrl.u32 %v3770, 7
    %v3772 = vsub.s32 0, %v3771
    %v3773 = vrot.slane %v3768, %v3772
    %v3775 = vadd.f32 %v3760, %v3773
    %v3776 = vadd.f32 %v3761, %v3773
    %v3777 = vadd.f32 %v3762, %v3773
    %v3778 = vadd.f32 %v3763, %v3773
    %v3779 = vadd.f32 %v3764, %v3773
    %v3780 = vadd.f32 %v3765, %v3773
    %v3781 = vadd.f32 %v3766, %v3773
    %v3782 = vadd.f32 %v3767, %v3773
    %v3783 = vsel %vm707, %v3775, 0.0
    %v3784 = vsel %vm707, %v3776, 0.0
    %v3785 = vadd.f32 %v3783, %v3784
    %v3786 = vsel %vm707, %v3777, 0.0
    %v3787 = vadd.f32 %v3785, %v3786
    %v3788 = vsel %vm707, %v3778, 0.0
    %v3789 = vadd.f32 %v3787, %v3788
    %v3790 = vsel %vm707, %v3779, 0.0
    %v3791 = vadd.f32 %v3789, %v3790
    %v3792 = vsel %vm707, %v3780, 0.0
    %v3793 = vadd.f32 %v3791, %v3792
    %v3794 = vsel %vm707, %v3781, 0.0
    %v3795 = vadd.f32 %v3793, %v3794
    %v3796 = vsel %vm707, %v3782, 0.0
    %v3797 = vadd.f32 %v3795, %v3796
    %v3798 = vrot.slane %v3797, 4
    %v3799 = vadd.f32 %v3797, %v3798
    %v3800 = vrot.slane %v3799, 2
    %v3801 = vadd.f32 %v3799, %v3800
    %v3802 = vrot.slane %v3801, 1
    %v3803 = vadd.f32 %v3801, %v3802
    %v3804 = vrcp.pop 64.0
    %v3805 = vmul.f32 %v3803, %v3804
    %v3806 = vsub.f32 %v3775, %v3805
    %v3807 = vsub.f32 %v3776, %v3805
    %v3808 = vsub.f32 %v3777, %v3805
    %v3809 = vsub.f32 %v3778, %v3805
    %v3810 = vsub.f32 %v3779, %v3805
    %v3811 = vsub.f32 %v3780, %v3805
    %v3812 = vsub.f32 %v3781, %v3805
    %v3813 = vsub.f32 %v3782, %v3805
    %v3814 = vmul.f32 %v3806, %v3806
    %v3815 = vmul.f32 %v3807, %v3807
    %v3816 = vmul.f32 %v3808, %v3808
    %v3817 = vmul.f32 %v3809, %v3809
    %v3818 = vmul.f32 %v3810, %v3810
    %v3819 = vmul.f32 %v3811, %v3811
    %v3820 = vmul.f32 %v3812, %v3812
    %v3821 = vmul.f32 %v3813, %v3813
    %v3822 = vsel %vm707, %v3814, 0.0
    %v3823 = vsel %vm707, %v3815, 0.0
    %v3824 = vadd.f32 %v3822, %v3823
    %v3825 = vsel %vm707, %v3816, 0.0
    %v3826 = vadd.f32 %v3824, %v3825
    %v3827 = vsel %vm707, %v3817, 0.0
    %v3828 = vadd.f32 %v3826, %v3827
    %v3829 = vsel %vm707, %v3818, 0.0
    %v3830 = vadd.f32 %v3828, %v3829
    %v3831 = vsel %vm707, %v3819, 0.0
    %v3832 = vadd.f32 %v3830, %v3831
    %v3833 = vsel %vm707, %v3820, 0.0
    %v3834 = vadd.f32 %v3832, %v3833
    %v3835 = vsel %vm707, %v3821, 0.0
    %v3836 = vadd.f32 %v3834, %v3835
    %v3837 = vrot.slane %v3836, 4
    %v3838 = vadd.f32 %v3836, %v3837
    %v3839 = vrot.slane %v3838, 2
    %v3840 = vadd.f32 %v3838, %v3839
    %v3841 = vrot.slane %v3840, 1
    %v3842 = vadd.f32 %v3840, %v3841
    %v3843 = vmul.f32 %v3842, %v3804
    %v3844 = vadd.f32 %v3843, 1e-05
    %v3845 = vrsqrt.pop %v3844
    %v3846 = vmul.f32 %v3806, %v3845
    %v3847 = vmul.f32 %v3807, %v3845
    %v3848 = vmul.f32 %v3808, %v3845
    %v3849 = vmul.f32 %v3809, %v3845
    %v3850 = vmul.f32 %v3810, %v3845
    %v3851 = vmul.f32 %v3811, %v3845
    %v3852 = vmul.f32 %v3812, %v3845
    %v3853 = vmul.f32 %v3813, %v3845
    %v3854 = vld [vmem:[%s9] sm:$0x1]
    %v3856 = vlaneseq
    %v3857 = vshrl.u32 %v3856, 7
    %v3858 = vsub.s32 0, %v3857
    %v3859 = vrot.slane %v3854, %v3858
    %v3861 = vmul.f32 %v3846, %v3859
    %v3862 = vmul.f32 %v3847, %v3859
    %v3863 = vmul.f32 %v3848, %v3859
    %v3864 = vmul.f32 %v3849, %v3859
    %v3865 = vmul.f32 %v3850, %v3859
    %v3866 = vmul.f32 %v3851, %v3859
    %v3867 = vmul.f32 %v3852, %v3859
    %v3868 = vmul.f32 %v3853, %v3859
    %v3869 = vld [vmem:[%s10] sm:$0x1]
    %v3871 = vlaneseq
    %v3872 = vshrl.u32 %v3871, 7
    %v3873 = vsub.s32 0, %v3872
    %v3874 = vrot.slane %v3869, %v3873
    %v3876 = vadd.f32 %v3861, %v3874
    %v3877 = vadd.f32 %v3862, %v3874
    %v3878 = vadd.f32 %v3863, %v3874
    %v3879 = vadd.f32 %v3864, %v3874
    %v3880 = vadd.f32 %v3865, %v3874
    %v3881 = vadd.f32 %v3866, %v3874
    %v3882 = vadd.f32 %v3867, %v3874
    %v3883 = vadd.f32 %v3868, %v3874
    %v3884 = vld [vmem:[#allocation9] sm:$0xff]
    %v3885 = vld [vmem:[#allocation9 + $0x8] sm:$0xff]
    %v3886 = vld [vmem:[#allocation9 + $0x10] sm:$0xff]
    %v3887 = vld [vmem:[#allocation9 + $0x18] sm:$0xff]
    %v3888 = vld [vmem:[%s12] sm:$0x1]
    %v3890 = vlaneseq
    %v3891 = vshrl.u32 %v3890, 7
    %v3892 = vsub.s32 0, %v3891
    %v3893 = vrot.slane %v3888, %v3892
    %v3896 = vsel %vm707, %v3876, 0
    %v3899 = vsel %vm707, %v3877, 0
    %v3902 = vsel %vm707, %v3878, 0
    %v3905 = vsel %vm707, %v3879, 0
    %v3908 = vsel %vm707, %v3880, 0
    %v3911 = vsel %vm707, %v3881, 0
    %v3914 = vsel %vm707, %v3882, 0
    %v3917 = vsel %vm707, %v3883, 0
    %3919 = vmatprep.subr.mxu0 0.0
    %3920 = vmatpush1.msra.mxu0 %v3884
    %3921 = vmatprep.subr.mxu0 0.0
    %3922 = vmatpush1.msra.mxu0 %v3885
    %3923 = vmatprep.subr.mxu0 0.0
    %3924 = vmatpush1.msra.mxu0 %v3886
    %3925 = vmatprep.subr.mxu0 0.0
    %3926 = vmatpush1.msra.mxu0 %v3887
    %3927 = vmatprep.subr.mxu0 0.0
    %3928 = vmatpush1.msra.mxu0 0.0
    %3929 = vmatprep.subr.mxu0 0.0
    %3930 = vmatpush1.msra.mxu0 0.0
    %3931 = vmatprep.subr.mxu0 0.0
    %3932 = vmatpush1.msra.mxu0 0.0
    %3933 = vmatprep.subr.mxu0 0.0
    %3934 = vmatpush1.msra.mxu0 0.0
    %3935 = vmatprep.subr.mxu0 0.0
    %3936 = vmatpush1.msra.mxu0 0.0
    %3937 = vmatprep.subr.mxu0 0.0
    %3938 = vmatpush1.msra.mxu0 0.0
    %3939 = vmatprep.subr.mxu0 0.0
    %3940 = vmatpush1.msra.mxu0 0.0
    %3941 = vmatprep.subr.mxu0 0.0
    %3942 = vmatpush1.msra.mxu0 0.0
    %3943 = vmatprep.subr.mxu0 0.0
    %3944 = vmatpush1.msra.mxu0 0.0
    %3945 = vmatprep.subr.mxu0 0.0
    %3946 = vmatpush1.msra.mxu0 0.0
    %3947 = vmatprep.subr.mxu0 0.0
    %3948 = vmatpush1.msra.mxu0 0.0
    %3949 = vmatprep.subr.mxu0 0.0
    %3950 = vmatpush1.msra.mxu0 0.0
    %3951 = vmatprep.subr.mxu0 0.0
    %3952 = vmatpush1.msra.mxu0 0.0
    %3953 = vmatprep.subr.mxu0 0.0
    %3954 = vmatpush1.msra.mxu0 0.0
    %3955 = vmatprep.subr.mxu0 0.0
    %3956 = vmatpush1.msra.mxu0 0.0
    %3957 = vmatprep.subr.mxu0 0.0
    %3958 = vmatpush1.msra.mxu0 0.0
    %3959 = vmatprep.subr.mxu0 0.0
    %3960 = vmatpush1.msra.mxu0 0.0
    %3961 = vmatprep.subr.mxu0 0.0
    %3962 = vmatpush1.msra.mxu0 0.0
    %3963 = vmatprep.subr.mxu0 0.0
    %3964 = vmatpush1.msra.mxu0 0.0
    %3965 = vmatprep.subr.mxu0 0.0
    %3966 = vmatpush1.msra.mxu0 0.0
    %3967 = vmatprep.subr.mxu0 0.0
    %3968 = vmatpush1.msra.mxu0 0.0
    %3969 = vmatprep.subr.mxu0 0.0
    %3970 = vmatpush1.msra.mxu0 0.0
    %3971 = vmatprep.subr.mxu0 0.0
    %3972 = vmatpush1.msra.mxu0 0.0
    %3973 = vmatprep.subr.mxu0 0.0
    %3974 = vmatpush1.msra.mxu0 0.0
    %3975 = vmatprep.subr.mxu0 0.0
    %3976 = vmatpush1.msra.mxu0 0.0
    %3977 = vmatprep.subr.mxu0 0.0
    %3978 = vmatpush1.msra.mxu0 0.0
    %3979 = vmatprep.subr.mxu0 0.0
    %3980 = vmatpush1.msra.mxu0 0.0
    %3981 = vmatprep.subr.mxu0 0.0
    %3982 = vmatpush1.msra.mxu0 0.0
    %3983 = vmatprep.mubr.f32.mxu0 0.0
    %3984 = vmatmul.mubr.f32.gmra.mrb[0].mxu0 %v3896
    %v3985 = vpop.f32.mrb[0].mxu0
    %v3986 = vadd.f32 %v3893, %v3985
    %v3987 = vpop.f32.mrb[0].mxu0
    %3988 = vmatprep.mubr.f32.mxu0 0.0
    %3989 = vmatmul.mubr.f32.gmra.mrb[0].mxu0 %v3899
    %v3990 = vpop.f32.mrb[0].mxu0
    %v3991 = vadd.f32 %v3893, %v3990
    %v3992 = vpop.f32.mrb[0].mxu0
    %3993 = vmatprep.mubr.f32.mxu0 0.0
    %3994 = vmatmul.mubr.f32.gmra.mrb[0].mxu0 %v3902
    %v3995 = vpop.f32.mrb[0].mxu0
    %v3996 = vadd.f32 %v3893, %v3995
    %v3997 = vpop.f32.mrb[0].mxu0
    %3998 = vmatprep.mubr.f32.mxu0 0.0
    %3999 = vmatmul.mubr.f32.gmra.mrb[0].mxu0 %v3905
    %v4000 = vpop.f32.mrb[0].mxu0
    %v4001 = vadd.f32 %v3893, %v4000
    %v4002 = vpop.f32.mrb[0].mxu0
    %4003 = vmatprep.mubr.f32.mxu0 0.0
    %4004 = vmatmul.mubr.f32.gmra.mrb[0].mxu0 %v3908
    %v4005 = vpop.f32.mrb[0].mxu0
    %v4006 = vadd.f32 %v3893, %v4005
    %v4007 = vpop.f32.mrb[0].mxu0
    %4008 = vmatprep.mubr.f32.mxu0 0.0
    %4009 = vmatmul.mubr.f32.gmra.mrb[0].mxu0 %v3911
    %v4010 = vpop.f32.mrb[0].mxu0
    %v4011 = vadd.f32 %v3893, %v4010
    %v4012 = vpop.f32.mrb[0].mxu0
    %4013 = vmatprep.mubr.f32.mxu0 0.0
    %4014 = vmatmul.mubr.f32.gmra.mrb[0].mxu0 %v3914
    %v4015 = vpop.f32.mrb[0].mxu0
    %v4016 = vadd.f32 %v3893, %v4015
    %v4017 = vpop.f32.mrb[0].mxu0
    %4018 = vmatprep.mubr.f32.mxu0 0.0
    %4019 = vmatmul.mubr.f32.gmra.mrb[0].mxu0 %v3917
    %v4020 = vpop.f32.mrb[0].mxu0
    %v4021 = vadd.f32 %v3893, %v4020
    %v4022 = vpop.f32.mrb[0].mxu0
    %4023 = vdwg.mxu0
    %v4024 = vmul.f32 %v3986, 0.5
    %v4025 = vmul.f32 %v3991, 0.5
    %v4026 = vmul.f32 %v3996, 0.5
    %v4027 = vmul.f32 %v4001, 0.5
    %v4028 = vmul.f32 %v4006, 0.5
    %v4029 = vmul.f32 %v4011, 0.5
    %v4030 = vmul.f32 %v4016, 0.5
    %v4031 = vmul.f32 %v4021, 0.5
    %v4032 = vmul.f32 %v3986, 0.70710677
    %v4033 = vmul.f32 %v3991, 0.70710677
    %v4034 = vmul.f32 %v3996, 0.70710677
    %v4035 = vmul.f32 %v4001, 0.70710677
    %v4036 = vmul.f32 %v4006, 0.70710677
    %v4037 = vmul.f32 %v4011, 0.70710677
    %v4038 = vmul.f32 %v4016, 0.70710677
    %v4039 = vmul.f32 %v4021, 0.70710677
    %vm4040 = vcmp.ge.f32.partialorder %v4032, 0.0
    %vm4041 = vcmp.ge.f32.partialorder %v4033, 0.0
    %vm4042 = vcmp.ge.f32.partialorder %v4034, 0.0
    %vm4043 = vcmp.ge.f32.partialorder %v4035, 0.0
    %vm4044 = vcmp.ge.f32.partialorder %v4036, 0.0
    %vm4045 = vcmp.ge.f32.partialorder %v4037, 0.0
    %vm4046 = vcmp.ge.f32.partialorder %v4038, 0.0
    %vm4047 = vcmp.ge.f32.partialorder %v4039, 0.0
    %v4048 = vsel %vm4040, 1.0, -1.0
    %v4049 = vsel %vm4041, 1.0, -1.0
    %v4050 = vsel %vm4042, 1.0, -1.0
    %v4051 = vsel %vm4043, 1.0, -1.0
    %v4052 = vsel %vm4044, 1.0, -1.0
    %v4053 = vsel %vm4045, 1.0, -1.0
    %v4054 = vsel %vm4046, 1.0, -1.0
    %v4055 = vsel %vm4047, 1.0, -1.0
    %v4056 = vand.u32 2147483647, %v4032
    %v4057 = vand.u32 2147483647, %v4033
    %v4058 = vand.u32 2147483647, %v4034
    %v4059 = vand.u32 2147483647, %v4035
    %v4060 = vand.u32 2147483647, %v4036
    %v4061 = vand.u32 2147483647, %v4037
    %v4062 = vand.u32 2147483647, %v4038
    %v4063 = vand.u32 2147483647, %v4039
    %v4064 = vmul.f32 %v4056, 0.3275911
    %v4065 = vmul.f32 %v4057, 0.3275911
    %v4066 = vmul.f32 %v4058, 0.3275911
    %v4067 = vmul.f32 %v4059, 0.3275911
    %v4068 = vmul.f32 %v4060, 0.3275911
    %v4069 = vmul.f32 %v4061, 0.3275911
    %v4070 = vmul.f32 %v4062, 0.3275911
    %v4071 = vmul.f32 %v4063, 0.3275911
    %v4072 = vadd.f32 %v4064, 1.0
    %v4073 = vadd.f32 %v4065, 1.0
    %v4074 = vadd.f32 %v4066, 1.0
    %v4075 = vadd.f32 %v4067, 1.0
    %v4076 = vadd.f32 %v4068, 1.0
    %v4077 = vadd.f32 %v4069, 1.0
    %v4078 = vadd.f32 %v4070, 1.0
    %v4079 = vadd.f32 %v4071, 1.0
    %v4080 = vrcp.pop %v4072
    %v4081 = vmul.f32 1.0, %v4080
    %v4082 = vrcp.pop %v4073
    %v4083 = vmul.f32 1.0, %v4082
    %v4084 = vrcp.pop %v4074
    %v4085 = vmul.f32 1.0, %v4084
    %v4086 = vrcp.pop %v4075
    %v4087 = vmul.f32 1.0, %v4086
    %v4088 = vrcp.pop %v4076
    %v4089 = vmul.f32 1.0, %v4088
    %v4090 = vrcp.pop %v4077
    %v4091 = vmul.f32 1.0, %v4090
    %v4092 = vrcp.pop %v4078
    %v4093 = vmul.f32 1.0, %v4092
    %v4094 = vrcp.pop %v4079
    %v4095 = vmul.f32 1.0, %v4094
    %v4096 = vmul.f32 %v4081, 1.0614054
    %v4097 = vmul.f32 %v4083, 1.0614054
    %v4098 = vmul.f32 %v4085, 1.0614054
    %v4099 = vmul.f32 %v4087, 1.0614054
    %v4100 = vmul.f32 %v4089, 1.0614054
    %v4101 = vmul.f32 %v4091, 1.0614054
    %v4102 = vmul.f32 %v4093, 1.0614054
    %v4103 = vmul.f32 %v4095, 1.0614054
    %v4104 = vadd.f32 %v4096, -1.4531521
    %v4105 = vadd.f32 %v4097, -1.4531521
    %v4106 = vadd.f32 %v4098, -1.4531521
    %v4107 = vadd.f32 %v4099, -1.4531521
    %v4108 = vadd.f32 %v4100, -1.4531521
    %v4109 = vadd.f32 %v4101, -1.4531521
    %v4110 = vadd.f32 %v4102, -1.4531521
    %v4111 = vadd.f32 %v4103, -1.4531521
    %v4112 = vmul.f32 %v4081, %v4104
    %v4113 = vmul.f32 %v4083, %v4105
    %v4114 = vmul.f32 %v4085, %v4106
    %v4115 = vmul.f32 %v4087, %v4107
    %v4116 = vmul.f32 %v4089, %v4108
    %v4117 = vmul.f32 %v4091, %v4109
    %v4118 = vmul.f32 %v4093, %v4110
    %v4119 = vmul.f32 %v4095, %v4111
    %v4120 = vadd.f32 %v4112, 1.4214138
    %v4121 = vadd.f32 %v4113, 1.4214138
    %v4122 = vadd.f32 %v4114, 1.4214138
    %v4123 = vadd.f32 %v4115, 1.4214138
    %v4124 = vadd.f32 %v4116, 1.4214138
    %v4125 = vadd.f32 %v4117, 1.4214138
    %v4126 = vadd.f32 %v4118, 1.4214138
    %v4127 = vadd.f32 %v4119, 1.4214138
    %v4128 = vmul.f32 %v4081, %v4120
    %v4129 = vmul.f32 %v4083, %v4121
    %v4130 = vmul.f32 %v4085, %v4122
    %v4131 = vmul.f32 %v4087, %v4123
    %v4132 = vmul.f32 %v4089, %v4124
    %v4133 = vmul.f32 %v4091, %v4125
    %v4134 = vmul.f32 %v4093, %v4126
    %v4135 = vmul.f32 %v4095, %v4127
    %v4136 = vadd.f32 %v4128, -0.28449672
    %v4137 = vadd.f32 %v4129, -0.28449672
    %v4138 = vadd.f32 %v4130, -0.28449672
    %v4139 = vadd.f32 %v4131, -0.28449672
    %v4140 = vadd.f32 %v4132, -0.28449672
    %v4141 = vadd.f32 %v4133, -0.28449672
    %v4142 = vadd.f32 %v4134, -0.28449672
    %v4143 = vadd.f32 %v4135, -0.28449672
    %v4144 = vmul.f32 %v4081, %v4136
    %v4145 = vmul.f32 %v4083, %v4137
    %v4146 = vmul.f32 %v4085, %v4138
    %v4147 = vmul.f32 %v4087, %v4139
    %v4148 = vmul.f32 %v4089, %v4140
    %v4149 = vmul.f32 %v4091, %v4141
    %v4150 = vmul.f32 %v4093, %v4142
    %v4151 = vmul.f32 %v4095, %v4143
    %v4152 = vadd.f32 %v4144, 0.2548296
    %v4153 = vadd.f32 %v4145, 0.2548296
    %v4154 = vadd.f32 %v4146, 0.2548296
    %v4155 = vadd.f32 %v4147, 0.2548296
    %v4156 = vadd.f32 %v4148, 0.2548296
    %v4157 = vadd.f32 %v4149, 0.2548296
    %v4158 = vadd.f32 %v4150, 0.2548296
    %v4159 = vadd.f32 %v4151, 0.2548296
    %v4160 = vmul.f32 %v4081, %v4152
    %v4161 = vmul.f32 %v4083, %v4153
    %v4162 = vmul.f32 %v4085, %v4154
    %v4163 = vmul.f32 %v4087, %v4155
    %v4164 = vmul.f32 %v4089, %v4156
    %v4165 = vmul.f32 %v4091, %v4157
    %v4166 = vmul.f32 %v4093, %v4158
    %v4167 = vmul.f32 %v4095, %v4159
    %v4168 = vsub.f32 0.0, %v4056
    %v4169 = vsub.f32 0.0, %v4057
    %v4170 = vsub.f32 0.0, %v4058
    %v4171 = vsub.f32 0.0, %v4059
    %v4172 = vsub.f32 0.0, %v4060
    %v4173 = vsub.f32 0.0, %v4061
    %v4174 = vsub.f32 0.0, %v4062
    %v4175 = vsub.f32 0.0, %v4063
    %v4176 = vmul.f32 %v4168, %v4056
    %v4177 = vmul.f32 %v4169, %v4057
    %v4178 = vmul.f32 %v4170, %v4058
    %v4179 = vmul.f32 %v4171, %v4059
    %v4180 = vmul.f32 %v4172, %v4060
    %v4181 = vmul.f32 %v4173, %v4061
    %v4182 = vmul.f32 %v4174, %v4062
    %v4183 = vmul.f32 %v4175, %v4063
    %v4184 = vmul.f32 %v4176, 1.442695
    %v4185 = vpow.pop %v4184
    %v4186 = vmul.f32 %v4177, 1.442695
    %v4187 = vpow.pop %v4186
    %v4188 = vmul.f32 %v4178, 1.442695
    %v4189 = vpow.pop %v4188
    %v4190 = vmul.f32 %v4179, 1.442695
    %v4191 = vpow.pop %v4190
    %v4192 = vmul.f32 %v4180, 1.442695
    %v4193 = vpow.pop %v4192
    %v4194 = vmul.f32 %v4181, 1.442695
    %v4195 = vpow.pop %v4194
    %v4196 = vmul.f32 %v4182, 1.442695
    %v4197 = vpow.pop %v4196
    %v4198 = vmul.f32 %v4183, 1.442695
    %v4199 = vpow.pop %v4198
    %v4200 = vmul.f32 %v4160, %v4185
    %v4201 = vmul.f32 %v4161, %v4187
    %v4202 = vmul.f32 %v4162, %v4189
    %v4203 = vmul.f32 %v4163, %v4191
    %v4204 = vmul.f32 %v4164, %v4193
    %v4205 = vmul.f32 %v4165, %v4195
    %v4206 = vmul.f32 %v4166, %v4197
    %v4207 = vmul.f32 %v4167, %v4199
    %v4208 = vsub.f32 1.0, %v4200
    %v4209 = vsub.f32 1.0, %v4201
    %v4210 = vsub.f32 1.0, %v4202
    %v4211 = vsub.f32 1.0, %v4203
    %v4212 = vsub.f32 1.0, %v4204
    %v4213 = vsub.f32 1.0, %v4205
    %v4214 = vsub.f32 1.0, %v4206
    %v4215 = vsub.f32 1.0, %v4207
    %v4216 = vmul.f32 %v4048, %v4208
    %v4217 = vmul.f32 %v4049, %v4209
    %v4218 = vmul.f32 %v4050, %v4210
    %v4219 = vmul.f32 %v4051, %v4211
    %v4220 = vmul.f32 %v4052, %v4212
    %v4221 = vmul.f32 %v4053, %v4213
    %v4222 = vmul.f32 %v4054, %v4214
    %v4223 = vmul.f32 %v4055, %v4215
    %v4224 = vadd.f32 %v4216, 1.0
    %v4225 = vadd.f32 %v4217, 1.0
    %v4226 = vadd.f32 %v4218, 1.0
    %v4227 = vadd.f32 %v4219, 1.0
    %v4228 = vadd.f32 %v4220, 1.0
    %v4229 = vadd.f32 %v4221, 1.0
    %v4230 = vadd.f32 %v4222, 1.0
    %v4231 = vadd.f32 %v4223, 1.0
    %v4232 = vmul.f32 %v4024, %v4224
    %v4233 = vmul.f32 %v4025, %v4225
    %v4234 = vmul.f32 %v4026, %v4226
    %v4235 = vmul.f32 %v4027, %v4227
    %v4236 = vmul.f32 %v4028, %v4228
    %v4237 = vmul.f32 %v4029, %v4229
    %v4238 = vmul.f32 %v4030, %v4230
    %v4239 = vmul.f32 %v4031, %v4231
    %v4240 = vld [vmem:[#allocation11] sm:$0xff]
    %v4241 = vld [vmem:[#allocation11 + $0x8] sm:$0xff]
    %v4242 = vld [vmem:[#allocation11 + $0x10] sm:$0xff]
    %v4243 = vld [vmem:[#allocation11 + $0x18] sm:$0xff]
    %v4244 = vld [vmem:[#allocation11 + $0x20] sm:$0xff]
    %v4245 = vld [vmem:[#allocation11 + $0x28] sm:$0xff]
    %v4246 = vld [vmem:[#allocation11 + $0x30] sm:$0xff]
    %v4247 = vld [vmem:[#allocation11 + $0x38] sm:$0xff]
    %vm4248 = vcmask 523264
    %v4250 = vsel %vm4248, %v4232, 0
    %v4253 = vsel %vm4248, %v4233, 0
    %v4256 = vsel %vm4248, %v4234, 0
    %v4259 = vsel %vm4248, %v4235, 0
    %v4262 = vsel %vm4248, %v4236, 0
    %v4265 = vsel %vm4248, %v4237, 0
    %v4268 = vsel %vm4248, %v4238, 0
    %v4271 = vsel %vm4248, %v4239, 0
    %4273 = vmatprep.subr.mxu0 0.0
    %4274 = vmatpush1.msra.mxu0 %v4240
    %4275 = vmatprep.subr.mxu0 0.0
    %4276 = vmatpush1.msra.mxu0 %v4241
    %4277 = vmatprep.subr.mxu0 0.0
    %4278 = vmatpush1.msra.mxu0 %v4242
    %4279 = vmatprep.subr.mxu0 0.0
    %4280 = vmatpush1.msra.mxu0 %v4243
    %4281 = vmatprep.subr.mxu0 0.0
    %4282 = vmatpush1.msra.mxu0 %v4244
    %4283 = vmatprep.subr.mxu0 0.0
    %4284 = vmatpush1.msra.mxu0 %v4245
    %4285 = vmatprep.subr.mxu0 0.0
    %4286 = vmatpush1.msra.mxu0 %v4246
    %4287 = vmatprep.subr.mxu0 0.0
    %4288 = vmatpush1.msra.mxu0 %v4247
    %4289 = vmatprep.subr.mxu0 0.0
    %4290 = vmatpush1.msra.mxu0 0.0
    %4291 = vmatprep.subr.mxu0 0.0
    %4292 = vmatpush1.msra.mxu0 0.0
    %4293 = vmatprep.subr.mxu0 0.0
    %4294 = vmatpush1.msra.mxu0 0.0
    %4295 = vmatprep.subr.mxu0 0.0
    %4296 = vmatpush1.msra.mxu0 0.0
    %4297 = vmatprep.subr.mxu0 0.0
    %4298 = vmatpush1.msra.mxu0 0.0
    %4299 = vmatprep.subr.mxu0 0.0
    %4300 = vmatpush1.msra.mxu0 0.0
    %4301 = vmatprep.subr.mxu0 0.0
    %4302 = vmatpush1.msra.mxu0 0.0
    %4303 = vmatprep.subr.mxu0 0.0
    %4304 = vmatpush1.msra.mxu0 0.0
    %4305 = vmatprep.subr.mxu0 0.0
    %4306 = vmatpush1.msra.mxu0 0.0
    %4307 = vmatprep.subr.mxu0 0.0
    %4308 = vmatpush1.msra.mxu0 0.0
    %4309 = vmatprep.subr.mxu0 0.0
    %4310 = vmatpush1.msra.mxu0 0.0
    %4311 = vmatprep.subr.mxu0 0.0
    %4312 = vmatpush1.msra.mxu0 0.0
    %4313 = vmatprep.subr.mxu0 0.0
    %4314 = vmatpush1.msra.mxu0 0.0
    %4315 = vmatprep.subr.mxu0 0.0
    %4316 = vmatpush1.msra.mxu0 0.0
    %4317 = vmatprep.subr.mxu0 0.0
    %4318 = vmatpush1.msra.mxu0 0.0
    %4319 = vmatprep.subr.mxu0 0.0
    %4320 = vmatpush1.msra.mxu0 0.0
    %4321 = vmatprep.subr.mxu0 0.0
    %4322 = vmatpush1.msra.mxu0 0.0
    %4323 = vmatprep.subr.mxu0 0.0
    %4324 = vmatpush1.msra.mxu0 0.0
    %4325 = vmatprep.subr.mxu0 0.0
    %4326 = vmatpush1.msra.mxu0 0.0
    %4327 = vmatprep.subr.mxu0 0.0
    %4328 = vmatpush1.msra.mxu0 0.0
    %4329 = vmatprep.subr.mxu0 0.0
    %4330 = vmatpush1.msra.mxu0 0.0
    %4331 = vmatprep.subr.mxu0 0.0
    %4332 = vmatpush1.msra.mxu0 0.0
    %4333 = vmatprep.subr.mxu0 0.0
    %4334 = vmatpush1.msra.mxu0 0.0
    %4335 = vmatprep.subr.mxu0 0.0
    %4336 = vmatpush1.msra.mxu0 0.0
    %4337 = vmatprep.mubr.f32.mxu0 0.0
    %4338 = vmatmul.mubr.f32.gmra.mrb[0].mxu0 %v4250
    %v4339 = vpop.f32.mrb[0].mxu0
    %v4340 = vadd.f32 0.0, %v4339
    %v4341 = vpop.f32.mrb[0].mxu0
    %4342 = vmatprep.mubr.f32.mxu0 0.0
    %4343 = vmatmul.mubr.f32.gmra.mrb[0].mxu0 %v4253
    %v4344 = vpop.f32.mrb[0].mxu0
    %v4345 = vadd.f32 0.0, %v4344
    %v4346 = vpop.f32.mrb[0].mxu0
    %4347 = vmatprep.mubr.f32.mxu0 0.0
    %4348 = vmatmul.mubr.f32.gmra.mrb[0].mxu0 %v4256
    %v4349 = vpop.f32.mrb[0].mxu0
    %v4350 = vadd.f32 0.0, %v4349
    %v4351 = vpop.f32.mrb[0].mxu0
    %4352 = vmatprep.mubr.f32.mxu0 0.0
    %4353 = vmatmul.mubr.f32.gmra.mrb[0].mxu0 %v4259
    %v4354 = vpop.f32.mrb[0].mxu0
    %v4355 = vadd.f32 0.0, %v4354
    %v4356 = vpop.f32.mrb[0].mxu0
    %4357 = vmatprep.mubr.f32.mxu0 0.0
    %4358 = vmatmul.mubr.f32.gmra.mrb[0].mxu0 %v4262
    %v4359 = vpop.f32.mrb[0].mxu0
    %v4360 = vadd.f32 0.0, %v4359
    %v4361 = vpop.f32.mrb[0].mxu0
    %4362 = vmatprep.mubr.f32.mxu0 0.0
    %4363 = vmatmul.mubr.f32.gmra.mrb[0].mxu0 %v4265
    %v4364 = vpop.f32.mrb[0].mxu0
    %v4365 = vadd.f32 0.0, %v4364
    %v4366 = vpop.f32.mrb[0].mxu0
    %4367 = vmatprep.mubr.f32.mxu0 0.0
    %4368 = vmatmul.mubr.f32.gmra.mrb[0].mxu0 %v4268
    %v4369 = vpop.f32.mrb[0].mxu0
    %v4370 = vadd.f32 0.0, %v4369
    %v4371 = vpop.f32.mrb[0].mxu0
    %4372 = vmatprep.mubr.f32.mxu0 0.0
    %4373 = vmatmul.mubr.f32.gmra.mrb[0].mxu0 %v4271
    %v4374 = vpop.f32.mrb[0].mxu0
    %v4375 = vadd.f32 0.0, %v4374
    %v4376 = vpop.f32.mrb[0].mxu0
    %4377 = vdwg.mxu0
    %v4378 = vadd.f32 %v3876, %v4340
    %v4379 = vadd.f32 %v3877, %v4345
    %v4380 = vadd.f32 %v3878, %v4350
    %v4381 = vadd.f32 %v3879, %v4355
    %v4382 = vadd.f32 %v3880, %v4360
    %v4383 = vadd.f32 %v3881, %v4365
    %v4384 = vadd.f32 %v3882, %v4370
    %v4385 = vadd.f32 %v3883, %v4375
    %v4386 = vld [vmem:[%s14] sm:$0x1]
    %v4388 = vlaneseq
    %v4389 = vshrl.u32 %v4388, 7
    %v4390 = vsub.s32 0, %v4389
    %v4391 = vrot.slane %v4386, %v4390
    %v4393 = vadd.f32 %v4378, %v4391
    %v4394 = vadd.f32 %v4379, %v4391
    %v4395 = vadd.f32 %v4380, %v4391
    %v4396 = vadd.f32 %v4381, %v4391
    %v4397 = vadd.f32 %v4382, %v4391
    %v4398 = vadd.f32 %v4383, %v4391
    %v4399 = vadd.f32 %v4384, %v4391
    %v4400 = vadd.f32 %v4385, %v4391
    %v4401 = vsel %vm707, %v4393, 0.0
    %v4402 = vsel %vm707, %v4394, 0.0
    %v4403 = vadd.f32 %v4401, %v4402
    %v4404 = vsel %vm707, %v4395, 0.0
    %v4405 = vadd.f32 %v4403, %v4404
    %v4406 = vsel %vm707, %v4396, 0.0
    %v4407 = vadd.f32 %v4405, %v4406
    %v4408 = vsel %vm707, %v4397, 0.0
    %v4409 = vadd.f32 %v4407, %v4408
    %v4410 = vsel %vm707, %v4398, 0.0
    %v4411 = vadd.f32 %v4409, %v4410
    %v4412 = vsel %vm707, %v4399, 0.0
    %v4413 = vadd.f32 %v4411, %v4412
    %v4414 = vsel %vm707, %v4400, 0.0
    %v4415 = vadd.f32 %v4413, %v4414
    %v4416 = vrot.slane %v4415, 4
    %v4417 = vadd.f32 %v4415, %v4416
    %v4418 = vrot.slane %v4417, 2
    %v4419 = vadd.f32 %v4417, %v4418
    %v4420 = vrot.slane %v4419, 1
    %v4421 = vadd.f32 %v4419, %v4420
    %v4422 = vmul.f32 %v4421, %v3804
    %v4423 = vsub.f32 %v4393, %v4422
    %v4424 = vsub.f32 %v4394, %v4422
    %v4425 = vsub.f32 %v4395, %v4422
    %v4426 = vsub.f32 %v4396, %v4422
    %v4427 = vsub.f32 %v4397, %v4422
    %v4428 = vsub.f32 %v4398, %v4422
    %v4429 = vsub.f32 %v4399, %v4422
    %v4430 = vsub.f32 %v4400, %v4422
    %v4431 = vmul.f32 %v4423, %v4423
    %v4432 = vmul.f32 %v4424, %v4424
    %v4433 = vmul.f32 %v4425, %v4425
    %v4434 = vmul.f32 %v4426, %v4426
    %v4435 = vmul.f32 %v4427, %v4427
    %v4436 = vmul.f32 %v4428, %v4428
    %v4437 = vmul.f32 %v4429, %v4429
    %v4438 = vmul.f32 %v4430, %v4430
    %v4439 = vsel %vm707, %v4431, 0.0
    %v4440 = vsel %vm707, %v4432, 0.0
    %v4441 = vadd.f32 %v4439, %v4440
    %v4442 = vsel %vm707, %v4433, 0.0
    %v4443 = vadd.f32 %v4441, %v4442
    %v4444 = vsel %vm707, %v4434, 0.0
    %v4445 = vadd.f32 %v4443, %v4444
    %v4446 = vsel %vm707, %v4435, 0.0
    %v4447 = vadd.f32 %v4445, %v4446
    %v4448 = vsel %vm707, %v4436, 0.0
    %v4449 = vadd.f32 %v4447, %v4448
    %v4450 = vsel %vm707, %v4437, 0.0
    %v4451 = vadd.f32 %v4449, %v4450
    %v4452 = vsel %vm707, %v4438, 0.0
    %v4453 = vadd.f32 %v4451, %v4452
    %v4454 = vrot.slane %v4453, 4
    %v4455 = vadd.f32 %v4453, %v4454
    %v4456 = vrot.slane %v4455, 2
    %v4457 = vadd.f32 %v4455, %v4456
    %v4458 = vrot.slane %v4457, 1
    %v4459 = vadd.f32 %v4457, %v4458
    %v4460 = vmul.f32 %v4459, %v3804
    %v4461 = vadd.f32 %v4460, 1e-05
    %v4462 = vrsqrt.pop %v4461
    %v4463 = vmul.f32 %v4423, %v4462
    %v4464 = vmul.f32 %v4424, %v4462
    %v4465 = vmul.f32 %v4425, %v4462
    %v4466 = vmul.f32 %v4426, %v4462
    %v4467 = vmul.f32 %v4427, %v4462
    %v4468 = vmul.f32 %v4428, %v4462
    %v4469 = vmul.f32 %v4429, %v4462
    %v4470 = vmul.f32 %v4430, %v4462
    %v4471 = vld [vmem:[%s15] sm:$0x1]
    %v4473 = vlaneseq
    %v4474 = vshrl.u32 %v4473, 7
    %v4475 = vsub.s32 0, %v4474
    %v4476 = vrot.slane %v4471, %v4475
    %v4478 = vmul.f32 %v4463, %v4476
    %v4479 = vmul.f32 %v4464, %v4476
    %v4480 = vmul.f32 %v4465, %v4476
    %v4481 = vmul.f32 %v4466, %v4476
    %v4482 = vmul.f32 %v4467, %v4476
    %v4483 = vmul.f32 %v4468, %v4476
    %v4484 = vmul.f32 %v4469, %v4476
    %v4485 = vmul.f32 %v4470, %v4476
    %v4486 = vld [vmem:[%s16] sm:$0x1]
    %v4488 = vlaneseq
    %v4489 = vshrl.u32 %v4488, 7
    %v4490 = vsub.s32 0, %v4489
    %v4491 = vrot.slane %v4486, %v4490
    %v4493 = vadd.f32 %v4478, %v4491
    %v4494 = vadd.f32 %v4479, %v4491
    %v4495 = vadd.f32 %v4480, %v4491
    %v4496 = vadd.f32 %v4481, %v4491
    %v4497 = vadd.f32 %v4482, %v4491
    %v4498 = vadd.f32 %v4483, %v4491
    %v4499 = vadd.f32 %v4484, %v4491
    %v4500 = vadd.f32 %v4485, %v4491
    %s4501 = scalar_lea.vmem [#allocation6], 32
    %v4502 = vld [vmem:[%s4501] sm:$0xff]
    %v4503 = vld [vmem:[%s4501 + $0x8] sm:$0xff]
    %v4504 = vld [vmem:[%s4501 + $0x10] sm:$0xff]
    %v4505 = vld [vmem:[%s4501 + $0x18] sm:$0xff]
    %s4506 = scalar_lea.vmem [#allocation8], 32
    %v4507 = vld [vmem:[%s4506] sm:$0xff]
    %v4508 = vld [vmem:[%s4506 + $0x8] sm:$0xff]
    %v4509 = vld [vmem:[%s4506 + $0x10] sm:$0xff]
    %v4510 = vld [vmem:[%s4506 + $0x18] sm:$0xff]
    %s4511 = scalar_lea.vmem %s6, 1
    %v4512 = vld [vmem:[%s4511] sm:$0x1]
    %v4514 = vlaneseq
    %v4515 = vshrl.u32 %v4514, 7
    %v4516 = vsub.s32 0, %v4515
    %v4517 = vrot.slane %v4512, %v4516
    %v4520 = vsel %vm707, %v4493, 0
    %v4523 = vsel %vm707, %v4494, 0
    %v4526 = vsel %vm707, %v4495, 0
    %v4529 = vsel %vm707, %v4496, 0
    %v4532 = vsel %vm707, %v4497, 0
    %v4535 = vsel %vm707, %v4498, 0
    %v4538 = vsel %vm707, %v4499, 0
    %v4541 = vsel %vm707, %v4500, 0
    %4543 = vmatprep.subr.mxu0 0.0
    %4544 = vmatpush1.msra.mxu0 %v4502
    %4545 = vmatprep.subr.mxu0 0.0
    %4546 = vmatpush1.msra.mxu0 %v4503
    %4547 = vmatprep.subr.mxu0 0.0
    %4548 = vmatpush1.msra.mxu0 %v4504
    %4549 = vmatprep.subr.mxu0 0.0
    %4550 = vmatpush1.msra.mxu0 %v4505
    %4551 = vmatprep.subr.mxu0 0.0
    %4552 = vmatpush1.msra.mxu0 0.0
    %4553 = vmatprep.subr.mxu0 0.0
    %4554 = vmatpush1.msra.mxu0 0.0
    %4555 = vmatprep.subr.mxu0 0.0
    %4556 = vmatpush1.msra.mxu0 0.0
    %4557 = vmatprep.subr.mxu0 0.0
    %4558 = vmatpush1.msra.mxu0 0.0
    %4559 = vmatprep.subr.mxu0 0.0
    %4560 = vmatpush1.msra.mxu0 0.0
    %4561 = vmatprep.subr.mxu0 0.0
    %4562 = vmatpush1.msra.mxu0 0.0
    %4563 = vmatprep.subr.mxu0 0.0
    %4564 = vmatpush1.msra.mxu0 0.0
    %4565 = vmatprep.subr.mxu0 0.0
    %4566 = vmatpush1.msra.mxu0 0.0
    %4567 = vmatprep.subr.mxu0 0.0
    %4568 = vmatpush1.msra.mxu0 0.0
    %4569 = vmatprep.subr.mxu0 0.0
    %4570 = vmatpush1.msra.mxu0 0.0
    %4571 = vmatprep.subr.mxu0 0.0
    %4572 = vmatpush1.msra.mxu0 0.0
    %4573 = vmatprep.subr.mxu0 0.0
    %4574 = vmatpush1.msra.mxu0 0.0
    %4575 = vmatprep.subr.mxu0 0.0
    %4576 = vmatpush1.msra.mxu0 0.0
    %4577 = vmatprep.subr.mxu0 0.0
    %4578 = vmatpush1.msra.mxu0 0.0
    %4579 = vmatprep.subr.mxu0 0.0
    %4580 = vmatpush1.msra.mxu0 0.0
    %4581 = vmatprep.subr.mxu0 0.0
    %4582 = vmatpush1.msra.mxu0 0.0
    %4583 = vmatprep.subr.mxu0 0.0
    %4584 = vmatpush1.msra.mxu0 0.0
    %4585 = vmatprep.subr.mxu0 0.0
    %4586 = vmatpush1.msra.mxu0 0.0
    %4587 = vmatprep.subr.mxu0 0.0
    %4588 = vmatpush1.msra.mxu0 0.0
    %4589 = vmatprep.subr.mxu0 0.0
    %4590 = vmatpush1.msra.mxu0 0.0
    %4591 = vmatprep.subr.mxu0 0.0
    %4592 = vmatpush1.msra.mxu0 0.0
    %4593 = vmatprep.subr.mxu0 0.0
    %4594 = vmatpush1.msra.mxu0 0.0
    %4595 = vmatprep.subr.mxu0 0.0
    %4596 = vmatpush1.msra.mxu0 0.0
    %4597 = vmatprep.subr.mxu0 0.0
    %4598 = vmatpush1.msra.mxu0 0.0
    %4599 = vmatprep.subr.mxu0 0.0
    %4600 = vmatpush1.msra.mxu0 0.0
    %4601 = vmatprep.subr.mxu0 0.0
    %4602 = vmatpush1.msra.mxu0 0.0
    %4603 = vmatprep.subr.mxu0 0.0
    %4604 = vmatpush1.msra.mxu0 0.0
    %4605 = vmatprep.subr.mxu0 0.0
    %4606 = vmatpush1.msra.mxu0 0.0
    %4607 = vmatprep.mubr.f32.mxu0 0.0
    %4608 = vmatmul.mubr.f32.gmra.mrb[0].mxu0 %v4520
    %v4609 = vpop.f32.mrb[0].mxu0
    %v4610 = vadd.f32 %v4517, %v4609
    %v4611 = vpop.f32.mrb[0].mxu0
    %4612 = vmatprep.mubr.f32.mxu0 0.0
    %4613 = vmatmul.mubr.f32.gmra.mrb[0].mxu0 %v4523
    %v4614 = vpop.f32.mrb[0].mxu0
    %v4615 = vadd.f32 %v4517, %v4614
    %v4616 = vpop.f32.mrb[0].mxu0
    %4617 = vmatprep.mubr.f32.mxu0 0.0
    %4618 = vmatmul.mubr.f32.gmra.mrb[0].mxu0 %v4526
    %v4619 = vpop.f32.mrb[0].mxu0
    %v4620 = vadd.f32 %v4517, %v4619
    %v4621 = vpop.f32.mrb[0].mxu0
    %4622 = vmatprep.mubr.f32.mxu0 0.0
    %4623 = vmatmul.mubr.f32.gmra.mrb[0].mxu0 %v4529
    %v4624 = vpop.f32.mrb[0].mxu0
    %v4625 = vadd.f32 %v4517, %v4624
    %v4626 = vpop.f32.mrb[0].mxu0
    %4627 = vmatprep.mubr.f32.mxu0 0.0
    %4628 = vmatmul.mubr.f32.gmra.mrb[0].mxu0 %v4532
    %v4629 = vpop.f32.mrb[0].mxu0
    %v4630 = vadd.f32 %v4517, %v4629
    %v4631 = vpop.f32.mrb[0].mxu0
    %4632 = vmatprep.mubr.f32.mxu0 0.0
    %4633 = vmatmul.mubr.f32.gmra.mrb[0].mxu0 %v4535
    %v4634 = vpop.f32.mrb[0].mxu0
    %v4635 = vadd.f32 %v4517, %v4634
    %v4636 = vpop.f32.mrb[0].mxu0
    %4637 = vmatprep.mubr.f32.mxu0 0.0
    %4638 = vmatmul.mubr.f32.gmra.mrb[0].mxu0 %v4538
    %v4639 = vpop.f32.mrb[0].mxu0
    %v4640 = vadd.f32 %v4517, %v4639
    %v4641 = vpop.f32.mrb[0].mxu0
    %4642 = vmatprep.mubr.f32.mxu0 0.0
    %4643 = vmatmul.mubr.f32.gmra.mrb[0].mxu0 %v4541
    %v4644 = vpop.f32.mrb[0].mxu0
    %v4645 = vadd.f32 %v4517, %v4644
    %v4646 = vpop.f32.mrb[0].mxu0
    %4647 = vdwg.mxu0
    %4649 = vrot.lane.b32.xlu0 %v4610, 96
    %v4650 = vpop.permute.xlu0 %4649
    %v4651 = vsel %vm146, %v4610, 0
    %v4653 = vsel %vm146, %v4650, 0
    %4655 = vmatprep.subr.mxu0 0.0
    %4656 = vmatpush1.xpose.msra.mxu0 %v4653
    %4657 = vmatprep.subr.mxu0 0.0
    %4658 = vmatpush1.xpose.msra.mxu0 0.0
    %4659 = vmatprep.subr.mxu0 0.0
    %4660 = vmatpush1.xpose.msra.mxu0 0.0
    %4661 = vmatprep.subr.mxu0 0.0
    %4662 = vmatpush1.xpose.msra.mxu0 0.0
    %4663 = vmatprep.subr.mxu0 0.0
    %4664 = vmatpush1.xpose.msra.mxu0 0.0
    %4665 = vmatprep.subr.mxu0 0.0
    %4666 = vmatpush1.xpose.msra.mxu0 0.0
    %4667 = vmatprep.subr.mxu0 0.0
    %4668 = vmatpush1.xpose.msra.mxu0 0.0
    %4669 = vmatprep.subr.mxu0 0.0
    %4670 = vmatpush1.xpose.msra.mxu0 0.0
    %4671 = vmatprep.subr.mxu0 0.0
    %4672 = vmatpush1.xpose.msra.mxu0 0.0
    %4673 = vmatprep.subr.mxu0 0.0
    %4674 = vmatpush1.xpose.msra.mxu0 0.0
    %4675 = vmatprep.subr.mxu0 0.0
    %4676 = vmatpush1.xpose.msra.mxu0 0.0
    %4677 = vmatprep.subr.mxu0 0.0
    %4678 = vmatpush1.xpose.msra.mxu0 0.0
    %4679 = vmatprep.subr.mxu0 0.0
    %4680 = vmatpush1.xpose.msra.mxu0 0.0
    %4681 = vmatprep.subr.mxu0 0.0
    %4682 = vmatpush1.xpose.msra.mxu0 0.0
    %4683 = vmatprep.subr.mxu0 0.0
    %4684 = vmatpush1.xpose.msra.mxu0 0.0
    %4685 = vmatprep.subr.mxu0 0.0
    %4686 = vmatpush1.xpose.msra.mxu0 0.0
    %4687 = vmatprep.subr.mxu0 0.0
    %4688 = vmatpush1.xpose.msra.mxu0 0.0
    %4689 = vmatprep.subr.mxu0 0.0
    %4690 = vmatpush1.xpose.msra.mxu0 0.0
    %4691 = vmatprep.subr.mxu0 0.0
    %4692 = vmatpush1.xpose.msra.mxu0 0.0
    %4693 = vmatprep.subr.mxu0 0.0
    %4694 = vmatpush1.xpose.msra.mxu0 0.0
    %4695 = vmatprep.subr.mxu0 0.0
    %4696 = vmatpush1.xpose.msra.mxu0 0.0
    %4697 = vmatprep.subr.mxu0 0.0
    %4698 = vmatpush1.xpose.msra.mxu0 0.0
    %4699 = vmatprep.subr.mxu0 0.0
    %4700 = vmatpush1.xpose.msra.mxu0 0.0
    %4701 = vmatprep.subr.mxu0 0.0
    %4702 = vmatpush1.xpose.msra.mxu0 0.0
    %4703 = vmatprep.subr.mxu0 0.0
    %4704 = vmatpush1.xpose.msra.mxu0 0.0
    %4705 = vmatprep.subr.mxu0 0.0
    %4706 = vmatpush1.xpose.msra.mxu0 0.0
    %4707 = vmatprep.subr.mxu0 0.0
    %4708 = vmatpush1.xpose.msra.mxu0 0.0
    %4709 = vmatprep.subr.mxu0 0.0
    %4710 = vmatpush1.xpose.msra.mxu0 0.0
    %4711 = vmatprep.subr.mxu0 0.0
    %4712 = vmatpush1.xpose.msra.mxu0 0.0
    %4713 = vmatprep.subr.mxu0 0.0
    %4714 = vmatpush1.xpose.msra.mxu0 0.0
    %4715 = vmatprep.subr.mxu0 0.0
    %4716 = vmatpush1.xpose.msra.mxu0 0.0
    %4717 = vmatprep.subr.mxu0 0.0
    %4718 = vmatpush1.xpose.msra.mxu0 0.0
    %4719 = vmatprep.mubr.f32.mxu0 0.0
    %4720 = vmatmul.mubr.f32.gmra.mrb[0].mxu0 %v4651
    %v4721 = vpop.f32.mrb[0].mxu0
    %v4722 = vadd.f32 0.0, %v4721
    %v4723 = vpop.f32.mrb[0].mxu0
    %4724 = vdwg.mxu0
    %4726 = vrot.lane.b32.xlu0 %v4615, 96
    %v4727 = vpop.permute.xlu0 %4726
    %v4728 = vsel %vm146, %v4615, 0
    %v4730 = vsel %vm146, %v4727, 0
    %4732 = vmatprep.subr.mxu0 0.0
    %4733 = vmatpush1.xpose.msra.mxu0 %v4730
    %4734 = vmatprep.subr.mxu0 0.0
    %4735 = vmatpush1.xpose.msra.mxu0 0.0
    %4736 = vmatprep.subr.mxu0 0.0
    %4737 = vmatpush1.xpose.msra.mxu0 0.0
    %4738 = vmatprep.subr.mxu0 0.0
    %4739 = vmatpush1.xpose.msra.mxu0 0.0
    %4740 = vmatprep.subr.mxu0 0.0
    %4741 = vmatpush1.xpose.msra.mxu0 0.0
    %4742 = vmatprep.subr.mxu0 0.0
    %4743 = vmatpush1.xpose.msra.mxu0 0.0
    %4744 = vmatprep.subr.mxu0 0.0
    %4745 = vmatpush1.xpose.msra.mxu0 0.0
    %4746 = vmatprep.subr.mxu0 0.0
    %4747 = vmatpush1.xpose.msra.mxu0 0.0
    %4748 = vmatprep.subr.mxu0 0.0
    %4749 = vmatpush1.xpose.msra.mxu0 0.0
    %4750 = vmatprep.subr.mxu0 0.0
    %4751 = vmatpush1.xpose.msra.mxu0 0.0
    %4752 = vmatprep.subr.mxu0 0.0
    %4753 = vmatpush1.xpose.msra.mxu0 0.0
    %4754 = vmatprep.subr.mxu0 0.0
    %4755 = vmatpush1.xpose.msra.mxu0 0.0
    %4756 = vmatprep.subr.mxu0 0.0
    %4757 = vmatpush1.xpose.msra.mxu0 0.0
    %4758 = vmatprep.subr.mxu0 0.0
    %4759 = vmatpush1.xpose.msra.mxu0 0.0
    %4760 = vmatprep.subr.mxu0 0.0
    %4761 = vmatpush1.xpose.msra.mxu0 0.0
    %4762 = vmatprep.subr.mxu0 0.0
    %4763 = vmatpush1.xpose.msra.mxu0 0.0
    %4764 = vmatprep.subr.mxu0 0.0
    %4765 = vmatpush1.xpose.msra.mxu0 0.0
    %4766 = vmatprep.subr.mxu0 0.0
    %4767 = vmatpush1.xpose.msra.mxu0 0.0
    %4768 = vmatprep.subr.mxu0 0.0
    %4769 = vmatpush1.xpose.msra.mxu0 0.0
    %4770 = vmatprep.subr.mxu0 0.0
    %4771 = vmatpush1.xpose.msra.mxu0 0.0
    %4772 = vmatprep.subr.mxu0 0.0
    %4773 = vmatpush1.xpose.msra.mxu0 0.0
    %4774 = vmatprep.subr.mxu0 0.0
    %4775 = vmatpush1.xpose.msra.mxu0 0.0
    %4776 = vmatprep.subr.mxu0 0.0
    %4777 = vmatpush1.xpose.msra.mxu0 0.0
    %4778 = vmatprep.subr.mxu0 0.0
    %4779 = vmatpush1.xpose.msra.mxu0 0.0
    %4780 = vmatprep.subr.mxu0 0.0
    %4781 = vmatpush1.xpose.msra.mxu0 0.0
    %4782 = vmatprep.subr.mxu0 0.0
    %4783 = vmatpush1.xpose.msra.mxu0 0.0
    %4784 = vmatprep.subr.mxu0 0.0
    %4785 = vmatpush1.xpose.msra.mxu0 0.0
    %4786 = vmatprep.subr.mxu0 0.0
    %4787 = vmatpush1.xpose.msra.mxu0 0.0
    %4788 = vmatprep.subr.mxu0 0.0
    %4789 = vmatpush1.xpose.msra.mxu0 0.0
    %4790 = vmatprep.subr.mxu0 0.0
    %4791 = vmatpush1.xpose.msra.mxu0 0.0
    %4792 = vmatprep.subr.mxu0 0.0
    %4793 = vmatpush1.xpose.msra.mxu0 0.0
    %4794 = vmatprep.subr.mxu0 0.0
    %4795 = vmatpush1.xpose.msra.mxu0 0.0
    %4796 = vmatprep.mubr.f32.mxu0 0.0
    %4797 = vmatmul.mubr.f32.gmra.mrb[0].mxu0 %v4728
    %v4798 = vpop.f32.mrb[0].mxu0
    %v4799 = vadd.f32 0.0, %v4798
    %v4800 = vpop.f32.mrb[0].mxu0
    %4801 = vdwg.mxu0
    %4803 = vrot.lane.b32.xlu0 %v4620, 96
    %v4804 = vpop.permute.xlu0 %4803
    %v4805 = vsel %vm146, %v4620, 0
    %v4807 = vsel %vm146, %v4804, 0
    %4809 = vmatprep.subr.mxu0 0.0
    %4810 = vmatpush1.xpose.msra.mxu0 %v4807
    %4811 = vmatprep.subr.mxu0 0.0
    %4812 = vmatpush1.xpose.msra.mxu0 0.0
    %4813 = vmatprep.subr.mxu0 0.0
    %4814 = vmatpush1.xpose.msra.mxu0 0.0
    %4815 = vmatprep.subr.mxu0 0.0
    %4816 = vmatpush1.xpose.msra.mxu0 0.0
    %4817 = vmatprep.subr.mxu0 0.0
    %4818 = vmatpush1.xpose.msra.mxu0 0.0
    %4819 = vmatprep.subr.mxu0 0.0
    %4820 = vmatpush1.xpose.msra.mxu0 0.0
    %4821 = vmatprep.subr.mxu0 0.0
    %4822 = vmatpush1.xpose.msra.mxu0 0.0
    %4823 = vmatprep.subr.mxu0 0.0
    %4824 = vmatpush1.xpose.msra.mxu0 0.0
    %4825 = vmatprep.subr.mxu0 0.0
    %4826 = vmatpush1.xpose.msra.mxu0 0.0
    %4827 = vmatprep.subr.mxu0 0.0
    %4828 = vmatpush1.xpose.msra.mxu0 0.0
    %4829 = vmatprep.subr.mxu0 0.0
    %4830 = vmatpush1.xpose.msra.mxu0 0.0
    %4831 = vmatprep.subr.mxu0 0.0
    %4832 = vmatpush1.xpose.msra.mxu0 0.0
    %4833 = vmatprep.subr.mxu0 0.0
    %4834 = vmatpush1.xpose.msra.mxu0 0.0
    %4835 = vmatprep.subr.mxu0 0.0
    %4836 = vmatpush1.xpose.msra.mxu0 0.0
    %4837 = vmatprep.subr.mxu0 0.0
    %4838 = vmatpush1.xpose.msra.mxu0 0.0
    %4839 = vmatprep.subr.mxu0 0.0
    %4840 = vmatpush1.xpose.msra.mxu0 0.0
    %4841 = vmatprep.subr.mxu0 0.0
    %4842 = vmatpush1.xpose.msra.mxu0 0.0
    %4843 = vmatprep.subr.mxu0 0.0
    %4844 = vmatpush1.xpose.msra.mxu0 0.0
    %4845 = vmatprep.subr.mxu0 0.0
    %4846 = vmatpush1.xpose.msra.mxu0 0.0
    %4847 = vmatprep.subr.mxu0 0.0
    %4848 = vmatpush1.xpose.msra.mxu0 0.0
    %4849 = vmatprep.subr.mxu0 0.0
    %4850 = vmatpush1.xpose.msra.mxu0 0.0
    %4851 = vmatprep.subr.mxu0 0.0
    %4852 = vmatpush1.xpose.msra.mxu0 0.0
    %4853 = vmatprep.subr.mxu0 0.0
    %4854 = vmatpush1.xpose.msra.mxu0 0.0
    %4855 = vmatprep.subr.mxu0 0.0
    %4856 = vmatpush1.xpose.msra.mxu0 0.0
    %4857 = vmatprep.subr.mxu0 0.0
    %4858 = vmatpush1.xpose.msra.mxu0 0.0
    %4859 = vmatprep.subr.mxu0 0.0
    %4860 = vmatpush1.xpose.msra.mxu0 0.0
    %4861 = vmatprep.subr.mxu0 0.0
    %4862 = vmatpush1.xpose.msra.mxu0 0.0
    %4863 = vmatprep.subr.mxu0 0.0
    %4864 = vmatpush1.xpose.msra.mxu0 0.0
    %4865 = vmatprep.subr.mxu0 0.0
    %4866 = vmatpush1.xpose.msra.mxu0 0.0
    %4867 = vmatprep.subr.mxu0 0.0
    %4868 = vmatpush1.xpose.msra.mxu0 0.0
    %4869 = vmatprep.subr.mxu0 0.0
    %4870 = vmatpush1.xpose.msra.mxu0 0.0
    %4871 = vmatprep.subr.mxu0 0.0
    %4872 = vmatpush1.xpose.msra.mxu0 0.0
    %4873 = vmatprep.mubr.f32.mxu0 0.0
    %4874 = vmatmul.mubr.f32.gmra.mrb[0].mxu0 %v4805
    %v4875 = vpop.f32.mrb[0].mxu0
    %v4876 = vadd.f32 0.0, %v4875
    %v4877 = vpop.f32.mrb[0].mxu0
    %4878 = vdwg.mxu0
    %4880 = vrot.lane.b32.xlu0 %v4625, 96
    %v4881 = vpop.permute.xlu0 %4880
    %v4882 = vsel %vm146, %v4625, 0
    %v4884 = vsel %vm146, %v4881, 0
    %4886 = vmatprep.subr.mxu0 0.0
    %4887 = vmatpush1.xpose.msra.mxu0 %v4884
    %4888 = vmatprep.subr.mxu0 0.0
    %4889 = vmatpush1.xpose.msra.mxu0 0.0
    %4890 = vmatprep.subr.mxu0 0.0
    %4891 = vmatpush1.xpose.msra.mxu0 0.0
    %4892 = vmatprep.subr.mxu0 0.0
    %4893 = vmatpush1.xpose.msra.mxu0 0.0
    %4894 = vmatprep.subr.mxu0 0.0
    %4895 = vmatpush1.xpose.msra.mxu0 0.0
    %4896 = vmatprep.subr.mxu0 0.0
    %4897 = vmatpush1.xpose.msra.mxu0 0.0
    %4898 = vmatprep.subr.mxu0 0.0
    %4899 = vmatpush1.xpose.msra.mxu0 0.0
    %4900 = vmatprep.subr.mxu0 0.0
    %4901 = vmatpush1.xpose.msra.mxu0 0.0
    %4902 = vmatprep.subr.mxu0 0.0
    %4903 = vmatpush1.xpose.msra.mxu0 0.0
    %4904 = vmatprep.subr.mxu0 0.0
    %4905 = vmatpush1.xpose.msra.mxu0 0.0
    %4906 = vmatprep.subr.mxu0 0.0
    %4907 = vmatpush1.xpose.msra.mxu0 0.0
    %4908 = vmatprep.subr.mxu0 0.0
    %4909 = vmatpush1.xpose.msra.mxu0 0.0
    %4910 = vmatprep.subr.mxu0 0.0
    %4911 = vmatpush1.xpose.msra.mxu0 0.0
    %4912 = vmatprep.subr.mxu0 0.0
    %4913 = vmatpush1.xpose.msra.mxu0 0.0
    %4914 = vmatprep.subr.mxu0 0.0
    %4915 = vmatpush1.xpose.msra.mxu0 0.0
    %4916 = vmatprep.subr.mxu0 0.0
    %4917 = vmatpush1.xpose.msra.mxu0 0.0
    %4918 = vmatprep.subr.mxu0 0.0
    %4919 = vmatpush1.xpose.msra.mxu0 0.0
    %4920 = vmatprep.subr.mxu0 0.0
    %4921 = vmatpush1.xpose.msra.mxu0 0.0
    %4922 = vmatprep.subr.mxu0 0.0
    %4923 = vmatpush1.xpose.msra.mxu0 0.0
    %4924 = vmatprep.subr.mxu0 0.0
    %4925 = vmatpush1.xpose.msra.mxu0 0.0
    %4926 = vmatprep.subr.mxu0 0.0
    %4927 = vmatpush1.xpose.msra.mxu0 0.0
    %4928 = vmatprep.subr.mxu0 0.0
    %4929 = vmatpush1.xpose.msra.mxu0 0.0
    %4930 = vmatprep.subr.mxu0 0.0
    %4931 = vmatpush1.xpose.msra.mxu0 0.0
    %4932 = vmatprep.subr.mxu0 0.0
    %4933 = vmatpush1.xpose.msra.mxu0 0.0
    %4934 = vmatprep.subr.mxu0 0.0
    %4935 = vmatpush1.xpose.msra.mxu0 0.0
    %4936 = vmatprep.subr.mxu0 0.0
    %4937 = vmatpush1.xpose.msra.mxu0 0.0
    %4938 = vmatprep.subr.mxu0 0.0
    %4939 = vmatpush1.xpose.msra.mxu0 0.0
    %4940 = vmatprep.subr.mxu0 0.0
    %4941 = vmatpush1.xpose.msra.mxu0 0.0
    %4942 = vmatprep.subr.mxu0 0.0
    %4943 = vmatpush1.xpose.msra.mxu0 0.0
    %4944 = vmatprep.subr.mxu0 0.0
    %4945 = vmatpush1.xpose.msra.mxu0 0.0
    %4946 = vmatprep.subr.mxu0 0.0
    %4947 = vmatpush1.xpose.msra.mxu0 0.0
    %4948 = vmatprep.subr.mxu0 0.0
    %4949 = vmatpush1.xpose.msra.mxu0 0.0
    %4950 = vmatprep.mubr.f32.mxu0 0.0
    %4951 = vmatmul.mubr.f32.gmra.mrb[0].mxu0 %v4882
    %v4952 = vpop.f32.mrb[0].mxu0
    %v4953 = vadd.f32 0.0, %v4952
    %v4954 = vpop.f32.mrb[0].mxu0
    %4955 = vdwg.mxu0
    %4957 = vrot.lane.b32.xlu0 %v4630, 96
    %v4958 = vpop.permute.xlu0 %4957
    %v4959 = vsel %vm146, %v4630, 0
    %v4961 = vsel %vm146, %v4958, 0
    %4963 = vmatprep.subr.mxu0 0.0
    %4964 = vmatpush1.xpose.msra.mxu0 %v4961
    %4965 = vmatprep.subr.mxu0 0.0
    %4966 = vmatpush1.xpose.msra.mxu0 0.0
    %4967 = vmatprep.subr.mxu0 0.0
    %4968 = vmatpush1.xpose.msra.mxu0 0.0
    %4969 = vmatprep.subr.mxu0 0.0
    %4970 = vmatpush1.xpose.msra.mxu0 0.0
    %4971 = vmatprep.subr.mxu0 0.0
    %4972 = vmatpush1.xpose.msra.mxu0 0.0
    %4973 = vmatprep.subr.mxu0 0.0
    %4974 = vmatpush1.xpose.msra.mxu0 0.0
    %4975 = vmatprep.subr.mxu0 0.0
    %4976 = vmatpush1.xpose.msra.mxu0 0.0
    %4977 = vmatprep.subr.mxu0 0.0
    %4978 = vmatpush1.xpose.msra.mxu0 0.0
    %4979 = vmatprep.subr.mxu0 0.0
    %4980 = vmatpush1.xpose.msra.mxu0 0.0
    %4981 = vmatprep.subr.mxu0 0.0
    %4982 = vmatpush1.xpose.msra.mxu0 0.0
    %4983 = vmatprep.subr.mxu0 0.0
    %4984 = vmatpush1.xpose.msra.mxu0 0.0
    %4985 = vmatprep.subr.mxu0 0.0
    %4986 = vmatpush1.xpose.msra.mxu0 0.0
    %4987 = vmatprep.subr.mxu0 0.0
    %4988 = vmatpush1.xpose.msra.mxu0 0.0
    %4989 = vmatprep.subr.mxu0 0.0
    %4990 = vmatpush1.xpose.msra.mxu0 0.0
    %4991 = vmatprep.subr.mxu0 0.0
    %4992 = vmatpush1.xpose.msra.mxu0 0.0
    %4993 = vmatprep.subr.mxu0 0.0
    %4994 = vmatpush1.xpose.msra.mxu0 0.0
    %4995 = vmatprep.subr.mxu0 0.0
    %4996 = vmatpush1.xpose.msra.mxu0 0.0
    %4997 = vmatprep.subr.mxu0 0.0
    %4998 = vmatpush1.xpose.msra.mxu0 0.0
    %4999 = vmatprep.subr.mxu0 0.0
    %5000 = vmatpush1.xpose.msra.mxu0 0.0
    %5001 = vmatprep.subr.mxu0 0.0
    %5002 = vmatpush1.xpose.msra.mxu0 0.0
    %5003 = vmatprep.subr.mxu0 0.0
    %5004 = vmatpush1.xpose.msra.mxu0 0.0
    %5005 = vmatprep.subr.mxu0 0.0
    %5006 = vmatpush1.xpose.msra.mxu0 0.0
    %5007 = vmatprep.subr.mxu0 0.0
    %5008 = vmatpush1.xpose.msra.mxu0 0.0
    %5009 = vmatprep.subr.mxu0 0.0
    %5010 = vmatpush1.xpose.msra.mxu0 0.0
    %5011 = vmatprep.subr.mxu0 0.0
    %5012 = vmatpush1.xpose.msra.mxu0 0.0
    %5013 = vmatprep.subr.mxu0 0.0
    %5014 = vmatpush1.xpose.msra.mxu0 0.0
    %5015 = vmatprep.subr.mxu0 0.0
    %5016 = vmatpush1.xpose.msra.mxu0 0.0
    %5017 = vmatprep.subr.mxu0 0.0
    %5018 = vmatpush1.xpose.msra.mxu0 0.0
    %5019 = vmatprep.subr.mxu0 0.0
    %5020 = vmatpush1.xpose.msra.mxu0 0.0
    %5021 = vmatprep.subr.mxu0 0.0
    %5022 = vmatpush1.xpose.msra.mxu0 0.0
    %5023 = vmatprep.subr.mxu0 0.0
    %5024 = vmatpush1.xpose.msra.mxu0 0.0
    %5025 = vmatprep.subr.mxu0 0.0
    %5026 = vmatpush1.xpose.msra.mxu0 0.0
    %5027 = vmatprep.mubr.f32.mxu0 0.0
    %5028 = vmatmul.mubr.f32.gmra.mrb[0].mxu0 %v4959
    %v5029 = vpop.f32.mrb[0].mxu0
    %v5030 = vadd.f32 0.0, %v5029
    %v5031 = vpop.f32.mrb[0].mxu0
    %5032 = vdwg.mxu0
    %5034 = vrot.lane.b32.xlu0 %v4635, 96
    %v5035 = vpop.permute.xlu0 %5034
    %v5036 = vsel %vm146, %v4635, 0
    %v5038 = vsel %vm146, %v5035, 0
    %5040 = vmatprep.subr.mxu0 0.0
    %5041 = vmatpush1.xpose.msra.mxu0 %v5038
    %5042 = vmatprep.subr.mxu0 0.0
    %5043 = vmatpush1.xpose.msra.mxu0 0.0
    %5044 = vmatprep.subr.mxu0 0.0
    %5045 = vmatpush1.xpose.msra.mxu0 0.0
    %5046 = vmatprep.subr.mxu0 0.0
    %5047 = vmatpush1.xpose.msra.mxu0 0.0
    %5048 = vmatprep.subr.mxu0 0.0
    %5049 = vmatpush1.xpose.msra.mxu0 0.0
    %5050 = vmatprep.subr.mxu0 0.0
    %5051 = vmatpush1.xpose.msra.mxu0 0.0
    %5052 = vmatprep.subr.mxu0 0.0
    %5053 = vmatpush1.xpose.msra.mxu0 0.0
    %5054 = vmatprep.subr.mxu0 0.0
    %5055 = vmatpush1.xpose.msra.mxu0 0.0
    %5056 = vmatprep.subr.mxu0 0.0
    %5057 = vmatpush1.xpose.msra.mxu0 0.0
    %5058 = vmatprep.subr.mxu0 0.0
    %5059 = vmatpush1.xpose.msra.mxu0 0.0
    %5060 = vmatprep.subr.mxu0 0.0
    %5061 = vmatpush1.xpose.msra.mxu0 0.0
    %5062 = vmatprep.subr.mxu0 0.0
    %5063 = vmatpush1.xpose.msra.mxu0 0.0
    %5064 = vmatprep.subr.mxu0 0.0
    %5065 = vmatpush1.xpose.msra.mxu0 0.0
    %5066 = vmatprep.subr.mxu0 0.0
    %5067 = vmatpush1.xpose.msra.mxu0 0.0
    %5068 = vmatprep.subr.mxu0 0.0
    %5069 = vmatpush1.xpose.msra.mxu0 0.0
    %5070 = vmatprep.subr.mxu0 0.0
    %5071 = vmatpush1.xpose.msra.mxu0 0.0
    %5072 = vmatprep.subr.mxu0 0.0
    %5073 = vmatpush1.xpose.msra.mxu0 0.0
    %5074 = vmatprep.subr.mxu0 0.0
    %5075 = vmatpush1.xpose.msra.mxu0 0.0
    %5076 = vmatprep.subr.mxu0 0.0
    %5077 = vmatpush1.xpose.msra.mxu0 0.0
    %5078 = vmatprep.subr.mxu0 0.0
    %5079 = vmatpush1.xpose.msra.mxu0 0.0
    %5080 = vmatprep.subr.mxu0 0.0
    %5081 = vmatpush1.xpose.msra.mxu0 0.0
    %5082 = vmatprep.subr.mxu0 0.0
    %5083 = vmatpush1.xpose.msra.mxu0 0.0
    %5084 = vmatprep.subr.mxu0 0.0
    %5085 = vmatpush1.xpose.msra.mxu0 0.0
    %5086 = vmatprep.subr.mxu0 0.0
    %5087 = vmatpush1.xpose.msra.mxu0 0.0
    %5088 = vmatprep.subr.mxu0 0.0
    %5089 = vmatpush1.xpose.msra.mxu0 0.0
    %5090 = vmatprep.subr.mxu0 0.0
    %5091 = vmatpush1.xpose.msra.mxu0 0.0
    %5092 = vmatprep.subr.mxu0 0.0
    %5093 = vmatpush1.xpose.msra.mxu0 0.0
    %5094 = vmatprep.subr.mxu0 0.0
    %5095 = vmatpush1.xpose.msra.mxu0 0.0
    %5096 = vmatprep.subr.mxu0 0.0
    %5097 = vmatpush1.xpose.msra.mxu0 0.0
    %5098 = vmatprep.subr.mxu0 0.0
    %5099 = vmatpush1.xpose.msra.mxu0 0.0
    %5100 = vmatprep.subr.mxu0 0.0
    %5101 = vmatpush1.xpose.msra.mxu0 0.0
    %5102 = vmatprep.subr.mxu0 0.0
    %5103 = vmatpush1.xpose.msra.mxu0 0.0
    %5104 = vmatprep.mubr.f32.mxu0 0.0
    %5105 = vmatmul.mubr.f32.gmra.mrb[0].mxu0 %v5036
    %v5106 = vpop.f32.mrb[0].mxu0
    %v5107 = vadd.f32 0.0, %v5106
    %v5108 = vpop.f32.mrb[0].mxu0
    %5109 = vdwg.mxu0
    %5111 = vrot.lane.b32.xlu0 %v4640, 96
    %v5112 = vpop.permute.xlu0 %5111
    %v5113 = vsel %vm146, %v4640, 0
    %v5115 = vsel %vm146, %v5112, 0
    %5117 = vmatprep.subr.mxu0 0.0
    %5118 = vmatpush1.xpose.msra.mxu0 %v5115
    %5119 = vmatprep.subr.mxu0 0.0
    %5120 = vmatpush1.xpose.msra.mxu0 0.0
    %5121 = vmatprep.subr.mxu0 0.0
    %5122 = vmatpush1.xpose.msra.mxu0 0.0
    %5123 = vmatprep.subr.mxu0 0.0
    %5124 = vmatpush1.xpose.msra.mxu0 0.0
    %5125 = vmatprep.subr.mxu0 0.0
    %5126 = vmatpush1.xpose.msra.mxu0 0.0
    %5127 = vmatprep.subr.mxu0 0.0
    %5128 = vmatpush1.xpose.msra.mxu0 0.0
    %5129 = vmatprep.subr.mxu0 0.0
    %5130 = vmatpush1.xpose.msra.mxu0 0.0
    %5131 = vmatprep.subr.mxu0 0.0
    %5132 = vmatpush1.xpose.msra.mxu0 0.0
    %5133 = vmatprep.subr.mxu0 0.0
    %5134 = vmatpush1.xpose.msra.mxu0 0.0
    %5135 = vmatprep.subr.mxu0 0.0
    %5136 = vmatpush1.xpose.msra.mxu0 0.0
    %5137 = vmatprep.subr.mxu0 0.0
    %5138 = vmatpush1.xpose.msra.mxu0 0.0
    %5139 = vmatprep.subr.mxu0 0.0
    %5140 = vmatpush1.xpose.msra.mxu0 0.0
    %5141 = vmatprep.subr.mxu0 0.0
    %5142 = vmatpush1.xpose.msra.mxu0 0.0
    %5143 = vmatprep.subr.mxu0 0.0
    %5144 = vmatpush1.xpose.msra.mxu0 0.0
    %5145 = vmatprep.subr.mxu0 0.0
    %5146 = vmatpush1.xpose.msra.mxu0 0.0
    %5147 = vmatprep.subr.mxu0 0.0
    %5148 = vmatpush1.xpose.msra.mxu0 0.0
    %5149 = vmatprep.subr.mxu0 0.0
    %5150 = vmatpush1.xpose.msra.mxu0 0.0
    %5151 = vmatprep.subr.mxu0 0.0
    %5152 = vmatpush1.xpose.msra.mxu0 0.0
    %5153 = vmatprep.subr.mxu0 0.0
    %5154 = vmatpush1.xpose.msra.mxu0 0.0
    %5155 = vmatprep.subr.mxu0 0.0
    %5156 = vmatpush1.xpose.msra.mxu0 0.0
    %5157 = vmatprep.subr.mxu0 0.0
    %5158 = vmatpush1.xpose.msra.mxu0 0.0
    %5159 = vmatprep.subr.mxu0 0.0
    %5160 = vmatpush1.xpose.msra.mxu0 0.0
    %5161 = vmatprep.subr.mxu0 0.0
    %5162 = vmatpush1.xpose.msra.mxu0 0.0
    %5163 = vmatprep.subr.mxu0 0.0
    %5164 = vmatpush1.xpose.msra.mxu0 0.0
    %5165 = vmatprep.subr.mxu0 0.0
    %5166 = vmatpush1.xpose.msra.mxu0 0.0
    %5167 = vmatprep.subr.mxu0 0.0
    %5168 = vmatpush1.xpose.msra.mxu0 0.0
    %5169 = vmatprep.subr.mxu0 0.0
    %5170 = vmatpush1.xpose.msra.mxu0 0.0
    %5171 = vmatprep.subr.mxu0 0.0
    %5172 = vmatpush1.xpose.msra.mxu0 0.0
    %5173 = vmatprep.subr.mxu0 0.0
    %5174 = vmatpush1.xpose.msra.mxu0 0.0
    %5175 = vmatprep.subr.mxu0 0.0
    %5176 = vmatpush1.xpose.msra.mxu0 0.0
    %5177 = vmatprep.subr.mxu0 0.0
    %5178 = vmatpush1.xpose.msra.mxu0 0.0
    %5179 = vmatprep.subr.mxu0 0.0
    %5180 = vmatpush1.xpose.msra.mxu0 0.0
    %5181 = vmatprep.mubr.f32.mxu0 0.0
    %5182 = vmatmul.mubr.f32.gmra.mrb[0].mxu0 %v5113
    %v5183 = vpop.f32.mrb[0].mxu0
    %v5184 = vadd.f32 0.0, %v5183
    %v5185 = vpop.f32.mrb[0].mxu0
    %5186 = vdwg.mxu0
    %5188 = vrot.lane.b32.xlu0 %v4645, 96
    %v5189 = vpop.permute.xlu0 %5188
    %v5190 = vsel %vm146, %v4645, 0
    %v5192 = vsel %vm146, %v5189, 0
    %5194 = vmatprep.subr.mxu0 0.0
    %5195 = vmatpush1.xpose.msra.mxu0 %v5192
    %5196 = vmatprep.subr.mxu0 0.0
    %5197 = vmatpush1.xpose.msra.mxu0 0.0
    %5198 = vmatprep.subr.mxu0 0.0
    %5199 = vmatpush1.xpose.msra.mxu0 0.0
    %5200 = vmatprep.subr.mxu0 0.0
    %5201 = vmatpush1.xpose.msra.mxu0 0.0
    %5202 = vmatprep.subr.mxu0 0.0
    %5203 = vmatpush1.xpose.msra.mxu0 0.0
    %5204 = vmatprep.subr.mxu0 0.0
    %5205 = vmatpush1.xpose.msra.mxu0 0.0
    %5206 = vmatprep.subr.mxu0 0.0
    %5207 = vmatpush1.xpose.msra.mxu0 0.0
    %5208 = vmatprep.subr.mxu0 0.0
    %5209 = vmatpush1.xpose.msra.mxu0 0.0
    %5210 = vmatprep.subr.mxu0 0.0
    %5211 = vmatpush1.xpose.msra.mxu0 0.0
    %5212 = vmatprep.subr.mxu0 0.0
    %5213 = vmatpush1.xpose.msra.mxu0 0.0
    %5214 = vmatprep.subr.mxu0 0.0
    %5215 = vmatpush1.xpose.msra.mxu0 0.0
    %5216 = vmatprep.subr.mxu0 0.0
    %5217 = vmatpush1.xpose.msra.mxu0 0.0
    %5218 = vmatprep.subr.mxu0 0.0
    %5219 = vmatpush1.xpose.msra.mxu0 0.0
    %5220 = vmatprep.subr.mxu0 0.0
    %5221 = vmatpush1.xpose.msra.mxu0 0.0
    %5222 = vmatprep.subr.mxu0 0.0
    %5223 = vmatpush1.xpose.msra.mxu0 0.0
    %5224 = vmatprep.subr.mxu0 0.0
    %5225 = vmatpush1.xpose.msra.mxu0 0.0
    %5226 = vmatprep.subr.mxu0 0.0
    %5227 = vmatpush1.xpose.msra.mxu0 0.0
    %5228 = vmatprep.subr.mxu0 0.0
    %5229 = vmatpush1.xpose.msra.mxu0 0.0
    %5230 = vmatprep.subr.mxu0 0.0
    %5231 = vmatpush1.xpose.msra.mxu0 0.0
    %5232 = vmatprep.subr.mxu0 0.0
    %5233 = vmatpush1.xpose.msra.mxu0 0.0
    %5234 = vmatprep.subr.mxu0 0.0
    %5235 = vmatpush1.xpose.msra.mxu0 0.0
    %5236 = vmatprep.subr.mxu0 0.0
    %5237 = vmatpush1.xpose.msra.mxu0 0.0
    %5238 = vmatprep.subr.mxu0 0.0
    %5239 = vmatpush1.xpose.msra.mxu0 0.0
    %5240 = vmatprep.subr.mxu0 0.0
    %5241 = vmatpush1.xpose.msra.mxu0 0.0
    %5242 = vmatprep.subr.mxu0 0.0
    %5243 = vmatpush1.xpose.msra.mxu0 0.0
    %5244 = vmatprep.subr.mxu0 0.0
    %5245 = vmatpush1.xpose.msra.mxu0 0.0
    %5246 = vmatprep.subr.mxu0 0.0
    %5247 = vmatpush1.xpose.msra.mxu0 0.0
    %5248 = vmatprep.subr.mxu0 0.0
    %5249 = vmatpush1.xpose.msra.mxu0 0.0
    %5250 = vmatprep.subr.mxu0 0.0
    %5251 = vmatpush1.xpose.msra.mxu0 0.0
    %5252 = vmatprep.subr.mxu0 0.0
    %5253 = vmatpush1.xpose.msra.mxu0 0.0
    %5254 = vmatprep.subr.mxu0 0.0
    %5255 = vmatpush1.xpose.msra.mxu0 0.0
    %5256 = vmatprep.subr.mxu0 0.0
    %5257 = vmatpush1.xpose.msra.mxu0 0.0
    %5258 = vmatprep.mubr.f32.mxu0 0.0
    %5259 = vmatmul.mubr.f32.gmra.mrb[0].mxu0 %v5190
    %v5260 = vpop.f32.mrb[0].mxu0
    %v5261 = vadd.f32 0.0, %v5260
    %v5262 = vpop.f32.mrb[0].mxu0
    %5263 = vdwg.mxu0
    %v5264 = vmul.f32 %v4722, 0.25
    %v5265 = vmul.f32 %v4799, 0.25
    %v5266 = vmul.f32 %v4876, 0.25
    %v5267 = vmul.f32 %v4953, 0.25
    %v5268 = vmul.f32 %v5030, 0.25
    %v5269 = vmul.f32 %v5107, 0.25
    %v5270 = vmul.f32 %v5184, 0.25
    %v5271 = vmul.f32 %v5261, 0.25
    %v5272 = vadd.f32 %v5264, %v1453
    %v5273 = vadd.f32 %v5265, %v1454
    %v5274 = vadd.f32 %v5266, %v1455
    %v5275 = vadd.f32 %v5267, %v1456
    %v5276 = vadd.f32 %v5268, %v1457
    %v5277 = vadd.f32 %v5269, %v1458
    %v5278 = vadd.f32 %v5270, %v1459
    %v5279 = vadd.f32 %v5271, %v1460
    %v5280 = vsel %vm1461, %v5272, -inf
    %5281 = vmax.xlane.f32.xlu0 %v5280
    %v5282 = vpop.xlane.xlu0 %5281
    %v5283 = vsel %vm1461, %v5273, -inf
    %5284 = vmax.xlane.f32.xlu0 %v5283
    %v5285 = vpop.xlane.xlu0 %5284
    %v5286 = vsel %vm1461, %v5274, -inf
    %5287 = vmax.xlane.f32.xlu0 %v5286
    %v5288 = vpop.xlane.xlu0 %5287
    %v5289 = vsel %vm1461, %v5275, -inf
    %5290 = vmax.xlane.f32.xlu0 %v5289
    %v5291 = vpop.xlane.xlu0 %5290
    %v5292 = vsel %vm1461, %v5276, -inf
    %5293 = vmax.xlane.f32.xlu0 %v5292
    %v5294 = vpop.xlane.xlu0 %5293
    %v5295 = vsel %vm1461, %v5277, -inf
    %5296 = vmax.xlane.f32.xlu0 %v5295
    %v5297 = vpop.xlane.xlu0 %5296
    %v5298 = vsel %vm1461, %v5278, -inf
    %5299 = vmax.xlane.f32.xlu0 %v5298
    %v5300 = vpop.xlane.xlu0 %5299
    %v5301 = vsel %vm1461, %v5279, -inf
    %5302 = vmax.xlane.f32.xlu0 %v5301
    %v5303 = vpop.xlane.xlu0 %5302
    %v5304 = vsub.f32 %v5272, %v5282
    %v5305 = vsub.f32 %v5273, %v5285
    %v5306 = vsub.f32 %v5274, %v5288
    %v5307 = vsub.f32 %v5275, %v5291
    %v5308 = vsub.f32 %v5276, %v5294
    %v5309 = vsub.f32 %v5277, %v5297
    %v5310 = vsub.f32 %v5278, %v5300
    %v5311 = vsub.f32 %v5279, %v5303
    %v5312 = vmul.f32 %v5304, 1.442695
    %v5313 = vpow.pop %v5312
    %v5314 = vmul.f32 %v5305, 1.442695
    %v5315 = vpow.pop %v5314
    %v5316 = vmul.f32 %v5306, 1.442695
    %v5317 = vpow.pop %v5316
    %v5318 = vmul.f32 %v5307, 1.442695
    %v5319 = vpow.pop %v5318
    %v5320 = vmul.f32 %v5308, 1.442695
    %v5321 = vpow.pop %v5320
    %v5322 = vmul.f32 %v5309, 1.442695
    %v5323 = vpow.pop %v5322
    %v5324 = vmul.f32 %v5310, 1.442695
    %v5325 = vpow.pop %v5324
    %v5326 = vmul.f32 %v5311, 1.442695
    %v5327 = vpow.pop %v5326
    %v5328 = vsel %vm1461, %v5313, 0.0
    %5329 = vadd.xlane.f32.xlu0 %v5328
    %v5330 = vpop.xlane.xlu0 %5329
    %v5331 = vsel %vm1461, %v5315, 0.0
    %5332 = vadd.xlane.f32.xlu0 %v5331
    %v5333 = vpop.xlane.xlu0 %5332
    %v5334 = vsel %vm1461, %v5317, 0.0
    %5335 = vadd.xlane.f32.xlu0 %v5334
    %v5336 = vpop.xlane.xlu0 %5335
    %v5337 = vsel %vm1461, %v5319, 0.0
    %5338 = vadd.xlane.f32.xlu0 %v5337
    %v5339 = vpop.xlane.xlu0 %5338
    %v5340 = vsel %vm1461, %v5321, 0.0
    %5341 = vadd.xlane.f32.xlu0 %v5340
    %v5342 = vpop.xlane.xlu0 %5341
    %v5343 = vsel %vm1461, %v5323, 0.0
    %5344 = vadd.xlane.f32.xlu0 %v5343
    %v5345 = vpop.xlane.xlu0 %5344
    %v5346 = vsel %vm1461, %v5325, 0.0
    %5347 = vadd.xlane.f32.xlu0 %v5346
    %v5348 = vpop.xlane.xlu0 %5347
    %v5349 = vsel %vm1461, %v5327, 0.0
    %5350 = vadd.xlane.f32.xlu0 %v5349
    %v5351 = vpop.xlane.xlu0 %5350
    %v5352 = vrcp.pop %v5330
    %v5353 = vmul.f32 1.0, %v5352
    %v5354 = vrcp.pop %v5333
    %v5355 = vmul.f32 1.0, %v5354
    %v5356 = vrcp.pop %v5336
    %v5357 = vmul.f32 1.0, %v5356
    %v5358 = vrcp.pop %v5339
    %v5359 = vmul.f32 1.0, %v5358
    %v5360 = vrcp.pop %v5342
    %v5361 = vmul.f32 1.0, %v5360
    %v5362 = vrcp.pop %v5345
    %v5363 = vmul.f32 1.0, %v5362
    %v5364 = vrcp.pop %v5348
    %v5365 = vmul.f32 1.0, %v5364
    %v5366 = vrcp.pop %v5351
    %v5367 = vmul.f32 1.0, %v5366
    %v5368 = vmul.f32 %v5313, %v5353
    %v5369 = vmul.f32 %v5315, %v5355
    %v5370 = vmul.f32 %v5317, %v5357
    %v5371 = vmul.f32 %v5319, %v5359
    %v5372 = vmul.f32 %v5321, %v5361
    %v5373 = vmul.f32 %v5323, %v5363
    %v5374 = vmul.f32 %v5325, %v5365
    %v5375 = vmul.f32 %v5327, %v5367
    %5376 = vrot.lane.b32.xlu0 %v4610, 64
    %v5377 = vpop.permute.xlu0 %5376
    %v5380 = vsel %vm1461, %v5368, 0
    %5382 = vmatprep.subr.mxu0 0.0
    %5383 = vmatpush1.msra.mxu0 %v5377
    %5384 = vmatprep.subr.mxu0 0.0
    %5385 = vmatpush1.msra.mxu0 0.0
    %5386 = vmatprep.subr.mxu0 0.0
    %5387 = vmatpush1.msra.mxu0 0.0
    %5388 = vmatprep.subr.mxu0 0.0
    %5389 = vmatpush1.msra.mxu0 0.0
    %5390 = vmatprep.subr.mxu0 0.0
    %5391 = vmatpush1.msra.mxu0 0.0
    %5392 = vmatprep.subr.mxu0 0.0
    %5393 = vmatpush1.msra.mxu0 0.0
    %5394 = vmatprep.subr.mxu0 0.0
    %5395 = vmatpush1.msra.mxu0 0.0
    %5396 = vmatprep.subr.mxu0 0.0
    %5397 = vmatpush1.msra.mxu0 0.0
    %5398 = vmatprep.subr.mxu0 0.0
    %5399 = vmatpush1.msra.mxu0 0.0
    %5400 = vmatprep.subr.mxu0 0.0
    %5401 = vmatpush1.msra.mxu0 0.0
    %5402 = vmatprep.subr.mxu0 0.0
    %5403 = vmatpush1.msra.mxu0 0.0
    %5404 = vmatprep.subr.mxu0 0.0
    %5405 = vmatpush1.msra.mxu0 0.0
    %5406 = vmatprep.subr.mxu0 0.0
    %5407 = vmatpush1.msra.mxu0 0.0
    %5408 = vmatprep.subr.mxu0 0.0
    %5409 = vmatpush1.msra.mxu0 0.0
    %5410 = vmatprep.subr.mxu0 0.0
    %5411 = vmatpush1.msra.mxu0 0.0
    %5412 = vmatprep.subr.mxu0 0.0
    %5413 = vmatpush1.msra.mxu0 0.0
    %5414 = vmatprep.subr.mxu0 0.0
    %5415 = vmatpush1.msra.mxu0 0.0
    %5416 = vmatprep.subr.mxu0 0.0
    %5417 = vmatpush1.msra.mxu0 0.0
    %5418 = vmatprep.subr.mxu0 0.0
    %5419 = vmatpush1.msra.mxu0 0.0
    %5420 = vmatprep.subr.mxu0 0.0
    %5421 = vmatpush1.msra.mxu0 0.0
    %5422 = vmatprep.subr.mxu0 0.0
    %5423 = vmatpush1.msra.mxu0 0.0
    %5424 = vmatprep.subr.mxu0 0.0
    %5425 = vmatpush1.msra.mxu0 0.0
    %5426 = vmatprep.subr.mxu0 0.0
    %5427 = vmatpush1.msra.mxu0 0.0
    %5428 = vmatprep.subr.mxu0 0.0
    %5429 = vmatpush1.msra.mxu0 0.0
    %5430 = vmatprep.subr.mxu0 0.0
    %5431 = vmatpush1.msra.mxu0 0.0
    %5432 = vmatprep.subr.mxu0 0.0
    %5433 = vmatpush1.msra.mxu0 0.0
    %5434 = vmatprep.subr.mxu0 0.0
    %5435 = vmatpush1.msra.mxu0 0.0
    %5436 = vmatprep.subr.mxu0 0.0
    %5437 = vmatpush1.msra.mxu0 0.0
    %5438 = vmatprep.subr.mxu0 0.0
    %5439 = vmatpush1.msra.mxu0 0.0
    %5440 = vmatprep.subr.mxu0 0.0
    %5441 = vmatpush1.msra.mxu0 0.0
    %5442 = vmatprep.subr.mxu0 0.0
    %5443 = vmatpush1.msra.mxu0 0.0
    %5444 = vmatprep.subr.mxu0 0.0
    %5445 = vmatpush1.msra.mxu0 0.0
    %5446 = vmatprep.mubr.f32.mxu0 0.0
    %5447 = vmatmul.mubr.f32.gmra.mrb[0].mxu0 %v5380
    %v5448 = vpop.f32.mrb[0].mxu0
    %v5449 = vadd.f32 0.0, %v5448
    %v5450 = vpop.f32.mrb[0].mxu0
    %5451 = vdwg.mxu0
    %5452 = vrot.lane.b32.xlu0 %v4615, 64
    %v5453 = vpop.permute.xlu0 %5452
    %v5456 = vsel %vm1461, %v5369, 0
    %5458 = vmatprep.subr.mxu0 0.0
    %5459 = vmatpush1.msra.mxu0 %v5453
    %5460 = vmatprep.subr.mxu0 0.0
    %5461 = vmatpush1.msra.mxu0 0.0
    %5462 = vmatprep.subr.mxu0 0.0
    %5463 = vmatpush1.msra.mxu0 0.0
    %5464 = vmatprep.subr.mxu0 0.0
    %5465 = vmatpush1.msra.mxu0 0.0
    %5466 = vmatprep.subr.mxu0 0.0
    %5467 = vmatpush1.msra.mxu0 0.0
    %5468 = vmatprep.subr.mxu0 0.0
    %5469 = vmatpush1.msra.mxu0 0.0
    %5470 = vmatprep.subr.mxu0 0.0
    %5471 = vmatpush1.msra.mxu0 0.0
    %5472 = vmatprep.subr.mxu0 0.0
    %5473 = vmatpush1.msra.mxu0 0.0
    %5474 = vmatprep.subr.mxu0 0.0
    %5475 = vmatpush1.msra.mxu0 0.0
    %5476 = vmatprep.subr.mxu0 0.0
    %5477 = vmatpush1.msra.mxu0 0.0
    %5478 = vmatprep.subr.mxu0 0.0
    %5479 = vmatpush1.msra.mxu0 0.0
    %5480 = vmatprep.subr.mxu0 0.0
    %5481 = vmatpush1.msra.mxu0 0.0
    %5482 = vmatprep.subr.mxu0 0.0
    %5483 = vmatpush1.msra.mxu0 0.0
    %5484 = vmatprep.subr.mxu0 0.0
    %5485 = vmatpush1.msra.mxu0 0.0
    %5486 = vmatprep.subr.mxu0 0.0
    %5487 = vmatpush1.msra.mxu0 0.0
    %5488 = vmatprep.subr.mxu0 0.0
    %5489 = vmatpush1.msra.mxu0 0.0
    %5490 = vmatprep.subr.mxu0 0.0
    %5491 = vmatpush1.msra.mxu0 0.0
    %5492 = vmatprep.subr.mxu0 0.0
    %5493 = vmatpush1.msra.mxu0 0.0
    %5494 = vmatprep.subr.mxu0 0.0
    %5495 = vmatpush1.msra.mxu0 0.0
    %5496 = vmatprep.subr.mxu0 0.0
    %5497 = vmatpush1.msra.mxu0 0.0
    %5498 = vmatprep.subr.mxu0 0.0
    %5499 = vmatpush1.msra.mxu0 0.0
    %5500 = vmatprep.subr.mxu0 0.0
    %5501 = vmatpush1.msra.mxu0 0.0
    %5502 = vmatprep.subr.mxu0 0.0
    %5503 = vmatpush1.msra.mxu0 0.0
    %5504 = vmatprep.subr.mxu0 0.0
    %5505 = vmatpush1.msra.mxu0 0.0
    %5506 = vmatprep.subr.mxu0 0.0
    %5507 = vmatpush1.msra.mxu0 0.0
    %5508 = vmatprep.subr.mxu0 0.0
    %5509 = vmatpush1.msra.mxu0 0.0
    %5510 = vmatprep.subr.mxu0 0.0
    %5511 = vmatpush1.msra.mxu0 0.0
    %5512 = vmatprep.subr.mxu0 0.0
    %5513 = vmatpush1.msra.mxu0 0.0
    %5514 = vmatprep.subr.mxu0 0.0
    %5515 = vmatpush1.msra.mxu0 0.0
    %5516 = vmatprep.subr.mxu0 0.0
    %5517 = vmatpush1.msra.mxu0 0.0
    %5518 = vmatprep.subr.mxu0 0.0
    %5519 = vmatpush1.msra.mxu0 0.0
    %5520 = vmatprep.subr.mxu0 0.0
    %5521 = vmatpush1.msra.mxu0 0.0
    %5522 = vmatprep.mubr.f32.mxu0 0.0
    %5523 = vmatmul.mubr.f32.gmra.mrb[0].mxu0 %v5456
    %v5524 = vpop.f32.mrb[0].mxu0
    %v5525 = vadd.f32 0.0, %v5524
    %v5526 = vpop.f32.mrb[0].mxu0
    %5527 = vdwg.mxu0
    %5528 = vrot.lane.b32.xlu0 %v4620, 64
    %v5529 = vpop.permute.xlu0 %5528
    %v5532 = vsel %vm1461, %v5370, 0
    %5534 = vmatprep.subr.mxu0 0.0
    %5535 = vmatpush1.msra.mxu0 %v5529
    %5536 = vmatprep.subr.mxu0 0.0
    %5537 = vmatpush1.msra.mxu0 0.0
    %5538 = vmatprep.subr.mxu0 0.0
    %5539 = vmatpush1.msra.mxu0 0.0
    %5540 = vmatprep.subr.mxu0 0.0
    %5541 = vmatpush1.msra.mxu0 0.0
    %5542 = vmatprep.subr.mxu0 0.0
    %5543 = vmatpush1.msra.mxu0 0.0
    %5544 = vmatprep.subr.mxu0 0.0
    %5545 = vmatpush1.msra.mxu0 0.0
    %5546 = vmatprep.subr.mxu0 0.0
    %5547 = vmatpush1.msra.mxu0 0.0
    %5548 = vmatprep.subr.mxu0 0.0
    %5549 = vmatpush1.msra.mxu0 0.0
    %5550 = vmatprep.subr.mxu0 0.0
    %5551 = vmatpush1.msra.mxu0 0.0
    %5552 = vmatprep.subr.mxu0 0.0
    %5553 = vmatpush1.msra.mxu0 0.0
    %5554 = vmatprep.subr.mxu0 0.0
    %5555 = vmatpush1.msra.mxu0 0.0
    %5556 = vmatprep.subr.mxu0 0.0
    %5557 = vmatpush1.msra.mxu0 0.0
    %5558 = vmatprep.subr.mxu0 0.0
    %5559 = vmatpush1.msra.mxu0 0.0
    %5560 = vmatprep.subr.mxu0 0.0
    %5561 = vmatpush1.msra.mxu0 0.0
    %5562 = vmatprep.subr.mxu0 0.0
    %5563 = vmatpush1.msra.mxu0 0.0
    %5564 = vmatprep.subr.mxu0 0.0
    %5565 = vmatpush1.msra.mxu0 0.0
    %5566 = vmatprep.subr.mxu0 0.0
    %5567 = vmatpush1.msra.mxu0 0.0
    %5568 = vmatprep.subr.mxu0 0.0
    %5569 = vmatpush1.msra.mxu0 0.0
    %5570 = vmatprep.subr.mxu0 0.0
    %5571 = vmatpush1.msra.mxu0 0.0
    %5572 = vmatprep.subr.mxu0 0.0
    %5573 = vmatpush1.msra.mxu0 0.0
    %5574 = vmatprep.subr.mxu0 0.0
    %5575 = vmatpush1.msra.mxu0 0.0
    %5576 = vmatprep.subr.mxu0 0.0
    %5577 = vmatpush1.msra.mxu0 0.0
    %5578 = vmatprep.subr.mxu0 0.0
    %5579 = vmatpush1.msra.mxu0 0.0
    %5580 = vmatprep.subr.mxu0 0.0
    %5581 = vmatpush1.msra.mxu0 0.0
    %5582 = vmatprep.subr.mxu0 0.0
    %5583 = vmatpush1.msra.mxu0 0.0
    %5584 = vmatprep.subr.mxu0 0.0
    %5585 = vmatpush1.msra.mxu0 0.0
    %5586 = vmatprep.subr.mxu0 0.0
    %5587 = vmatpush1.msra.mxu0 0.0
    %5588 = vmatprep.subr.mxu0 0.0
    %5589 = vmatpush1.msra.mxu0 0.0
    %5590 = vmatprep.subr.mxu0 0.0
    %5591 = vmatpush1.msra.mxu0 0.0
    %5592 = vmatprep.subr.mxu0 0.0
    %5593 = vmatpush1.msra.mxu0 0.0
    %5594 = vmatprep.subr.mxu0 0.0
    %5595 = vmatpush1.msra.mxu0 0.0
    %5596 = vmatprep.subr.mxu0 0.0
    %5597 = vmatpush1.msra.mxu0 0.0
    %5598 = vmatprep.mubr.f32.mxu0 0.0
    %5599 = vmatmul.mubr.f32.gmra.mrb[0].mxu0 %v5532
    %v5600 = vpop.f32.mrb[0].mxu0
    %v5601 = vadd.f32 0.0, %v5600
    %v5602 = vpop.f32.mrb[0].mxu0
    %5603 = vdwg.mxu0
    %5604 = vrot.lane.b32.xlu0 %v4625, 64
    %v5605 = vpop.permute.xlu0 %5604
    %v5608 = vsel %vm1461, %v5371, 0
    %5610 = vmatprep.subr.mxu0 0.0
    %5611 = vmatpush1.msra.mxu0 %v5605
    %5612 = vmatprep.subr.mxu0 0.0
    %5613 = vmatpush1.msra.mxu0 0.0
    %5614 = vmatprep.subr.mxu0 0.0
    %5615 = vmatpush1.msra.mxu0 0.0
    %5616 = vmatprep.subr.mxu0 0.0
    %5617 = vmatpush1.msra.mxu0 0.0
    %5618 = vmatprep.subr.mxu0 0.0
    %5619 = vmatpush1.msra.mxu0 0.0
    %5620 = vmatprep.subr.mxu0 0.0
    %5621 = vmatpush1.msra.mxu0 0.0
    %5622 = vmatprep.subr.mxu0 0.0
    %5623 = vmatpush1.msra.mxu0 0.0
    %5624 = vmatprep.subr.mxu0 0.0
    %5625 = vmatpush1.msra.mxu0 0.0
    %5626 = vmatprep.subr.mxu0 0.0
    %5627 = vmatpush1.msra.mxu0 0.0
    %5628 = vmatprep.subr.mxu0 0.0
    %5629 = vmatpush1.msra.mxu0 0.0
    %5630 = vmatprep.subr.mxu0 0.0
    %5631 = vmatpush1.msra.mxu0 0.0
    %5632 = vmatprep.subr.mxu0 0.0
    %5633 = vmatpush1.msra.mxu0 0.0
    %5634 = vmatprep.subr.mxu0 0.0
    %5635 = vmatpush1.msra.mxu0 0.0
    %5636 = vmatprep.subr.mxu0 0.0
    %5637 = vmatpush1.msra.mxu0 0.0
    %5638 = vmatprep.subr.mxu0 0.0
    %5639 = vmatpush1.msra.mxu0 0.0
    %5640 = vmatprep.subr.mxu0 0.0
    %5641 = vmatpush1.msra.mxu0 0.0
    %5642 = vmatprep.subr.mxu0 0.0
    %5643 = vmatpush1.msra.mxu0 0.0
    %5644 = vmatprep.subr.mxu0 0.0
    %5645 = vmatpush1.msra.mxu0 0.0
    %5646 = vmatprep.subr.mxu0 0.0
    %5647 = vmatpush1.msra.mxu0 0.0
    %5648 = vmatprep.subr.mxu0 0.0
    %5649 = vmatpush1.msra.mxu0 0.0
    %5650 = vmatprep.subr.mxu0 0.0
    %5651 = vmatpush1.msra.mxu0 0.0
    %5652 = vmatprep.subr.mxu0 0.0
    %5653 = vmatpush1.msra.mxu0 0.0
    %5654 = vmatprep.subr.mxu0 0.0
    %5655 = vmatpush1.msra.mxu0 0.0
    %5656 = vmatprep.subr.mxu0 0.0
    %5657 = vmatpush1.msra.mxu0 0.0
    %5658 = vmatprep.subr.mxu0 0.0
    %5659 = vmatpush1.msra.mxu0 0.0
    %5660 = vmatprep.subr.mxu0 0.0
    %5661 = vmatpush1.msra.mxu0 0.0
    %5662 = vmatprep.subr.mxu0 0.0
    %5663 = vmatpush1.msra.mxu0 0.0
    %5664 = vmatprep.subr.mxu0 0.0
    %5665 = vmatpush1.msra.mxu0 0.0
    %5666 = vmatprep.subr.mxu0 0.0
    %5667 = vmatpush1.msra.mxu0 0.0
    %5668 = vmatprep.subr.mxu0 0.0
    %5669 = vmatpush1.msra.mxu0 0.0
    %5670 = vmatprep.subr.mxu0 0.0
    %5671 = vmatpush1.msra.mxu0 0.0
    %5672 = vmatprep.subr.mxu0 0.0
    %5673 = vmatpush1.msra.mxu0 0.0
    %5674 = vmatprep.mubr.f32.mxu0 0.0
    %5675 = vmatmul.mubr.f32.gmra.mrb[0].mxu0 %v5608
    %v5676 = vpop.f32.mrb[0].mxu0
    %v5677 = vadd.f32 0.0, %v5676
    %v5678 = vpop.f32.mrb[0].mxu0
    %5679 = vdwg.mxu0
    %5680 = vrot.lane.b32.xlu0 %v4630, 64
    %v5681 = vpop.permute.xlu0 %5680
    %v5684 = vsel %vm1461, %v5372, 0
    %5686 = vmatprep.subr.mxu0 0.0
    %5687 = vmatpush1.msra.mxu0 %v5681
    %5688 = vmatprep.subr.mxu0 0.0
    %5689 = vmatpush1.msra.mxu0 0.0
    %5690 = vmatprep.subr.mxu0 0.0
    %5691 = vmatpush1.msra.mxu0 0.0
    %5692 = vmatprep.subr.mxu0 0.0
    %5693 = vmatpush1.msra.mxu0 0.0
    %5694 = vmatprep.subr.mxu0 0.0
    %5695 = vmatpush1.msra.mxu0 0.0
    %5696 = vmatprep.subr.mxu0 0.0
    %5697 = vmatpush1.msra.mxu0 0.0
    %5698 = vmatprep.subr.mxu0 0.0
    %5699 = vmatpush1.msra.mxu0 0.0
    %5700 = vmatprep.subr.mxu0 0.0
    %5701 = vmatpush1.msra.mxu0 0.0
    %5702 = vmatprep.subr.mxu0 0.0
    %5703 = vmatpush1.msra.mxu0 0.0
    %5704 = vmatprep.subr.mxu0 0.0
    %5705 = vmatpush1.msra.mxu0 0.0
    %5706 = vmatprep.subr.mxu0 0.0
    %5707 = vmatpush1.msra.mxu0 0.0
    %5708 = vmatprep.subr.mxu0 0.0
    %5709 = vmatpush1.msra.mxu0 0.0
    %5710 = vmatprep.subr.mxu0 0.0
    %5711 = vmatpush1.msra.mxu0 0.0
    %5712 = vmatprep.subr.mxu0 0.0
    %5713 = vmatpush1.msra.mxu0 0.0
    %5714 = vmatprep.subr.mxu0 0.0
    %5715 = vmatpush1.msra.mxu0 0.0
    %5716 = vmatprep.subr.mxu0 0.0
    %5717 = vmatpush1.msra.mxu0 0.0
    %5718 = vmatprep.subr.mxu0 0.0
    %5719 = vmatpush1.msra.mxu0 0.0
    %5720 = vmatprep.subr.mxu0 0.0
    %5721 = vmatpush1.msra.mxu0 0.0
    %5722 = vmatprep.subr.mxu0 0.0
    %5723 = vmatpush1.msra.mxu0 0.0
    %5724 = vmatprep.subr.mxu0 0.0
    %5725 = vmatpush1.msra.mxu0 0.0
    %5726 = vmatprep.subr.mxu0 0.0
    %5727 = vmatpush1.msra.mxu0 0.0
    %5728 = vmatprep.subr.mxu0 0.0
    %5729 = vmatpush1.msra.mxu0 0.0
    %5730 = vmatprep.subr.mxu0 0.0
    %5731 = vmatpush1.msra.mxu0 0.0
    %5732 = vmatprep.subr.mxu0 0.0
    %5733 = vmatpush1.msra.mxu0 0.0
    %5734 = vmatprep.subr.mxu0 0.0
    %5735 = vmatpush1.msra.mxu0 0.0
    %5736 = vmatprep.subr.mxu0 0.0
    %5737 = vmatpush1.msra.mxu0 0.0
    %5738 = vmatprep.subr.mxu0 0.0
    %5739 = vmatpush1.msra.mxu0 0.0
    %5740 = vmatprep.subr.mxu0 0.0
    %5741 = vmatpush1.msra.mxu0 0.0
    %5742 = vmatprep.subr.mxu0 0.0
    %5743 = vmatpush1.msra.mxu0 0.0
    %5744 = vmatprep.subr.mxu0 0.0
    %5745 = vmatpush1.msra.mxu0 0.0
    %5746 = vmatprep.subr.mxu0 0.0
    %5747 = vmatpush1.msra.mxu0 0.0
    %5748 = vmatprep.subr.mxu0 0.0
    %5749 = vmatpush1.msra.mxu0 0.0
    %5750 = vmatprep.mubr.f32.mxu0 0.0
    %5751 = vmatmul.mubr.f32.gmra.mrb[0].mxu0 %v5684
    %v5752 = vpop.f32.mrb[0].mxu0
    %v5753 = vadd.f32 0.0, %v5752
    %v5754 = vpop.f32.mrb[0].mxu0
    %5755 = vdwg.mxu0
    %5756 = vrot.lane.b32.xlu0 %v4635, 64
    %v5757 = vpop.permute.xlu0 %5756
    %v5760 = vsel %vm1461, %v5373, 0
    %5762 = vmatprep.subr.mxu0 0.0
    %5763 = vmatpush1.msra.mxu0 %v5757
    %5764 = vmatprep.subr.mxu0 0.0
    %5765 = vmatpush1.msra.mxu0 0.0
    %5766 = vmatprep.subr.mxu0 0.0
    %5767 = vmatpush1.msra.mxu0 0.0
    %5768 = vmatprep.subr.mxu0 0.0
    %5769 = vmatpush1.msra.mxu0 0.0
    %5770 = vmatprep.subr.mxu0 0.0
    %5771 = vmatpush1.msra.mxu0 0.0
    %5772 = vmatprep.subr.mxu0 0.0
    %5773 = vmatpush1.msra.mxu0 0.0
    %5774 = vmatprep.subr.mxu0 0.0
    %5775 = vmatpush1.msra.mxu0 0.0
    %5776 = vmatprep.subr.mxu0 0.0
    %5777 = vmatpush1.msra.mxu0 0.0
    %5778 = vmatprep.subr.mxu0 0.0
    %5779 = vmatpush1.msra.mxu0 0.0
    %5780 = vmatprep.subr.mxu0 0.0
    %5781 = vmatpush1.msra.mxu0 0.0
    %5782 = vmatprep.subr.mxu0 0.0
    %5783 = vmatpush1.msra.mxu0 0.0
    %5784 = vmatprep.subr.mxu0 0.0
    %5785 = vmatpush1.msra.mxu0 0.0
    %5786 = vmatprep.subr.mxu0 0.0
    %5787 = vmatpush1.msra.mxu0 0.0
    %5788 = vmatprep.subr.mxu0 0.0
    %5789 = vmatpush1.msra.mxu0 0.0
    %5790 = vmatprep.subr.mxu0 0.0
    %5791 = vmatpush1.msra.mxu0 0.0
    %5792 = vmatprep.subr.mxu0 0.0
    %5793 = vmatpush1.msra.mxu0 0.0
    %5794 = vmatprep.subr.mxu0 0.0
    %5795 = vmatpush1.msra.mxu0 0.0
    %5796 = vmatprep.subr.mxu0 0.0
    %5797 = vmatpush1.msra.mxu0 0.0
    %5798 = vmatprep.subr.mxu0 0.0
    %5799 = vmatpush1.msra.mxu0 0.0
    %5800 = vmatprep.subr.mxu0 0.0
    %5801 = vmatpush1.msra.mxu0 0.0
    %5802 = vmatprep.subr.mxu0 0.0
    %5803 = vmatpush1.msra.mxu0 0.0
    %5804 = vmatprep.subr.mxu0 0.0
    %5805 = vmatpush1.msra.mxu0 0.0
    %5806 = vmatprep.subr.mxu0 0.0
    %5807 = vmatpush1.msra.mxu0 0.0
    %5808 = vmatprep.subr.mxu0 0.0
    %5809 = vmatpush1.msra.mxu0 0.0
    %5810 = vmatprep.subr.mxu0 0.0
    %5811 = vmatpush1.msra.mxu0 0.0
    %5812 = vmatprep.subr.mxu0 0.0
    %5813 = vmatpush1.msra.mxu0 0.0
    %5814 = vmatprep.subr.mxu0 0.0
    %5815 = vmatpush1.msra.mxu0 0.0
    %5816 = vmatprep.subr.mxu0 0.0
    %5817 = vmatpush1.msra.mxu0 0.0
    %5818 = vmatprep.subr.mxu0 0.0
    %5819 = vmatpush1.msra.mxu0 0.0
    %5820 = vmatprep.subr.mxu0 0.0
    %5821 = vmatpush1.msra.mxu0 0.0
    %5822 = vmatprep.subr.mxu0 0.0
    %5823 = vmatpush1.msra.mxu0 0.0
    %5824 = vmatprep.subr.mxu0 0.0
    %5825 = vmatpush1.msra.mxu0 0.0
    %5826 = vmatprep.mubr.f32.mxu0 0.0
    %5827 = vmatmul.mubr.f32.gmra.mrb[0].mxu0 %v5760
    %v5828 = vpop.f32.mrb[0].mxu0
    %v5829 = vadd.f32 0.0, %v5828
    %v5830 = vpop.f32.mrb[0].mxu0
    %5831 = vdwg.mxu0
    %5832 = vrot.lane.b32.xlu0 %v4640, 64
    %v5833 = vpop.permute.xlu0 %5832
    %v5836 = vsel %vm1461, %v5374, 0
    %5838 = vmatprep.subr.mxu0 0.0
    %5839 = vmatpush1.msra.mxu0 %v5833
    %5840 = vmatprep.subr.mxu0 0.0
    %5841 = vmatpush1.msra.mxu0 0.0
    %5842 = vmatprep.subr.mxu0 0.0
    %5843 = vmatpush1.msra.mxu0 0.0
    %5844 = vmatprep.subr.mxu0 0.0
    %5845 = vmatpush1.msra.mxu0 0.0
    %5846 = vmatprep.subr.mxu0 0.0
    %5847 = vmatpush1.msra.mxu0 0.0
    %5848 = vmatprep.subr.mxu0 0.0
    %5849 = vmatpush1.msra.mxu0 0.0
    %5850 = vmatprep.subr.mxu0 0.0
    %5851 = vmatpush1.msra.mxu0 0.0
    %5852 = vmatprep.subr.mxu0 0.0
    %5853 = vmatpush1.msra.mxu0 0.0
    %5854 = vmatprep.subr.mxu0 0.0
    %5855 = vmatpush1.msra.mxu0 0.0
    %5856 = vmatprep.subr.mxu0 0.0
    %5857 = vmatpush1.msra.mxu0 0.0
    %5858 = vmatprep.subr.mxu0 0.0
    %5859 = vmatpush1.msra.mxu0 0.0
    %5860 = vmatprep.subr.mxu0 0.0
    %5861 = vmatpush1.msra.mxu0 0.0
    %5862 = vmatprep.subr.mxu0 0.0
    %5863 = vmatpush1.msra.mxu0 0.0
    %5864 = vmatprep.subr.mxu0 0.0
    %5865 = vmatpush1.msra.mxu0 0.0
    %5866 = vmatprep.subr.mxu0 0.0
    %5867 = vmatpush1.msra.mxu0 0.0
    %5868 = vmatprep.subr.mxu0 0.0
    %5869 = vmatpush1.msra.mxu0 0.0
    %5870 = vmatprep.subr.mxu0 0.0
    %5871 = vmatpush1.msra.mxu0 0.0
    %5872 = vmatprep.subr.mxu0 0.0
    %5873 = vmatpush1.msra.mxu0 0.0
    %5874 = vmatprep.subr.mxu0 0.0
    %5875 = vmatpush1.msra.mxu0 0.0
    %5876 = vmatprep.subr.mxu0 0.0
    %5877 = vmatpush1.msra.mxu0 0.0
    %5878 = vmatprep.subr.mxu0 0.0
    %5879 = vmatpush1.msra.mxu0 0.0
    %5880 = vmatprep.subr.mxu0 0.0
    %5881 = vmatpush1.msra.mxu0 0.0
    %5882 = vmatprep.subr.mxu0 0.0
    %5883 = vmatpush1.msra.mxu0 0.0
    %5884 = vmatprep.subr.mxu0 0.0
    %5885 = vmatpush1.msra.mxu0 0.0
    %5886 = vmatprep.subr.mxu0 0.0
    %5887 = vmatpush1.msra.mxu0 0.0
    %5888 = vmatprep.subr.mxu0 0.0
    %5889 = vmatpush1.msra.mxu0 0.0
    %5890 = vmatprep.subr.mxu0 0.0
    %5891 = vmatpush1.msra.mxu0 0.0
    %5892 = vmatprep.subr.mxu0 0.0
    %5893 = vmatpush1.msra.mxu0 0.0
    %5894 = vmatprep.subr.mxu0 0.0
    %5895 = vmatpush1.msra.mxu0 0.0
    %5896 = vmatprep.subr.mxu0 0.0
    %5897 = vmatpush1.msra.mxu0 0.0
    %5898 = vmatprep.subr.mxu0 0.0
    %5899 = vmatpush1.msra.mxu0 0.0
    %5900 = vmatprep.subr.mxu0 0.0
    %5901 = vmatpush1.msra.mxu0 0.0
    %5902 = vmatprep.mubr.f32.mxu0 0.0
    %5903 = vmatmul.mubr.f32.gmra.mrb[0].mxu0 %v5836
    %v5904 = vpop.f32.mrb[0].mxu0
    %v5905 = vadd.f32 0.0, %v5904
    %v5906 = vpop.f32.mrb[0].mxu0
    %5907 = vdwg.mxu0
    %5908 = vrot.lane.b32.xlu0 %v4645, 64
    %v5909 = vpop.permute.xlu0 %5908
    %v5912 = vsel %vm1461, %v5375, 0
    %5914 = vmatprep.subr.mxu0 0.0
    %5915 = vmatpush1.msra.mxu0 %v5909
    %5916 = vmatprep.subr.mxu0 0.0
    %5917 = vmatpush1.msra.mxu0 0.0
    %5918 = vmatprep.subr.mxu0 0.0
    %5919 = vmatpush1.msra.mxu0 0.0
    %5920 = vmatprep.subr.mxu0 0.0
    %5921 = vmatpush1.msra.mxu0 0.0
    %5922 = vmatprep.subr.mxu0 0.0
    %5923 = vmatpush1.msra.mxu0 0.0
    %5924 = vmatprep.subr.mxu0 0.0
    %5925 = vmatpush1.msra.mxu0 0.0
    %5926 = vmatprep.subr.mxu0 0.0
    %5927 = vmatpush1.msra.mxu0 0.0
    %5928 = vmatprep.subr.mxu0 0.0
    %5929 = vmatpush1.msra.mxu0 0.0
    %5930 = vmatprep.subr.mxu0 0.0
    %5931 = vmatpush1.msra.mxu0 0.0
    %5932 = vmatprep.subr.mxu0 0.0
    %5933 = vmatpush1.msra.mxu0 0.0
    %5934 = vmatprep.subr.mxu0 0.0
    %5935 = vmatpush1.msra.mxu0 0.0
    %5936 = vmatprep.subr.mxu0 0.0
    %5937 = vmatpush1.msra.mxu0 0.0
    %5938 = vmatprep.subr.mxu0 0.0
    %5939 = vmatpush1.msra.mxu0 0.0
    %5940 = vmatprep.subr.mxu0 0.0
    %5941 = vmatpush1.msra.mxu0 0.0
    %5942 = vmatprep.subr.mxu0 0.0
    %5943 = vmatpush1.msra.mxu0 0.0
    %5944 = vmatprep.subr.mxu0 0.0
    %5945 = vmatpush1.msra.mxu0 0.0
    %5946 = vmatprep.subr.mxu0 0.0
    %5947 = vmatpush1.msra.mxu0 0.0
    %5948 = vmatprep.subr.mxu0 0.0
    %5949 = vmatpush1.msra.mxu0 0.0
    %5950 = vmatprep.subr.mxu0 0.0
    %5951 = vmatpush1.msra.mxu0 0.0
    %5952 = vmatprep.subr.mxu0 0.0
    %5953 = vmatpush1.msra.mxu0 0.0
    %5954 = vmatprep.subr.mxu0 0.0
    %5955 = vmatpush1.msra.mxu0 0.0
    %5956 = vmatprep.subr.mxu0 0.0
    %5957 = vmatpush1.msra.mxu0 0.0
    %5958 = vmatprep.subr.mxu0 0.0
    %5959 = vmatpush1.msra.mxu0 0.0
    %5960 = vmatprep.subr.mxu0 0.0
    %5961 = vmatpush1.msra.mxu0 0.0
    %5962 = vmatprep.subr.mxu0 0.0
    %5963 = vmatpush1.msra.mxu0 0.0
    %5964 = vmatprep.subr.mxu0 0.0
    %5965 = vmatpush1.msra.mxu0 0.0
    %5966 = vmatprep.subr.mxu0 0.0
    %5967 = vmatpush1.msra.mxu0 0.0
    %5968 = vmatprep.subr.mxu0 0.0
    %5969 = vmatpush1.msra.mxu0 0.0
    %5970 = vmatprep.subr.mxu0 0.0
    %5971 = vmatpush1.msra.mxu0 0.0
    %5972 = vmatprep.subr.mxu0 0.0
    %5973 = vmatpush1.msra.mxu0 0.0
    %5974 = vmatprep.subr.mxu0 0.0
    %5975 = vmatpush1.msra.mxu0 0.0
    %5976 = vmatprep.subr.mxu0 0.0
    %5977 = vmatpush1.msra.mxu0 0.0
    %5978 = vmatprep.mubr.f32.mxu0 0.0
    %5979 = vmatmul.mubr.f32.gmra.mrb[0].mxu0 %v5912
    %v5980 = vpop.f32.mrb[0].mxu0
    %v5981 = vadd.f32 0.0, %v5980
    %v5982 = vpop.f32.mrb[0].mxu0
    %5983 = vdwg.mxu0
    %5984 = vrot.lane.b32.xlu0 %v4610, 112
    %v5985 = vpop.permute.xlu0 %5984
    %5986 = vrot.lane.b32.xlu0 %v4610, 80
    %v5987 = vpop.permute.xlu0 %5986
    %v5988 = vsel %vm146, %v5985, 0
    %v5990 = vsel %vm146, %v5987, 0
    %5992 = vmatprep.subr.mxu0 0.0
    %5993 = vmatpush1.xpose.msra.mxu0 %v5990
    %5994 = vmatprep.subr.mxu0 0.0
    %5995 = vmatpush1.xpose.msra.mxu0 0.0
    %5996 = vmatprep.subr.mxu0 0.0
    %5997 = vmatpush1.xpose.msra.mxu0 0.0
    %5998 = vmatprep.subr.mxu0 0.0
    %5999 = vmatpush1.xpose.msra.mxu0 0.0
    %6000 = vmatprep.subr.mxu0 0.0
    %6001 = vmatpush1.xpose.msra.mxu0 0.0
    %6002 = vmatprep.subr.mxu0 0.0
    %6003 = vmatpush1.xpose.msra.mxu0 0.0
    %6004 = vmatprep.subr.mxu0 0.0
    %6005 = vmatpush1.xpose.msra.mxu0 0.0
    %6006 = vmatprep.subr.mxu0 0.0
    %6007 = vmatpush1.xpose.msra.mxu0 0.0
    %6008 = vmatprep.subr.mxu0 0.0
    %6009 = vmatpush1.xpose.msra.mxu0 0.0
    %6010 = vmatprep.subr.mxu0 0.0
    %6011 = vmatpush1.xpose.msra.mxu0 0.0
    %6012 = vmatprep.subr.mxu0 0.0
    %6013 = vmatpush1.xpose.msra.mxu0 0.0
    %6014 = vmatprep.subr.mxu0 0.0
    %6015 = vmatpush1.xpose.msra.mxu0 0.0
    %6016 = vmatprep.subr.mxu0 0.0
    %6017 = vmatpush1.xpose.msra.mxu0 0.0
    %6018 = vmatprep.subr.mxu0 0.0
    %6019 = vmatpush1.xpose.msra.mxu0 0.0
    %6020 = vmatprep.subr.mxu0 0.0
    %6021 = vmatpush1.xpose.msra.mxu0 0.0
    %6022 = vmatprep.subr.mxu0 0.0
    %6023 = vmatpush1.xpose.msra.mxu0 0.0
    %6024 = vmatprep.subr.mxu0 0.0
    %6025 = vmatpush1.xpose.msra.mxu0 0.0
    %6026 = vmatprep.subr.mxu0 0.0
    %6027 = vmatpush1.xpose.msra.mxu0 0.0
    %6028 = vmatprep.subr.mxu0 0.0
    %6029 = vmatpush1.xpose.msra.mxu0 0.0
    %6030 = vmatprep.subr.mxu0 0.0
    %6031 = vmatpush1.xpose.msra.mxu0 0.0
    %6032 = vmatprep.subr.mxu0 0.0
    %6033 = vmatpush1.xpose.msra.mxu0 0.0
    %6034 = vmatprep.subr.mxu0 0.0
    %6035 = vmatpush1.xpose.msra.mxu0 0.0
    %6036 = vmatprep.subr.mxu0 0.0
    %6037 = vmatpush1.xpose.msra.mxu0 0.0
    %6038 = vmatprep.subr.mxu0 0.0
    %6039 = vmatpush1.xpose.msra.mxu0 0.0
    %6040 = vmatprep.subr.mxu0 0.0
    %6041 = vmatpush1.xpose.msra.mxu0 0.0
    %6042 = vmatprep.subr.mxu0 0.0
    %6043 = vmatpush1.xpose.msra.mxu0 0.0
    %6044 = vmatprep.subr.mxu0 0.0
    %6045 = vmatpush1.xpose.msra.mxu0 0.0
    %6046 = vmatprep.subr.mxu0 0.0
    %6047 = vmatpush1.xpose.msra.mxu0 0.0
    %6048 = vmatprep.subr.mxu0 0.0
    %6049 = vmatpush1.xpose.msra.mxu0 0.0
    %6050 = vmatprep.subr.mxu0 0.0
    %6051 = vmatpush1.xpose.msra.mxu0 0.0
    %6052 = vmatprep.subr.mxu0 0.0
    %6053 = vmatpush1.xpose.msra.mxu0 0.0
    %6054 = vmatprep.subr.mxu0 0.0
    %6055 = vmatpush1.xpose.msra.mxu0 0.0
    %6056 = vmatprep.mubr.f32.mxu0 0.0
    %6057 = vmatmul.mubr.f32.gmra.mrb[0].mxu0 %v5988
    %v6058 = vpop.f32.mrb[0].mxu0
    %v6059 = vadd.f32 0.0, %v6058
    %v6060 = vpop.f32.mrb[0].mxu0
    %6061 = vdwg.mxu0
    %6062 = vrot.lane.b32.xlu0 %v4615, 112
    %v6063 = vpop.permute.xlu0 %6062
    %6064 = vrot.lane.b32.xlu0 %v4615, 80
    %v6065 = vpop.permute.xlu0 %6064
    %v6066 = vsel %vm146, %v6063, 0
    %v6068 = vsel %vm146, %v6065, 0
    %6070 = vmatprep.subr.mxu0 0.0
    %6071 = vmatpush1.xpose.msra.mxu0 %v6068
    %6072 = vmatprep.subr.mxu0 0.0
    %6073 = vmatpush1.xpose.msra.mxu0 0.0
    %6074 = vmatprep.subr.mxu0 0.0
    %6075 = vmatpush1.xpose.msra.mxu0 0.0
    %6076 = vmatprep.subr.mxu0 0.0
    %6077 = vmatpush1.xpose.msra.mxu0 0.0
    %6078 = vmatprep.subr.mxu0 0.0
    %6079 = vmatpush1.xpose.msra.mxu0 0.0
    %6080 = vmatprep.subr.mxu0 0.0
    %6081 = vmatpush1.xpose.msra.mxu0 0.0
    %6082 = vmatprep.subr.mxu0 0.0
    %6083 = vmatpush1.xpose.msra.mxu0 0.0
    %6084 = vmatprep.subr.mxu0 0.0
    %6085 = vmatpush1.xpose.msra.mxu0 0.0
    %6086 = vmatprep.subr.mxu0 0.0
    %6087 = vmatpush1.xpose.msra.mxu0 0.0
    %6088 = vmatprep.subr.mxu0 0.0
    %6089 = vmatpush1.xpose.msra.mxu0 0.0
    %6090 = vmatprep.subr.mxu0 0.0
    %6091 = vmatpush1.xpose.msra.mxu0 0.0
    %6092 = vmatprep.subr.mxu0 0.0
    %6093 = vmatpush1.xpose.msra.mxu0 0.0
    %6094 = vmatprep.subr.mxu0 0.0
    %6095 = vmatpush1.xpose.msra.mxu0 0.0
    %6096 = vmatprep.subr.mxu0 0.0
    %6097 = vmatpush1.xpose.msra.mxu0 0.0
    %6098 = vmatprep.subr.mxu0 0.0
    %6099 = vmatpush1.xpose.msra.mxu0 0.0
    %6100 = vmatprep.subr.mxu0 0.0
    %6101 = vmatpush1.xpose.msra.mxu0 0.0
    %6102 = vmatprep.subr.mxu0 0.0
    %6103 = vmatpush1.xpose.msra.mxu0 0.0
    %6104 = vmatprep.subr.mxu0 0.0
    %6105 = vmatpush1.xpose.msra.mxu0 0.0
    %6106 = vmatprep.subr.mxu0 0.0
    %6107 = vmatpush1.xpose.msra.mxu0 0.0
    %6108 = vmatprep.subr.mxu0 0.0
    %6109 = vmatpush1.xpose.msra.mxu0 0.0
    %6110 = vmatprep.subr.mxu0 0.0
    %6111 = vmatpush1.xpose.msra.mxu0 0.0
    %6112 = vmatprep.subr.mxu0 0.0
    %6113 = vmatpush1.xpose.msra.mxu0 0.0
    %6114 = vmatprep.subr.mxu0 0.0
    %6115 = vmatpush1.xpose.msra.mxu0 0.0
    %6116 = vmatprep.subr.mxu0 0.0
    %6117 = vmatpush1.xpose.msra.mxu0 0.0
    %6118 = vmatprep.subr.mxu0 0.0
    %6119 = vmatpush1.xpose.msra.mxu0 0.0
    %6120 = vmatprep.subr.mxu0 0.0
    %6121 = vmatpush1.xpose.msra.mxu0 0.0
    %6122 = vmatprep.subr.mxu0 0.0
    %6123 = vmatpush1.xpose.msra.mxu0 0.0
    %6124 = vmatprep.subr.mxu0 0.0
    %6125 = vmatpush1.xpose.msra.mxu0 0.0
    %6126 = vmatprep.subr.mxu0 0.0
    %6127 = vmatpush1.xpose.msra.mxu0 0.0
    %6128 = vmatprep.subr.mxu0 0.0
    %6129 = vmatpush1.xpose.msra.mxu0 0.0
    %6130 = vmatprep.subr.mxu0 0.0
    %6131 = vmatpush1.xpose.msra.mxu0 0.0
    %6132 = vmatprep.subr.mxu0 0.0
    %6133 = vmatpush1.xpose.msra.mxu0 0.0
    %6134 = vmatprep.mubr.f32.mxu0 0.0
    %6135 = vmatmul.mubr.f32.gmra.mrb[0].mxu0 %v6066
    %v6136 = vpop.f32.mrb[0].mxu0
    %v6137 = vadd.f32 0.0, %v6136
    %v6138 = vpop.f32.mrb[0].mxu0
    %6139 = vdwg.mxu0
    %6140 = vrot.lane.b32.xlu0 %v4620, 112
    %v6141 = vpop.permute.xlu0 %6140
    %6142 = vrot.lane.b32.xlu0 %v4620, 80
    %v6143 = vpop.permute.xlu0 %6142
    %v6144 = vsel %vm146, %v6141, 0
    %v6146 = vsel %vm146, %v6143, 0
    %6148 = vmatprep.subr.mxu0 0.0
    %6149 = vmatpush1.xpose.msra.mxu0 %v6146
    %6150 = vmatprep.subr.mxu0 0.0
    %6151 = vmatpush1.xpose.msra.mxu0 0.0
    %6152 = vmatprep.subr.mxu0 0.0
    %6153 = vmatpush1.xpose.msra.mxu0 0.0
    %6154 = vmatprep.subr.mxu0 0.0
    %6155 = vmatpush1.xpose.msra.mxu0 0.0
    %6156 = vmatprep.subr.mxu0 0.0
    %6157 = vmatpush1.xpose.msra.mxu0 0.0
    %6158 = vmatprep.subr.mxu0 0.0
    %6159 = vmatpush1.xpose.msra.mxu0 0.0
    %6160 = vmatprep.subr.mxu0 0.0
    %6161 = vmatpush1.xpose.msra.mxu0 0.0
    %6162 = vmatprep.subr.mxu0 0.0
    %6163 = vmatpush1.xpose.msra.mxu0 0.0
    %6164 = vmatprep.subr.mxu0 0.0
    %6165 = vmatpush1.xpose.msra.mxu0 0.0
    %6166 = vmatprep.subr.mxu0 0.0
    %6167 = vmatpush1.xpose.msra.mxu0 0.0
    %6168 = vmatprep.subr.mxu0 0.0
    %6169 = vmatpush1.xpose.msra.mxu0 0.0
    %6170 = vmatprep.subr.mxu0 0.0
    %6171 = vmatpush1.xpose.msra.mxu0 0.0
    %6172 = vmatprep.subr.mxu0 0.0
    %6173 = vmatpush1.xpose.msra.mxu0 0.0
    %6174 = vmatprep.subr.mxu0 0.0
    %6175 = vmatpush1.xpose.msra.mxu0 0.0
    %6176 = vmatprep.subr.mxu0 0.0
    %6177 = vmatpush1.xpose.msra.mxu0 0.0
    %6178 = vmatprep.subr.mxu0 0.0
    %6179 = vmatpush1.xpose.msra.mxu0 0.0
    %6180 = vmatprep.subr.mxu0 0.0
    %6181 = vmatpush1.xpose.msra.mxu0 0.0
    %6182 = vmatprep.subr.mxu0 0.0
    %6183 = vmatpush1.xpose.msra.mxu0 0.0
    %6184 = vmatprep.subr.mxu0 0.0
    %6185 = vmatpush1.xpose.msra.mxu0 0.0
    %6186 = vmatprep.subr.mxu0 0.0
    %6187 = vmatpush1.xpose.msra.mxu0 0.0
    %6188 = vmatprep.subr.mxu0 0.0
    %6189 = vmatpush1.xpose.msra.mxu0 0.0
    %6190 = vmatprep.subr.mxu0 0.0
    %6191 = vmatpush1.xpose.msra.mxu0 0.0
    %6192 = vmatprep.subr.mxu0 0.0
    %6193 = vmatpush1.xpose.msra.mxu0 0.0
    %6194 = vmatprep.subr.mxu0 0.0
    %6195 = vmatpush1.xpose.msra.mxu0 0.0
    %6196 = vmatprep.subr.mxu0 0.0
    %6197 = vmatpush1.xpose.msra.mxu0 0.0
    %6198 = vmatprep.subr.mxu0 0.0
    %6199 = vmatpush1.xpose.msra.mxu0 0.0
    %6200 = vmatprep.subr.mxu0 0.0
    %6201 = vmatpush1.xpose.msra.mxu0 0.0
    %6202 = vmatprep.subr.mxu0 0.0
    %6203 = vmatpush1.xpose.msra.mxu0 0.0
    %6204 = vmatprep.subr.mxu0 0.0
    %6205 = vmatpush1.xpose.msra.mxu0 0.0
    %6206 = vmatprep.subr.mxu0 0.0
    %6207 = vmatpush1.xpose.msra.mxu0 0.0
    %6208 = vmatprep.subr.mxu0 0.0
    %6209 = vmatpush1.xpose.msra.mxu0 0.0
    %6210 = vmatprep.subr.mxu0 0.0
    %6211 = vmatpush1.xpose.msra.mxu0 0.0
    %6212 = vmatprep.mubr.f32.mxu0 0.0
    %6213 = vmatmul.mubr.f32.gmra.mrb[0].mxu0 %v6144
    %v6214 = vpop.f32.mrb[0].mxu0
    %v6215 = vadd.f32 0.0, %v6214
    %v6216 = vpop.f32.mrb[0].mxu0
    %6217 = vdwg.mxu0
    %6218 = vrot.lane.b32.xlu0 %v4625, 112
    %v6219 = vpop.permute.xlu0 %6218
    %6220 = vrot.lane.b32.xlu0 %v4625, 80
    %v6221 = vpop.permute.xlu0 %6220
    %v6222 = vsel %vm146, %v6219, 0
    %v6224 = vsel %vm146, %v6221, 0
    %6226 = vmatprep.subr.mxu0 0.0
    %6227 = vmatpush1.xpose.msra.mxu0 %v6224
    %6228 = vmatprep.subr.mxu0 0.0
    %6229 = vmatpush1.xpose.msra.mxu0 0.0
    %6230 = vmatprep.subr.mxu0 0.0
    %6231 = vmatpush1.xpose.msra.mxu0 0.0
    %6232 = vmatprep.subr.mxu0 0.0
    %6233 = vmatpush1.xpose.msra.mxu0 0.0
    %6234 = vmatprep.subr.mxu0 0.0
    %6235 = vmatpush1.xpose.msra.mxu0 0.0
    %6236 = vmatprep.subr.mxu0 0.0
    %6237 = vmatpush1.xpose.msra.mxu0 0.0
    %6238 = vmatprep.subr.mxu0 0.0
    %6239 = vmatpush1.xpose.msra.mxu0 0.0
    %6240 = vmatprep.subr.mxu0 0.0
    %6241 = vmatpush1.xpose.msra.mxu0 0.0
    %6242 = vmatprep.subr.mxu0 0.0
    %6243 = vmatpush1.xpose.msra.mxu0 0.0
    %6244 = vmatprep.subr.mxu0 0.0
    %6245 = vmatpush1.xpose.msra.mxu0 0.0
    %6246 = vmatprep.subr.mxu0 0.0
    %6247 = vmatpush1.xpose.msra.mxu0 0.0
    %6248 = vmatprep.subr.mxu0 0.0
    %6249 = vmatpush1.xpose.msra.mxu0 0.0
    %6250 = vmatprep.subr.mxu0 0.0
    %6251 = vmatpush1.xpose.msra.mxu0 0.0
    %6252 = vmatprep.subr.mxu0 0.0
    %6253 = vmatpush1.xpose.msra.mxu0 0.0
    %6254 = vmatprep.subr.mxu0 0.0
    %6255 = vmatpush1.xpose.msra.mxu0 0.0
    %6256 = vmatprep.subr.mxu0 0.0
    %6257 = vmatpush1.xpose.msra.mxu0 0.0
    %6258 = vmatprep.subr.mxu0 0.0
    %6259 = vmatpush1.xpose.msra.mxu0 0.0
    %6260 = vmatprep.subr.mxu0 0.0
    %6261 = vmatpush1.xpose.msra.mxu0 0.0
    %6262 = vmatprep.subr.mxu0 0.0
    %6263 = vmatpush1.xpose.msra.mxu0 0.0
    %6264 = vmatprep.subr.mxu0 0.0
    %6265 = vmatpush1.xpose.msra.mxu0 0.0
    %6266 = vmatprep.subr.mxu0 0.0
    %6267 = vmatpush1.xpose.msra.mxu0 0.0
    %6268 = vmatprep.subr.mxu0 0.0
    %6269 = vmatpush1.xpose.msra.mxu0 0.0
    %6270 = vmatprep.subr.mxu0 0.0
    %6271 = vmatpush1.xpose.msra.mxu0 0.0
    %6272 = vmatprep.subr.mxu0 0.0
    %6273 = vmatpush1.xpose.msra.mxu0 0.0
    %6274 = vmatprep.subr.mxu0 0.0
    %6275 = vmatpush1.xpose.msra.mxu0 0.0
    %6276 = vmatprep.subr.mxu0 0.0
    %6277 = vmatpush1.xpose.msra.mxu0 0.0
    %6278 = vmatprep.subr.mxu0 0.0
    %6279 = vmatpush1.xpose.msra.mxu0 0.0
    %6280 = vmatprep.subr.mxu0 0.0
    %6281 = vmatpush1.xpose.msra.mxu0 0.0
    %6282 = vmatprep.subr.mxu0 0.0
    %6283 = vmatpush1.xpose.msra.mxu0 0.0
    %6284 = vmatprep.subr.mxu0 0.0
    %6285 = vmatpush1.xpose.msra.mxu0 0.0
    %6286 = vmatprep.subr.mxu0 0.0
    %6287 = vmatpush1.xpose.msra.mxu0 0.0
    %6288 = vmatprep.subr.mxu0 0.0
    %6289 = vmatpush1.xpose.msra.mxu0 0.0
    %6290 = vmatprep.mubr.f32.mxu0 0.0
    %6291 = vmatmul.mubr.f32.gmra.mrb[0].mxu0 %v6222
    %v6292 = vpop.f32.mrb[0].mxu0
    %v6293 = vadd.f32 0.0, %v6292
    %v6294 = vpop.f32.mrb[0].mxu0
    %6295 = vdwg.mxu0
    %6296 = vrot.lane.b32.xlu0 %v4630, 112
    %v6297 = vpop.permute.xlu0 %6296
    %6298 = vrot.lane.b32.xlu0 %v4630, 80
    %v6299 = vpop.permute.xlu0 %6298
    %v6300 = vsel %vm146, %v6297, 0
    %v6302 = vsel %vm146, %v6299, 0
    %6304 = vmatprep.subr.mxu0 0.0
    %6305 = vmatpush1.xpose.msra.mxu0 %v6302
    %6306 = vmatprep.subr.mxu0 0.0
    %6307 = vmatpush1.xpose.msra.mxu0 0.0
    %6308 = vmatprep.subr.mxu0 0.0
    %6309 = vmatpush1.xpose.msra.mxu0 0.0
    %6310 = vmatprep.subr.mxu0 0.0
    %6311 = vmatpush1.xpose.msra.mxu0 0.0
    %6312 = vmatprep.subr.mxu0 0.0
    %6313 = vmatpush1.xpose.msra.mxu0 0.0
    %6314 = vmatprep.subr.mxu0 0.0
    %6315 = vmatpush1.xpose.msra.mxu0 0.0
    %6316 = vmatprep.subr.mxu0 0.0
    %6317 = vmatpush1.xpose.msra.mxu0 0.0
    %6318 = vmatprep.subr.mxu0 0.0
    %6319 = vmatpush1.xpose.msra.mxu0 0.0
    %6320 = vmatprep.subr.mxu0 0.0
    %6321 = vmatpush1.xpose.msra.mxu0 0.0
    %6322 = vmatprep.subr.mxu0 0.0
    %6323 = vmatpush1.xpose.msra.mxu0 0.0
    %6324 = vmatprep.subr.mxu0 0.0
    %6325 = vmatpush1.xpose.msra.mxu0 0.0
    %6326 = vmatprep.subr.mxu0 0.0
    %6327 = vmatpush1.xpose.msra.mxu0 0.0
    %6328 = vmatprep.subr.mxu0 0.0
    %6329 = vmatpush1.xpose.msra.mxu0 0.0
    %6330 = vmatprep.subr.mxu0 0.0
    %6331 = vmatpush1.xpose.msra.mxu0 0.0
    %6332 = vmatprep.subr.mxu0 0.0
    %6333 = vmatpush1.xpose.msra.mxu0 0.0
    %6334 = vmatprep.subr.mxu0 0.0
    %6335 = vmatpush1.xpose.msra.mxu0 0.0
    %6336 = vmatprep.subr.mxu0 0.0
    %6337 = vmatpush1.xpose.msra.mxu0 0.0
    %6338 = vmatprep.subr.mxu0 0.0
    %6339 = vmatpush1.xpose.msra.mxu0 0.0
    %6340 = vmatprep.subr.mxu0 0.0
    %6341 = vmatpush1.xpose.msra.mxu0 0.0
    %6342 = vmatprep.subr.mxu0 0.0
    %6343 = vmatpush1.xpose.msra.mxu0 0.0
    %6344 = vmatprep.subr.mxu0 0.0
    %6345 = vmatpush1.xpose.msra.mxu0 0.0
    %6346 = vmatprep.subr.mxu0 0.0
    %6347 = vmatpush1.xpose.msra.mxu0 0.0
    %6348 = vmatprep.subr.mxu0 0.0
    %6349 = vmatpush1.xpose.msra.mxu0 0.0
    %6350 = vmatprep.subr.mxu0 0.0
    %6351 = vmatpush1.xpose.msra.mxu0 0.0
    %6352 = vmatprep.subr.mxu0 0.0
    %6353 = vmatpush1.xpose.msra.mxu0 0.0
    %6354 = vmatprep.subr.mxu0 0.0
    %6355 = vmatpush1.xpose.msra.mxu0 0.0
    %6356 = vmatprep.subr.mxu0 0.0
    %6357 = vmatpush1.xpose.msra.mxu0 0.0
    %6358 = vmatprep.subr.mxu0 0.0
    %6359 = vmatpush1.xpose.msra.mxu0 0.0
    %6360 = vmatprep.subr.mxu0 0.0
    %6361 = vmatpush1.xpose.msra.mxu0 0.0
    %6362 = vmatprep.subr.mxu0 0.0
    %6363 = vmatpush1.xpose.msra.mxu0 0.0
    %6364 = vmatprep.subr.mxu0 0.0
    %6365 = vmatpush1.xpose.msra.mxu0 0.0
    %6366 = vmatprep.subr.mxu0 0.0
    %6367 = vmatpush1.xpose.msra.mxu0 0.0
    %6368 = vmatprep.mubr.f32.mxu0 0.0
    %6369 = vmatmul.mubr.f32.gmra.mrb[0].mxu0 %v6300
    %v6370 = vpop.f32.mrb[0].mxu0
    %v6371 = vadd.f32 0.0, %v6370
    %v6372 = vpop.f32.mrb[0].mxu0
    %6373 = vdwg.mxu0
    %6374 = vrot.lane.b32.xlu0 %v4635, 112
    %v6375 = vpop.permute.xlu0 %6374
    %6376 = vrot.lane.b32.xlu0 %v4635, 80
    %v6377 = vpop.permute.xlu0 %6376
    %v6378 = vsel %vm146, %v6375, 0
    %v6380 = vsel %vm146, %v6377, 0
    %6382 = vmatprep.subr.mxu0 0.0
    %6383 = vmatpush1.xpose.msra.mxu0 %v6380
    %6384 = vmatprep.subr.mxu0 0.0
    %6385 = vmatpush1.xpose.msra.mxu0 0.0
    %6386 = vmatprep.subr.mxu0 0.0
    %6387 = vmatpush1.xpose.msra.mxu0 0.0
    %6388 = vmatprep.subr.mxu0 0.0
    %6389 = vmatpush1.xpose.msra.mxu0 0.0
    %6390 = vmatprep.subr.mxu0 0.0
    %6391 = vmatpush1.xpose.msra.mxu0 0.0
    %6392 = vmatprep.subr.mxu0 0.0
    %6393 = vmatpush1.xpose.msra.mxu0 0.0
    %6394 = vmatprep.subr.mxu0 0.0
    %6395 = vmatpush1.xpose.msra.mxu0 0.0
    %6396 = vmatprep.subr.mxu0 0.0
    %6397 = vmatpush1.xpose.msra.mxu0 0.0
    %6398 = vmatprep.subr.mxu0 0.0
    %6399 = vmatpush1.xpose.msra.mxu0 0.0
    %6400 = vmatprep.subr.mxu0 0.0
    %6401 = vmatpush1.xpose.msra.mxu0 0.0
    %6402 = vmatprep.subr.mxu0 0.0
    %6403 = vmatpush1.xpose.msra.mxu0 0.0
    %6404 = vmatprep.subr.mxu0 0.0
    %6405 = vmatpush1.xpose.msra.mxu0 0.0
    %6406 = vmatprep.subr.mxu0 0.0
    %6407 = vmatpush1.xpose.msra.mxu0 0.0
    %6408 = vmatprep.subr.mxu0 0.0
    %6409 = vmatpush1.xpose.msra.mxu0 0.0
    %6410 = vmatprep.subr.mxu0 0.0
    %6411 = vmatpush1.xpose.msra.mxu0 0.0
    %6412 = vmatprep.subr.mxu0 0.0
    %6413 = vmatpush1.xpose.msra.mxu0 0.0
    %6414 = vmatprep.subr.mxu0 0.0
    %6415 = vmatpush1.xpose.msra.mxu0 0.0
    %6416 = vmatprep.subr.mxu0 0.0
    %6417 = vmatpush1.xpose.msra.mxu0 0.0
    %6418 = vmatprep.subr.mxu0 0.0
    %6419 = vmatpush1.xpose.msra.mxu0 0.0
    %6420 = vmatprep.subr.mxu0 0.0
    %6421 = vmatpush1.xpose.msra.mxu0 0.0
    %6422 = vmatprep.subr.mxu0 0.0
    %6423 = vmatpush1.xpose.msra.mxu0 0.0
    %6424 = vmatprep.subr.mxu0 0.0
    %6425 = vmatpush1.xpose.msra.mxu0 0.0
    %6426 = vmatprep.subr.mxu0 0.0
    %6427 = vmatpush1.xpose.msra.mxu0 0.0
    %6428 = vmatprep.subr.mxu0 0.0
    %6429 = vmatpush1.xpose.msra.mxu0 0.0
    %6430 = vmatprep.subr.mxu0 0.0
    %6431 = vmatpush1.xpose.msra.mxu0 0.0
    %6432 = vmatprep.subr.mxu0 0.0
    %6433 = vmatpush1.xpose.msra.mxu0 0.0
    %6434 = vmatprep.subr.mxu0 0.0
    %6435 = vmatpush1.xpose.msra.mxu0 0.0
    %6436 = vmatprep.subr.mxu0 0.0
    %6437 = vmatpush1.xpose.msra.mxu0 0.0
    %6438 = vmatprep.subr.mxu0 0.0
    %6439 = vmatpush1.xpose.msra.mxu0 0.0
    %6440 = vmatprep.subr.mxu0 0.0
    %6441 = vmatpush1.xpose.msra.mxu0 0.0
    %6442 = vmatprep.subr.mxu0 0.0
    %6443 = vmatpush1.xpose.msra.mxu0 0.0
    %6444 = vmatprep.subr.mxu0 0.0
    %6445 = vmatpush1.xpose.msra.mxu0 0.0
    %6446 = vmatprep.mubr.f32.mxu0 0.0
    %6447 = vmatmul.mubr.f32.gmra.mrb[0].mxu0 %v6378
    %v6448 = vpop.f32.mrb[0].mxu0
    %v6449 = vadd.f32 0.0, %v6448
    %v6450 = vpop.f32.mrb[0].mxu0
    %6451 = vdwg.mxu0
    %6452 = vrot.lane.b32.xlu0 %v4640, 112
    %v6453 = vpop.permute.xlu0 %6452
    %6454 = vrot.lane.b32.xlu0 %v4640, 80
    %v6455 = vpop.permute.xlu0 %6454
    %v6456 = vsel %vm146, %v6453, 0
    %v6458 = vsel %vm146, %v6455, 0
    %6460 = vmatprep.subr.mxu0 0.0
    %6461 = vmatpush1.xpose.msra.mxu0 %v6458
    %6462 = vmatprep.subr.mxu0 0.0
    %6463 = vmatpush1.xpose.msra.mxu0 0.0
    %6464 = vmatprep.subr.mxu0 0.0
    %6465 = vmatpush1.xpose.msra.mxu0 0.0
    %6466 = vmatprep.subr.mxu0 0.0
    %6467 = vmatpush1.xpose.msra.mxu0 0.0
    %6468 = vmatprep.subr.mxu0 0.0
    %6469 = vmatpush1.xpose.msra.mxu0 0.0
    %6470 = vmatprep.subr.mxu0 0.0
    %6471 = vmatpush1.xpose.msra.mxu0 0.0
    %6472 = vmatprep.subr.mxu0 0.0
    %6473 = vmatpush1.xpose.msra.mxu0 0.0
    %6474 = vmatprep.subr.mxu0 0.0
    %6475 = vmatpush1.xpose.msra.mxu0 0.0
    %6476 = vmatprep.subr.mxu0 0.0
    %6477 = vmatpush1.xpose.msra.mxu0 0.0
    %6478 = vmatprep.subr.mxu0 0.0
    %6479 = vmatpush1.xpose.msra.mxu0 0.0
    %6480 = vmatprep.subr.mxu0 0.0
    %6481 = vmatpush1.xpose.msra.mxu0 0.0
    %6482 = vmatprep.subr.mxu0 0.0
    %6483 = vmatpush1.xpose.msra.mxu0 0.0
    %6484 = vmatprep.subr.mxu0 0.0
    %6485 = vmatpush1.xpose.msra.mxu0 0.0
    %6486 = vmatprep.subr.mxu0 0.0
    %6487 = vmatpush1.xpose.msra.mxu0 0.0
    %6488 = vmatprep.subr.mxu0 0.0
    %6489 = vmatpush1.xpose.msra.mxu0 0.0
    %6490 = vmatprep.subr.mxu0 0.0
    %6491 = vmatpush1.xpose.msra.mxu0 0.0
    %6492 = vmatprep.subr.mxu0 0.0
    %6493 = vmatpush1.xpose.msra.mxu0 0.0
    %6494 = vmatprep.subr.mxu0 0.0
    %6495 = vmatpush1.xpose.msra.mxu0 0.0
    %6496 = vmatprep.subr.mxu0 0.0
    %6497 = vmatpush1.xpose.msra.mxu0 0.0
    %6498 = vmatprep.subr.mxu0 0.0
    %6499 = vmatpush1.xpose.msra.mxu0 0.0
    %6500 = vmatprep.subr.mxu0 0.0
    %6501 = vmatpush1.xpose.msra.mxu0 0.0
    %6502 = vmatprep.subr.mxu0 0.0
    %6503 = vmatpush1.xpose.msra.mxu0 0.0
    %6504 = vmatprep.subr.mxu0 0.0
    %6505 = vmatpush1.xpose.msra.mxu0 0.0
    %6506 = vmatprep.subr.mxu0 0.0
    %6507 = vmatpush1.xpose.msra.mxu0 0.0
    %6508 = vmatprep.subr.mxu0 0.0
    %6509 = vmatpush1.xpose.msra.mxu0 0.0
    %6510 = vmatprep.subr.mxu0 0.0
    %6511 = vmatpush1.xpose.msra.mxu0 0.0
    %6512 = vmatprep.subr.mxu0 0.0
    %6513 = vmatpush1.xpose.msra.mxu0 0.0
    %6514 = vmatprep.subr.mxu0 0.0
    %6515 = vmatpush1.xpose.msra.mxu0 0.0
    %6516 = vmatprep.subr.mxu0 0.0
    %6517 = vmatpush1.xpose.msra.mxu0 0.0
    %6518 = vmatprep.subr.mxu0 0.0
    %6519 = vmatpush1.xpose.msra.mxu0 0.0
    %6520 = vmatprep.subr.mxu0 0.0
    %6521 = vmatpush1.xpose.msra.mxu0 0.0
    %6522 = vmatprep.subr.mxu0 0.0
    %6523 = vmatpush1.xpose.msra.mxu0 0.0
    %6524 = vmatprep.mubr.f32.mxu0 0.0
    %6525 = vmatmul.mubr.f32.gmra.mrb[0].mxu0 %v6456
    %v6526 = vpop.f32.mrb[0].mxu0
    %v6527 = vadd.f32 0.0, %v6526
    %v6528 = vpop.f32.mrb[0].mxu0
    %6529 = vdwg.mxu0
    %6530 = vrot.lane.b32.xlu0 %v4645, 112
    %v6531 = vpop.permute.xlu0 %6530
    %6532 = vrot.lane.b32.xlu0 %v4645, 80
    %v6533 = vpop.permute.xlu0 %6532
    %v6534 = vsel %vm146, %v6531, 0
    %v6536 = vsel %vm146, %v6533, 0
    %6538 = vmatprep.subr.mxu0 0.0
    %6539 = vmatpush1.xpose.msra.mxu0 %v6536
    %6540 = vmatprep.subr.mxu0 0.0
    %6541 = vmatpush1.xpose.msra.mxu0 0.0
    %6542 = vmatprep.subr.mxu0 0.0
    %6543 = vmatpush1.xpose.msra.mxu0 0.0
    %6544 = vmatprep.subr.mxu0 0.0
    %6545 = vmatpush1.xpose.msra.mxu0 0.0
    %6546 = vmatprep.subr.mxu0 0.0
    %6547 = vmatpush1.xpose.msra.mxu0 0.0
    %6548 = vmatprep.subr.mxu0 0.0
    %6549 = vmatpush1.xpose.msra.mxu0 0.0
    %6550 = vmatprep.subr.mxu0 0.0
    %6551 = vmatpush1.xpose.msra.mxu0 0.0
    %6552 = vmatprep.subr.mxu0 0.0
    %6553 = vmatpush1.xpose.msra.mxu0 0.0
    %6554 = vmatprep.subr.mxu0 0.0
    %6555 = vmatpush1.xpose.msra.mxu0 0.0
    %6556 = vmatprep.subr.mxu0 0.0
    %6557 = vmatpush1.xpose.msra.mxu0 0.0
    %6558 = vmatprep.subr.mxu0 0.0
    %6559 = vmatpush1.xpose.msra.mxu0 0.0
    %6560 = vmatprep.subr.mxu0 0.0
    %6561 = vmatpush1.xpose.msra.mxu0 0.0
    %6562 = vmatprep.subr.mxu0 0.0
    %6563 = vmatpush1.xpose.msra.mxu0 0.0
    %6564 = vmatprep.subr.mxu0 0.0
    %6565 = vmatpush1.xpose.msra.mxu0 0.0
    %6566 = vmatprep.subr.mxu0 0.0
    %6567 = vmatpush1.xpose.msra.mxu0 0.0
    %6568 = vmatprep.subr.mxu0 0.0
    %6569 = vmatpush1.xpose.msra.mxu0 0.0
    %6570 = vmatprep.subr.mxu0 0.0
    %6571 = vmatpush1.xpose.msra.mxu0 0.0
    %6572 = vmatprep.subr.mxu0 0.0
    %6573 = vmatpush1.xpose.msra.mxu0 0.0
    %6574 = vmatprep.subr.mxu0 0.0
    %6575 = vmatpush1.xpose.msra.mxu0 0.0
    %6576 = vmatprep.subr.mxu0 0.0
    %6577 = vmatpush1.xpose.msra.mxu0 0.0
    %6578 = vmatprep.subr.mxu0 0.0
    %6579 = vmatpush1.xpose.msra.mxu0 0.0
    %6580 = vmatprep.subr.mxu0 0.0
    %6581 = vmatpush1.xpose.msra.mxu0 0.0
    %6582 = vmatprep.subr.mxu0 0.0
    %6583 = vmatpush1.xpose.msra.mxu0 0.0
    %6584 = vmatprep.subr.mxu0 0.0
    %6585 = vmatpush1.xpose.msra.mxu0 0.0
    %6586 = vmatprep.subr.mxu0 0.0
    %6587 = vmatpush1.xpose.msra.mxu0 0.0
    %6588 = vmatprep.subr.mxu0 0.0
    %6589 = vmatpush1.xpose.msra.mxu0 0.0
    %6590 = vmatprep.subr.mxu0 0.0
    %6591 = vmatpush1.xpose.msra.mxu0 0.0
    %6592 = vmatprep.subr.mxu0 0.0
    %6593 = vmatpush1.xpose.msra.mxu0 0.0
    %6594 = vmatprep.subr.mxu0 0.0
    %6595 = vmatpush1.xpose.msra.mxu0 0.0
    %6596 = vmatprep.subr.mxu0 0.0
    %6597 = vmatpush1.xpose.msra.mxu0 0.0
    %6598 = vmatprep.subr.mxu0 0.0
    %6599 = vmatpush1.xpose.msra.mxu0 0.0
    %6600 = vmatprep.subr.mxu0 0.0
    %6601 = vmatpush1.xpose.msra.mxu0 0.0
    %6602 = vmatprep.mubr.f32.mxu0 0.0
    %6603 = vmatmul.mubr.f32.gmra.mrb[0].mxu0 %v6534
    %v6604 = vpop.f32.mrb[0].mxu0
    %v6605 = vadd.f32 0.0, %v6604
    %v6606 = vpop.f32.mrb[0].mxu0
    %6607 = vdwg.mxu0
    %v6608 = vmul.f32 %v6059, 0.25
    %v6609 = vmul.f32 %v6137, 0.25
    %v6610 = vmul.f32 %v6215, 0.25
    %v6611 = vmul.f32 %v6293, 0.25
    %v6612 = vmul.f32 %v6371, 0.25
    %v6613 = vmul.f32 %v6449, 0.25
    %v6614 = vmul.f32 %v6527, 0.25
    %v6615 = vmul.f32 %v6605, 0.25
    %v6616 = vadd.f32 %v6608, %v2790
    %v6617 = vadd.f32 %v6609, %v2791
    %v6618 = vadd.f32 %v6610, %v2792
    %v6619 = vadd.f32 %v6611, %v2793
    %v6620 = vadd.f32 %v6612, %v2794
    %v6621 = vadd.f32 %v6613, %v2795
    %v6622 = vadd.f32 %v6614, %v2796
    %v6623 = vadd.f32 %v6615, %v2797
    %v6624 = vsel %vm1461, %v6616, -inf
    %6625 = vmax.xlane.f32.xlu0 %v6624
    %v6626 = vpop.xlane.xlu0 %6625
    %v6627 = vsel %vm1461, %v6617, -inf
    %6628 = vmax.xlane.f32.xlu0 %v6627
    %v6629 = vpop.xlane.xlu0 %6628
    %v6630 = vsel %vm1461, %v6618, -inf
    %6631 = vmax.xlane.f32.xlu0 %v6630
    %v6632 = vpop.xlane.xlu0 %6631
    %v6633 = vsel %vm1461, %v6619, -inf
    %6634 = vmax.xlane.f32.xlu0 %v6633
    %v6635 = vpop.xlane.xlu0 %6634
    %v6636 = vsel %vm1461, %v6620, -inf
    %6637 = vmax.xlane.f32.xlu0 %v6636
    %v6638 = vpop.xlane.xlu0 %6637
    %v6639 = vsel %vm1461, %v6621, -inf
    %6640 = vmax.xlane.f32.xlu0 %v6639
    %v6641 = vpop.xlane.xlu0 %6640
    %v6642 = vsel %vm1461, %v6622, -inf
    %6643 = vmax.xlane.f32.xlu0 %v6642
    %v6644 = vpop.xlane.xlu0 %6643
    %v6645 = vsel %vm1461, %v6623, -inf
    %6646 = vmax.xlane.f32.xlu0 %v6645
    %v6647 = vpop.xlane.xlu0 %6646
    %v6648 = vsub.f32 %v6616, %v6626
    %v6649 = vsub.f32 %v6617, %v6629
    %v6650 = vsub.f32 %v6618, %v6632
    %v6651 = vsub.f32 %v6619, %v6635
    %v6652 = vsub.f32 %v6620, %v6638
    %v6653 = vsub.f32 %v6621, %v6641
    %v6654 = vsub.f32 %v6622, %v6644
    %v6655 = vsub.f32 %v6623, %v6647
    %v6656 = vmul.f32 %v6648, 1.442695
    %v6657 = vpow.pop %v6656
    %v6658 = vmul.f32 %v6649, 1.442695
    %v6659 = vpow.pop %v6658
    %v6660 = vmul.f32 %v6650, 1.442695
    %v6661 = vpow.pop %v6660
    %v6662 = vmul.f32 %v6651, 1.442695
    %v6663 = vpow.pop %v6662
    %v6664 = vmul.f32 %v6652, 1.442695
    %v6665 = vpow.pop %v6664
    %v6666 = vmul.f32 %v6653, 1.442695
    %v6667 = vpow.pop %v6666
    %v6668 = vmul.f32 %v6654, 1.442695
    %v6669 = vpow.pop %v6668
    %v6670 = vmul.f32 %v6655, 1.442695
    %v6671 = vpow.pop %v6670
    %v6672 = vsel %vm1461, %v6657, 0.0
    %6673 = vadd.xlane.f32.xlu0 %v6672
    %v6674 = vpop.xlane.xlu0 %6673
    %v6675 = vsel %vm1461, %v6659, 0.0
    %6676 = vadd.xlane.f32.xlu0 %v6675
    %v6677 = vpop.xlane.xlu0 %6676
    %v6678 = vsel %vm1461, %v6661, 0.0
    %6679 = vadd.xlane.f32.xlu0 %v6678
    %v6680 = vpop.xlane.xlu0 %6679
    %v6681 = vsel %vm1461, %v6663, 0.0
    %6682 = vadd.xlane.f32.xlu0 %v6681
    %v6683 = vpop.xlane.xlu0 %6682
    %v6684 = vsel %vm1461, %v6665, 0.0
    %6685 = vadd.xlane.f32.xlu0 %v6684
    %v6686 = vpop.xlane.xlu0 %6685
    %v6687 = vsel %vm1461, %v6667, 0.0
    %6688 = vadd.xlane.f32.xlu0 %v6687
    %v6689 = vpop.xlane.xlu0 %6688
    %v6690 = vsel %vm1461, %v6669, 0.0
    %6691 = vadd.xlane.f32.xlu0 %v6690
    %v6692 = vpop.xlane.xlu0 %6691
    %v6693 = vsel %vm1461, %v6671, 0.0
    %6694 = vadd.xlane.f32.xlu0 %v6693
    %v6695 = vpop.xlane.xlu0 %6694
    %v6696 = vrcp.pop %v6674
    %v6697 = vmul.f32 1.0, %v6696
    %v6698 = vrcp.pop %v6677
    %v6699 = vmul.f32 1.0, %v6698
    %v6700 = vrcp.pop %v6680
    %v6701 = vmul.f32 1.0, %v6700
    %v6702 = vrcp.pop %v6683
    %v6703 = vmul.f32 1.0, %v6702
    %v6704 = vrcp.pop %v6686
    %v6705 = vmul.f32 1.0, %v6704
    %v6706 = vrcp.pop %v6689
    %v6707 = vmul.f32 1.0, %v6706
    %v6708 = vrcp.pop %v6692
    %v6709 = vmul.f32 1.0, %v6708
    %v6710 = vrcp.pop %v6695
    %v6711 = vmul.f32 1.0, %v6710
    %v6712 = vmul.f32 %v6657, %v6697
    %v6713 = vmul.f32 %v6659, %v6699
    %v6714 = vmul.f32 %v6661, %v6701
    %v6715 = vmul.f32 %v6663, %v6703
    %v6716 = vmul.f32 %v6665, %v6705
    %v6717 = vmul.f32 %v6667, %v6707
    %v6718 = vmul.f32 %v6669, %v6709
    %v6719 = vmul.f32 %v6671, %v6711
    %6720 = vrot.lane.b32.xlu0 %v4610, 48
    %v6721 = vpop.permute.xlu0 %6720
    %v6724 = vsel %vm1461, %v6712, 0
    %6726 = vmatprep.subr.mxu0 0.0
    %6727 = vmatpush1.msra.mxu0 %v6721
    %6728 = vmatprep.subr.mxu0 0.0
    %6729 = vmatpush1.msra.mxu0 0.0
    %6730 = vmatprep.subr.mxu0 0.0
    %6731 = vmatpush1.msra.mxu0 0.0
    %6732 = vmatprep.subr.mxu0 0.0
    %6733 = vmatpush1.msra.mxu0 0.0
    %6734 = vmatprep.subr.mxu0 0.0
    %6735 = vmatpush1.msra.mxu0 0.0
    %6736 = vmatprep.subr.mxu0 0.0
    %6737 = vmatpush1.msra.mxu0 0.0
    %6738 = vmatprep.subr.mxu0 0.0
    %6739 = vmatpush1.msra.mxu0 0.0
    %6740 = vmatprep.subr.mxu0 0.0
    %6741 = vmatpush1.msra.mxu0 0.0
    %6742 = vmatprep.subr.mxu0 0.0
    %6743 = vmatpush1.msra.mxu0 0.0
    %6744 = vmatprep.subr.mxu0 0.0
    %6745 = vmatpush1.msra.mxu0 0.0
    %6746 = vmatprep.subr.mxu0 0.0
    %6747 = vmatpush1.msra.mxu0 0.0
    %6748 = vmatprep.subr.mxu0 0.0
    %6749 = vmatpush1.msra.mxu0 0.0
    %6750 = vmatprep.subr.mxu0 0.0
    %6751 = vmatpush1.msra.mxu0 0.0
    %6752 = vmatprep.subr.mxu0 0.0
    %6753 = vmatpush1.msra.mxu0 0.0
    %6754 = vmatprep.subr.mxu0 0.0
    %6755 = vmatpush1.msra.mxu0 0.0
    %6756 = vmatprep.subr.mxu0 0.0
    %6757 = vmatpush1.msra.mxu0 0.0
    %6758 = vmatprep.subr.mxu0 0.0
    %6759 = vmatpush1.msra.mxu0 0.0
    %6760 = vmatprep.subr.mxu0 0.0
    %6761 = vmatpush1.msra.mxu0 0.0
    %6762 = vmatprep.subr.mxu0 0.0
    %6763 = vmatpush1.msra.mxu0 0.0
    %6764 = vmatprep.subr.mxu0 0.0
    %6765 = vmatpush1.msra.mxu0 0.0
    %6766 = vmatprep.subr.mxu0 0.0
    %6767 = vmatpush1.msra.mxu0 0.0
    %6768 = vmatprep.subr.mxu0 0.0
    %6769 = vmatpush1.msra.mxu0 0.0
    %6770 = vmatprep.subr.mxu0 0.0
    %6771 = vmatpush1.msra.mxu0 0.0
    %6772 = vmatprep.subr.mxu0 0.0
    %6773 = vmatpush1.msra.mxu0 0.0
    %6774 = vmatprep.subr.mxu0 0.0
    %6775 = vmatpush1.msra.mxu0 0.0
    %6776 = vmatprep.subr.mxu0 0.0
    %6777 = vmatpush1.msra.mxu0 0.0
    %6778 = vmatprep.subr.mxu0 0.0
    %6779 = vmatpush1.msra.mxu0 0.0
    %6780 = vmatprep.subr.mxu0 0.0
    %6781 = vmatpush1.msra.mxu0 0.0
    %6782 = vmatprep.subr.mxu0 0.0
    %6783 = vmatpush1.msra.mxu0 0.0
    %6784 = vmatprep.subr.mxu0 0.0
    %6785 = vmatpush1.msra.mxu0 0.0
    %6786 = vmatprep.subr.mxu0 0.0
    %6787 = vmatpush1.msra.mxu0 0.0
    %6788 = vmatprep.subr.mxu0 0.0
    %6789 = vmatpush1.msra.mxu0 0.0
    %6790 = vmatprep.mubr.f32.mxu0 0.0
    %6791 = vmatmul.mubr.f32.gmra.mrb[0].mxu0 %v6724
    %v6792 = vpop.f32.mrb[0].mxu0
    %v6793 = vadd.f32 0.0, %v6792
    %v6794 = vpop.f32.mrb[0].mxu0
    %6795 = vdwg.mxu0
    %6796 = vrot.lane.b32.xlu0 %v4615, 48
    %v6797 = vpop.permute.xlu0 %6796
    %v6800 = vsel %vm1461, %v6713, 0
    %6802 = vmatprep.subr.mxu0 0.0
    %6803 = vmatpush1.msra.mxu0 %v6797
    %6804 = vmatprep.subr.mxu0 0.0
    %6805 = vmatpush1.msra.mxu0 0.0
    %6806 = vmatprep.subr.mxu0 0.0
    %6807 = vmatpush1.msra.mxu0 0.0
    %6808 = vmatprep.subr.mxu0 0.0
    %6809 = vmatpush1.msra.mxu0 0.0
    %6810 = vmatprep.subr.mxu0 0.0
    %6811 = vmatpush1.msra.mxu0 0.0
    %6812 = vmatprep.subr.mxu0 0.0
    %6813 = vmatpush1.msra.mxu0 0.0
    %6814 = vmatprep.subr.mxu0 0.0
    %6815 = vmatpush1.msra.mxu0 0.0
    %6816 = vmatprep.subr.mxu0 0.0
    %6817 = vmatpush1.msra.mxu0 0.0
    %6818 = vmatprep.subr.mxu0 0.0
    %6819 = vmatpush1.msra.mxu0 0.0
    %6820 = vmatprep.subr.mxu0 0.0
    %6821 = vmatpush1.msra.mxu0 0.0
    %6822 = vmatprep.subr.mxu0 0.0
    %6823 = vmatpush1.msra.mxu0 0.0
    %6824 = vmatprep.subr.mxu0 0.0
    %6825 = vmatpush1.msra.mxu0 0.0
    %6826 = vmatprep.subr.mxu0 0.0
    %6827 = vmatpush1.msra.mxu0 0.0
    %6828 = vmatprep.subr.mxu0 0.0
    %6829 = vmatpush1.msra.mxu0 0.0
    %6830 = vmatprep.subr.mxu0 0.0
    %6831 = vmatpush1.msra.mxu0 0.0
    %6832 = vmatprep.subr.mxu0 0.0
    %6833 = vmatpush1.msra.mxu0 0.0
    %6834 = vmatprep.subr.mxu0 0.0
    %6835 = vmatpush1.msra.mxu0 0.0
    %6836 = vmatprep.subr.mxu0 0.0
    %6837 = vmatpush1.msra.mxu0 0.0
    %6838 = vmatprep.subr.mxu0 0.0
    %6839 = vmatpush1.msra.mxu0 0.0
    %6840 = vmatprep.subr.mxu0 0.0
    %6841 = vmatpush1.msra.mxu0 0.0
    %6842 = vmatprep.subr.mxu0 0.0
    %6843 = vmatpush1.msra.mxu0 0.0
    %6844 = vmatprep.subr.mxu0 0.0
    %6845 = vmatpush1.msra.mxu0 0.0
    %6846 = vmatprep.subr.mxu0 0.0
    %6847 = vmatpush1.msra.mxu0 0.0
    %6848 = vmatprep.subr.mxu0 0.0
    %6849 = vmatpush1.msra.mxu0 0.0
    %6850 = vmatprep.subr.mxu0 0.0
    %6851 = vmatpush1.msra.mxu0 0.0
    %6852 = vmatprep.subr.mxu0 0.0
    %6853 = vmatpush1.msra.mxu0 0.0
    %6854 = vmatprep.subr.mxu0 0.0
    %6855 = vmatpush1.msra.mxu0 0.0
    %6856 = vmatprep.subr.mxu0 0.0
    %6857 = vmatpush1.msra.mxu0 0.0
    %6858 = vmatprep.subr.mxu0 0.0
    %6859 = vmatpush1.msra.mxu0 0.0
    %6860 = vmatprep.subr.mxu0 0.0
    %6861 = vmatpush1.msra.mxu0 0.0
    %6862 = vmatprep.subr.mxu0 0.0
    %6863 = vmatpush1.msra.mxu0 0.0
    %6864 = vmatprep.subr.mxu0 0.0
    %6865 = vmatpush1.msra.mxu0 0.0
    %6866 = vmatprep.mubr.f32.mxu0 0.0
    %6867 = vmatmul.mubr.f32.gmra.mrb[0].mxu0 %v6800
    %v6868 = vpop.f32.mrb[0].mxu0
    %v6869 = vadd.f32 0.0, %v6868
    %v6870 = vpop.f32.mrb[0].mxu0
    %6871 = vdwg.mxu0
    %6872 = vrot.lane.b32.xlu0 %v4620, 48
    %v6873 = vpop.permute.xlu0 %6872
    %v6876 = vsel %vm1461, %v6714, 0
    %6878 = vmatprep.subr.mxu0 0.0
    %6879 = vmatpush1.msra.mxu0 %v6873
    %6880 = vmatprep.subr.mxu0 0.0
    %6881 = vmatpush1.msra.mxu0 0.0
    %6882 = vmatprep.subr.mxu0 0.0
    %6883 = vmatpush1.msra.mxu0 0.0
    %6884 = vmatprep.subr.mxu0 0.0
    %6885 = vmatpush1.msra.mxu0 0.0
    %6886 = vmatprep.subr.mxu0 0.0
    %6887 = vmatpush1.msra.mxu0 0.0
    %6888 = vmatprep.subr.mxu0 0.0
    %6889 = vmatpush1.msra.mxu0 0.0
    %6890 = vmatprep.subr.mxu0 0.0
    %6891 = vmatpush1.msra.mxu0 0.0
    %6892 = vmatprep.subr.mxu0 0.0
    %6893 = vmatpush1.msra.mxu0 0.0
    %6894 = vmatprep.subr.mxu0 0.0
    %6895 = vmatpush1.msra.mxu0 0.0
    %6896 = vmatprep.subr.mxu0 0.0
    %6897 = vmatpush1.msra.mxu0 0.0
    %6898 = vmatprep.subr.mxu0 0.0
    %6899 = vmatpush1.msra.mxu0 0.0
    %6900 = vmatprep.subr.mxu0 0.0
    %6901 = vmatpush1.msra.mxu0 0.0
    %6902 = vmatprep.subr.mxu0 0.0
    %6903 = vmatpush1.msra.mxu0 0.0
    %6904 = vmatprep.subr.mxu0 0.0
    %6905 = vmatpush1.msra.mxu0 0.0
    %6906 = vmatprep.subr.mxu0 0.0
    %6907 = vmatpush1.msra.mxu0 0.0
    %6908 = vmatprep.subr.mxu0 0.0
    %6909 = vmatpush1.msra.mxu0 0.0
    %6910 = vmatprep.subr.mxu0 0.0
    %6911 = vmatpush1.msra.mxu0 0.0
    %6912 = vmatprep.subr.mxu0 0.0
    %6913 = vmatpush1.msra.mxu0 0.0
    %6914 = vmatprep.subr.mxu0 0.0
    %6915 = vmatpush1.msra.mxu0 0.0
    %6916 = vmatprep.subr.mxu0 0.0
    %6917 = vmatpush1.msra.mxu0 0.0
    %6918 = vmatprep.subr.mxu0 0.0
    %6919 = vmatpush1.msra.mxu0 0.0
    %6920 = vmatprep.subr.mxu0 0.0
    %6921 = vmatpush1.msra.mxu0 0.0
    %6922 = vmatprep.subr.mxu0 0.0
    %6923 = vmatpush1.msra.mxu0 0.0
    %6924 = vmatprep.subr.mxu0 0.0
    %6925 = vmatpush1.msra.mxu0 0.0
    %6926 = vmatprep.subr.mxu0 0.0
    %6927 = vmatpush1.msra.mxu0 0.0
    %6928 = vmatprep.subr.mxu0 0.0
    %6929 = vmatpush1.msra.mxu0 0.0
    %6930 = vmatprep.subr.mxu0 0.0
    %6931 = vmatpush1.msra.mxu0 0.0
    %6932 = vmatprep.subr.mxu0 0.0
    %6933 = vmatpush1.msra.mxu0 0.0
    %6934 = vmatprep.subr.mxu0 0.0
    %6935 = vmatpush1.msra.mxu0 0.0
    %6936 = vmatprep.subr.mxu0 0.0
    %6937 = vmatpush1.msra.mxu0 0.0
    %6938 = vmatprep.subr.mxu0 0.0
    %6939 = vmatpush1.msra.mxu0 0.0
    %6940 = vmatprep.subr.mxu0 0.0
    %6941 = vmatpush1.msra.mxu0 0.0
    %6942 = vmatprep.mubr.f32.mxu0 0.0
    %6943 = vmatmul.mubr.f32.gmra.mrb[0].mxu0 %v6876
    %v6944 = vpop.f32.mrb[0].mxu0
    %v6945 = vadd.f32 0.0, %v6944
    %v6946 = vpop.f32.mrb[0].mxu0
    %6947 = vdwg.mxu0
    %6948 = vrot.lane.b32.xlu0 %v4625, 48
    %v6949 = vpop.permute.xlu0 %6948
    %v6952 = vsel %vm1461, %v6715, 0
    %6954 = vmatprep.subr.mxu0 0.0
    %6955 = vmatpush1.msra.mxu0 %v6949
    %6956 = vmatprep.subr.mxu0 0.0
    %6957 = vmatpush1.msra.mxu0 0.0
    %6958 = vmatprep.subr.mxu0 0.0
    %6959 = vmatpush1.msra.mxu0 0.0
    %6960 = vmatprep.subr.mxu0 0.0
    %6961 = vmatpush1.msra.mxu0 0.0
    %6962 = vmatprep.subr.mxu0 0.0
    %6963 = vmatpush1.msra.mxu0 0.0
    %6964 = vmatprep.subr.mxu0 0.0
    %6965 = vmatpush1.msra.mxu0 0.0
    %6966 = vmatprep.subr.mxu0 0.0
    %6967 = vmatpush1.msra.mxu0 0.0
    %6968 = vmatprep.subr.mxu0 0.0
    %6969 = vmatpush1.msra.mxu0 0.0
    %6970 = vmatprep.subr.mxu0 0.0
    %6971 = vmatpush1.msra.mxu0 0.0
    %6972 = vmatprep.subr.mxu0 0.0
    %6973 = vmatpush1.msra.mxu0 0.0
    %6974 = vmatprep.subr.mxu0 0.0
    %6975 = vmatpush1.msra.mxu0 0.0
    %6976 = vmatprep.subr.mxu0 0.0
    %6977 = vmatpush1.msra.mxu0 0.0
    %6978 = vmatprep.subr.mxu0 0.0
    %6979 = vmatpush1.msra.mxu0 0.0
    %6980 = vmatprep.subr.mxu0 0.0
    %6981 = vmatpush1.msra.mxu0 0.0
    %6982 = vmatprep.subr.mxu0 0.0
    %6983 = vmatpush1.msra.mxu0 0.0
    %6984 = vmatprep.subr.mxu0 0.0
    %6985 = vmatpush1.msra.mxu0 0.0
    %6986 = vmatprep.subr.mxu0 0.0
    %6987 = vmatpush1.msra.mxu0 0.0
    %6988 = vmatprep.subr.mxu0 0.0
    %6989 = vmatpush1.msra.mxu0 0.0
    %6990 = vmatprep.subr.mxu0 0.0
    %6991 = vmatpush1.msra.mxu0 0.0
    %6992 = vmatprep.subr.mxu0 0.0
    %6993 = vmatpush1.msra.mxu0 0.0
    %6994 = vmatprep.subr.mxu0 0.0
    %6995 = vmatpush1.msra.mxu0 0.0
    %6996 = vmatprep.subr.mxu0 0.0
    %6997 = vmatpush1.msra.mxu0 0.0
    %6998 = vmatprep.subr.mxu0 0.0
    %6999 = vmatpush1.msra.mxu0 0.0
    %7000 = vmatprep.subr.mxu0 0.0
    %7001 = vmatpush1.msra.mxu0 0.0
    %7002 = vmatprep.subr.mxu0 0.0
    %7003 = vmatpush1.msra.mxu0 0.0
    %7004 = vmatprep.subr.mxu0 0.0
    %7005 = vmatpush1.msra.mxu0 0.0
    %7006 = vmatprep.subr.mxu0 0.0
    %7007 = vmatpush1.msra.mxu0 0.0
    %7008 = vmatprep.subr.mxu0 0.0
    %7009 = vmatpush1.msra.mxu0 0.0
    %7010 = vmatprep.subr.mxu0 0.0
    %7011 = vmatpush1.msra.mxu0 0.0
    %7012 = vmatprep.subr.mxu0 0.0
    %7013 = vmatpush1.msra.mxu0 0.0
    %7014 = vmatprep.subr.mxu0 0.0
    %7015 = vmatpush1.msra.mxu0 0.0
    %7016 = vmatprep.subr.mxu0 0.0
    %7017 = vmatpush1.msra.mxu0 0.0
    %7018 = vmatprep.mubr.f32.mxu0 0.0
    %7019 = vmatmul.mubr.f32.gmra.mrb[0].mxu0 %v6952
    %v7020 = vpop.f32.mrb[0].mxu0
    %v7021 = vadd.f32 0.0, %v7020
    %v7022 = vpop.f32.mrb[0].mxu0
    %7023 = vdwg.mxu0
    %7024 = vrot.lane.b32.xlu0 %v4630, 48
    %v7025 = vpop.permute.xlu0 %7024
    %v7028 = vsel %vm1461, %v6716, 0
    %7030 = vmatprep.subr.mxu0 0.0
    %7031 = vmatpush1.msra.mxu0 %v7025
    %7032 = vmatprep.subr.mxu0 0.0
    %7033 = vmatpush1.msra.mxu0 0.0
    %7034 = vmatprep.subr.mxu0 0.0
    %7035 = vmatpush1.msra.mxu0 0.0
    %7036 = vmatprep.subr.mxu0 0.0
    %7037 = vmatpush1.msra.mxu0 0.0
    %7038 = vmatprep.subr.mxu0 0.0
    %7039 = vmatpush1.msra.mxu0 0.0
    %7040 = vmatprep.subr.mxu0 0.0
    %7041 = vmatpush1.msra.mxu0 0.0
    %7042 = vmatprep.subr.mxu0 0.0
    %7043 = vmatpush1.msra.mxu0 0.0
    %7044 = vmatprep.subr.mxu0 0.0
    %7045 = vmatpush1.msra.mxu0 0.0
    %7046 = vmatprep.subr.mxu0 0.0
    %7047 = vmatpush1.msra.mxu0 0.0
    %7048 = vmatprep.subr.mxu0 0.0
    %7049 = vmatpush1.msra.mxu0 0.0
    %7050 = vmatprep.subr.mxu0 0.0
    %7051 = vmatpush1.msra.mxu0 0.0
    %7052 = vmatprep.subr.mxu0 0.0
    %7053 = vmatpush1.msra.mxu0 0.0
    %7054 = vmatprep.subr.mxu0 0.0
    %7055 = vmatpush1.msra.mxu0 0.0
    %7056 = vmatprep.subr.mxu0 0.0
    %7057 = vmatpush1.msra.mxu0 0.0
    %7058 = vmatprep.subr.mxu0 0.0
    %7059 = vmatpush1.msra.mxu0 0.0
    %7060 = vmatprep.subr.mxu0 0.0
    %7061 = vmatpush1.msra.mxu0 0.0
    %7062 = vmatprep.subr.mxu0 0.0
    %7063 = vmatpush1.msra.mxu0 0.0
    %7064 = vmatprep.subr.mxu0 0.0
    %7065 = vmatpush1.msra.mxu0 0.0
    %7066 = vmatprep.subr.mxu0 0.0
    %7067 = vmatpush1.msra.mxu0 0.0
    %7068 = vmatprep.subr.mxu0 0.0
    %7069 = vmatpush1.msra.mxu0 0.0
    %7070 = vmatprep.subr.mxu0 0.0
    %7071 = vmatpush1.msra.mxu0 0.0
    %7072 = vmatprep.subr.mxu0 0.0
    %7073 = vmatpush1.msra.mxu0 0.0
    %7074 = vmatprep.subr.mxu0 0.0
    %7075 = vmatpush1.msra.mxu0 0.0
    %7076 = vmatprep.subr.mxu0 0.0
    %7077 = vmatpush1.msra.mxu0 0.0
    %7078 = vmatprep.subr.mxu0 0.0
    %7079 = vmatpush1.msra.mxu0 0.0
    %7080 = vmatprep.subr.mxu0 0.0
    %7081 = vmatpush1.msra.mxu0 0.0
    %7082 = vmatprep.subr.mxu0 0.0
    %7083 = vmatpush1.msra.mxu0 0.0
    %7084 = vmatprep.subr.mxu0 0.0
    %7085 = vmatpush1.msra.mxu0 0.0
    %7086 = vmatprep.subr.mxu0 0.0
    %7087 = vmatpush1.msra.mxu0 0.0
    %7088 = vmatprep.subr.mxu0 0.0
    %7089 = vmatpush1.msra.mxu0 0.0
    %7090 = vmatprep.subr.mxu0 0.0
    %7091 = vmatpush1.msra.mxu0 0.0
    %7092 = vmatprep.subr.mxu0 0.0
    %7093 = vmatpush1.msra.mxu0 0.0
    %7094 = vmatprep.mubr.f32.mxu0 0.0
    %7095 = vmatmul.mubr.f32.gmra.mrb[0].mxu0 %v7028
    %v7096 = vpop.f32.mrb[0].mxu0
    %v7097 = vadd.f32 0.0, %v7096
    %v7098 = vpop.f32.mrb[0].mxu0
    %7099 = vdwg.mxu0
    %7100 = vrot.lane.b32.xlu0 %v4635, 48
    %v7101 = vpop.permute.xlu0 %7100
    %v7104 = vsel %vm1461, %v6717, 0
    %7106 = vmatprep.subr.mxu0 0.0
    %7107 = vmatpush1.msra.mxu0 %v7101
    %7108 = vmatprep.subr.mxu0 0.0
    %7109 = vmatpush1.msra.mxu0 0.0
    %7110 = vmatprep.subr.mxu0 0.0
    %7111 = vmatpush1.msra.mxu0 0.0
    %7112 = vmatprep.subr.mxu0 0.0
    %7113 = vmatpush1.msra.mxu0 0.0
    %7114 = vmatprep.subr.mxu0 0.0
    %7115 = vmatpush1.msra.mxu0 0.0
    %7116 = vmatprep.subr.mxu0 0.0
    %7117 = vmatpush1.msra.mxu0 0.0
    %7118 = vmatprep.subr.mxu0 0.0
    %7119 = vmatpush1.msra.mxu0 0.0
    %7120 = vmatprep.subr.mxu0 0.0
    %7121 = vmatpush1.msra.mxu0 0.0
    %7122 = vmatprep.subr.mxu0 0.0
    %7123 = vmatpush1.msra.mxu0 0.0
    %7124 = vmatprep.subr.mxu0 0.0
    %7125 = vmatpush1.msra.mxu0 0.0
    %7126 = vmatprep.subr.mxu0 0.0
    %7127 = vmatpush1.msra.mxu0 0.0
    %7128 = vmatprep.subr.mxu0 0.0
    %7129 = vmatpush1.msra.mxu0 0.0
    %7130 = vmatprep.subr.mxu0 0.0
    %7131 = vmatpush1.msra.mxu0 0.0
    %7132 = vmatprep.subr.mxu0 0.0
    %7133 = vmatpush1.msra.mxu0 0.0
    %7134 = vmatprep.subr.mxu0 0.0
    %7135 = vmatpush1.msra.mxu0 0.0
    %7136 = vmatprep.subr.mxu0 0.0
    %7137 = vmatpush1.msra.mxu0 0.0
    %7138 = vmatprep.subr.mxu0 0.0
    %7139 = vmatpush1.msra.mxu0 0.0
    %7140 = vmatprep.subr.mxu0 0.0
    %7141 = vmatpush1.msra.mxu0 0.0
    %7142 = vmatprep.subr.mxu0 0.0
    %7143 = vmatpush1.msra.mxu0 0.0
    %7144 = vmatprep.subr.mxu0 0.0
    %7145 = vmatpush1.msra.mxu0 0.0
    %7146 = vmatprep.subr.mxu0 0.0
    %7147 = vmatpush1.msra.mxu0 0.0
    %7148 = vmatprep.subr.mxu0 0.0
    %7149 = vmatpush1.msra.mxu0 0.0
    %7150 = vmatprep.subr.mxu0 0.0
    %7151 = vmatpush1.msra.mxu0 0.0
    %7152 = vmatprep.subr.mxu0 0.0
    %7153 = vmatpush1.msra.mxu0 0.0
    %7154 = vmatprep.subr.mxu0 0.0
    %7155 = vmatpush1.msra.mxu0 0.0
    %7156 = vmatprep.subr.mxu0 0.0
    %7157 = vmatpush1.msra.mxu0 0.0
    %7158 = vmatprep.subr.mxu0 0.0
    %7159 = vmatpush1.msra.mxu0 0.0
    %7160 = vmatprep.subr.mxu0 0.0
    %7161 = vmatpush1.msra.mxu0 0.0
    %7162 = vmatprep.subr.mxu0 0.0
    %7163 = vmatpush1.msra.mxu0 0.0
    %7164 = vmatprep.subr.mxu0 0.0
    %7165 = vmatpush1.msra.mxu0 0.0
    %7166 = vmatprep.subr.mxu0 0.0
    %7167 = vmatpush1.msra.mxu0 0.0
    %7168 = vmatprep.subr.mxu0 0.0
    %7169 = vmatpush1.msra.mxu0 0.0
    %7170 = vmatprep.mubr.f32.mxu0 0.0
    %7171 = vmatmul.mubr.f32.gmra.mrb[0].mxu0 %v7104
    %v7172 = vpop.f32.mrb[0].mxu0
    %v7173 = vadd.f32 0.0, %v7172
    %v7174 = vpop.f32.mrb[0].mxu0
    %7175 = vdwg.mxu0
    %7176 = vrot.lane.b32.xlu0 %v4640, 48
    %v7177 = vpop.permute.xlu0 %7176
    %v7180 = vsel %vm1461, %v6718, 0
    %7182 = vmatprep.subr.mxu0 0.0
    %7183 = vmatpush1.msra.mxu0 %v7177
    %7184 = vmatprep.subr.mxu0 0.0
    %7185 = vmatpush1.msra.mxu0 0.0
    %7186 = vmatprep.subr.mxu0 0.0
    %7187 = vmatpush1.msra.mxu0 0.0
    %7188 = vmatprep.subr.mxu0 0.0
    %7189 = vmatpush1.msra.mxu0 0.0
    %7190 = vmatprep.subr.mxu0 0.0
    %7191 = vmatpush1.msra.mxu0 0.0
    %7192 = vmatprep.subr.mxu0 0.0
    %7193 = vmatpush1.msra.mxu0 0.0
    %7194 = vmatprep.subr.mxu0 0.0
    %7195 = vmatpush1.msra.mxu0 0.0
    %7196 = vmatprep.subr.mxu0 0.0
    %7197 = vmatpush1.msra.mxu0 0.0
    %7198 = vmatprep.subr.mxu0 0.0
    %7199 = vmatpush1.msra.mxu0 0.0
    %7200 = vmatprep.subr.mxu0 0.0
    %7201 = vmatpush1.msra.mxu0 0.0
    %7202 = vmatprep.subr.mxu0 0.0
    %7203 = vmatpush1.msra.mxu0 0.0
    %7204 = vmatprep.subr.mxu0 0.0
    %7205 = vmatpush1.msra.mxu0 0.0
    %7206 = vmatprep.subr.mxu0 0.0
    %7207 = vmatpush1.msra.mxu0 0.0
    %7208 = vmatprep.subr.mxu0 0.0
    %7209 = vmatpush1.msra.mxu0 0.0
    %7210 = vmatprep.subr.mxu0 0.0
    %7211 = vmatpush1.msra.mxu0 0.0
    %7212 = vmatprep.subr.mxu0 0.0
    %7213 = vmatpush1.msra.mxu0 0.0
    %7214 = vmatprep.subr.mxu0 0.0
    %7215 = vmatpush1.msra.mxu0 0.0
    %7216 = vmatprep.subr.mxu0 0.0
    %7217 = vmatpush1.msra.mxu0 0.0
    %7218 = vmatprep.subr.mxu0 0.0
    %7219 = vmatpush1.msra.mxu0 0.0
    %7220 = vmatprep.subr.mxu0 0.0
    %7221 = vmatpush1.msra.mxu0 0.0
    %7222 = vmatprep.subr.mxu0 0.0
    %7223 = vmatpush1.msra.mxu0 0.0
    %7224 = vmatprep.subr.mxu0 0.0
    %7225 = vmatpush1.msra.mxu0 0.0
    %7226 = vmatprep.subr.mxu0 0.0
    %7227 = vmatpush1.msra.mxu0 0.0
    %7228 = vmatprep.subr.mxu0 0.0
    %7229 = vmatpush1.msra.mxu0 0.0
    %7230 = vmatprep.subr.mxu0 0.0
    %7231 = vmatpush1.msra.mxu0 0.0
    %7232 = vmatprep.subr.mxu0 0.0
    %7233 = vmatpush1.msra.mxu0 0.0
    %7234 = vmatprep.subr.mxu0 0.0
    %7235 = vmatpush1.msra.mxu0 0.0
    %7236 = vmatprep.subr.mxu0 0.0
    %7237 = vmatpush1.msra.mxu0 0.0
    %7238 = vmatprep.subr.mxu0 0.0
    %7239 = vmatpush1.msra.mxu0 0.0
    %7240 = vmatprep.subr.mxu0 0.0
    %7241 = vmatpush1.msra.mxu0 0.0
    %7242 = vmatprep.subr.mxu0 0.0
    %7243 = vmatpush1.msra.mxu0 0.0
    %7244 = vmatprep.subr.mxu0 0.0
    %7245 = vmatpush1.msra.mxu0 0.0
    %7246 = vmatprep.mubr.f32.mxu0 0.0
    %7247 = vmatmul.mubr.f32.gmra.mrb[0].mxu0 %v7180
    %v7248 = vpop.f32.mrb[0].mxu0
    %v7249 = vadd.f32 0.0, %v7248
    %v7250 = vpop.f32.mrb[0].mxu0
    %7251 = vdwg.mxu0
    %7252 = vrot.lane.b32.xlu0 %v4645, 48
    %v7253 = vpop.permute.xlu0 %7252
    %v7256 = vsel %vm1461, %v6719, 0
    %7258 = vmatprep.subr.mxu0 0.0
    %7259 = vmatpush1.msra.mxu0 %v7253
    %7260 = vmatprep.subr.mxu0 0.0
    %7261 = vmatpush1.msra.mxu0 0.0
    %7262 = vmatprep.subr.mxu0 0.0
    %7263 = vmatpush1.msra.mxu0 0.0
    %7264 = vmatprep.subr.mxu0 0.0
    %7265 = vmatpush1.msra.mxu0 0.0
    %7266 = vmatprep.subr.mxu0 0.0
    %7267 = vmatpush1.msra.mxu0 0.0
    %7268 = vmatprep.subr.mxu0 0.0
    %7269 = vmatpush1.msra.mxu0 0.0
    %7270 = vmatprep.subr.mxu0 0.0
    %7271 = vmatpush1.msra.mxu0 0.0
    %7272 = vmatprep.subr.mxu0 0.0
    %7273 = vmatpush1.msra.mxu0 0.0
    %7274 = vmatprep.subr.mxu0 0.0
    %7275 = vmatpush1.msra.mxu0 0.0
    %7276 = vmatprep.subr.mxu0 0.0
    %7277 = vmatpush1.msra.mxu0 0.0
    %7278 = vmatprep.subr.mxu0 0.0
    %7279 = vmatpush1.msra.mxu0 0.0
    %7280 = vmatprep.subr.mxu0 0.0
    %7281 = vmatpush1.msra.mxu0 0.0
    %7282 = vmatprep.subr.mxu0 0.0
    %7283 = vmatpush1.msra.mxu0 0.0
    %7284 = vmatprep.subr.mxu0 0.0
    %7285 = vmatpush1.msra.mxu0 0.0
    %7286 = vmatprep.subr.mxu0 0.0
    %7287 = vmatpush1.msra.mxu0 0.0
    %7288 = vmatprep.subr.mxu0 0.0
    %7289 = vmatpush1.msra.mxu0 0.0
    %7290 = vmatprep.subr.mxu0 0.0
    %7291 = vmatpush1.msra.mxu0 0.0
    %7292 = vmatprep.subr.mxu0 0.0
    %7293 = vmatpush1.msra.mxu0 0.0
    %7294 = vmatprep.subr.mxu0 0.0
    %7295 = vmatpush1.msra.mxu0 0.0
    %7296 = vmatprep.subr.mxu0 0.0
    %7297 = vmatpush1.msra.mxu0 0.0
    %7298 = vmatprep.subr.mxu0 0.0
    %7299 = vmatpush1.msra.mxu0 0.0
    %7300 = vmatprep.subr.mxu0 0.0
    %7301 = vmatpush1.msra.mxu0 0.0
    %7302 = vmatprep.subr.mxu0 0.0
    %7303 = vmatpush1.msra.mxu0 0.0
    %7304 = vmatprep.subr.mxu0 0.0
    %7305 = vmatpush1.msra.mxu0 0.0
    %7306 = vmatprep.subr.mxu0 0.0
    %7307 = vmatpush1.msra.mxu0 0.0
    %7308 = vmatprep.subr.mxu0 0.0
    %7309 = vmatpush1.msra.mxu0 0.0
    %7310 = vmatprep.subr.mxu0 0.0
    %7311 = vmatpush1.msra.mxu0 0.0
    %7312 = vmatprep.subr.mxu0 0.0
    %7313 = vmatpush1.msra.mxu0 0.0
    %7314 = vmatprep.subr.mxu0 0.0
    %7315 = vmatpush1.msra.mxu0 0.0
    %7316 = vmatprep.subr.mxu0 0.0
    %7317 = vmatpush1.msra.mxu0 0.0
    %7318 = vmatprep.subr.mxu0 0.0
    %7319 = vmatpush1.msra.mxu0 0.0
    %7320 = vmatprep.subr.mxu0 0.0
    %7321 = vmatpush1.msra.mxu0 0.0
    %7322 = vmatprep.mubr.f32.mxu0 0.0
    %7323 = vmatmul.mubr.f32.gmra.mrb[0].mxu0 %v7256
    %v7324 = vpop.f32.mrb[0].mxu0
    %v7325 = vadd.f32 0.0, %v7324
    %v7326 = vpop.f32.mrb[0].mxu0
    %7327 = vdwg.mxu0
    %v7329 = vsel %vm146, %v6793, 0
    %v7332 = vsel %vm146, %v6869, 0
    %v7335 = vsel %vm146, %v6945, 0
    %v7338 = vsel %vm146, %v7021, 0
    %v7341 = vsel %vm146, %v7097, 0
    %v7344 = vsel %vm146, %v7173, 0
    %v7347 = vsel %vm146, %v7249, 0
    %v7350 = vsel %vm146, %v7325, 0
    %7352 = vmatprep.subr.mxu0 0.0
    %7353 = vmatpush1.msra.mxu0 %v4509
    %7354 = vmatprep.subr.mxu0 0.0
    %7355 = vmatpush1.msra.mxu0 %v4510
    %7356 = vmatprep.subr.mxu0 0.0
    %7357 = vmatpush1.msra.mxu0 0.0
    %7358 = vmatprep.subr.mxu0 0.0
    %7359 = vmatpush1.msra.mxu0 0.0
    %7360 = vmatprep.subr.mxu0 0.0
    %7361 = vmatpush1.msra.mxu0 0.0
    %7362 = vmatprep.subr.mxu0 0.0
    %7363 = vmatpush1.msra.mxu0 0.0
    %7364 = vmatprep.subr.mxu0 0.0
    %7365 = vmatpush1.msra.mxu0 0.0
    %7366 = vmatprep.subr.mxu0 0.0
    %7367 = vmatpush1.msra.mxu0 0.0
    %7368 = vmatprep.subr.mxu0 0.0
    %7369 = vmatpush1.msra.mxu0 0.0
    %7370 = vmatprep.subr.mxu0 0.0
    %7371 = vmatpush1.msra.mxu0 0.0
    %7372 = vmatprep.subr.mxu0 0.0
    %7373 = vmatpush1.msra.mxu0 0.0
    %7374 = vmatprep.subr.mxu0 0.0
    %7375 = vmatpush1.msra.mxu0 0.0
    %7376 = vmatprep.subr.mxu0 0.0
    %7377 = vmatpush1.msra.mxu0 0.0
    %7378 = vmatprep.subr.mxu0 0.0
    %7379 = vmatpush1.msra.mxu0 0.0
    %7380 = vmatprep.subr.mxu0 0.0
    %7381 = vmatpush1.msra.mxu0 0.0
    %7382 = vmatprep.subr.mxu0 0.0
    %7383 = vmatpush1.msra.mxu0 0.0
    %7384 = vmatprep.subr.mxu0 0.0
    %7385 = vmatpush1.msra.mxu0 0.0
    %7386 = vmatprep.subr.mxu0 0.0
    %7387 = vmatpush1.msra.mxu0 0.0
    %7388 = vmatprep.subr.mxu0 0.0
    %7389 = vmatpush1.msra.mxu0 0.0
    %7390 = vmatprep.subr.mxu0 0.0
    %7391 = vmatpush1.msra.mxu0 0.0
    %7392 = vmatprep.subr.mxu0 0.0
    %7393 = vmatpush1.msra.mxu0 0.0
    %7394 = vmatprep.subr.mxu0 0.0
    %7395 = vmatpush1.msra.mxu0 0.0
    %7396 = vmatprep.subr.mxu0 0.0
    %7397 = vmatpush1.msra.mxu0 0.0
    %7398 = vmatprep.subr.mxu0 0.0
    %7399 = vmatpush1.msra.mxu0 0.0
    %7400 = vmatprep.subr.mxu0 0.0
    %7401 = vmatpush1.msra.mxu0 0.0
    %7402 = vmatprep.subr.mxu0 0.0
    %7403 = vmatpush1.msra.mxu0 0.0
    %7404 = vmatprep.subr.mxu0 0.0
    %7405 = vmatpush1.msra.mxu0 0.0
    %7406 = vmatprep.subr.mxu0 0.0
    %7407 = vmatpush1.msra.mxu0 0.0
    %7408 = vmatprep.subr.mxu0 0.0
    %7409 = vmatpush1.msra.mxu0 0.0
    %7410 = vmatprep.subr.mxu0 0.0
    %7411 = vmatpush1.msra.mxu0 0.0
    %7412 = vmatprep.subr.mxu0 0.0
    %7413 = vmatpush1.msra.mxu0 0.0
    %7414 = vmatprep.subr.mxu0 0.0
    %7415 = vmatpush1.msra.mxu0 0.0
    %7416 = vmatprep.mubr.f32.mxu0 0.0
    %7417 = vmatmul.mubr.f32.gmra.mrb[0].mxu0 %v7329
    %v7418 = vpop.f32.mrb[0].mxu0
    %v7419 = vadd.f32 0.0, %v7418
    %v7420 = vpop.f32.mrb[0].mxu0
    %7421 = vmatprep.mubr.f32.mxu0 0.0
    %7422 = vmatmul.mubr.f32.gmra.mrb[0].mxu0 %v7332
    %v7423 = vpop.f32.mrb[0].mxu0
    %v7424 = vadd.f32 0.0, %v7423
    %v7425 = vpop.f32.mrb[0].mxu0
    %7426 = vmatprep.mubr.f32.mxu0 0.0
    %7427 = vmatmul.mubr.f32.gmra.mrb[0].mxu0 %v7335
    %v7428 = vpop.f32.mrb[0].mxu0
    %v7429 = vadd.f32 0.0, %v7428
    %v7430 = vpop.f32.mrb[0].mxu0
    %7431 = vmatprep.mubr.f32.mxu0 0.0
    %7432 = vmatmul.mubr.f32.gmra.mrb[0].mxu0 %v7338
    %v7433 = vpop.f32.mrb[0].mxu0
    %v7434 = vadd.f32 0.0, %v7433
    %v7435 = vpop.f32.mrb[0].mxu0
    %7436 = vmatprep.mubr.f32.mxu0 0.0
    %7437 = vmatmul.mubr.f32.gmra.mrb[0].mxu0 %v7341
    %v7438 = vpop.f32.mrb[0].mxu0
    %v7439 = vadd.f32 0.0, %v7438
    %v7440 = vpop.f32.mrb[0].mxu0
    %7441 = vmatprep.mubr.f32.mxu0 0.0
    %7442 = vmatmul.mubr.f32.gmra.mrb[0].mxu0 %v7344
    %v7443 = vpop.f32.mrb[0].mxu0
    %v7444 = vadd.f32 0.0, %v7443
    %v7445 = vpop.f32.mrb[0].mxu0
    %7446 = vmatprep.mubr.f32.mxu0 0.0
    %7447 = vmatmul.mubr.f32.gmra.mrb[0].mxu0 %v7347
    %v7448 = vpop.f32.mrb[0].mxu0
    %v7449 = vadd.f32 0.0, %v7448
    %v7450 = vpop.f32.mrb[0].mxu0
    %7451 = vmatprep.mubr.f32.mxu0 0.0
    %7452 = vmatmul.mubr.f32.gmra.mrb[0].mxu0 %v7350
    %v7453 = vpop.f32.mrb[0].mxu0
    %v7454 = vadd.f32 0.0, %v7453
    %v7455 = vpop.f32.mrb[0].mxu0
    %7456 = vdwg.mxu0
    %v7458 = vsel %vm146, %v5449, 0
    %v7461 = vsel %vm146, %v5525, 0
    %v7464 = vsel %vm146, %v5601, 0
    %v7467 = vsel %vm146, %v5677, 0
    %v7470 = vsel %vm146, %v5753, 0
    %v7473 = vsel %vm146, %v5829, 0
    %v7476 = vsel %vm146, %v5905, 0
    %v7479 = vsel %vm146, %v5981, 0
    %7481 = vmatprep.subr.mxu0 0.0
    %7482 = vmatpush1.msra.mxu0 %v4507
    %7483 = vmatprep.subr.mxu0 0.0
    %7484 = vmatpush1.msra.mxu0 %v4508
    %7485 = vmatprep.subr.mxu0 0.0
    %7486 = vmatpush1.msra.mxu0 0.0
    %7487 = vmatprep.subr.mxu0 0.0
    %7488 = vmatpush1.msra.mxu0 0.0
    %7489 = vmatprep.subr.mxu0 0.0
    %7490 = vmatpush1.msra.mxu0 0.0
    %7491 = vmatprep.subr.mxu0 0.0
    %7492 = vmatpush1.msra.mxu0 0.0
    %7493 = vmatprep.subr.mxu0 0.0
    %7494 = vmatpush1.msra.mxu0 0.0
    %7495 = vmatprep.subr.mxu0 0.0
    %7496 = vmatpush1.msra.mxu0 0.0
    %7497 = vmatprep.subr.mxu0 0.0
    %7498 = vmatpush1.msra.mxu0 0.0
    %7499 = vmatprep.subr.mxu0 0.0
    %7500 = vmatpush1.msra.mxu0 0.0
    %7501 = vmatprep.subr.mxu0 0.0
    %7502 = vmatpush1.msra.mxu0 0.0
    %7503 = vmatprep.subr.mxu0 0.0
    %7504 = vmatpush1.msra.mxu0 0.0
    %7505 = vmatprep.subr.mxu0 0.0
    %7506 = vmatpush1.msra.mxu0 0.0
    %7507 = vmatprep.subr.mxu0 0.0
    %7508 = vmatpush1.msra.mxu0 0.0
    %7509 = vmatprep.subr.mxu0 0.0
    %7510 = vmatpush1.msra.mxu0 0.0
    %7511 = vmatprep.subr.mxu0 0.0
    %7512 = vmatpush1.msra.mxu0 0.0
    %7513 = vmatprep.subr.mxu0 0.0
    %7514 = vmatpush1.msra.mxu0 0.0
    %7515 = vmatprep.subr.mxu0 0.0
    %7516 = vmatpush1.msra.mxu0 0.0
    %7517 = vmatprep.subr.mxu0 0.0
    %7518 = vmatpush1.msra.mxu0 0.0
    %7519 = vmatprep.subr.mxu0 0.0
    %7520 = vmatpush1.msra.mxu0 0.0
    %7521 = vmatprep.subr.mxu0 0.0
    %7522 = vmatpush1.msra.mxu0 0.0
    %7523 = vmatprep.subr.mxu0 0.0
    %7524 = vmatpush1.msra.mxu0 0.0
    %7525 = vmatprep.subr.mxu0 0.0
    %7526 = vmatpush1.msra.mxu0 0.0
    %7527 = vmatprep.subr.mxu0 0.0
    %7528 = vmatpush1.msra.mxu0 0.0
    %7529 = vmatprep.subr.mxu0 0.0
    %7530 = vmatpush1.msra.mxu0 0.0
    %7531 = vmatprep.subr.mxu0 0.0
    %7532 = vmatpush1.msra.mxu0 0.0
    %7533 = vmatprep.subr.mxu0 0.0
    %7534 = vmatpush1.msra.mxu0 0.0
    %7535 = vmatprep.subr.mxu0 0.0
    %7536 = vmatpush1.msra.mxu0 0.0
    %7537 = vmatprep.subr.mxu0 0.0
    %7538 = vmatpush1.msra.mxu0 0.0
    %7539 = vmatprep.subr.mxu0 0.0
    %7540 = vmatpush1.msra.mxu0 0.0
    %7541 = vmatprep.subr.mxu0 0.0
    %7542 = vmatpush1.msra.mxu0 0.0
    %7543 = vmatprep.subr.mxu0 0.0
    %7544 = vmatpush1.msra.mxu0 0.0
    %7545 = vmatprep.mubr.f32.mxu0 0.0
    %7546 = vmatmul.mubr.f32.gmra.mrb[0].mxu0 %v7458
    %v7547 = vpop.f32.mrb[0].mxu0
    %v7548 = vadd.f32 %v7419, %v7547
    %v7549 = vpop.f32.mrb[0].mxu0
    %7550 = vmatprep.mubr.f32.mxu0 0.0
    %7551 = vmatmul.mubr.f32.gmra.mrb[0].mxu0 %v7461
    %v7552 = vpop.f32.mrb[0].mxu0
    %v7553 = vadd.f32 %v7424, %v7552
    %v7554 = vpop.f32.mrb[0].mxu0
    %7555 = vmatprep.mubr.f32.mxu0 0.0
    %7556 = vmatmul.mubr.f32.gmra.mrb[0].mxu0 %v7464
    %v7557 = vpop.f32.mrb[0].mxu0
    %v7558 = vadd.f32 %v7429, %v7557
    %v7559 = vpop.f32.mrb[0].mxu0
    %7560 = vmatprep.mubr.f32.mxu0 0.0
    %7561 = vmatmul.mubr.f32.gmra.mrb[0].mxu0 %v7467
    %v7562 = vpop.f32.mrb[0].mxu0
    %v7563 = vadd.f32 %v7434, %v7562
    %v7564 = vpop.f32.mrb[0].mxu0
    %7565 = vmatprep.mubr.f32.mxu0 0.0
    %7566 = vmatmul.mubr.f32.gmra.mrb[0].mxu0 %v7470
    %v7567 = vpop.f32.mrb[0].mxu0
    %v7568 = vadd.f32 %v7439, %v7567
    %v7569 = vpop.f32.mrb[0].mxu0
    %7570 = vmatprep.mubr.f32.mxu0 0.0
    %7571 = vmatmul.mubr.f32.gmra.mrb[0].mxu0 %v7473
    %v7572 = vpop.f32.mrb[0].mxu0
    %v7573 = vadd.f32 %v7444, %v7572
    %v7574 = vpop.f32.mrb[0].mxu0
    %7575 = vmatprep.mubr.f32.mxu0 0.0
    %7576 = vmatmul.mubr.f32.gmra.mrb[0].mxu0 %v7476
    %v7577 = vpop.f32.mrb[0].mxu0
    %v7578 = vadd.f32 %v7449, %v7577
    %v7579 = vpop.f32.mrb[0].mxu0
    %7580 = vmatprep.mubr.f32.mxu0 0.0
    %7581 = vmatmul.mubr.f32.gmra.mrb[0].mxu0 %v7479
    %v7582 = vpop.f32.mrb[0].mxu0
    %v7583 = vadd.f32 %v7454, %v7582
    %v7584 = vpop.f32.mrb[0].mxu0
    %7585 = vdwg.mxu0
    %v7586 = vadd.f32 %v4493, %v7548
    %v7587 = vadd.f32 %v4494, %v7553
    %v7588 = vadd.f32 %v4495, %v7558
    %v7589 = vadd.f32 %v4496, %v7563
    %v7590 = vadd.f32 %v4497, %v7568
    %v7591 = vadd.f32 %v4498, %v7573
    %v7592 = vadd.f32 %v4499, %v7578
    %v7593 = vadd.f32 %v4500, %v7583
    %s7594 = scalar_lea.vmem %s8, 1
    %v7595 = vld [vmem:[%s7594] sm:$0x1]
    %v7597 = vlaneseq
    %v7598 = vshrl.u32 %v7597, 7
    %v7599 = vsub.s32 0, %v7598
    %v7600 = vrot.slane %v7595, %v7599
    %v7602 = vadd.f32 %v7586, %v7600
    %v7603 = vadd.f32 %v7587, %v7600
    %v7604 = vadd.f32 %v7588, %v7600
    %v7605 = vadd.f32 %v7589, %v7600
    %v7606 = vadd.f32 %v7590, %v7600
    %v7607 = vadd.f32 %v7591, %v7600
    %v7608 = vadd.f32 %v7592, %v7600
    %v7609 = vadd.f32 %v7593, %v7600
    %v7610 = vsel %vm707, %v7602, 0.0
    %v7611 = vsel %vm707, %v7603, 0.0
    %v7612 = vadd.f32 %v7610, %v7611
    %v7613 = vsel %vm707, %v7604, 0.0
    %v7614 = vadd.f32 %v7612, %v7613
    %v7615 = vsel %vm707, %v7605, 0.0
    %v7616 = vadd.f32 %v7614, %v7615
    %v7617 = vsel %vm707, %v7606, 0.0
    %v7618 = vadd.f32 %v7616, %v7617
    %v7619 = vsel %vm707, %v7607, 0.0
    %v7620 = vadd.f32 %v7618, %v7619
    %v7621 = vsel %vm707, %v7608, 0.0
    %v7622 = vadd.f32 %v7620, %v7621
    %v7623 = vsel %vm707, %v7609, 0.0
    %v7624 = vadd.f32 %v7622, %v7623
    %v7625 = vrot.slane %v7624, 4
    %v7626 = vadd.f32 %v7624, %v7625
    %v7627 = vrot.slane %v7626, 2
    %v7628 = vadd.f32 %v7626, %v7627
    %v7629 = vrot.slane %v7628, 1
    %v7630 = vadd.f32 %v7628, %v7629
    %v7631 = vmul.f32 %v7630, %v3804
    %v7632 = vsub.f32 %v7602, %v7631
    %v7633 = vsub.f32 %v7603, %v7631
    %v7634 = vsub.f32 %v7604, %v7631
    %v7635 = vsub.f32 %v7605, %v7631
    %v7636 = vsub.f32 %v7606, %v7631
    %v7637 = vsub.f32 %v7607, %v7631
    %v7638 = vsub.f32 %v7608, %v7631
    %v7639 = vsub.f32 %v7609, %v7631
    %v7640 = vmul.f32 %v7632, %v7632
    %v7641 = vmul.f32 %v7633, %v7633
    %v7642 = vmul.f32 %v7634, %v7634
    %v7643 = vmul.f32 %v7635, %v7635
    %v7644 = vmul.f32 %v7636, %v7636
    %v7645 = vmul.f32 %v7637, %v7637
    %v7646 = vmul.f32 %v7638, %v7638
    %v7647 = vmul.f32 %v7639, %v7639
    %v7648 = vsel %vm707, %v7640, 0.0
    %v7649 = vsel %vm707, %v7641, 0.0
    %v7650 = vadd.f32 %v7648, %v7649
    %v7651 = vsel %vm707, %v7642, 0.0
    %v7652 = vadd.f32 %v7650, %v7651
    %v7653 = vsel %vm707, %v7643, 0.0
    %v7654 = vadd.f32 %v7652, %v7653
    %v7655 = vsel %vm707, %v7644, 0.0
    %v7656 = vadd.f32 %v7654, %v7655
    %v7657 = vsel %vm707, %v7645, 0.0
    %v7658 = vadd.f32 %v7656, %v7657
    %v7659 = vsel %vm707, %v7646, 0.0
    %v7660 = vadd.f32 %v7658, %v7659
    %v7661 = vsel %vm707, %v7647, 0.0
    %v7662 = vadd.f32 %v7660, %v7661
    %v7663 = vrot.slane %v7662, 4
    %v7664 = vadd.f32 %v7662, %v7663
    %v7665 = vrot.slane %v7664, 2
    %v7666 = vadd.f32 %v7664, %v7665
    %v7667 = vrot.slane %v7666, 1
    %v7668 = vadd.f32 %v7666, %v7667
    %v7669 = vmul.f32 %v7668, %v3804
    %v7670 = vadd.f32 %v7669, 1e-05
    %v7671 = vrsqrt.pop %v7670
    %v7672 = vmul.f32 %v7632, %v7671
    %v7673 = vmul.f32 %v7633, %v7671
    %v7674 = vmul.f32 %v7634, %v7671
    %v7675 = vmul.f32 %v7635, %v7671
    %v7676 = vmul.f32 %v7636, %v7671
    %v7677 = vmul.f32 %v7637, %v7671
    %v7678 = vmul.f32 %v7638, %v7671
    %v7679 = vmul.f32 %v7639, %v7671
    %s7680 = scalar_lea.vmem %s9, 1
    %v7681 = vld [vmem:[%s7680] sm:$0x1]
    %v7683 = vlaneseq
    %v7684 = vshrl.u32 %v7683, 7
    %v7685 = vsub.s32 0, %v7684
    %v7686 = vrot.slane %v7681, %v7685
    %v7688 = vmul.f32 %v7672, %v7686
    %v7689 = vmul.f32 %v7673, %v7686
    %v7690 = vmul.f32 %v7674, %v7686
    %v7691 = vmul.f32 %v7675, %v7686
    %v7692 = vmul.f32 %v7676, %v7686
    %v7693 = vmul.f32 %v7677, %v7686
    %v7694 = vmul.f32 %v7678, %v7686
    %v7695 = vmul.f32 %v7679, %v7686
    %s7696 = scalar_lea.vmem %s10, 1
    %v7697 = vld [vmem:[%s7696] sm:$0x1]
    %v7699 = vlaneseq
    %v7700 = vshrl.u32 %v7699, 7
    %v7701 = vsub.s32 0, %v7700
    %v7702 = vrot.slane %v7697, %v7701
    %v7704 = vadd.f32 %v7688, %v7702
    %v7705 = vadd.f32 %v7689, %v7702
    %v7706 = vadd.f32 %v7690, %v7702
    %v7707 = vadd.f32 %v7691, %v7702
    %v7708 = vadd.f32 %v7692, %v7702
    %v7709 = vadd.f32 %v7693, %v7702
    %v7710 = vadd.f32 %v7694, %v7702
    %v7711 = vadd.f32 %v7695, %v7702
    %s7712 = scalar_lea.vmem [#allocation9], 32
    %v7713 = vld [vmem:[%s7712] sm:$0xff]
    %v7714 = vld [vmem:[%s7712 + $0x8] sm:$0xff]
    %v7715 = vld [vmem:[%s7712 + $0x10] sm:$0xff]
    %v7716 = vld [vmem:[%s7712 + $0x18] sm:$0xff]
    %s7717 = scalar_lea.vmem %s12, 1
    %v7718 = vld [vmem:[%s7717] sm:$0x1]
    %v7720 = vlaneseq
    %v7721 = vshrl.u32 %v7720, 7
    %v7722 = vsub.s32 0, %v7721
    %v7723 = vrot.slane %v7718, %v7722
    %v7726 = vsel %vm707, %v7704, 0
    %v7729 = vsel %vm707, %v7705, 0
    %v7732 = vsel %vm707, %v7706, 0
    %v7735 = vsel %vm707, %v7707, 0
    %v7738 = vsel %vm707, %v7708, 0
    %v7741 = vsel %vm707, %v7709, 0
    %v7744 = vsel %vm707, %v7710, 0
    %v7747 = vsel %vm707, %v7711, 0
    %7749 = vmatprep.subr.mxu0 0.0
    %7750 = vmatpush1.msra.mxu0 %v7713
    %7751 = vmatprep.subr.mxu0 0.0
    %7752 = vmatpush1.msra.mxu0 %v7714
    %7753 = vmatprep.subr.mxu0 0.0
    %7754 = vmatpush1.msra.mxu0 %v7715
    %7755 = vmatprep.subr.mxu0 0.0
    %7756 = vmatpush1.msra.mxu0 %v7716
    %7757 = vmatprep.subr.mxu0 0.0
    %7758 = vmatpush1.msra.mxu0 0.0
    %7759 = vmatprep.subr.mxu0 0.0
    %7760 = vmatpush1.msra.mxu0 0.0
    %7761 = vmatprep.subr.mxu0 0.0
    %7762 = vmatpush1.msra.mxu0 0.0
    %7763 = vmatprep.subr.mxu0 0.0
    %7764 = vmatpush1.msra.mxu0 0.0
    %7765 = vmatprep.subr.mxu0 0.0
    %7766 = vmatpush1.msra.mxu0 0.0
    %7767 = vmatprep.subr.mxu0 0.0
    %7768 = vmatpush1.msra.mxu0 0.0
    %7769 = vmatprep.subr.mxu0 0.0
    %7770 = vmatpush1.msra.mxu0 0.0
    %7771 = vmatprep.subr.mxu0 0.0
    %7772 = vmatpush1.msra.mxu0 0.0
    %7773 = vmatprep.subr.mxu0 0.0
    %7774 = vmatpush1.msra.mxu0 0.0
    %7775 = vmatprep.subr.mxu0 0.0
    %7776 = vmatpush1.msra.mxu0 0.0
    %7777 = vmatprep.subr.mxu0 0.0
    %7778 = vmatpush1.msra.mxu0 0.0
    %7779 = vmatprep.subr.mxu0 0.0
    %7780 = vmatpush1.msra.mxu0 0.0
    %7781 = vmatprep.subr.mxu0 0.0
    %7782 = vmatpush1.msra.mxu0 0.0
    %7783 = vmatprep.subr.mxu0 0.0
    %7784 = vmatpush1.msra.mxu0 0.0
    %7785 = vmatprep.subr.mxu0 0.0
    %7786 = vmatpush1.msra.mxu0 0.0
    %7787 = vmatprep.subr.mxu0 0.0
    %7788 = vmatpush1.msra.mxu0 0.0
    %7789 = vmatprep.subr.mxu0 0.0
    %7790 = vmatpush1.msra.mxu0 0.0
    %7791 = vmatprep.subr.mxu0 0.0
    %7792 = vmatpush1.msra.mxu0 0.0
    %7793 = vmatprep.subr.mxu0 0.0
    %7794 = vmatpush1.msra.mxu0 0.0
    %7795 = vmatprep.subr.mxu0 0.0
    %7796 = vmatpush1.msra.mxu0 0.0
    %7797 = vmatprep.subr.mxu0 0.0
    %7798 = vmatpush1.msra.mxu0 0.0
    %7799 = vmatprep.subr.mxu0 0.0
    %7800 = vmatpush1.msra.mxu0 0.0
    %7801 = vmatprep.subr.mxu0 0.0
    %7802 = vmatpush1.msra.mxu0 0.0
    %7803 = vmatprep.subr.mxu0 0.0
    %7804 = vmatpush1.msra.mxu0 0.0
    %7805 = vmatprep.subr.mxu0 0.0
    %7806 = vmatpush1.msra.mxu0 0.0
    %7807 = vmatprep.subr.mxu0 0.0
    %7808 = vmatpush1.msra.mxu0 0.0
    %7809 = vmatprep.subr.mxu0 0.0
    %7810 = vmatpush1.msra.mxu0 0.0
    %7811 = vmatprep.subr.mxu0 0.0
    %7812 = vmatpush1.msra.mxu0 0.0
    %7813 = vmatprep.mubr.f32.mxu0 0.0
    %7814 = vmatmul.mubr.f32.gmra.mrb[0].mxu0 %v7726
    %v7815 = vpop.f32.mrb[0].mxu0
    %v7816 = vadd.f32 %v7723, %v7815
    %v7817 = vpop.f32.mrb[0].mxu0
    %7818 = vmatprep.mubr.f32.mxu0 0.0
    %7819 = vmatmul.mubr.f32.gmra.mrb[0].mxu0 %v7729
    %v7820 = vpop.f32.mrb[0].mxu0
    %v7821 = vadd.f32 %v7723, %v7820
    %v7822 = vpop.f32.mrb[0].mxu0
    %7823 = vmatprep.mubr.f32.mxu0 0.0
    %7824 = vmatmul.mubr.f32.gmra.mrb[0].mxu0 %v7732
    %v7825 = vpop.f32.mrb[0].mxu0
    %v7826 = vadd.f32 %v7723, %v7825
    %v7827 = vpop.f32.mrb[0].mxu0
    %7828 = vmatprep.mubr.f32.mxu0 0.0
    %7829 = vmatmul.mubr.f32.gmra.mrb[0].mxu0 %v7735
    %v7830 = vpop.f32.mrb[0].mxu0
    %v7831 = vadd.f32 %v7723, %v7830
    %v7832 = vpop.f32.mrb[0].mxu0
    %7833 = vmatprep.mubr.f32.mxu0 0.0
    %7834 = vmatmul.mubr.f32.gmra.mrb[0].mxu0 %v7738
    %v7835 = vpop.f32.mrb[0].mxu0
    %v7836 = vadd.f32 %v7723, %v7835
    %v7837 = vpop.f32.mrb[0].mxu0
    %7838 = vmatprep.mubr.f32.mxu0 0.0
    %7839 = vmatmul.mubr.f32.gmra.mrb[0].mxu0 %v7741
    %v7840 = vpop.f32.mrb[0].mxu0
    %v7841 = vadd.f32 %v7723, %v7840
    %v7842 = vpop.f32.mrb[0].mxu0
    %7843 = vmatprep.mubr.f32.mxu0 0.0
    %7844 = vmatmul.mubr.f32.gmra.mrb[0].mxu0 %v7744
    %v7845 = vpop.f32.mrb[0].mxu0
    %v7846 = vadd.f32 %v7723, %v7845
    %v7847 = vpop.f32.mrb[0].mxu0
    %7848 = vmatprep.mubr.f32.mxu0 0.0
    %7849 = vmatmul.mubr.f32.gmra.mrb[0].mxu0 %v7747
    %v7850 = vpop.f32.mrb[0].mxu0
    %v7851 = vadd.f32 %v7723, %v7850
    %v7852 = vpop.f32.mrb[0].mxu0
    %7853 = vdwg.mxu0
    %v7854 = vmul.f32 %v7816, 0.5
    %v7855 = vmul.f32 %v7821, 0.5
    %v7856 = vmul.f32 %v7826, 0.5
    %v7857 = vmul.f32 %v7831, 0.5
    %v7858 = vmul.f32 %v7836, 0.5
    %v7859 = vmul.f32 %v7841, 0.5
    %v7860 = vmul.f32 %v7846, 0.5
    %v7861 = vmul.f32 %v7851, 0.5
    %v7862 = vmul.f32 %v7816, 0.70710677
    %v7863 = vmul.f32 %v7821, 0.70710677
    %v7864 = vmul.f32 %v7826, 0.70710677
    %v7865 = vmul.f32 %v7831, 0.70710677
    %v7866 = vmul.f32 %v7836, 0.70710677
    %v7867 = vmul.f32 %v7841, 0.70710677
    %v7868 = vmul.f32 %v7846, 0.70710677
    %v7869 = vmul.f32 %v7851, 0.70710677
    %vm7870 = vcmp.ge.f32.partialorder %v7862, 0.0
    %vm7871 = vcmp.ge.f32.partialorder %v7863, 0.0
    %vm7872 = vcmp.ge.f32.partialorder %v7864, 0.0
    %vm7873 = vcmp.ge.f32.partialorder %v7865, 0.0
    %vm7874 = vcmp.ge.f32.partialorder %v7866, 0.0
    %vm7875 = vcmp.ge.f32.partialorder %v7867, 0.0
    %vm7876 = vcmp.ge.f32.partialorder %v7868, 0.0
    %vm7877 = vcmp.ge.f32.partialorder %v7869, 0.0
    %v7878 = vsel %vm7870, 1.0, -1.0
    %v7879 = vsel %vm7871, 1.0, -1.0
    %v7880 = vsel %vm7872, 1.0, -1.0
    %v7881 = vsel %vm7873, 1.0, -1.0
    %v7882 = vsel %vm7874, 1.0, -1.0
    %v7883 = vsel %vm7875, 1.0, -1.0
    %v7884 = vsel %vm7876, 1.0, -1.0
    %v7885 = vsel %vm7877, 1.0, -1.0
    %v7886 = vand.u32 2147483647, %v7862
    %v7887 = vand.u32 2147483647, %v7863
    %v7888 = vand.u32 2147483647, %v7864
    %v7889 = vand.u32 2147483647, %v7865
    %v7890 = vand.u32 2147483647, %v7866
    %v7891 = vand.u32 2147483647, %v7867
    %v7892 = vand.u32 2147483647, %v7868
    %v7893 = vand.u32 2147483647, %v7869
    %v7894 = vmul.f32 %v7886, 0.3275911
    %v7895 = vmul.f32 %v7887, 0.3275911
    %v7896 = vmul.f32 %v7888, 0.3275911
    %v7897 = vmul.f32 %v7889, 0.3275911
    %v7898 = vmul.f32 %v7890, 0.3275911
    %v7899 = vmul.f32 %v7891, 0.3275911
    %v7900 = vmul.f32 %v7892, 0.3275911
    %v7901 = vmul.f32 %v7893, 0.3275911
    %v7902 = vadd.f32 %v7894, 1.0
    %v7903 = vadd.f32 %v7895, 1.0
    %v7904 = vadd.f32 %v7896, 1.0
    %v7905 = vadd.f32 %v7897, 1.0
    %v7906 = vadd.f32 %v7898, 1.0
    %v7907 = vadd.f32 %v7899, 1.0
    %v7908 = vadd.f32 %v7900, 1.0
    %v7909 = vadd.f32 %v7901, 1.0
    %v7910 = vrcp.pop %v7902
    %v7911 = vmul.f32 1.0, %v7910
    %v7912 = vrcp.pop %v7903
    %v7913 = vmul.f32 1.0, %v7912
    %v7914 = vrcp.pop %v7904
    %v7915 = vmul.f32 1.0, %v7914
    %v7916 = vrcp.pop %v7905
    %v7917 = vmul.f32 1.0, %v7916
    %v7918 = vrcp.pop %v7906
    %v7919 = vmul.f32 1.0, %v7918
    %v7920 = vrcp.pop %v7907
    %v7921 = vmul.f32 1.0, %v7920
    %v7922 = vrcp.pop %v7908
    %v7923 = vmul.f32 1.0, %v7922
    %v7924 = vrcp.pop %v7909
    %v7925 = vmul.f32 1.0, %v7924
    %v7926 = vmul.f32 %v7911, 1.0614054
    %v7927 = vmul.f32 %v7913, 1.0614054
    %v7928 = vmul.f32 %v7915, 1.0614054
    %v7929 = vmul.f32 %v7917, 1.0614054
    %v7930 = vmul.f32 %v7919, 1.0614054
    %v7931 = vmul.f32 %v7921, 1.0614054
    %v7932 = vmul.f32 %v7923, 1.0614054
    %v7933 = vmul.f32 %v7925, 1.0614054
    %v7934 = vadd.f32 %v7926, -1.4531521
    %v7935 = vadd.f32 %v7927, -1.4531521
    %v7936 = vadd.f32 %v7928, -1.4531521
    %v7937 = vadd.f32 %v7929, -1.4531521
    %v7938 = vadd.f32 %v7930, -1.4531521
    %v7939 = vadd.f32 %v7931, -1.4531521
    %v7940 = vadd.f32 %v7932, -1.4531521
    %v7941 = vadd.f32 %v7933, -1.4531521
    %v7942 = vmul.f32 %v7911, %v7934
    %v7943 = vmul.f32 %v7913, %v7935
    %v7944 = vmul.f32 %v7915, %v7936
    %v7945 = vmul.f32 %v7917, %v7937
    %v7946 = vmul.f32 %v7919, %v7938
    %v7947 = vmul.f32 %v7921, %v7939
    %v7948 = vmul.f32 %v7923, %v7940
    %v7949 = vmul.f32 %v7925, %v7941
    %v7950 = vadd.f32 %v7942, 1.4214138
    %v7951 = vadd.f32 %v7943, 1.4214138
    %v7952 = vadd.f32 %v7944, 1.4214138
    %v7953 = vadd.f32 %v7945, 1.4214138
    %v7954 = vadd.f32 %v7946, 1.4214138
    %v7955 = vadd.f32 %v7947, 1.4214138
    %v7956 = vadd.f32 %v7948, 1.4214138
    %v7957 = vadd.f32 %v7949, 1.4214138
    %v7958 = vmul.f32 %v7911, %v7950
    %v7959 = vmul.f32 %v7913, %v7951
    %v7960 = vmul.f32 %v7915, %v7952
    %v7961 = vmul.f32 %v7917, %v7953
    %v7962 = vmul.f32 %v7919, %v7954
    %v7963 = vmul.f32 %v7921, %v7955
    %v7964 = vmul.f32 %v7923, %v7956
    %v7965 = vmul.f32 %v7925, %v7957
    %v7966 = vadd.f32 %v7958, -0.28449672
    %v7967 = vadd.f32 %v7959, -0.28449672
    %v7968 = vadd.f32 %v7960, -0.28449672
    %v7969 = vadd.f32 %v7961, -0.28449672
    %v7970 = vadd.f32 %v7962, -0.28449672
    %v7971 = vadd.f32 %v7963, -0.28449672
    %v7972 = vadd.f32 %v7964, -0.28449672
    %v7973 = vadd.f32 %v7965, -0.28449672
    %v7974 = vmul.f32 %v7911, %v7966
    %v7975 = vmul.f32 %v7913, %v7967
    %v7976 = vmul.f32 %v7915, %v7968
    %v7977 = vmul.f32 %v7917, %v7969
    %v7978 = vmul.f32 %v7919, %v7970
    %v7979 = vmul.f32 %v7921, %v7971
    %v7980 = vmul.f32 %v7923, %v7972
    %v7981 = vmul.f32 %v7925, %v7973
    %v7982 = vadd.f32 %v7974, 0.2548296
    %v7983 = vadd.f32 %v7975, 0.2548296
    %v7984 = vadd.f32 %v7976, 0.2548296
    %v7985 = vadd.f32 %v7977, 0.2548296
    %v7986 = vadd.f32 %v7978, 0.2548296
    %v7987 = vadd.f32 %v7979, 0.2548296
    %v7988 = vadd.f32 %v7980, 0.2548296
    %v7989 = vadd.f32 %v7981, 0.2548296
    %v7990 = vmul.f32 %v7911, %v7982
    %v7991 = vmul.f32 %v7913, %v7983
    %v7992 = vmul.f32 %v7915, %v7984
    %v7993 = vmul.f32 %v7917, %v7985
    %v7994 = vmul.f32 %v7919, %v7986
    %v7995 = vmul.f32 %v7921, %v7987
    %v7996 = vmul.f32 %v7923, %v7988
    %v7997 = vmul.f32 %v7925, %v7989
    %v7998 = vsub.f32 0.0, %v7886
    %v7999 = vsub.f32 0.0, %v7887
    %v8000 = vsub.f32 0.0, %v7888
    %v8001 = vsub.f32 0.0, %v7889
    %v8002 = vsub.f32 0.0, %v7890
    %v8003 = vsub.f32 0.0, %v7891
    %v8004 = vsub.f32 0.0, %v7892
    %v8005 = vsub.f32 0.0, %v7893
    %v8006 = vmul.f32 %v7998, %v7886
    %v8007 = vmul.f32 %v7999, %v7887
    %v8008 = vmul.f32 %v8000, %v7888
    %v8009 = vmul.f32 %v8001, %v7889
    %v8010 = vmul.f32 %v8002, %v7890
    %v8011 = vmul.f32 %v8003, %v7891
    %v8012 = vmul.f32 %v8004, %v7892
    %v8013 = vmul.f32 %v8005, %v7893
    %v8014 = vmul.f32 %v8006, 1.442695
    %v8015 = vpow.pop %v8014
    %v8016 = vmul.f32 %v8007, 1.442695
    %v8017 = vpow.pop %v8016
    %v8018 = vmul.f32 %v8008, 1.442695
    %v8019 = vpow.pop %v8018
    %v8020 = vmul.f32 %v8009, 1.442695
    %v8021 = vpow.pop %v8020
    %v8022 = vmul.f32 %v8010, 1.442695
    %v8023 = vpow.pop %v8022
    %v8024 = vmul.f32 %v8011, 1.442695
    %v8025 = vpow.pop %v8024
    %v8026 = vmul.f32 %v8012, 1.442695
    %v8027 = vpow.pop %v8026
    %v8028 = vmul.f32 %v8013, 1.442695
    %v8029 = vpow.pop %v8028
    %v8030 = vmul.f32 %v7990, %v8015
    %v8031 = vmul.f32 %v7991, %v8017
    %v8032 = vmul.f32 %v7992, %v8019
    %v8033 = vmul.f32 %v7993, %v8021
    %v8034 = vmul.f32 %v7994, %v8023
    %v8035 = vmul.f32 %v7995, %v8025
    %v8036 = vmul.f32 %v7996, %v8027
    %v8037 = vmul.f32 %v7997, %v8029
    %v8038 = vsub.f32 1.0, %v8030
    %v8039 = vsub.f32 1.0, %v8031
    %v8040 = vsub.f32 1.0, %v8032
    %v8041 = vsub.f32 1.0, %v8033
    %v8042 = vsub.f32 1.0, %v8034
    %v8043 = vsub.f32 1.0, %v8035
    %v8044 = vsub.f32 1.0, %v8036
    %v8045 = vsub.f32 1.0, %v8037
    %v8046 = vmul.f32 %v7878, %v8038
    %v8047 = vmul.f32 %v7879, %v8039
    %v8048 = vmul.f32 %v7880, %v8040
    %v8049 = vmul.f32 %v7881, %v8041
    %v8050 = vmul.f32 %v7882, %v8042
    %v8051 = vmul.f32 %v7883, %v8043
    %v8052 = vmul.f32 %v7884, %v8044
    %v8053 = vmul.f32 %v7885, %v8045
    %v8054 = vadd.f32 %v8046, 1.0
    %v8055 = vadd.f32 %v8047, 1.0
    %v8056 = vadd.f32 %v8048, 1.0
    %v8057 = vadd.f32 %v8049, 1.0
    %v8058 = vadd.f32 %v8050, 1.0
    %v8059 = vadd.f32 %v8051, 1.0
    %v8060 = vadd.f32 %v8052, 1.0
    %v8061 = vadd.f32 %v8053, 1.0
    %v8062 = vmul.f32 %v7854, %v8054
    %v8063 = vmul.f32 %v7855, %v8055
    %v8064 = vmul.f32 %v7856, %v8056
    %v8065 = vmul.f32 %v7857, %v8057
    %v8066 = vmul.f32 %v7858, %v8058
    %v8067 = vmul.f32 %v7859, %v8059
    %v8068 = vmul.f32 %v7860, %v8060
    %v8069 = vmul.f32 %v7861, %v8061
    %s8070 = scalar_lea.vmem [#allocation11], 64
    %v8071 = vld [vmem:[%s8070] sm:$0xff]
    %v8072 = vld [vmem:[%s8070 + $0x8] sm:$0xff]
    %v8073 = vld [vmem:[%s8070 + $0x10] sm:$0xff]
    %v8074 = vld [vmem:[%s8070 + $0x18] sm:$0xff]
    %v8075 = vld [vmem:[%s8070 + $0x20] sm:$0xff]
    %v8076 = vld [vmem:[%s8070 + $0x28] sm:$0xff]
    %v8077 = vld [vmem:[%s8070 + $0x30] sm:$0xff]
    %v8078 = vld [vmem:[%s8070 + $0x38] sm:$0xff]
    %v8080 = vsel %vm4248, %v8062, 0
    %v8083 = vsel %vm4248, %v8063, 0
    %v8086 = vsel %vm4248, %v8064, 0
    %v8089 = vsel %vm4248, %v8065, 0
    %v8092 = vsel %vm4248, %v8066, 0
    %v8095 = vsel %vm4248, %v8067, 0
    %v8098 = vsel %vm4248, %v8068, 0
    %v8101 = vsel %vm4248, %v8069, 0
    %8103 = vmatprep.subr.mxu0 0.0
    %8104 = vmatpush1.msra.mxu0 %v8071
    %8105 = vmatprep.subr.mxu0 0.0
    %8106 = vmatpush1.msra.mxu0 %v8072
    %8107 = vmatprep.subr.mxu0 0.0
    %8108 = vmatpush1.msra.mxu0 %v8073
    %8109 = vmatprep.subr.mxu0 0.0
    %8110 = vmatpush1.msra.mxu0 %v8074
    %8111 = vmatprep.subr.mxu0 0.0
    %8112 = vmatpush1.msra.mxu0 %v8075
    %8113 = vmatprep.subr.mxu0 0.0
    %8114 = vmatpush1.msra.mxu0 %v8076
    %8115 = vmatprep.subr.mxu0 0.0
    %8116 = vmatpush1.msra.mxu0 %v8077
    %8117 = vmatprep.subr.mxu0 0.0
    %8118 = vmatpush1.msra.mxu0 %v8078
    %8119 = vmatprep.subr.mxu0 0.0
    %8120 = vmatpush1.msra.mxu0 0.0
    %8121 = vmatprep.subr.mxu0 0.0
    %8122 = vmatpush1.msra.mxu0 0.0
    %8123 = vmatprep.subr.mxu0 0.0
    %8124 = vmatpush1.msra.mxu0 0.0
    %8125 = vmatprep.subr.mxu0 0.0
    %8126 = vmatpush1.msra.mxu0 0.0
    %8127 = vmatprep.subr.mxu0 0.0
    %8128 = vmatpush1.msra.mxu0 0.0
    %8129 = vmatprep.subr.mxu0 0.0
    %8130 = vmatpush1.msra.mxu0 0.0
    %8131 = vmatprep.subr.mxu0 0.0
    %8132 = vmatpush1.msra.mxu0 0.0
    %8133 = vmatprep.subr.mxu0 0.0
    %8134 = vmatpush1.msra.mxu0 0.0
    %8135 = vmatprep.subr.mxu0 0.0
    %8136 = vmatpush1.msra.mxu0 0.0
    %8137 = vmatprep.subr.mxu0 0.0
    %8138 = vmatpush1.msra.mxu0 0.0
    %8139 = vmatprep.subr.mxu0 0.0
    %8140 = vmatpush1.msra.mxu0 0.0
    %8141 = vmatprep.subr.mxu0 0.0
    %8142 = vmatpush1.msra.mxu0 0.0
    %8143 = vmatprep.subr.mxu0 0.0
    %8144 = vmatpush1.msra.mxu0 0.0
    %8145 = vmatprep.subr.mxu0 0.0
    %8146 = vmatpush1.msra.mxu0 0.0
    %8147 = vmatprep.subr.mxu0 0.0
    %8148 = vmatpush1.msra.mxu0 0.0
    %8149 = vmatprep.subr.mxu0 0.0
    %8150 = vmatpush1.msra.mxu0 0.0
    %8151 = vmatprep.subr.mxu0 0.0
    %8152 = vmatpush1.msra.mxu0 0.0
    %8153 = vmatprep.subr.mxu0 0.0
    %8154 = vmatpush1.msra.mxu0 0.0
    %8155 = vmatprep.subr.mxu0 0.0
    %8156 = vmatpush1.msra.mxu0 0.0
    %8157 = vmatprep.subr.mxu0 0.0
    %8158 = vmatpush1.msra.mxu0 0.0
    %8159 = vmatprep.subr.mxu0 0.0
    %8160 = vmatpush1.msra.mxu0 0.0
    %8161 = vmatprep.subr.mxu0 0.0
    %8162 = vmatpush1.msra.mxu0 0.0
    %8163 = vmatprep.subr.mxu0 0.0
    %8164 = vmatpush1.msra.mxu0 0.0
    %8165 = vmatprep.subr.mxu0 0.0
    %8166 = vmatpush1.msra.mxu0 0.0
    %8167 = vmatprep.mubr.f32.mxu0 0.0
    %8168 = vmatmul.mubr.f32.gmra.mrb[0].mxu0 %v8080
    %v8169 = vpop.f32.mrb[0].mxu0
    %v8170 = vadd.f32 0.0, %v8169
    %v8171 = vpop.f32.mrb[0].mxu0
    %8172 = vmatprep.mubr.f32.mxu0 0.0
    %8173 = vmatmul.mubr.f32.gmra.mrb[0].mxu0 %v8083
    %v8174 = vpop.f32.mrb[0].mxu0
    %v8175 = vadd.f32 0.0, %v8174
    %v8176 = vpop.f32.mrb[0].mxu0
    %8177 = vmatprep.mubr.f32.mxu0 0.0
    %8178 = vmatmul.mubr.f32.gmra.mrb[0].mxu0 %v8086
    %v8179 = vpop.f32.mrb[0].mxu0
    %v8180 = vadd.f32 0.0, %v8179
    %v8181 = vpop.f32.mrb[0].mxu0
    %8182 = vmatprep.mubr.f32.mxu0 0.0
    %8183 = vmatmul.mubr.f32.gmra.mrb[0].mxu0 %v8089
    %v8184 = vpop.f32.mrb[0].mxu0
    %v8185 = vadd.f32 0.0, %v8184
    %v8186 = vpop.f32.mrb[0].mxu0
    %8187 = vmatprep.mubr.f32.mxu0 0.0
    %8188 = vmatmul.mubr.f32.gmra.mrb[0].mxu0 %v8092
    %v8189 = vpop.f32.mrb[0].mxu0
    %v8190 = vadd.f32 0.0, %v8189
    %v8191 = vpop.f32.mrb[0].mxu0
    %8192 = vmatprep.mubr.f32.mxu0 0.0
    %8193 = vmatmul.mubr.f32.gmra.mrb[0].mxu0 %v8095
    %v8194 = vpop.f32.mrb[0].mxu0
    %v8195 = vadd.f32 0.0, %v8194
    %v8196 = vpop.f32.mrb[0].mxu0
    %8197 = vmatprep.mubr.f32.mxu0 0.0
    %8198 = vmatmul.mubr.f32.gmra.mrb[0].mxu0 %v8098
    %v8199 = vpop.f32.mrb[0].mxu0
    %v8200 = vadd.f32 0.0, %v8199
    %v8201 = vpop.f32.mrb[0].mxu0
    %8202 = vmatprep.mubr.f32.mxu0 0.0
    %8203 = vmatmul.mubr.f32.gmra.mrb[0].mxu0 %v8101
    %v8204 = vpop.f32.mrb[0].mxu0
    %v8205 = vadd.f32 0.0, %v8204
    %v8206 = vpop.f32.mrb[0].mxu0
    %8207 = vdwg.mxu0
    %v8208 = vadd.f32 %v7704, %v8170
    %v8209 = vadd.f32 %v7705, %v8175
    %v8210 = vadd.f32 %v7706, %v8180
    %v8211 = vadd.f32 %v7707, %v8185
    %v8212 = vadd.f32 %v7708, %v8190
    %v8213 = vadd.f32 %v7709, %v8195
    %v8214 = vadd.f32 %v7710, %v8200
    %v8215 = vadd.f32 %v7711, %v8205
    %s8216 = scalar_lea.vmem %s14, 1
    %v8217 = vld [vmem:[%s8216] sm:$0x1]
    %v8219 = vlaneseq
    %v8220 = vshrl.u32 %v8219, 7
    %v8221 = vsub.s32 0, %v8220
    %v8222 = vrot.slane %v8217, %v8221
    %v8224 = vadd.f32 %v8208, %v8222
    %v8225 = vadd.f32 %v8209, %v8222
    %v8226 = vadd.f32 %v8210, %v8222
    %v8227 = vadd.f32 %v8211, %v8222
    %v8228 = vadd.f32 %v8212, %v8222
    %v8229 = vadd.f32 %v8213, %v8222
    %v8230 = vadd.f32 %v8214, %v8222
    %v8231 = vadd.f32 %v8215, %v8222
    %v8232 = vsel %vm707, %v8224, 0.0
    %v8233 = vsel %vm707, %v8225, 0.0
    %v8234 = vadd.f32 %v8232, %v8233
    %v8235 = vsel %vm707, %v8226, 0.0
    %v8236 = vadd.f32 %v8234, %v8235
    %v8237 = vsel %vm707, %v8227, 0.0
    %v8238 = vadd.f32 %v8236, %v8237
    %v8239 = vsel %vm707, %v8228, 0.0
    %v8240 = vadd.f32 %v8238, %v8239
    %v8241 = vsel %vm707, %v8229, 0.0
    %v8242 = vadd.f32 %v8240, %v8241
    %v8243 = vsel %vm707, %v8230, 0.0
    %v8244 = vadd.f32 %v8242, %v8243
    %v8245 = vsel %vm707, %v8231, 0.0
    %v8246 = vadd.f32 %v8244, %v8245
    %v8247 = vrot.slane %v8246, 4
    %v8248 = vadd.f32 %v8246, %v8247
    %v8249 = vrot.slane %v8248, 2
    %v8250 = vadd.f32 %v8248, %v8249
    %v8251 = vrot.slane %v8250, 1
    %v8252 = vadd.f32 %v8250, %v8251
    %v8253 = vmul.f32 %v8252, %v3804
    %v8254 = vsub.f32 %v8224, %v8253
    %v8255 = vsub.f32 %v8225, %v8253
    %v8256 = vsub.f32 %v8226, %v8253
    %v8257 = vsub.f32 %v8227, %v8253
    %v8258 = vsub.f32 %v8228, %v8253
    %v8259 = vsub.f32 %v8229, %v8253
    %v8260 = vsub.f32 %v8230, %v8253
    %v8261 = vsub.f32 %v8231, %v8253
    %v8262 = vmul.f32 %v8254, %v8254
    %v8263 = vmul.f32 %v8255, %v8255
    %v8264 = vmul.f32 %v8256, %v8256
    %v8265 = vmul.f32 %v8257, %v8257
    %v8266 = vmul.f32 %v8258, %v8258
    %v8267 = vmul.f32 %v8259, %v8259
    %v8268 = vmul.f32 %v8260, %v8260
    %v8269 = vmul.f32 %v8261, %v8261
    %v8270 = vsel %vm707, %v8262, 0.0
    %v8271 = vsel %vm707, %v8263, 0.0
    %v8272 = vadd.f32 %v8270, %v8271
    %v8273 = vsel %vm707, %v8264, 0.0
    %v8274 = vadd.f32 %v8272, %v8273
    %v8275 = vsel %vm707, %v8265, 0.0
    %v8276 = vadd.f32 %v8274, %v8275
    %v8277 = vsel %vm707, %v8266, 0.0
    %v8278 = vadd.f32 %v8276, %v8277
    %v8279 = vsel %vm707, %v8267, 0.0
    %v8280 = vadd.f32 %v8278, %v8279
    %v8281 = vsel %vm707, %v8268, 0.0
    %v8282 = vadd.f32 %v8280, %v8281
    %v8283 = vsel %vm707, %v8269, 0.0
    %v8284 = vadd.f32 %v8282, %v8283
    %v8285 = vrot.slane %v8284, 4
    %v8286 = vadd.f32 %v8284, %v8285
    %v8287 = vrot.slane %v8286, 2
    %v8288 = vadd.f32 %v8286, %v8287
    %v8289 = vrot.slane %v8288, 1
    %v8290 = vadd.f32 %v8288, %v8289
    %v8291 = vmul.f32 %v8290, %v3804
    %v8292 = vadd.f32 %v8291, 1e-05
    %v8293 = vrsqrt.pop %v8292
    %v8294 = vmul.f32 %v8254, %v8293
    %v8295 = vmul.f32 %v8255, %v8293
    %v8296 = vmul.f32 %v8256, %v8293
    %v8297 = vmul.f32 %v8257, %v8293
    %v8298 = vmul.f32 %v8258, %v8293
    %v8299 = vmul.f32 %v8259, %v8293
    %v8300 = vmul.f32 %v8260, %v8293
    %v8301 = vmul.f32 %v8261, %v8293
    %s8302 = scalar_lea.vmem %s15, 1
    %v8303 = vld [vmem:[%s8302] sm:$0x1]
    %v8305 = vlaneseq
    %v8306 = vshrl.u32 %v8305, 7
    %v8307 = vsub.s32 0, %v8306
    %v8308 = vrot.slane %v8303, %v8307
    %v8310 = vmul.f32 %v8294, %v8308
    %v8311 = vmul.f32 %v8295, %v8308
    %v8312 = vmul.f32 %v8296, %v8308
    %v8313 = vmul.f32 %v8297, %v8308
    %v8314 = vmul.f32 %v8298, %v8308
    %v8315 = vmul.f32 %v8299, %v8308
    %v8316 = vmul.f32 %v8300, %v8308
    %v8317 = vmul.f32 %v8301, %v8308
    %s8318 = scalar_lea.vmem %s16, 1
    %v8319 = vld [vmem:[%s8318] sm:$0x1]
    %v8321 = vlaneseq
    %v8322 = vshrl.u32 %v8321, 7
    %v8323 = vsub.s32 0, %v8322
    %v8324 = vrot.slane %v8319, %v8323
    %v8326 = vadd.f32 %v8310, %v8324
    %v8327 = vadd.f32 %v8311, %v8324
    %v8328 = vadd.f32 %v8312, %v8324
    %v8329 = vadd.f32 %v8313, %v8324
    %v8330 = vadd.f32 %v8314, %v8324
    %v8331 = vadd.f32 %v8315, %v8324
    %v8332 = vadd.f32 %v8316, %v8324
    %v8333 = vadd.f32 %v8317, %v8324
    %8334 = vst.msk [vmem:[#allocation2] sm:$0xff] %vm707, %v8326
    %8335 = vst.msk [vmem:[#allocation2 + $0x8] sm:$0xff] %vm707, %v8327
    %8336 = vst.msk [vmem:[#allocation2 + $0x10] sm:$0xff] %vm707, %v8328
    %8337 = vst.msk [vmem:[#allocation2 + $0x18] sm:$0xff] %vm707, %v8329
    %8338 = vst.msk [vmem:[#allocation2 + $0x20] sm:$0xff] %vm707, %v8330
    %8339 = vst.msk [vmem:[#allocation2 + $0x28] sm:$0xff] %vm707, %v8331
    %8340 = vst.msk [vmem:[#allocation2 + $0x30] sm:$0xff] %vm707, %v8332
    %8341 = vst.msk [vmem:[#allocation2 + $0x38] sm:$0xff] %vm707, %v8333
    %v8342 = vld [vmem:[#allocation2] sm:$0x1]
    %v8343 = vld [vmem:[#allocation2 + $0x8] sm:$0x1]
    %v8344 = vld [vmem:[#allocation2 + $0x10] sm:$0x1]
    %v8345 = vld [vmem:[#allocation2 + $0x18] sm:$0x1]
    %v8346 = vld [vmem:[#allocation2 + $0x20] sm:$0x1]
    %v8347 = vld [vmem:[#allocation2 + $0x28] sm:$0x1]
    %v8348 = vld [vmem:[#allocation2 + $0x30] sm:$0x1]
    %v8349 = vld [vmem:[#allocation2 + $0x38] sm:$0x1]
    %v8350 = vld [vmem:[#allocation12] sm:$0xff]
    %v8351 = vld [vmem:[#allocation12 + $0x8] sm:$0xff]
    %v8352 = vld [vmem:[#allocation12 + $0x10] sm:$0xff]
    %v8353 = vld [vmem:[#allocation12 + $0x18] sm:$0xff]
    %v8354 = vld [vmem:[#allocation2 + $0x1] sm:$0x1]
    %v8355 = vld [vmem:[#allocation2 + $0x9] sm:$0x1]
    %v8356 = vld [vmem:[#allocation2 + $0x11] sm:$0x1]
    %v8357 = vld [vmem:[#allocation2 + $0x19] sm:$0x1]
    %v8358 = vld [vmem:[#allocation2 + $0x21] sm:$0x1]
    %v8359 = vld [vmem:[#allocation2 + $0x29] sm:$0x1]
    %v8360 = vld [vmem:[#allocation2 + $0x31] sm:$0x1]
    %v8361 = vld [vmem:[#allocation2 + $0x39] sm:$0x1]
    %s8362 = scalar_lea.vmem [#allocation12], 32
    %v8363 = vld [vmem:[%s8362] sm:$0xff]
    %v8364 = vld [vmem:[%s8362 + $0x8] sm:$0xff]
    %v8365 = vld [vmem:[%s8362 + $0x10] sm:$0xff]
    %v8366 = vld [vmem:[%s8362 + $0x18] sm:$0xff]
    %v8375 = vrot.slane %v8355, 7
    %vm8376 = vcmask 1041409
    %v8377 = vsel %vm8376, %v8375, %v8354
    %v8378 = vrot.slane %v8356, 6
    %vm8379 = vcmask 1042434
    %v8380 = vsel %vm8379, %v8378, %v8377
    %v8381 = vrot.slane %v8357, 5
    %vm8382 = vcmask 1043459
    %v8383 = vsel %vm8382, %v8381, %v8380
    %v8384 = vrot.slane %v8358, 4
    %vm8385 = vcmask 1044484
    %v8386 = vsel %vm8385, %v8384, %v8383
    %v8387 = vrot.slane %v8359, 3
    %vm8388 = vcmask 1045509
    %v8389 = vsel %vm8388, %v8387, %v8386
    %v8390 = vrot.slane %v8360, 2
    %vm8391 = vcmask 1046534
    %v8392 = vsel %vm8391, %v8390, %v8389
    %v8393 = vrot.slane %v8361, 1
    %vm8394 = vcmask 1047559
    %v8395 = vsel %vm8394, %v8393, %v8392
    %v8396 = vsel %vm707, %v8395, 0
    %8398 = vmatprep.subr.mxu0 0.0
    %8399 = vmatpush1.msra.mxu0 %v8363
    %8400 = vmatprep.subr.mxu0 0.0
    %8401 = vmatpush1.msra.mxu0 %v8364
    %8402 = vmatprep.subr.mxu0 0.0
    %8403 = vmatpush1.msra.mxu0 %v8365
    %8404 = vmatprep.subr.mxu0 0.0
    %8405 = vmatpush1.msra.mxu0 %v8366
    %8406 = vmatprep.subr.mxu0 0.0
    %8407 = vmatpush1.msra.mxu0 0.0
    %8408 = vmatprep.subr.mxu0 0.0
    %8409 = vmatpush1.msra.mxu0 0.0
    %8410 = vmatprep.subr.mxu0 0.0
    %8411 = vmatpush1.msra.mxu0 0.0
    %8412 = vmatprep.subr.mxu0 0.0
    %8413 = vmatpush1.msra.mxu0 0.0
    %8414 = vmatprep.subr.mxu0 0.0
    %8415 = vmatpush1.msra.mxu0 0.0
    %8416 = vmatprep.subr.mxu0 0.0
    %8417 = vmatpush1.msra.mxu0 0.0
    %8418 = vmatprep.subr.mxu0 0.0
    %8419 = vmatpush1.msra.mxu0 0.0
    %8420 = vmatprep.subr.mxu0 0.0
    %8421 = vmatpush1.msra.mxu0 0.0
    %8422 = vmatprep.subr.mxu0 0.0
    %8423 = vmatpush1.msra.mxu0 0.0
    %8424 = vmatprep.subr.mxu0 0.0
    %8425 = vmatpush1.msra.mxu0 0.0
    %8426 = vmatprep.subr.mxu0 0.0
    %8427 = vmatpush1.msra.mxu0 0.0
    %8428 = vmatprep.subr.mxu0 0.0
    %8429 = vmatpush1.msra.mxu0 0.0
    %8430 = vmatprep.subr.mxu0 0.0
    %8431 = vmatpush1.msra.mxu0 0.0
    %8432 = vmatprep.subr.mxu0 0.0
    %8433 = vmatpush1.msra.mxu0 0.0
    %8434 = vmatprep.subr.mxu0 0.0
    %8435 = vmatpush1.msra.mxu0 0.0
    %8436 = vmatprep.subr.mxu0 0.0
    %8437 = vmatpush1.msra.mxu0 0.0
    %8438 = vmatprep.subr.mxu0 0.0
    %8439 = vmatpush1.msra.mxu0 0.0
    %8440 = vmatprep.subr.mxu0 0.0
    %8441 = vmatpush1.msra.mxu0 0.0
    %8442 = vmatprep.subr.mxu0 0.0
    %8443 = vmatpush1.msra.mxu0 0.0
    %8444 = vmatprep.subr.mxu0 0.0
    %8445 = vmatpush1.msra.mxu0 0.0
    %8446 = vmatprep.subr.mxu0 0.0
    %8447 = vmatpush1.msra.mxu0 0.0
    %8448 = vmatprep.subr.mxu0 0.0
    %8449 = vmatpush1.msra.mxu0 0.0
    %8450 = vmatprep.subr.mxu0 0.0
    %8451 = vmatpush1.msra.mxu0 0.0
    %8452 = vmatprep.subr.mxu0 0.0
    %8453 = vmatpush1.msra.mxu0 0.0
    %8454 = vmatprep.subr.mxu0 0.0
    %8455 = vmatpush1.msra.mxu0 0.0
    %8456 = vmatprep.subr.mxu0 0.0
    %8457 = vmatpush1.msra.mxu0 0.0
    %8458 = vmatprep.subr.mxu0 0.0
    %8459 = vmatpush1.msra.mxu0 0.0
    %8460 = vmatprep.subr.mxu0 0.0
    %8461 = vmatpush1.msra.mxu0 0.0
    %8462 = vmatprep.mubr.f32.mxu0 0.0
    %8463 = vmatmul.mubr.f32.gmra.mrb[0].mxu0 %v8396
    %v8464 = vpop.f32.mrb[0].mxu0
    %v8465 = vadd.f32 0.0, %v8464
    %v8466 = vpop.f32.mrb[0].mxu0
    %8467 = vdwg.mxu0
    %v8476 = vrot.slane %v8343, 7
    %v8477 = vsel %vm8376, %v8476, %v8342
    %v8478 = vrot.slane %v8344, 6
    %v8479 = vsel %vm8379, %v8478, %v8477
    %v8480 = vrot.slane %v8345, 5
    %v8481 = vsel %vm8382, %v8480, %v8479
    %v8482 = vrot.slane %v8346, 4
    %v8483 = vsel %vm8385, %v8482, %v8481
    %v8484 = vrot.slane %v8347, 3
    %v8485 = vsel %vm8388, %v8484, %v8483
    %v8486 = vrot.slane %v8348, 2
    %v8487 = vsel %vm8391, %v8486, %v8485
    %v8488 = vrot.slane %v8349, 1
    %v8489 = vsel %vm8394, %v8488, %v8487
    %v8490 = vsel %vm707, %v8489, 0
    %8492 = vmatprep.subr.mxu0 0.0
    %8493 = vmatpush1.msra.mxu0 %v8350
    %8494 = vmatprep.subr.mxu0 0.0
    %8495 = vmatpush1.msra.mxu0 %v8351
    %8496 = vmatprep.subr.mxu0 0.0
    %8497 = vmatpush1.msra.mxu0 %v8352
    %8498 = vmatprep.subr.mxu0 0.0
    %8499 = vmatpush1.msra.mxu0 %v8353
    %8500 = vmatprep.subr.mxu0 0.0
    %8501 = vmatpush1.msra.mxu0 0.0
    %8502 = vmatprep.subr.mxu0 0.0
    %8503 = vmatpush1.msra.mxu0 0.0
    %8504 = vmatprep.subr.mxu0 0.0
    %8505 = vmatpush1.msra.mxu0 0.0
    %8506 = vmatprep.subr.mxu0 0.0
    %8507 = vmatpush1.msra.mxu0 0.0
    %8508 = vmatprep.subr.mxu0 0.0
    %8509 = vmatpush1.msra.mxu0 0.0
    %8510 = vmatprep.subr.mxu0 0.0
    %8511 = vmatpush1.msra.mxu0 0.0
    %8512 = vmatprep.subr.mxu0 0.0
    %8513 = vmatpush1.msra.mxu0 0.0
    %8514 = vmatprep.subr.mxu0 0.0
    %8515 = vmatpush1.msra.mxu0 0.0
    %8516 = vmatprep.subr.mxu0 0.0
    %8517 = vmatpush1.msra.mxu0 0.0
    %8518 = vmatprep.subr.mxu0 0.0
    %8519 = vmatpush1.msra.mxu0 0.0
    %8520 = vmatprep.subr.mxu0 0.0
    %8521 = vmatpush1.msra.mxu0 0.0
    %8522 = vmatprep.subr.mxu0 0.0
    %8523 = vmatpush1.msra.mxu0 0.0
    %8524 = vmatprep.subr.mxu0 0.0
    %8525 = vmatpush1.msra.mxu0 0.0
    %8526 = vmatprep.subr.mxu0 0.0
    %8527 = vmatpush1.msra.mxu0 0.0
    %8528 = vmatprep.subr.mxu0 0.0
    %8529 = vmatpush1.msra.mxu0 0.0
    %8530 = vmatprep.subr.mxu0 0.0
    %8531 = vmatpush1.msra.mxu0 0.0
    %8532 = vmatprep.subr.mxu0 0.0
    %8533 = vmatpush1.msra.mxu0 0.0
    %8534 = vmatprep.subr.mxu0 0.0
    %8535 = vmatpush1.msra.mxu0 0.0
    %8536 = vmatprep.subr.mxu0 0.0
    %8537 = vmatpush1.msra.mxu0 0.0
    %8538 = vmatprep.subr.mxu0 0.0
    %8539 = vmatpush1.msra.mxu0 0.0
    %8540 = vmatprep.subr.mxu0 0.0
    %8541 = vmatpush1.msra.mxu0 0.0
    %8542 = vmatprep.subr.mxu0 0.0
    %8543 = vmatpush1.msra.mxu0 0.0
    %8544 = vmatprep.subr.mxu0 0.0
    %8545 = vmatpush1.msra.mxu0 0.0
    %8546 = vmatprep.subr.mxu0 0.0
    %8547 = vmatpush1.msra.mxu0 0.0
    %8548 = vmatprep.subr.mxu0 0.0
    %8549 = vmatpush1.msra.mxu0 0.0
    %8550 = vmatprep.subr.mxu0 0.0
    %8551 = vmatpush1.msra.mxu0 0.0
    %8552 = vmatprep.subr.mxu0 0.0
    %8553 = vmatpush1.msra.mxu0 0.0
    %8554 = vmatprep.subr.mxu0 0.0
    %8555 = vmatpush1.msra.mxu0 0.0
    %8556 = vmatprep.mubr.f32.mxu0 0.0
    %8557 = vmatmul.mubr.f32.gmra.mrb[0].mxu0 %v8490
    %v8558 = vpop.f32.mrb[0].mxu0
    %v8559 = vadd.f32 %v8465, %v8558
    %v8560 = vpop.f32.mrb[0].mxu0
    %8561 = vdwg.mxu0
    %v8562 = vld [vmem:[#allocation2 + $0x2] sm:$0x1]
    %v8563 = vld [vmem:[#allocation2 + $0xa] sm:$0x1]
    %v8564 = vld [vmem:[#allocation2 + $0x12] sm:$0x1]
    %v8565 = vld [vmem:[#allocation2 + $0x1a] sm:$0x1]
    %v8566 = vld [vmem:[#allocation2 + $0x22] sm:$0x1]
    %v8567 = vld [vmem:[#allocation2 + $0x2a] sm:$0x1]
    %v8568 = vld [vmem:[#allocation2 + $0x32] sm:$0x1]
    %v8569 = vld [vmem:[#allocation2 + $0x3a] sm:$0x1]
    %s8570 = scalar_lea.vmem [#allocation12], 64
    %v8571 = vld [vmem:[%s8570] sm:$0xff]
    %v8572 = vld [vmem:[%s8570 + $0x8] sm:$0xff]
    %v8573 = vld [vmem:[%s8570 + $0x10] sm:$0xff]
    %v8574 = vld [vmem:[%s8570 + $0x18] sm:$0xff]
    %v8583 = vrot.slane %v8563, 7
    %v8584 = vsel %vm8376, %v8583, %v8562
    %v8585 = vrot.slane %v8564, 6
    %v8586 = vsel %vm8379, %v8585, %v8584
    %v8587 = vrot.slane %v8565, 5
    %v8588 = vsel %vm8382, %v8587, %v8586
    %v8589 = vrot.slane %v8566, 4
    %v8590 = vsel %vm8385, %v8589, %v8588
    %v8591 = vrot.slane %v8567, 3
    %v8592 = vsel %vm8388, %v8591, %v8590
    %v8593 = vrot.slane %v8568, 2
    %v8594 = vsel %vm8391, %v8593, %v8592
    %v8595 = vrot.slane %v8569, 1
    %v8596 = vsel %vm8394, %v8595, %v8594
    %v8597 = vsel %vm707, %v8596, 0
    %8599 = vmatprep.subr.mxu0 0.0
    %8600 = vmatpush1.msra.mxu0 %v8571
    %8601 = vmatprep.subr.mxu0 0.0
    %8602 = vmatpush1.msra.mxu0 %v8572
    %8603 = vmatprep.subr.mxu0 0.0
    %8604 = vmatpush1.msra.mxu0 %v8573
    %8605 = vmatprep.subr.mxu0 0.0
    %8606 = vmatpush1.msra.mxu0 %v8574
    %8607 = vmatprep.subr.mxu0 0.0
    %8608 = vmatpush1.msra.mxu0 0.0
    %8609 = vmatprep.subr.mxu0 0.0
    %8610 = vmatpush1.msra.mxu0 0.0
    %8611 = vmatprep.subr.mxu0 0.0
    %8612 = vmatpush1.msra.mxu0 0.0
    %8613 = vmatprep.subr.mxu0 0.0
    %8614 = vmatpush1.msra.mxu0 0.0
    %8615 = vmatprep.subr.mxu0 0.0
    %8616 = vmatpush1.msra.mxu0 0.0
    %8617 = vmatprep.subr.mxu0 0.0
    %8618 = vmatpush1.msra.mxu0 0.0
    %8619 = vmatprep.subr.mxu0 0.0
    %8620 = vmatpush1.msra.mxu0 0.0
    %8621 = vmatprep.subr.mxu0 0.0
    %8622 = vmatpush1.msra.mxu0 0.0
    %8623 = vmatprep.subr.mxu0 0.0
    %8624 = vmatpush1.msra.mxu0 0.0
    %8625 = vmatprep.subr.mxu0 0.0
    %8626 = vmatpush1.msra.mxu0 0.0
    %8627 = vmatprep.subr.mxu0 0.0
    %8628 = vmatpush1.msra.mxu0 0.0
    %8629 = vmatprep.subr.mxu0 0.0
    %8630 = vmatpush1.msra.mxu0 0.0
    %8631 = vmatprep.subr.mxu0 0.0
    %8632 = vmatpush1.msra.mxu0 0.0
    %8633 = vmatprep.subr.mxu0 0.0
    %8634 = vmatpush1.msra.mxu0 0.0
    %8635 = vmatprep.subr.mxu0 0.0
    %8636 = vmatpush1.msra.mxu0 0.0
    %8637 = vmatprep.subr.mxu0 0.0
    %8638 = vmatpush1.msra.mxu0 0.0
    %8639 = vmatprep.subr.mxu0 0.0
    %8640 = vmatpush1.msra.mxu0 0.0
    %8641 = vmatprep.subr.mxu0 0.0
    %8642 = vmatpush1.msra.mxu0 0.0
    %8643 = vmatprep.subr.mxu0 0.0
    %8644 = vmatpush1.msra.mxu0 0.0
    %8645 = vmatprep.subr.mxu0 0.0
    %8646 = vmatpush1.msra.mxu0 0.0
    %8647 = vmatprep.subr.mxu0 0.0
    %8648 = vmatpush1.msra.mxu0 0.0
    %8649 = vmatprep.subr.mxu0 0.0
    %8650 = vmatpush1.msra.mxu0 0.0
    %8651 = vmatprep.subr.mxu0 0.0
    %8652 = vmatpush1.msra.mxu0 0.0
    %8653 = vmatprep.subr.mxu0 0.0
    %8654 = vmatpush1.msra.mxu0 0.0
    %8655 = vmatprep.subr.mxu0 0.0
    %8656 = vmatpush1.msra.mxu0 0.0
    %8657 = vmatprep.subr.mxu0 0.0
    %8658 = vmatpush1.msra.mxu0 0.0
    %8659 = vmatprep.subr.mxu0 0.0
    %8660 = vmatpush1.msra.mxu0 0.0
    %8661 = vmatprep.subr.mxu0 0.0
    %8662 = vmatpush1.msra.mxu0 0.0
    %8663 = vmatprep.mubr.f32.mxu0 0.0
    %8664 = vmatmul.mubr.f32.gmra.mrb[0].mxu0 %v8597
    %v8665 = vpop.f32.mrb[0].mxu0
    %v8666 = vadd.f32 0.0, %v8665
    %v8667 = vpop.f32.mrb[0].mxu0
    %8668 = vdwg.mxu0
    %v8669 = vadd.f32 %v8559, %v8666
    %v8670 = vld [vmem:[#allocation2 + $0x3] sm:$0x1]
    %v8671 = vld [vmem:[#allocation2 + $0xb] sm:$0x1]
    %v8672 = vld [vmem:[#allocation2 + $0x13] sm:$0x1]
    %v8673 = vld [vmem:[#allocation2 + $0x1b] sm:$0x1]
    %v8674 = vld [vmem:[#allocation2 + $0x23] sm:$0x1]
    %v8675 = vld [vmem:[#allocation2 + $0x2b] sm:$0x1]
    %v8676 = vld [vmem:[#allocation2 + $0x33] sm:$0x1]
    %v8677 = vld [vmem:[#allocation2 + $0x3b] sm:$0x1]
    %s8678 = scalar_lea.vmem [#allocation12], 96
    %v8679 = vld [vmem:[%s8678] sm:$0xff]
    %v8680 = vld [vmem:[%s8678 + $0x8] sm:$0xff]
    %v8681 = vld [vmem:[%s8678 + $0x10] sm:$0xff]
    %v8682 = vld [vmem:[%s8678 + $0x18] sm:$0xff]
    %v8691 = vrot.slane %v8671, 7
    %v8692 = vsel %vm8376, %v8691, %v8670
    %v8693 = vrot.slane %v8672, 6
    %v8694 = vsel %vm8379, %v8693, %v8692
    %v8695 = vrot.slane %v8673, 5
    %v8696 = vsel %vm8382, %v8695, %v8694
    %v8697 = vrot.slane %v8674, 4
    %v8698 = vsel %vm8385, %v8697, %v8696
    %v8699 = vrot.slane %v8675, 3
    %v8700 = vsel %vm8388, %v8699, %v8698
    %v8701 = vrot.slane %v8676, 2
    %v8702 = vsel %vm8391, %v8701, %v8700
    %v8703 = vrot.slane %v8677, 1
    %v8704 = vsel %vm8394, %v8703, %v8702
    %v8705 = vsel %vm707, %v8704, 0
    %8707 = vmatprep.subr.mxu0 0.0
    %8708 = vmatpush1.msra.mxu0 %v8679
    %8709 = vmatprep.subr.mxu0 0.0
    %8710 = vmatpush1.msra.mxu0 %v8680
    %8711 = vmatprep.subr.mxu0 0.0
    %8712 = vmatpush1.msra.mxu0 %v8681
    %8713 = vmatprep.subr.mxu0 0.0
    %8714 = vmatpush1.msra.mxu0 %v8682
    %8715 = vmatprep.subr.mxu0 0.0
    %8716 = vmatpush1.msra.mxu0 0.0
    %8717 = vmatprep.subr.mxu0 0.0
    %8718 = vmatpush1.msra.mxu0 0.0
    %8719 = vmatprep.subr.mxu0 0.0
    %8720 = vmatpush1.msra.mxu0 0.0
    %8721 = vmatprep.subr.mxu0 0.0
    %8722 = vmatpush1.msra.mxu0 0.0
    %8723 = vmatprep.subr.mxu0 0.0
    %8724 = vmatpush1.msra.mxu0 0.0
    %8725 = vmatprep.subr.mxu0 0.0
    %8726 = vmatpush1.msra.mxu0 0.0
    %8727 = vmatprep.subr.mxu0 0.0
    %8728 = vmatpush1.msra.mxu0 0.0
    %8729 = vmatprep.subr.mxu0 0.0
    %8730 = vmatpush1.msra.mxu0 0.0
    %8731 = vmatprep.subr.mxu0 0.0
    %8732 = vmatpush1.msra.mxu0 0.0
    %8733 = vmatprep.subr.mxu0 0.0
    %8734 = vmatpush1.msra.mxu0 0.0
    %8735 = vmatprep.subr.mxu0 0.0
    %8736 = vmatpush1.msra.mxu0 0.0
    %8737 = vmatprep.subr.mxu0 0.0
    %8738 = vmatpush1.msra.mxu0 0.0
    %8739 = vmatprep.subr.mxu0 0.0
    %8740 = vmatpush1.msra.mxu0 0.0
    %8741 = vmatprep.subr.mxu0 0.0
    %8742 = vmatpush1.msra.mxu0 0.0
    %8743 = vmatprep.subr.mxu0 0.0
    %8744 = vmatpush1.msra.mxu0 0.0
    %8745 = vmatprep.subr.mxu0 0.0
    %8746 = vmatpush1.msra.mxu0 0.0
    %8747 = vmatprep.subr.mxu0 0.0
    %8748 = vmatpush1.msra.mxu0 0.0
    %8749 = vmatprep.subr.mxu0 0.0
    %8750 = vmatpush1.msra.mxu0 0.0
    %8751 = vmatprep.subr.mxu0 0.0
    %8752 = vmatpush1.msra.mxu0 0.0
    %8753 = vmatprep.subr.mxu0 0.0
    %8754 = vmatpush1.msra.mxu0 0.0
    %8755 = vmatprep.subr.mxu0 0.0
    %8756 = vmatpush1.msra.mxu0 0.0
    %8757 = vmatprep.subr.mxu0 0.0
    %8758 = vmatpush1.msra.mxu0 0.0
    %8759 = vmatprep.subr.mxu0 0.0
    %8760 = vmatpush1.msra.mxu0 0.0
    %8761 = vmatprep.subr.mxu0 0.0
    %8762 = vmatpush1.msra.mxu0 0.0
    %8763 = vmatprep.subr.mxu0 0.0
    %8764 = vmatpush1.msra.mxu0 0.0
    %8765 = vmatprep.subr.mxu0 0.0
    %8766 = vmatpush1.msra.mxu0 0.0
    %8767 = vmatprep.subr.mxu0 0.0
    %8768 = vmatpush1.msra.mxu0 0.0
    %8769 = vmatprep.subr.mxu0 0.0
    %8770 = vmatpush1.msra.mxu0 0.0
    %8771 = vmatprep.mubr.f32.mxu0 0.0
    %8772 = vmatmul.mubr.f32.gmra.mrb[0].mxu0 %v8705
    %v8773 = vpop.f32.mrb[0].mxu0
    %v8774 = vadd.f32 0.0, %v8773
    %v8775 = vpop.f32.mrb[0].mxu0
    %8776 = vdwg.mxu0
    %v8777 = vadd.f32 %v8669, %v8774
    %v8778 = vld [vmem:[#allocation2 + $0x4] sm:$0x1]
    %v8779 = vld [vmem:[#allocation2 + $0xc] sm:$0x1]
    %v8780 = vld [vmem:[#allocation2 + $0x14] sm:$0x1]
    %v8781 = vld [vmem:[#allocation2 + $0x1c] sm:$0x1]
    %v8782 = vld [vmem:[#allocation2 + $0x24] sm:$0x1]
    %v8783 = vld [vmem:[#allocation2 + $0x2c] sm:$0x1]
    %v8784 = vld [vmem:[#allocation2 + $0x34] sm:$0x1]
    %v8785 = vld [vmem:[#allocation2 + $0x3c] sm:$0x1]
    %s8786 = scalar_lea.vmem [#allocation12], 128
    %v8787 = vld [vmem:[%s8786] sm:$0xff]
    %v8788 = vld [vmem:[%s8786 + $0x8] sm:$0xff]
    %v8789 = vld [vmem:[%s8786 + $0x10] sm:$0xff]
    %v8790 = vld [vmem:[%s8786 + $0x18] sm:$0xff]
    %v8799 = vrot.slane %v8779, 7
    %v8800 = vsel %vm8376, %v8799, %v8778
    %v8801 = vrot.slane %v8780, 6
    %v8802 = vsel %vm8379, %v8801, %v8800
    %v8803 = vrot.slane %v8781, 5
    %v8804 = vsel %vm8382, %v8803, %v8802
    %v8805 = vrot.slane %v8782, 4
    %v8806 = vsel %vm8385, %v8805, %v8804
    %v8807 = vrot.slane %v8783, 3
    %v8808 = vsel %vm8388, %v8807, %v8806
    %v8809 = vrot.slane %v8784, 2
    %v8810 = vsel %vm8391, %v8809, %v8808
    %v8811 = vrot.slane %v8785, 1
    %v8812 = vsel %vm8394, %v8811, %v8810
    %v8813 = vsel %vm707, %v8812, 0
    %8815 = vmatprep.subr.mxu0 0.0
    %8816 = vmatpush1.msra.mxu0 %v8787
    %8817 = vmatprep.subr.mxu0 0.0
    %8818 = vmatpush1.msra.mxu0 %v8788
    %8819 = vmatprep.subr.mxu0 0.0
    %8820 = vmatpush1.msra.mxu0 %v8789
    %8821 = vmatprep.subr.mxu0 0.0
    %8822 = vmatpush1.msra.mxu0 %v8790
    %8823 = vmatprep.subr.mxu0 0.0
    %8824 = vmatpush1.msra.mxu0 0.0
    %8825 = vmatprep.subr.mxu0 0.0
    %8826 = vmatpush1.msra.mxu0 0.0
    %8827 = vmatprep.subr.mxu0 0.0
    %8828 = vmatpush1.msra.mxu0 0.0
    %8829 = vmatprep.subr.mxu0 0.0
    %8830 = vmatpush1.msra.mxu0 0.0
    %8831 = vmatprep.subr.mxu0 0.0
    %8832 = vmatpush1.msra.mxu0 0.0
    %8833 = vmatprep.subr.mxu0 0.0
    %8834 = vmatpush1.msra.mxu0 0.0
    %8835 = vmatprep.subr.mxu0 0.0
    %8836 = vmatpush1.msra.mxu0 0.0
    %8837 = vmatprep.subr.mxu0 0.0
    %8838 = vmatpush1.msra.mxu0 0.0
    %8839 = vmatprep.subr.mxu0 0.0
    %8840 = vmatpush1.msra.mxu0 0.0
    %8841 = vmatprep.subr.mxu0 0.0
    %8842 = vmatpush1.msra.mxu0 0.0
    %8843 = vmatprep.subr.mxu0 0.0
    %8844 = vmatpush1.msra.mxu0 0.0
    %8845 = vmatprep.subr.mxu0 0.0
    %8846 = vmatpush1.msra.mxu0 0.0
    %8847 = vmatprep.subr.mxu0 0.0
    %8848 = vmatpush1.msra.mxu0 0.0
    %8849 = vmatprep.subr.mxu0 0.0
    %8850 = vmatpush1.msra.mxu0 0.0
    %8851 = vmatprep.subr.mxu0 0.0
    %8852 = vmatpush1.msra.mxu0 0.0
    %8853 = vmatprep.subr.mxu0 0.0
    %8854 = vmatpush1.msra.mxu0 0.0
    %8855 = vmatprep.subr.mxu0 0.0
    %8856 = vmatpush1.msra.mxu0 0.0
    %8857 = vmatprep.subr.mxu0 0.0
    %8858 = vmatpush1.msra.mxu0 0.0
    %8859 = vmatprep.subr.mxu0 0.0
    %8860 = vmatpush1.msra.mxu0 0.0
    %8861 = vmatprep.subr.mxu0 0.0
    %8862 = vmatpush1.msra.mxu0 0.0
    %8863 = vmatprep.subr.mxu0 0.0
    %8864 = vmatpush1.msra.mxu0 0.0
    %8865 = vmatprep.subr.mxu0 0.0
    %8866 = vmatpush1.msra.mxu0 0.0
    %8867 = vmatprep.subr.mxu0 0.0
    %8868 = vmatpush1.msra.mxu0 0.0
    %8869 = vmatprep.subr.mxu0 0.0
    %8870 = vmatpush1.msra.mxu0 0.0
    %8871 = vmatprep.subr.mxu0 0.0
    %8872 = vmatpush1.msra.mxu0 0.0
    %8873 = vmatprep.subr.mxu0 0.0
    %8874 = vmatpush1.msra.mxu0 0.0
    %8875 = vmatprep.subr.mxu0 0.0
    %8876 = vmatpush1.msra.mxu0 0.0
    %8877 = vmatprep.subr.mxu0 0.0
    %8878 = vmatpush1.msra.mxu0 0.0
    %8879 = vmatprep.mubr.f32.mxu0 0.0
    %8880 = vmatmul.mubr.f32.gmra.mrb[0].mxu0 %v8813
    %v8881 = vpop.f32.mrb[0].mxu0
    %v8882 = vadd.f32 0.0, %v8881
    %v8883 = vpop.f32.mrb[0].mxu0
    %8884 = vdwg.mxu0
    %v8885 = vadd.f32 %v8777, %v8882
    %v8886 = vld [vmem:[#allocation2 + $0x5] sm:$0x1]
    %v8887 = vld [vmem:[#allocation2 + $0xd] sm:$0x1]
    %v8888 = vld [vmem:[#allocation2 + $0x15] sm:$0x1]
    %v8889 = vld [vmem:[#allocation2 + $0x1d] sm:$0x1]
    %v8890 = vld [vmem:[#allocation2 + $0x25] sm:$0x1]
    %v8891 = vld [vmem:[#allocation2 + $0x2d] sm:$0x1]
    %v8892 = vld [vmem:[#allocation2 + $0x35] sm:$0x1]
    %v8893 = vld [vmem:[#allocation2 + $0x3d] sm:$0x1]
    %s8894 = scalar_lea.vmem [#allocation12], 160
    %v8895 = vld [vmem:[%s8894] sm:$0xff]
    %v8896 = vld [vmem:[%s8894 + $0x8] sm:$0xff]
    %v8897 = vld [vmem:[%s8894 + $0x10] sm:$0xff]
    %v8898 = vld [vmem:[%s8894 + $0x18] sm:$0xff]
    %v8907 = vrot.slane %v8887, 7
    %v8908 = vsel %vm8376, %v8907, %v8886
    %v8909 = vrot.slane %v8888, 6
    %v8910 = vsel %vm8379, %v8909, %v8908
    %v8911 = vrot.slane %v8889, 5
    %v8912 = vsel %vm8382, %v8911, %v8910
    %v8913 = vrot.slane %v8890, 4
    %v8914 = vsel %vm8385, %v8913, %v8912
    %v8915 = vrot.slane %v8891, 3
    %v8916 = vsel %vm8388, %v8915, %v8914
    %v8917 = vrot.slane %v8892, 2
    %v8918 = vsel %vm8391, %v8917, %v8916
    %v8919 = vrot.slane %v8893, 1
    %v8920 = vsel %vm8394, %v8919, %v8918
    %v8921 = vsel %vm707, %v8920, 0
    %8923 = vmatprep.subr.mxu0 0.0
    %8924 = vmatpush1.msra.mxu0 %v8895
    %8925 = vmatprep.subr.mxu0 0.0
    %8926 = vmatpush1.msra.mxu0 %v8896
    %8927 = vmatprep.subr.mxu0 0.0
    %8928 = vmatpush1.msra.mxu0 %v8897
    %8929 = vmatprep.subr.mxu0 0.0
    %8930 = vmatpush1.msra.mxu0 %v8898
    %8931 = vmatprep.subr.mxu0 0.0
    %8932 = vmatpush1.msra.mxu0 0.0
    %8933 = vmatprep.subr.mxu0 0.0
    %8934 = vmatpush1.msra.mxu0 0.0
    %8935 = vmatprep.subr.mxu0 0.0
    %8936 = vmatpush1.msra.mxu0 0.0
    %8937 = vmatprep.subr.mxu0 0.0
    %8938 = vmatpush1.msra.mxu0 0.0
    %8939 = vmatprep.subr.mxu0 0.0
    %8940 = vmatpush1.msra.mxu0 0.0
    %8941 = vmatprep.subr.mxu0 0.0
    %8942 = vmatpush1.msra.mxu0 0.0
    %8943 = vmatprep.subr.mxu0 0.0
    %8944 = vmatpush1.msra.mxu0 0.0
    %8945 = vmatprep.subr.mxu0 0.0
    %8946 = vmatpush1.msra.mxu0 0.0
    %8947 = vmatprep.subr.mxu0 0.0
    %8948 = vmatpush1.msra.mxu0 0.0
    %8949 = vmatprep.subr.mxu0 0.0
    %8950 = vmatpush1.msra.mxu0 0.0
    %8951 = vmatprep.subr.mxu0 0.0
    %8952 = vmatpush1.msra.mxu0 0.0
    %8953 = vmatprep.subr.mxu0 0.0
    %8954 = vmatpush1.msra.mxu0 0.0
    %8955 = vmatprep.subr.mxu0 0.0
    %8956 = vmatpush1.msra.mxu0 0.0
    %8957 = vmatprep.subr.mxu0 0.0
    %8958 = vmatpush1.msra.mxu0 0.0
    %8959 = vmatprep.subr.mxu0 0.0
    %8960 = vmatpush1.msra.mxu0 0.0
    %8961 = vmatprep.subr.mxu0 0.0
    %8962 = vmatpush1.msra.mxu0 0.0
    %8963 = vmatprep.subr.mxu0 0.0
    %8964 = vmatpush1.msra.mxu0 0.0
    %8965 = vmatprep.subr.mxu0 0.0
    %8966 = vmatpush1.msra.mxu0 0.0
    %8967 = vmatprep.subr.mxu0 0.0
    %8968 = vmatpush1.msra.mxu0 0.0
    %8969 = vmatprep.subr.mxu0 0.0
    %8970 = vmatpush1.msra.mxu0 0.0
    %8971 = vmatprep.subr.mxu0 0.0
    %8972 = vmatpush1.msra.mxu0 0.0
    %8973 = vmatprep.subr.mxu0 0.0
    %8974 = vmatpush1.msra.mxu0 0.0
    %8975 = vmatprep.subr.mxu0 0.0
    %8976 = vmatpush1.msra.mxu0 0.0
    %8977 = vmatprep.subr.mxu0 0.0
    %8978 = vmatpush1.msra.mxu0 0.0
    %8979 = vmatprep.subr.mxu0 0.0
    %8980 = vmatpush1.msra.mxu0 0.0
    %8981 = vmatprep.subr.mxu0 0.0
    %8982 = vmatpush1.msra.mxu0 0.0
    %8983 = vmatprep.subr.mxu0 0.0
    %8984 = vmatpush1.msra.mxu0 0.0
    %8985 = vmatprep.subr.mxu0 0.0
    %8986 = vmatpush1.msra.mxu0 0.0
    %8987 = vmatprep.mubr.f32.mxu0 0.0
    %8988 = vmatmul.mubr.f32.gmra.mrb[0].mxu0 %v8921
    %v8989 = vpop.f32.mrb[0].mxu0
    %v8990 = vadd.f32 0.0, %v8989
    %v8991 = vpop.f32.mrb[0].mxu0
    %8992 = vdwg.mxu0
    %v8993 = vadd.f32 %v8885, %v8990
    %v8994 = vld [vmem:[#allocation2 + $0x6] sm:$0x1]
    %v8995 = vld [vmem:[#allocation2 + $0xe] sm:$0x1]
    %v8996 = vld [vmem:[#allocation2 + $0x16] sm:$0x1]
    %v8997 = vld [vmem:[#allocation2 + $0x1e] sm:$0x1]
    %v8998 = vld [vmem:[#allocation2 + $0x26] sm:$0x1]
    %v8999 = vld [vmem:[#allocation2 + $0x2e] sm:$0x1]
    %v9000 = vld [vmem:[#allocation2 + $0x36] sm:$0x1]
    %v9001 = vld [vmem:[#allocation2 + $0x3e] sm:$0x1]
    %s9002 = scalar_lea.vmem [#allocation12], 192
    %v9003 = vld [vmem:[%s9002] sm:$0xff]
    %v9004 = vld [vmem:[%s9002 + $0x8] sm:$0xff]
    %v9005 = vld [vmem:[%s9002 + $0x10] sm:$0xff]
    %v9006 = vld [vmem:[%s9002 + $0x18] sm:$0xff]
    %v9015 = vrot.slane %v8995, 7
    %v9016 = vsel %vm8376, %v9015, %v8994
    %v9017 = vrot.slane %v8996, 6
    %v9018 = vsel %vm8379, %v9017, %v9016
    %v9019 = vrot.slane %v8997, 5
    %v9020 = vsel %vm8382, %v9019, %v9018
    %v9021 = vrot.slane %v8998, 4
    %v9022 = vsel %vm8385, %v9021, %v9020
    %v9023 = vrot.slane %v8999, 3
    %v9024 = vsel %vm8388, %v9023, %v9022
    %v9025 = vrot.slane %v9000, 2
    %v9026 = vsel %vm8391, %v9025, %v9024
    %v9027 = vrot.slane %v9001, 1
    %v9028 = vsel %vm8394, %v9027, %v9026
    %v9029 = vsel %vm707, %v9028, 0
    %9031 = vmatprep.subr.mxu0 0.0
    %9032 = vmatpush1.msra.mxu0 %v9003
    %9033 = vmatprep.subr.mxu0 0.0
    %9034 = vmatpush1.msra.mxu0 %v9004
    %9035 = vmatprep.subr.mxu0 0.0
    %9036 = vmatpush1.msra.mxu0 %v9005
    %9037 = vmatprep.subr.mxu0 0.0
    %9038 = vmatpush1.msra.mxu0 %v9006
    %9039 = vmatprep.subr.mxu0 0.0
    %9040 = vmatpush1.msra.mxu0 0.0
    %9041 = vmatprep.subr.mxu0 0.0
    %9042 = vmatpush1.msra.mxu0 0.0
    %9043 = vmatprep.subr.mxu0 0.0
    %9044 = vmatpush1.msra.mxu0 0.0
    %9045 = vmatprep.subr.mxu0 0.0
    %9046 = vmatpush1.msra.mxu0 0.0
    %9047 = vmatprep.subr.mxu0 0.0
    %9048 = vmatpush1.msra.mxu0 0.0
    %9049 = vmatprep.subr.mxu0 0.0
    %9050 = vmatpush1.msra.mxu0 0.0
    %9051 = vmatprep.subr.mxu0 0.0
    %9052 = vmatpush1.msra.mxu0 0.0
    %9053 = vmatprep.subr.mxu0 0.0
    %9054 = vmatpush1.msra.mxu0 0.0
    %9055 = vmatprep.subr.mxu0 0.0
    %9056 = vmatpush1.msra.mxu0 0.0
    %9057 = vmatprep.subr.mxu0 0.0
    %9058 = vmatpush1.msra.mxu0 0.0
    %9059 = vmatprep.subr.mxu0 0.0
    %9060 = vmatpush1.msra.mxu0 0.0
    %9061 = vmatprep.subr.mxu0 0.0
    %9062 = vmatpush1.msra.mxu0 0.0
    %9063 = vmatprep.subr.mxu0 0.0
    %9064 = vmatpush1.msra.mxu0 0.0
    %9065 = vmatprep.subr.mxu0 0.0
    %9066 = vmatpush1.msra.mxu0 0.0
    %9067 = vmatprep.subr.mxu0 0.0
    %9068 = vmatpush1.msra.mxu0 0.0
    %9069 = vmatprep.subr.mxu0 0.0
    %9070 = vmatpush1.msra.mxu0 0.0
    %9071 = vmatprep.subr.mxu0 0.0
    %9072 = vmatpush1.msra.mxu0 0.0
    %9073 = vmatprep.subr.mxu0 0.0
    %9074 = vmatpush1.msra.mxu0 0.0
    %9075 = vmatprep.subr.mxu0 0.0
    %9076 = vmatpush1.msra.mxu0 0.0
    %9077 = vmatprep.subr.mxu0 0.0
    %9078 = vmatpush1.msra.mxu0 0.0
    %9079 = vmatprep.subr.mxu0 0.0
    %9080 = vmatpush1.msra.mxu0 0.0
    %9081 = vmatprep.subr.mxu0 0.0
    %9082 = vmatpush1.msra.mxu0 0.0
    %9083 = vmatprep.subr.mxu0 0.0
    %9084 = vmatpush1.msra.mxu0 0.0
    %9085 = vmatprep.subr.mxu0 0.0
    %9086 = vmatpush1.msra.mxu0 0.0
    %9087 = vmatprep.subr.mxu0 0.0
    %9088 = vmatpush1.msra.mxu0 0.0
    %9089 = vmatprep.subr.mxu0 0.0
    %9090 = vmatpush1.msra.mxu0 0.0
    %9091 = vmatprep.subr.mxu0 0.0
    %9092 = vmatpush1.msra.mxu0 0.0
    %9093 = vmatprep.subr.mxu0 0.0
    %9094 = vmatpush1.msra.mxu0 0.0
    %9095 = vmatprep.mubr.f32.mxu0 0.0
    %9096 = vmatmul.mubr.f32.gmra.mrb[0].mxu0 %v9029
    %v9097 = vpop.f32.mrb[0].mxu0
    %v9098 = vadd.f32 0.0, %v9097
    %v9099 = vpop.f32.mrb[0].mxu0
    %9100 = vdwg.mxu0
    %v9101 = vadd.f32 %v8993, %v9098
    %v9102 = vld [vmem:[#allocation2 + $0x7] sm:$0x1]
    %v9103 = vld [vmem:[#allocation2 + $0xf] sm:$0x1]
    %v9104 = vld [vmem:[#allocation2 + $0x17] sm:$0x1]
    %v9105 = vld [vmem:[#allocation2 + $0x1f] sm:$0x1]
    %v9106 = vld [vmem:[#allocation2 + $0x27] sm:$0x1]
    %v9107 = vld [vmem:[#allocation2 + $0x2f] sm:$0x1]
    %v9108 = vld [vmem:[#allocation2 + $0x37] sm:$0x1]
    %v9109 = vld [vmem:[#allocation2 + $0x3f] sm:$0x1]
    %s9110 = scalar_lea.vmem [#allocation12], 224
    %v9111 = vld [vmem:[%s9110] sm:$0xff]
    %v9112 = vld [vmem:[%s9110 + $0x8] sm:$0xff]
    %v9113 = vld [vmem:[%s9110 + $0x10] sm:$0xff]
    %v9114 = vld [vmem:[%s9110 + $0x18] sm:$0xff]
    %v9123 = vrot.slane %v9103, 7
    %v9124 = vsel %vm8376, %v9123, %v9102
    %v9125 = vrot.slane %v9104, 6
    %v9126 = vsel %vm8379, %v9125, %v9124
    %v9127 = vrot.slane %v9105, 5
    %v9128 = vsel %vm8382, %v9127, %v9126
    %v9129 = vrot.slane %v9106, 4
    %v9130 = vsel %vm8385, %v9129, %v9128
    %v9131 = vrot.slane %v9107, 3
    %v9132 = vsel %vm8388, %v9131, %v9130
    %v9133 = vrot.slane %v9108, 2
    %v9134 = vsel %vm8391, %v9133, %v9132
    %v9135 = vrot.slane %v9109, 1
    %v9136 = vsel %vm8394, %v9135, %v9134
    %v9137 = vsel %vm707, %v9136, 0
    %9139 = vmatprep.subr.mxu0 0.0
    %9140 = vmatpush1.msra.mxu0 %v9111
    %9141 = vmatprep.subr.mxu0 0.0
    %9142 = vmatpush1.msra.mxu0 %v9112
    %9143 = vmatprep.subr.mxu0 0.0
    %9144 = vmatpush1.msra.mxu0 %v9113
    %9145 = vmatprep.subr.mxu0 0.0
    %9146 = vmatpush1.msra.mxu0 %v9114
    %9147 = vmatprep.subr.mxu0 0.0
    %9148 = vmatpush1.msra.mxu0 0.0
    %9149 = vmatprep.subr.mxu0 0.0
    %9150 = vmatpush1.msra.mxu0 0.0
    %9151 = vmatprep.subr.mxu0 0.0
    %9152 = vmatpush1.msra.mxu0 0.0
    %9153 = vmatprep.subr.mxu0 0.0
    %9154 = vmatpush1.msra.mxu0 0.0
    %9155 = vmatprep.subr.mxu0 0.0
    %9156 = vmatpush1.msra.mxu0 0.0
    %9157 = vmatprep.subr.mxu0 0.0
    %9158 = vmatpush1.msra.mxu0 0.0
    %9159 = vmatprep.subr.mxu0 0.0
    %9160 = vmatpush1.msra.mxu0 0.0
    %9161 = vmatprep.subr.mxu0 0.0
    %9162 = vmatpush1.msra.mxu0 0.0
    %9163 = vmatprep.subr.mxu0 0.0
    %9164 = vmatpush1.msra.mxu0 0.0
    %9165 = vmatprep.subr.mxu0 0.0
    %9166 = vmatpush1.msra.mxu0 0.0
    %9167 = vmatprep.subr.mxu0 0.0
    %9168 = vmatpush1.msra.mxu0 0.0
    %9169 = vmatprep.subr.mxu0 0.0
    %9170 = vmatpush1.msra.mxu0 0.0
    %9171 = vmatprep.subr.mxu0 0.0
    %9172 = vmatpush1.msra.mxu0 0.0
    %9173 = vmatprep.subr.mxu0 0.0
    %9174 = vmatpush1.msra.mxu0 0.0
    %9175 = vmatprep.subr.mxu0 0.0
    %9176 = vmatpush1.msra.mxu0 0.0
    %9177 = vmatprep.subr.mxu0 0.0
    %9178 = vmatpush1.msra.mxu0 0.0
    %9179 = vmatprep.subr.mxu0 0.0
    %9180 = vmatpush1.msra.mxu0 0.0
    %9181 = vmatprep.subr.mxu0 0.0
    %9182 = vmatpush1.msra.mxu0 0.0
    %9183 = vmatprep.subr.mxu0 0.0
    %9184 = vmatpush1.msra.mxu0 0.0
    %9185 = vmatprep.subr.mxu0 0.0
    %9186 = vmatpush1.msra.mxu0 0.0
    %9187 = vmatprep.subr.mxu0 0.0
    %9188 = vmatpush1.msra.mxu0 0.0
    %9189 = vmatprep.subr.mxu0 0.0
    %9190 = vmatpush1.msra.mxu0 0.0
    %9191 = vmatprep.subr.mxu0 0.0
    %9192 = vmatpush1.msra.mxu0 0.0
    %9193 = vmatprep.subr.mxu0 0.0
    %9194 = vmatpush1.msra.mxu0 0.0
    %9195 = vmatprep.subr.mxu0 0.0
    %9196 = vmatpush1.msra.mxu0 0.0
    %9197 = vmatprep.subr.mxu0 0.0
    %9198 = vmatpush1.msra.mxu0 0.0
    %9199 = vmatprep.subr.mxu0 0.0
    %9200 = vmatpush1.msra.mxu0 0.0
    %9201 = vmatprep.subr.mxu0 0.0
    %9202 = vmatpush1.msra.mxu0 0.0
    %9203 = vmatprep.mubr.f32.mxu0 0.0
    %9204 = vmatmul.mubr.f32.gmra.mrb[0].mxu0 %v9137
    %v9205 = vpop.f32.mrb[0].mxu0
    %v9206 = vadd.f32 0.0, %v9205
    %v9207 = vpop.f32.mrb[0].mxu0
    %9208 = vdwg.mxu0
    %v9209 = vadd.f32 %v9101, %v9206
    %v9210 = vld [vmem:[%s18] sm:$0x1]
    %v9212 = vlaneseq
    %v9213 = vshrl.u32 %v9212, 7
    %v9214 = vsub.s32 0, %v9213
    %v9215 = vrot.slane %v9210, %v9214
    %v9217 = vadd.f32 %v9209, %v9215
    %v9218 = vmul.f32 %v9217, %v166
    %v9219 = vadd.f32 %v9218, %v151
    %9220 = vst.msk [vmem:[#allocation14] sm:$0xff] %vm1461, %v9219
    // Predicated region
    $region102: #{run.1} parent=1 // pred_check
      _
    $region103: #{run.1} parent=1 // pred_check_branch
      %9222 = sbr.rel (0) target = $region105
    $region104: #{run.1} parent=1 // pred_region
      %s9224 = ssub.s32 128, 128
      %9225 = vsyncadd [#allocation5], %s9224
      %s9227 = sshll.u32 [#allocation14], 4
      %s9228 = int_to_ptr.vmem [resolvable:$true] %s9227
      %9230 = dma.vmem_to_hbm [thread:$0]  %s9228, 128, %s19, [#allocation5]
    $region105: #{run.1} parent=1 // pred_fallthru
      _
    // Predicated region
    $region106: #{run.1} parent=1 // pred_check
      _
    $region107: #{run.1} parent=1 // pred_check_branch
      %9232 = sbr.rel (0) target = $region109
    $region108: #{run.1} parent=1 // pred_region
      %9233 = dma.done [#allocation5], 128
    $region109: #{run.1} parent=1 // pred_fallthru
      _
    %9234 = vsyncpa [#allocation4], 1
    %9235 = vsyncpa [#allocation7], 1
    %9236 = vsyncpa [#allocation10], 1
    %9237 = vsyncpa [#allocation13], 1
    %9238 = vsyncpa [#allocation5], 1

</llo_original>
